<compile_context>
chip_gen: v7x
topology: tpu7x:2x2x1
jax: 0.10.0
libtpu: 0.0.40
codegen_flags: <defaults>
</compile_context>

<pallas_src>
import math
from functools import partial

import jax
import jax.numpy as jnp
from jax import lax
from jax.experimental import pallas as pl
from jax.experimental.pallas import tpu as pltpu

_EPS = 1e-6
_VMEM_LIMIT = 48 * 1024 * 1024


def _round_up(v, m):
    return -(-v // m) * m


def _pow_static(x, p):
    # x > 0 guaranteed by callers; p is a static python float.
    if p == 2.0:
        return x * x
    if float(p).is_integer() and p > 0:
        out = x
        for _ in range(int(p) - 1):
            out = out * x
        return out
    return jnp.exp(p * jnp.log(x))


def _rowsumsq(x):
    return jnp.sum(x * x, axis=-1, keepdims=True)


def _ltime(s, k):
    # Lorentz time coordinate of an on-manifold point from its space part.
    return jnp.sqrt(_rowsumsq(s) + k)


def _fp_slab(x, power_k, mask_mh, mask_hm):
    # torch fp(): ||x||_2 / ||x^p||_2 * x^p  with norms taken per head over D.
    # x: (tile, H*D) positive slab; mask_mh: (H*D, H); mask_hm: (H, H*D).
    xp = _pow_static(x, power_k)
    ssq = jnp.dot(x * x, mask_mh, preferred_element_type=jnp.float32)     # (tile, H)
    ssqp = jnp.dot(xp * xp, mask_mh, preferred_element_type=jnp.float32)  # (tile, H)
    ratio = jnp.sqrt(ssq) * lax.rsqrt(ssqp)                               # EUP rsqrt
    ratio_slab = jnp.dot(ratio, mask_hm, preferred_element_type=jnp.float32)
    return ratio_slab * xp


def _midpoint2_space(sa, sb, k_out):
    # Lorentz centroid of two on-manifold points (space parts sa, sb) -> space part.
    at = 0.5 * (_ltime(sa, k_out) + _ltime(sb, k_out))
    asp = 0.5 * (sa + sb)
    mink = _rowsumsq(asp) - at * at
    c = math.sqrt(k_out) * lax.rsqrt(jnp.maximum(jnp.abs(mink), 1e-8))
    return asp * c


# --------------------------------------------------------------------- kernels

def _prologue_kernel(x_ref, fc0_wt_ref, fc0_wsT_ref, fc0_b_ref,
                     bn_g_ref, bn_b_ref,
                     pos_wt_ref, pos_wsT_ref, pos_b_ref,
                     o_ref, *, k_in, k_out, epsilon, add_pos_enc):
    f32 = jnp.float32
    x = x_ref[...]
    sk_in = math.sqrt(k_in)

    # expmap0_{k_in}((1, x)) with projection (time re-derived), geoopt Minkowski norm.
    nomin = jnp.sqrt(jnp.maximum(_rowsumsq(x) - 1.0, 1e-8))
    z = nomin * (1.0 / sk_in)
    sinh_small = z * (1.0 + z * z * (1.0 / 6.0))                # Taylor for tiny z
    sinh_big = 0.5 * (jnp.exp(z) - jnp.exp(-z))
    sinh_z = jnp.where(z < 1e-2, sinh_small, sinh_big)
    exp_s = (sk_in * sinh_z * pl.reciprocal(nomin)) * x          # (tile, Fin)
    exp_t = _ltime(exp_s, k_in)                                  # (tile, 1)

    scale_in = math.sqrt(k_out / k_in)

    def hyp_lin_space(wt_ref, wsT_ref, b_ref):
        return (jnp.dot(exp_s, wsT_ref[...], preferred_element_type=f32)
                + exp_t * wt_ref[...] + b_ref[...])

    # fcs[0] (x_manifold='euc'), rescaled onto the k_out manifold.
    hs = hyp_lin_space(fc0_wt_ref, fc0_wsT_ref, fc0_b_ref) * scale_in

    # fc_bns[0]: HypLayerNorm on the space part (time re-derived implicitly later).
    mu = jnp.mean(hs, axis=-1, keepdims=True)
    xc = hs - mu
    var = jnp.mean(xc * xc, axis=-1, keepdims=True)
    hs = xc * lax.rsqrt(var + 1e-5) * bn_g_ref[...] + bn_b_ref[...]

    if add_pos_enc:
        # positional encoding HypLinear (k_in -> k_out), then Lorentz midpoint with
        # the epsilon-scaled pos point (scaled point time = eps * on-manifold time).
        ps = hyp_lin_space(pos_wt_ref, pos_wsT_ref, pos_b_ref)
        pt = _ltime(ps, k_in)
        ps = ps * (scale_in * epsilon)
        pt = pt * (scale_in * epsilon)
        ht = _ltime(hs, k_out)
        at = 0.5 * (ht + pt)
        asp = 0.5 * (hs + ps)
        mink = _rowsumsq(asp) - at * at
        hs = asp * (math.sqrt(k_out) * lax.rsqrt(jnp.maximum(jnp.abs(mink), 1e-8)))

    o_ref[...] = hs


def _conv_reduce_kernel(ns_ref, s_ref, kv_wt_ref, kv_wsT_ref, kv_b_ref,
                        mask_mh_ref, mask_hm_ref,
                        ktv_ref, ksum_ref,
                        *, k_out, power_k, num_heads, head_dim, n_valid, tile,
                        needs_mask):
    f32 = jnp.float32
    hd = num_heads * head_dim

    s = s_ref[...]
    t = _ltime(s, k_out)
    # single MXU matmul for all heads' [k | v] space projections
    kv = (jnp.dot(s, kv_wsT_ref[...], preferred_element_type=f32)
          + t * kv_wt_ref[...] + kv_b_ref[...])                      # (tile, 2HD)
    k_slab = kv[:, :hd]
    v_slab = kv[:, hd:]

    inv_ns = 1.0 / (jnp.abs(ns_ref[0]) + _EPS)                        # SMEM scalar
    phi_k = _fp_slab((jnp.maximum(k_slab, 0.0) + _EPS) * inv_ns,
                     power_k, mask_mh_ref[...], mask_hm_ref[...])

    if needs_mask:
        row = (pl.program_id(0) * tile
               + lax.broadcasted_iota(jnp.int32, (tile, 1), 0))
        valid = row < n_valid
        phi_k = jnp.where(valid, phi_k, 0.0)
        v_slab = jnp.where(valid, v_slab, 0.0)

    # batched k^T v over all head pairs (block-diag kept at finalization)
    ktv_c = lax.dot_general(phi_k, v_slab, (((0,), (0,)), ((), ())),
                            preferred_element_type=f32)               # (HD, HD)
    ksum_c = jnp.sum(phi_k, axis=0, keepdims=True)                    # (1, HD)

    @pl.when(pl.program_id(0) == 0)
    def _():
        ktv_ref[...] = jnp.zeros_like(ktv_ref)
        ksum_ref[...] = jnp.zeros_like(ksum_ref)

    ktv_ref[...] += ktv_c
    ksum_ref[...] += ksum_c

    @pl.when(pl.program_id(0) == pl.num_programs(0) - 1)
    def _():
        # keep only the per-head diagonal blocks so the apply pass is one matmul
        bd = jnp.dot(mask_mh_ref[...], mask_hm_ref[...], preferred_element_type=f32)
        ktv_ref[...] = ktv_ref[...] * bd


def _conv_apply_kernel(*refs, k_out, power_k, num_heads, head_dim,
                       residual, use_act):
    f32 = jnp.float32
    hd = num_heads * head_dim
    if residual:
        (ns_ref, s_ref, resid_ref, ktv_ref, ksum_ref, vq_wt_ref, vq_wsT_ref,
         vq_b_ref, vmap_wT_ref, vmap_b_ref, mask_mh_ref, mask_hm_ref,
         mean_md_ref, o_ref) = refs
    else:
        (ns_ref, s_ref, ktv_ref, ksum_ref, vq_wt_ref, vq_wsT_ref,
         vq_b_ref, vmap_wT_ref, vmap_b_ref, mask_mh_ref, mask_hm_ref,
         mean_md_ref, o_ref) = refs
        resid_ref = None

    s = s_ref[...]
    t = _ltime(s, k_out)
    # single MXU matmul for all heads' [v | q] space projections
    vq = (jnp.dot(s, vq_wsT_ref[...], preferred_element_type=f32)
          + t * vq_wt_ref[...] + vq_b_ref[...])                       # (tile, 2HD)
    v_slab = vq[:, :hd]
    q_slab = vq[:, hd:]

    inv_ns = 1.0 / (jnp.abs(ns_ref[0]) + _EPS)
    phi_q = _fp_slab((jnp.maximum(q_slab, 0.0) + _EPS) * inv_ns,
                     power_k, mask_mh_ref[...], mask_hm_ref[...])

    num = jnp.dot(phi_q, ktv_ref[...], preferred_element_type=f32)    # (tile, HD)
    den = jnp.dot(phi_q * ksum_ref[...], mask_mh_ref[...],
                  preferred_element_type=f32)                         # (tile, H)
    inv_den = pl.reciprocal(den + _EPS, approx=True)                  # EUP
    att = num * jnp.dot(inv_den, mask_hm_ref[...], preferred_element_type=f32)

    attn = jnp.dot(att, mean_md_ref[...], preferred_element_type=f32)      # head mean
    v_mean = jnp.dot(v_slab, mean_md_ref[...], preferred_element_type=f32)
    # mean_h(v_map_mlp(v_h)) == v_map_mlp(mean_h(v_h))
    vss = jnp.dot(v_mean, vmap_wT_ref[...],
                  preferred_element_type=f32) + vmap_b_ref[...]
    x_s = attn + vss

    if residual:
        x_s = _midpoint2_space(x_s, resid_ref[...], k_out)
    if use_act:
        x_s = jnp.maximum(x_s, 0.0)                                   # HypActivation(relu)
    # HypDropout: identity (inference mode).
    o_ref[...] = x_s


def _epilogue_kernel(s_ref, fcL_wt_ref, fcL_wsT_ref, fcL_b_ref,
                     dec_wT_ref, dec_b_ref, o_ref, *, k_out):
    f32 = jnp.float32
    s = s_ref[...]
    t = _ltime(s, k_out)
    # fcs[-1]: HypLinear manifold_hidden(k_out) -> manifold_out(k_out), scale == 1.
    hs = (jnp.dot(s, fcL_wsT_ref[...], preferred_element_type=f32)
          + t * fcL_wt_ref[...] + fcL_b_ref[...])
    ht = _ltime(hs, k_out)
    # decoder_type == 'euc': logmap0(x)[..., 1:] -> nn.Linear
    alpha = ht * (1.0 / math.sqrt(k_out))
    a2m1 = alpha * alpha - 1.0
    acosh = jnp.log(alpha + jnp.sqrt(jnp.maximum(a2m1, 0.0)))
    coef = acosh * lax.rsqrt(jnp.maximum(a2m1, 1e-8))
    log_s = coef * hs
    o_ref[...] = (jnp.dot(log_s, dec_wT_ref[...], preferred_element_type=f32)
                  + dec_b_ref[...])


# ------------------------------------------------------------------ pallas_call glue

def _vspec(shape):
    nd = len(shape)
    return pl.BlockSpec(shape, lambda i, _nd=nd: (0,) * _nd)


def hypformer_forward(packed, x, cfg):
    f32 = jnp.float32
    n, f_in = x.shape
    d = packed['fc0_wsT'].shape[1]
    h = int(cfg['num_heads'])
    hd = h * d
    c = packed['dec_wT'].shape[1]
    convs = packed['convs']
    num_convs = len(convs)

    k_in = float(cfg['k_in'])
    k_out = float(cfg['k_out'])
    power_k = float(cfg['power_k'])
    residual = bool(cfg['residual'])
    use_act = bool(cfg['use_act'])

    # ----- N tiling: rows per tile multiple of 8, capped, pad N up to tile multiple.
    max_tile = int(cfg.get('max_tile_rows', 512))
    max_tile = max(8, (max_tile // 8) * 8)
    n8 = _round_up(n, 8)
    tile = min(max_tile, n8)
    n_pad = _round_up(n8, tile)
    num_tiles = n_pad // tile
    needs_mask = (n_pad != n)

    x = x.astype(f32)
    if n_pad != n:
        x = jnp.pad(x, ((0, n_pad - n), (0, 0)))

    par_params = pltpu.CompilerParams(dimension_semantics=("parallel",),
                                      vmem_limit_bytes=_VMEM_LIMIT)
    arb_params = pltpu.CompilerParams(dimension_semantics=("arbitrary",),
                                      vmem_limit_bytes=_VMEM_LIMIT)

    row_spec_d = pl.BlockSpec((tile, d), lambda i: (i, 0))
    smem_spec = pl.BlockSpec(memory_space=pltpu.MemorySpace.SMEM)
    mask_mh = packed['headmask_mh']
    mask_hm = packed['headmask_hm']
    mean_md = packed['headmean_md']

    # ----------------------------- prologue (row-parallel) -----------------------
    prologue_ops = (x, packed['fc0_wt'], packed['fc0_wsT'], packed['fc0_b'],
                    packed['bn_g'], packed['bn_b'],
                    packed['pos_wt'], packed['pos_wsT'], packed['pos_b'])
    s = pl.pallas_call(
        partial(_prologue_kernel, k_in=k_in, k_out=k_out,
                epsilon=float(cfg['epsilon']),
                add_pos_enc=bool(cfg['add_pos_enc'])),
        out_shape=jax.ShapeDtypeStruct((n_pad, d), f32),
        grid=(num_tiles,),
        in_specs=[pl.BlockSpec((tile, f_in), lambda i: (i, 0))]
                 + [_vspec(a.shape) for a in prologue_ops[1:]],
        out_specs=row_spec_d,
        compiler_params=par_params,
    )(*prologue_ops)

    # ----------------------------- conv layers -----------------------------------
    def conv_reduce(s_act, cp):
        const_ops = [cp['kv_wt'], cp['kv_wsT'], cp['kv_b'], mask_mh, mask_hm]
        kernel = partial(_conv_reduce_kernel, k_out=k_out, power_k=power_k,
                         num_heads=h, head_dim=d, n_valid=n, tile=tile,
                         needs_mask=needs_mask)
        return pl.pallas_call(
            kernel,
            out_shape=(jax.ShapeDtypeStruct((hd, hd), f32),
                       jax.ShapeDtypeStruct((1, hd), f32)),
            grid=(num_tiles,),
            in_specs=[smem_spec, row_spec_d] + [_vspec(a.shape) for a in const_ops],
            out_specs=(_vspec((hd, hd)), _vspec((1, hd))),
            compiler_params=arb_params,
        )(cp['norm_scale'], s_act, *const_ops)

    def conv_apply(s_act, resid, ktv, ksum, cp, act_flag):
        const_ops = [ktv, ksum, cp['vq_wt'], cp['vq_wsT'], cp['vq_b'],
                     cp['vmap_wT'], cp['vmap_b'], mask_mh, mask_hm, mean_md]
        ops = [cp['norm_scale'], s_act] + ([resid] if residual else []) + const_ops
        specs = ([smem_spec, row_spec_d] + ([row_spec_d] if residual else [])
                 + [_vspec(a.shape) for a in const_ops])
        kernel = partial(_conv_apply_kernel, k_out=k_out, power_k=power_k,
                         num_heads=h, head_dim=d, residual=residual,
                         use_act=act_flag)
        return pl.pallas_call(
            kernel,
            out_shape=jax.ShapeDtypeStruct((n_pad, d), f32),
            grid=(num_tiles,),
            in_specs=specs,
            out_specs=row_spec_d,
            compiler_params=par_params,
        )(*ops)

    # Two passes over self.convs, exactly as in the reference TransConv.forward
    # (the second pass's residual re-uses the FIRST pass's layer_ entries).
    layer_list = [s]
    cur = s
    for pass_idx in range(2):
        for ci in range(num_convs):
            cp = convs[ci]
            ktv, ksum = conv_reduce(cur, cp)
            resid = layer_list[ci] if residual else None
            act_flag = use_act and (pass_idx == 1)
            cur = conv_apply(cur, resid, ktv, ksum, cp, act_flag)
            if pass_idx == 0:
                layer_list.append(cur)

    # ----------------------------- epilogue (row-parallel) -----------------------
    epi_ops = (cur, packed['fcL_wt'], packed['fcL_wsT'], packed['fcL_b'],
               packed['dec_wT'], packed['dec_b'])
    out = pl.pallas_call(
        partial(_epilogue_kernel, k_out=k_out),
        out_shape=jax.ShapeDtypeStruct((n_pad, c), f32),
        grid=(num_tiles,),
        in_specs=[row_spec_d] + [_vspec(a.shape) for a in epi_ops[1:]],
        out_specs=pl.BlockSpec((tile, c), lambda i: (i, 0)),
        compiler_params=par_params,
    )(*epi_ops)

    return out[:n]


# ------------------------------------------------------------------ parameter init

def _xavier(key, shape, gain):
    fan_out, fan_in = shape
    lim = gain * math.sqrt(6.0 / (fan_in + fan_out))
    return jax.random.uniform(key, shape, jnp.float32, -lim, lim)


def _torch_linear(key, out_f, in_f):
    kw, kb = jax.random.split(key)
    lim = 1.0 / math.sqrt(in_f)
    w = jax.random.uniform(kw, (out_f, in_f), jnp.float32, -lim, lim)
    b = jax.random.uniform(kb, (out_f,), jnp.float32, -lim, lim)
    return w, b


def init_params(key, *, in_channels, hidden, out_channels, num_heads, num_layers):
    gain = math.sqrt(2.0)
    keys = jax.random.split(key, 64)
    ki = iter(keys)
    p = {}
    p['fc0_w'] = _xavier(next(ki), (hidden, in_channels + 1), gain)   # HypLinear: in+1 -> hidden
    p['fc0_b'] = jnp.zeros((hidden,), jnp.float32)
    p['fcbn0_g'] = jnp.ones((hidden,), jnp.float32)
    p['fcbn0_b'] = jnp.zeros((hidden,), jnp.float32)
    p['pos_w'] = _xavier(next(ki), (hidden, in_channels + 1), gain)
    p['pos_b'] = jnp.zeros((hidden,), jnp.float32)
    convs = []
    for _ in range(2 * num_layers):   # TransConv.__init__ appends TransConvLayer twice per layer
        cp = {
            'wq_w': [_xavier(next(ki), (hidden, hidden + 1), gain) for _ in range(num_heads)],
            'wq_b': [jnp.zeros((hidden,), jnp.float32) for _ in range(num_heads)],
            'wk_w': [_xavier(next(ki), (hidden, hidden + 1), gain) for _ in range(num_heads)],
            'wk_b': [jnp.zeros((hidden,), jnp.float32) for _ in range(num_heads)],
            'wv_w': [_xavier(next(ki), (hidden, hidden + 1), gain) for _ in range(num_heads)],
            'wv_b': [jnp.zeros((hidden,), jnp.float32) for _ in range(num_heads)],
        }
        vw, vb = _torch_linear(next(ki), hidden, hidden)              # v_map_mlp
        cp['vmap_w'], cp['vmap_b'] = vw, vb
        cp['norm_scale'] = jnp.ones((), jnp.float32)
        convs.append(cp)
    p['convs'] = convs
    p['fcL_w'] = _xavier(next(ki), (hidden, hidden + 1), gain)
    p['fcL_b'] = jnp.zeros((hidden,), jnp.float32)
    dw, db = _torch_linear(next(ki), out_channels, hidden)            # decode_trans (euc)
    p['dec_w'], p['dec_b'] = dw, db
    return p


def pack_params(p):
    """Repack torch-layout params into kernel operands:
       * HypLinear weights split into (time column, transposed space part, bias);
       * per-head Q/K/V weights packed column-wise as [k|v] (reduce) and [v|q] (apply);
       * constant head-mask / head-mean matrices for slab-wise per-head ops."""
    f32 = jnp.float32

    def split_hyp_linear(w, b):
        # w: (out, in+1) -> (w_time (1,out), w_space_T (in,out), b (1,out))
        return w[:, :1].T, w[:, 1:].T, b.reshape(1, -1)

    fc0_wt, fc0_wsT, fc0_b = split_hyp_linear(p['fc0_w'], p['fc0_b'])
    pos_wt, pos_wsT, pos_b = split_hyp_linear(p['pos_w'], p['pos_b'])
    fcL_wt, fcL_wsT, fcL_b = split_hyp_linear(p['fcL_w'], p['fcL_b'])

    num_heads = len(p['convs'][0]['wq_w'])
    hidden = p['convs'][0]['vmap_w'].shape[0]
    hd = num_heads * hidden

    convs = []
    for cp in p['convs']:
        wk = jnp.concatenate(cp['wk_w'], axis=0)   # (HD, D+1)
        wv = jnp.concatenate(cp['wv_w'], axis=0)
        wq = jnp.concatenate(cp['wq_w'], axis=0)
        bk = jnp.concatenate(cp['wk_b'], axis=0)
        bv = jnp.concatenate(cp['wv_b'], axis=0)
        bq = jnp.concatenate(cp['wq_b'], axis=0)
        kv_wt, kv_wsT, kv_b = split_hyp_linear(jnp.concatenate([wk, wv], axis=0),
                                               jnp.concatenate([bk, bv], axis=0))
        vq_wt, vq_wsT, vq_b = split_hyp_linear(jnp.concatenate([wv, wq], axis=0),
                                               jnp.concatenate([bv, bq], axis=0))
        convs.append(dict(
            kv_wt=kv_wt, kv_wsT=kv_wsT, kv_b=kv_b,
            vq_wt=vq_wt, vq_wsT=vq_wsT, vq_b=vq_b,
            vmap_wT=jnp.asarray(cp['vmap_w']).T,
            vmap_b=cp['vmap_b'].reshape(1, -1),
            norm_scale=cp['norm_scale'].reshape(1).astype(f32),
        ))

    head_ids = jnp.arange(hd) // hidden
    headmask_mh = (head_ids[:, None] == jnp.arange(num_heads)[None, :]).astype(f32)
    headmask_hm = headmask_mh.T
    headmean_md = jnp.tile(jnp.eye(hidden, dtype=f32), (num_heads, 1)) / num_heads

    return dict(
        fc0_wt=fc0_wt, fc0_wsT=fc0_wsT, fc0_b=fc0_b,
        bn_g=p['fcbn0_g'].reshape(1, -1), bn_b=p['fcbn0_b'].reshape(1, -1),
        pos_wt=pos_wt, pos_wsT=pos_wsT, pos_b=pos_b,
        fcL_wt=fcL_wt, fcL_wsT=fcL_wsT, fcL_b=fcL_b,
        dec_wT=jnp.asarray(p['dec_w']).T, dec_b=p['dec_b'].reshape(1, -1),
        headmask_mh=headmask_mh, headmask_hm=headmask_hm, headmean_md=headmean_md,
        convs=convs,
    )


if __name__ == "__main__":
    # Small deterministic example: 44 nodes (not a tile multiple -> exercises the
    # padded-row masking), 8 input features, hidden 32, 4 classes, 2 heads, 1 layer.
    N, F_in, D, C, H, L = 44, 8, 32, 4, 2, 1
    cfg = dict(k_in=1.0, k_out=1.0, num_heads=H, power_k=2.0, epsilon=1.0,
               add_pos_enc=True, residual=True, use_act=True,
               max_tile_rows=16)        # small tile so the grid has 3 N-tiles

    key = jax.random.PRNGKey(0)
    kp, kx = jax.random.split(key)
    params = init_params(kp, in_channels=F_in, hidden=D, out_channels=C,
                         num_heads=H, num_layers=L)
    packed = pack_params(params)
    x = jax.random.normal(kx, (N, F_in), jnp.float32)

    fwd = jax.jit(lambda p, xx: hypformer_forward(p, xx, cfg))
    out = jax.block_until_ready(fwd(packed, x))
    assert out.shape == (N, C), out.shape
    assert bool(jnp.all(jnp.isfinite(out)))
    print("KERNEL_OK")
</pallas_src>

<mosaic_0001>
module attributes {stable_mosaic.version = 11 : i64} {
  func.func @_prologue_kernel(%arg0: i32, %arg1: memref<16x8xf32, #tpu.memory_space<vmem>>, %arg2: memref<1x32xf32, #tpu.memory_space<vmem>>, %arg3: memref<8x32xf32, #tpu.memory_space<vmem>>, %arg4: memref<1x32xf32, #tpu.memory_space<vmem>>, %arg5: memref<1x32xf32, #tpu.memory_space<vmem>>, %arg6: memref<1x32xf32, #tpu.memory_space<vmem>>, %arg7: memref<1x32xf32, #tpu.memory_space<vmem>>, %arg8: memref<8x32xf32, #tpu.memory_space<vmem>>, %arg9: memref<1x32xf32, #tpu.memory_space<vmem>>, %arg10: memref<16x32xf32, #tpu.memory_space<vmem>>) attributes {dimension_semantics = [#tpu.dimension_semantics<parallel>], iteration_bounds = array<i64: 3>, scalar_prefetch = 0 : i64, scratch_operands = 0 : i64, tpu.core_type = #tpu.core_type<tc>, window_params = [{transform_indices = @transform_0, window_bounds = array<i64: 16, 8>}, {pipeline_mode = #tpu.pipeline_mode<synchronous>, transform_indices = @transform_1, window_bounds = array<i64: 1, 32>}, {pipeline_mode = #tpu.pipeline_mode<synchronous>, transform_indices = @transform_2, window_bounds = array<i64: 8, 32>}, {pipeline_mode = #tpu.pipeline_mode<synchronous>, transform_indices = @transform_3, window_bounds = array<i64: 1, 32>}, {pipeline_mode = #tpu.pipeline_mode<synchronous>, transform_indices = @transform_4, window_bounds = array<i64: 1, 32>}, {pipeline_mode = #tpu.pipeline_mode<synchronous>, transform_indices = @transform_5, window_bounds = array<i64: 1, 32>}, {pipeline_mode = #tpu.pipeline_mode<synchronous>, transform_indices = @transform_6, window_bounds = array<i64: 1, 32>}, {pipeline_mode = #tpu.pipeline_mode<synchronous>, transform_indices = @transform_7, window_bounds = array<i64: 8, 32>}, {pipeline_mode = #tpu.pipeline_mode<synchronous>, transform_indices = @transform_8, window_bounds = array<i64: 1, 32>}, {transform_indices = @transform_9, window_bounds = array<i64: 16, 32>}]} {
    %c0 = arith.constant 0 : index
    %c0_0 = arith.constant 0 : index
    %0 = vector.load %arg1[%c0, %c0_0] : memref<16x8xf32, #tpu.memory_space<vmem>>, vector<16x8xf32>
    %1 = arith.mulf %0, %0 : vector<16x8xf32>
    %cst = arith.constant dense<0.000000e+00> : vector<16xf32>
    %2 = vector.multi_reduction <add>, %1, %cst [1] : vector<16x8xf32> to vector<16xf32>
    %3 = vector.shape_cast %2 : vector<16xf32> to vector<16x1xf32>
    %cst_1 = arith.constant 1.000000e+00 : f32
    %4 = vector.broadcast %cst_1 : f32 to vector<16x1xf32>
    %5 = arith.subf %3, %4 : vector<16x1xf32>
    %cst_2 = arith.constant 9.99999993E-9 : f32
    %6 = vector.broadcast %cst_2 : f32 to vector<16x1xf32>
    %7 = arith.maximumf %5, %6 : vector<16x1xf32>
    %8 = math.sqrt %7 : vector<16x1xf32>
    %cst_3 = arith.constant 1.000000e+00 : f32
    %9 = vector.broadcast %cst_3 : f32 to vector<16x1xf32>
    %10 = arith.mulf %8, %9 : vector<16x1xf32>
    %11 = arith.mulf %10, %10 : vector<16x1xf32>
    %cst_4 = arith.constant 0.166666672 : f32
    %12 = vector.broadcast %cst_4 : f32 to vector<16x1xf32>
    %13 = arith.mulf %11, %12 : vector<16x1xf32>
    %cst_5 = arith.constant 1.000000e+00 : f32
    %14 = vector.broadcast %cst_5 : f32 to vector<16x1xf32>
    %15 = arith.addf %14, %13 : vector<16x1xf32>
    %16 = arith.mulf %10, %15 : vector<16x1xf32>
    %17 = math.exp %10 : vector<16x1xf32>
    %cst_6 = arith.constant 0.000000e+00 : f32
    %18 = vector.broadcast %cst_6 : f32 to vector<16x1xf32>
    %19 = arith.subf %18, %10 : vector<16x1xf32>
    %20 = math.exp %19 : vector<16x1xf32>
    %21 = arith.subf %17, %20 : vector<16x1xf32>
    %cst_7 = arith.constant 5.000000e-01 : f32
    %22 = vector.broadcast %cst_7 : f32 to vector<16x1xf32>
    %23 = arith.mulf %22, %21 : vector<16x1xf32>
    %cst_8 = arith.constant 0.00999999977 : f32
    %24 = vector.broadcast %cst_8 : f32 to vector<16x1xf32>
    %25 = arith.cmpf olt, %10, %24 : vector<16x1xf32>
    %26 = arith.select %25, %16, %23 : vector<16x1xi1>, vector<16x1xf32>
    %cst_9 = arith.constant 1.000000e+00 : f32
    %27 = vector.broadcast %cst_9 : f32 to vector<16x1xf32>
    %28 = arith.mulf %27, %26 : vector<16x1xf32>
    %29 = tpu.reciprocal %8 : vector<16x1xf32> -> vector<16x1xf32>
    %30 = arith.mulf %28, %29 : vector<16x1xf32>
    %31 = vector.broadcast %30 : vector<16x1xf32> to vector<16x8xf32>
    %32 = arith.mulf %31, %0 : vector<16x8xf32>
    %33 = arith.mulf %32, %32 : vector<16x8xf32>
    %cst_10 = arith.constant dense<0.000000e+00> : vector<16xf32>
    %34 = vector.multi_reduction <add>, %33, %cst_10 [1] : vector<16x8xf32> to vector<16xf32>
    %35 = vector.shape_cast %34 : vector<16xf32> to vector<16x1xf32>
    %cst_11 = arith.constant 1.000000e+00 : f32
    %36 = vector.broadcast %cst_11 : f32 to vector<16x1xf32>
    %37 = arith.addf %35, %36 : vector<16x1xf32>
    %38 = math.sqrt %37 : vector<16x1xf32>
    %c0_12 = arith.constant 0 : index
    %c0_13 = arith.constant 0 : index
    %39 = vector.load %arg3[%c0_12, %c0_13] : memref<8x32xf32, #tpu.memory_space<vmem>>, vector<8x32xf32>
    %cst_14 = arith.constant dense<0.000000e+00> : vector<16x32xf32>
    %40 = tpu.matmul %32, %39, %cst_14 {dimension_numbers = #tpu.dot_dimension_numbers<[1], [0], [0], [1], [0, 0, 1, 1], [], []>} : vector<16x8xf32>, vector<8x32xf32>, vector<16x32xf32> -> vector<16x32xf32>
    %c0_15 = arith.constant 0 : index
    %c0_16 = arith.constant 0 : index
    %41 = vector.load %arg2[%c0_15, %c0_16] : memref<1x32xf32, #tpu.memory_space<vmem>>, vector<1x32xf32>
    %42 = vector.broadcast %38 : vector<16x1xf32> to vector<16x32xf32>
    %43 = vector.broadcast %41 : vector<1x32xf32> to vector<16x32xf32>
    %44 = arith.mulf %42, %43 : vector<16x32xf32>
    %45 = arith.addf %40, %44 : vector<16x32xf32>
    %c0_17 = arith.constant 0 : index
    %c0_18 = arith.constant 0 : index
    %46 = vector.load %arg4[%c0_17, %c0_18] : memref<1x32xf32, #tpu.memory_space<vmem>>, vector<1x32xf32>
    %47 = vector.broadcast %46 : vector<1x32xf32> to vector<16x32xf32>
    %48 = arith.addf %45, %47 : vector<16x32xf32>
    %cst_19 = arith.constant 1.000000e+00 : f32
    %49 = vector.broadcast %cst_19 : f32 to vector<16x32xf32>
    %50 = arith.mulf %48, %49 : vector<16x32xf32>
    %cst_20 = arith.constant dense<0.000000e+00> : vector<16xf32>
    %51 = vector.multi_reduction <add>, %50, %cst_20 [1] : vector<16x32xf32> to vector<16xf32>
    %52 = vector.shape_cast %51 : vector<16xf32> to vector<16x1xf32>
    %cst_21 = arith.constant 3.200000e+01 : f32
    %53 = vector.broadcast %cst_21 : f32 to vector<16x1xf32>
    %54 = arith.divf %52, %53 : vector<16x1xf32>
    %55 = vector.broadcast %54 : vector<16x1xf32> to vector<16x32xf32>
    %56 = arith.subf %50, %55 : vector<16x32xf32>
    %57 = arith.mulf %56, %56 : vector<16x32xf32>
    %cst_22 = arith.constant dense<0.000000e+00> : vector<16xf32>
    %58 = vector.multi_reduction <add>, %57, %cst_22 [1] : vector<16x32xf32> to vector<16xf32>
    %59 = vector.shape_cast %58 : vector<16xf32> to vector<16x1xf32>
    %cst_23 = arith.constant 3.200000e+01 : f32
    %60 = vector.broadcast %cst_23 : f32 to vector<16x1xf32>
    %61 = arith.divf %59, %60 : vector<16x1xf32>
    %cst_24 = arith.constant 9.99999974E-6 : f32
    %62 = vector.broadcast %cst_24 : f32 to vector<16x1xf32>
    %63 = arith.addf %61, %62 : vector<16x1xf32>
    %64 = math.rsqrt %63 : vector<16x1xf32>
    %65 = vector.broadcast %64 : vector<16x1xf32> to vector<16x32xf32>
    %66 = arith.mulf %56, %65 : vector<16x32xf32>
    %c0_25 = arith.constant 0 : index
    %c0_26 = arith.constant 0 : index
    %67 = vector.load %arg5[%c0_25, %c0_26] : memref<1x32xf32, #tpu.memory_space<vmem>>, vector<1x32xf32>
    %68 = vector.broadcast %67 : vector<1x32xf32> to vector<16x32xf32>
    %69 = arith.mulf %66, %68 : vector<16x32xf32>
    %c0_27 = arith.constant 0 : index
    %c0_28 = arith.constant 0 : index
    %70 = vector.load %arg6[%c0_27, %c0_28] : memref<1x32xf32, #tpu.memory_space<vmem>>, vector<1x32xf32>
    %71 = vector.broadcast %70 : vector<1x32xf32> to vector<16x32xf32>
    %72 = arith.addf %69, %71 : vector<16x32xf32>
    %c0_29 = arith.constant 0 : index
    %c0_30 = arith.constant 0 : index
    %73 = vector.load %arg8[%c0_29, %c0_30] : memref<8x32xf32, #tpu.memory_space<vmem>>, vector<8x32xf32>
    %cst_31 = arith.constant dense<0.000000e+00> : vector<16x32xf32>
    %74 = tpu.matmul %32, %73, %cst_31 {dimension_numbers = #tpu.dot_dimension_numbers<[1], [0], [0], [1], [0, 0, 1, 1], [], []>} : vector<16x8xf32>, vector<8x32xf32>, vector<16x32xf32> -> vector<16x32xf32>
    %c0_32 = arith.constant 0 : index
    %c0_33 = arith.constant 0 : index
    %75 = vector.load %arg7[%c0_32, %c0_33] : memref<1x32xf32, #tpu.memory_space<vmem>>, vector<1x32xf32>
    %76 = vector.broadcast %38 : vector<16x1xf32> to vector<16x32xf32>
    %77 = vector.broadcast %75 : vector<1x32xf32> to vector<16x32xf32>
    %78 = arith.mulf %76, %77 : vector<16x32xf32>
    %79 = arith.addf %74, %78 : vector<16x32xf32>
    %c0_34 = arith.constant 0 : index
    %c0_35 = arith.constant 0 : index
    %80 = vector.load %arg9[%c0_34, %c0_35] : memref<1x32xf32, #tpu.memory_space<vmem>>, vector<1x32xf32>
    %81 = vector.broadcast %80 : vector<1x32xf32> to vector<16x32xf32>
    %82 = arith.addf %79, %81 : vector<16x32xf32>
    %83 = arith.mulf %82, %82 : vector<16x32xf32>
    %cst_36 = arith.constant dense<0.000000e+00> : vector<16xf32>
    %84 = vector.multi_reduction <add>, %83, %cst_36 [1] : vector<16x32xf32> to vector<16xf32>
    %85 = vector.shape_cast %84 : vector<16xf32> to vector<16x1xf32>
    %cst_37 = arith.constant 1.000000e+00 : f32
    %86 = vector.broadcast %cst_37 : f32 to vector<16x1xf32>
    %87 = arith.addf %85, %86 : vector<16x1xf32>
    %88 = math.sqrt %87 : vector<16x1xf32>
    %cst_38 = arith.constant 1.000000e+00 : f32
    %89 = vector.broadcast %cst_38 : f32 to vector<16x32xf32>
    %90 = arith.mulf %82, %89 : vector<16x32xf32>
    %cst_39 = arith.constant 1.000000e+00 : f32
    %91 = vector.broadcast %cst_39 : f32 to vector<16x1xf32>
    %92 = arith.mulf %88, %91 : vector<16x1xf32>
    %93 = arith.mulf %72, %72 : vector<16x32xf32>
    %cst_40 = arith.constant dense<0.000000e+00> : vector<16xf32>
    %94 = vector.multi_reduction <add>, %93, %cst_40 [1] : vector<16x32xf32> to vector<16xf32>
    %95 = vector.shape_cast %94 : vector<16xf32> to vector<16x1xf32>
    %cst_41 = arith.constant 1.000000e+00 : f32
    %96 = vector.broadcast %cst_41 : f32 to vector<16x1xf32>
    %97 = arith.addf %95, %96 : vector<16x1xf32>
    %98 = math.sqrt %97 : vector<16x1xf32>
    %99 = arith.addf %98, %92 : vector<16x1xf32>
    %cst_42 = arith.constant 5.000000e-01 : f32
    %100 = vector.broadcast %cst_42 : f32 to vector<16x1xf32>
    %101 = arith.mulf %100, %99 : vector<16x1xf32>
    %102 = arith.addf %72, %90 : vector<16x32xf32>
    %cst_43 = arith.constant 5.000000e-01 : f32
    %103 = vector.broadcast %cst_43 : f32 to vector<16x32xf32>
    %104 = arith.mulf %103, %102 : vector<16x32xf32>
    %105 = arith.mulf %104, %104 : vector<16x32xf32>
    %cst_44 = arith.constant dense<0.000000e+00> : vector<16xf32>
    %106 = vector.multi_reduction <add>, %105, %cst_44 [1] : vector<16x32xf32> to vector<16xf32>
    %107 = vector.shape_cast %106 : vector<16xf32> to vector<16x1xf32>
    %108 = arith.mulf %101, %101 : vector<16x1xf32>
    %109 = arith.subf %107, %108 : vector<16x1xf32>
    %110 = math.absf %109 : vector<16x1xf32>
    %cst_45 = arith.constant 9.99999993E-9 : f32
    %111 = vector.broadcast %cst_45 : f32 to vector<16x1xf32>
    %112 = arith.maximumf %110, %111 : vector<16x1xf32>
    %113 = math.rsqrt %112 : vector<16x1xf32>
    %cst_46 = arith.constant 1.000000e+00 : f32
    %114 = vector.broadcast %cst_46 : f32 to vector<16x1xf32>
    %115 = arith.mulf %114, %113 : vector<16x1xf32>
    %116 = vector.broadcast %115 : vector<16x1xf32> to vector<16x32xf32>
    %117 = arith.mulf %104, %116 : vector<16x32xf32>
    %c0_47 = arith.constant 0 : index
    %c0_48 = arith.constant 0 : index
    %118 = vector.load %arg10[%c0_47, %c0_48] : memref<16x32xf32, #tpu.memory_space<vmem>>, vector<16x32xf32>
    tpu.vector_store %arg10[%c0_47, %c0_48], %117 {strides = array<i32>} : memref<16x32xf32, #tpu.memory_space<vmem>>, vector<16x32xf32>,
    return
  }
  func.func @transform_0(%arg0: i32) -> (i32, i32) {
    %c0_i32 = arith.constant 0 : i32
    %c0_i32_0 = arith.constant 0 : i32
    return %arg0, %c0_i32 : i32, i32
  }
  func.func @transform_1(%arg0: i32) -> (i32, i32) {
    %c0_i32 = arith.constant 0 : i32
    %c0_i32_0 = arith.constant 0 : i32
    %c0_i32_1 = arith.constant 0 : i32
    return %c0_i32, %c0_i32_0 : i32, i32
  }
  func.func @transform_2(%arg0: i32) -> (i32, i32) {
    %c0_i32 = arith.constant 0 : i32
    %c0_i32_0 = arith.constant 0 : i32
    %c0_i32_1 = arith.constant 0 : i32
    return %c0_i32, %c0_i32_0 : i32, i32
  }
  func.func @transform_3(%arg0: i32) -> (i32, i32) {
    %c0_i32 = arith.constant 0 : i32
    %c0_i32_0 = arith.constant 0 : i32
    %c0_i32_1 = arith.constant 0 : i32
    return %c0_i32, %c0_i32_0 : i32, i32
  }
  func.func @transform_4(%arg0: i32) -> (i32, i32) {
    %c0_i32 = arith.constant 0 : i32
    %c0_i32_0 = arith.constant 0 : i32
    %c0_i32_1 = arith.constant 0 : i32
    return %c0_i32, %c0_i32_0 : i32, i32
  }
  func.func @transform_5(%arg0: i32) -> (i32, i32) {
    %c0_i32 = arith.constant 0 : i32
    %c0_i32_0 = arith.constant 0 : i32
    %c0_i32_1 = arith.constant 0 : i32
    return %c0_i32, %c0_i32_0 : i32, i32
  }
  func.func @transform_6(%arg0: i32) -> (i32, i32) {
    %c0_i32 = arith.constant 0 : i32
    %c0_i32_0 = arith.constant 0 : i32
    %c0_i32_1 = arith.constant 0 : i32
    return %c0_i32, %c0_i32_0 : i32, i32
  }
  func.func @transform_7(%arg0: i32) -> (i32, i32) {
    %c0_i32 = arith.constant 0 : i32
    %c0_i32_0 = arith.constant 0 : i32
    %c0_i32_1 = arith.constant 0 : i32
    return %c0_i32, %c0_i32_0 : i32, i32
  }
  func.func @transform_8(%arg0: i32) -> (i32, i32) {
    %c0_i32 = arith.constant 0 : i32
    %c0_i32_0 = arith.constant 0 : i32
    %c0_i32_1 = arith.constant 0 : i32
    return %c0_i32, %c0_i32_0 : i32, i32
  }
  func.func @transform_9(%arg0: i32) -> (i32, i32) {
    %c0_i32 = arith.constant 0 : i32
    %c0_i32_0 = arith.constant 0 : i32
    return %arg0, %c0_i32 : i32, i32
  }
}

module attributes {stable_mosaic.version = 11 : i64} {
  func.func @_conv_reduce_kernel(%arg0: i32, %arg1: memref<1xf32, #tpu.memory_space<smem>>, %arg2: memref<16x32xf32, #tpu.memory_space<vmem>>, %arg3: memref<1x128xf32, #tpu.memory_space<vmem>>, %arg4: memref<32x128xf32, #tpu.memory_space<vmem>>, %arg5: memref<1x128xf32, #tpu.memory_space<vmem>>, %arg6: memref<64x2xf32, #tpu.memory_space<vmem>>, %arg7: memref<2x64xf32, #tpu.memory_space<vmem>>, %arg8: memref<64x64xf32, #tpu.memory_space<vmem>>, %arg9: memref<1x64xf32, #tpu.memory_space<vmem>>) attributes {dimension_semantics = [#tpu.dimension_semantics<arbitrary>], iteration_bounds = array<i64: 3>, scalar_prefetch = 0 : i64, scratch_operands = 0 : i64, tpu.core_type = #tpu.core_type<tc>, window_params = [{transform_indices = @transform_0, window_bounds = array<i64: 1>}, {transform_indices = @transform_1, window_bounds = array<i64: 16, 32>}, {pipeline_mode = #tpu.pipeline_mode<synchronous>, transform_indices = @transform_2, window_bounds = array<i64: 1, 128>}, {pipeline_mode = #tpu.pipeline_mode<synchronous>, transform_indices = @transform_3, window_bounds = array<i64: 32, 128>}, {pipeline_mode = #tpu.pipeline_mode<synchronous>, transform_indices = @transform_4, window_bounds = array<i64: 1, 128>}, {pipeline_mode = #tpu.pipeline_mode<synchronous>, transform_indices = @transform_5, window_bounds = array<i64: 64, 2>}, {pipeline_mode = #tpu.pipeline_mode<synchronous>, transform_indices = @transform_6, window_bounds = array<i64: 2, 64>}, {pipeline_mode = #tpu.pipeline_mode<synchronous>, transform_indices = @transform_7, window_bounds = array<i64: 64, 64>}, {pipeline_mode = #tpu.pipeline_mode<synchronous>, transform_indices = @transform_8, window_bounds = array<i64: 1, 64>}]} {
    %c0 = arith.constant 0 : index
    %c0_0 = arith.constant 0 : index
    %0 = vector.load %arg2[%c0, %c0_0] : memref<16x32xf32, #tpu.memory_space<vmem>>, vector<16x32xf32>
    %1 = arith.mulf %0, %0 : vector<16x32xf32>
    %cst = arith.constant dense<0.000000e+00> : vector<16xf32>
    %2 = vector.multi_reduction <add>, %1, %cst [1] : vector<16x32xf32> to vector<16xf32>
    %3 = vector.shape_cast %2 : vector<16xf32> to vector<16x1xf32>
    %cst_1 = arith.constant 1.000000e+00 : f32
    %4 = vector.broadcast %cst_1 : f32 to vector<16x1xf32>
    %5 = arith.addf %3, %4 : vector<16x1xf32>
    %6 = math.sqrt %5 : vector<16x1xf32>
    %c0_2 = arith.constant 0 : index
    %c0_3 = arith.constant 0 : index
    %7 = vector.load %arg4[%c0_2, %c0_3] : memref<32x128xf32, #tpu.memory_space<vmem>>, vector<32x128xf32>
    %cst_4 = arith.constant dense<0.000000e+00> : vector<16x128xf32>
    %8 = tpu.matmul %0, %7, %cst_4 {dimension_numbers = #tpu.dot_dimension_numbers<[1], [0], [0], [1], [0, 0, 1, 1], [], []>} : vector<16x32xf32>, vector<32x128xf32>, vector<16x128xf32> -> vector<16x128xf32>
    %c0_5 = arith.constant 0 : index
    %c0_6 = arith.constant 0 : index
    %9 = vector.load %arg3[%c0_5, %c0_6] : memref<1x128xf32, #tpu.memory_space<vmem>>, vector<1x128xf32>
    %10 = vector.broadcast %6 : vector<16x1xf32> to vector<16x128xf32>
    %11 = vector.broadcast %9 : vector<1x128xf32> to vector<16x128xf32>
    %12 = arith.mulf %10, %11 : vector<16x128xf32>
    %13 = arith.addf %8, %12 : vector<16x128xf32>
    %c0_7 = arith.constant 0 : index
    %c0_8 = arith.constant 0 : index
    %14 = vector.load %arg5[%c0_7, %c0_8] : memref<1x128xf32, #tpu.memory_space<vmem>>, vector<1x128xf32>
    %15 = vector.broadcast %14 : vector<1x128xf32> to vector<16x128xf32>
    %16 = arith.addf %13, %15 : vector<16x128xf32>
    %17 = vector.extract_strided_slice %16 {offsets = [0, 0], sizes = [16, 64], strides = [1, 1]} : vector<16x128xf32> to vector<16x64xf32>
    %18 = vector.extract_strided_slice %16 {offsets = [0, 64], sizes = [16, 64], strides = [1, 1]} : vector<16x128xf32> to vector<16x64xf32>
    %c0_9 = arith.constant 0 : index
    %19 = memref.load %arg1[%c0_9] : memref<1xf32, #tpu.memory_space<smem>>
    %20 = math.absf %19 : f32
    %cst_10 = arith.constant 9.99999997E-7 : f32
    %21 = arith.addf %20, %cst_10 : f32
    %cst_11 = arith.constant 1.000000e+00 : f32
    %22 = arith.divf %cst_11, %21 : f32
    %cst_12 = arith.constant 0.000000e+00 : f32
    %23 = vector.broadcast %cst_12 : f32 to vector<16x64xf32>
    %24 = arith.maximumf %17, %23 : vector<16x64xf32>
    %cst_13 = arith.constant 9.99999997E-7 : f32
    %25 = vector.broadcast %cst_13 : f32 to vector<16x64xf32>
    %26 = arith.addf %24, %25 : vector<16x64xf32>
    %27 = vector.broadcast %22 : f32 to vector<16x64xf32>
    %28 = arith.mulf %26, %27 : vector<16x64xf32>
    %c0_14 = arith.constant 0 : index
    %c0_15 = arith.constant 0 : index
    %29 = vector.load %arg6[%c0_14, %c0_15] : memref<64x2xf32, #tpu.memory_space<vmem>>, vector<64x2xf32>
    %c0_16 = arith.constant 0 : index
    %c0_17 = arith.constant 0 : index
    %30 = vector.load %arg7[%c0_16, %c0_17] : memref<2x64xf32, #tpu.memory_space<vmem>>, vector<2x64xf32>
    %31 = arith.mulf %28, %28 : vector<16x64xf32>
    %32 = arith.mulf %28, %28 : vector<16x64xf32>
    %cst_18 = arith.constant dense<0.000000e+00> : vector<16x2xf32>
    %33 = tpu.matmul %32, %29, %cst_18 {dimension_numbers = #tpu.dot_dimension_numbers<[1], [0], [0], [1], [0, 0, 1, 1], [], []>} : vector<16x64xf32>, vector<64x2xf32>, vector<16x2xf32> -> vector<16x2xf32>
    %34 = arith.mulf %31, %31 : vector<16x64xf32>
    %cst_19 = arith.constant dense<0.000000e+00> : vector<16x2xf32>
    %35 = tpu.matmul %34, %29, %cst_19 {dimension_numbers = #tpu.dot_dimension_numbers<[1], [0], [0], [1], [0, 0, 1, 1], [], []>} : vector<16x64xf32>, vector<64x2xf32>, vector<16x2xf32> -> vector<16x2xf32>
    %36 = math.sqrt %33 : vector<16x2xf32>
    %37 = math.rsqrt %35 : vector<16x2xf32>
    %38 = arith.mulf %36, %37 : vector<16x2xf32>
    %cst_20 = arith.constant dense<0.000000e+00> : vector<16x64xf32>
    %39 = tpu.matmul %38, %30, %cst_20 {dimension_numbers = #tpu.dot_dimension_numbers<[1], [0], [0], [1], [0, 0, 1, 1], [], []>} : vector<16x2xf32>, vector<2x64xf32>, vector<16x64xf32> -> vector<16x64xf32>
    %40 = arith.mulf %39, %31 : vector<16x64xf32>
    %c16_i32 = arith.constant 16 : i32
    %41 = arith.muli %arg0, %c16_i32 : i32
    %42 = tpu.iota {dimensions = array<i32: 0>} : vector<16x1xi32>
    %43 = vector.broadcast %41 : i32 to vector<16x1xi32>
    %44 = arith.addi %43, %42 : vector<16x1xi32>
    %c44_i32 = arith.constant 44 : i32
    %45 = vector.broadcast %c44_i32 : i32 to vector<16x1xi32>
    %46 = arith.cmpi slt, %44, %45 : vector<16x1xi32>
    %cst_21 = arith.constant 0.000000e+00 : f32
    %47 = vector.shape_cast %46 : vector<16x1xi1> to vector<16x1xi1>
    %48 = vector.broadcast %47 : vector<16x1xi1> to vector<16x64xi1>
    %49 = vector.broadcast %cst_21 : f32 to vector<16x64xf32>
    %50 = arith.select %48, %40, %49 : vector<16x64xi1>, vector<16x64xf32>
    %cst_22 = arith.constant 0.000000e+00 : f32
    %51 = vector.shape_cast %46 : vector<16x1xi1> to vector<16x1xi1>
    %52 = vector.broadcast %51 : vector<16x1xi1> to vector<16x64xi1>
    %53 = vector.broadcast %cst_22 : f32 to vector<16x64xf32>
    %54 = arith.select %52, %18, %53 : vector<16x64xi1>, vector<16x64xf32>
    %cst_23 = arith.constant dense<0.000000e+00> : vector<64x64xf32>
    %55 = tpu.matmul %50, %54, %cst_23 {dimension_numbers = #tpu.dot_dimension_numbers<[0], [0], [1], [1], [0, 1, 1, 1], [], []>} : vector<16x64xf32>, vector<16x64xf32>, vector<64x64xf32> -> vector<64x64xf32>
    %cst_24 = arith.constant dense<0.000000e+00> : vector<64xf32>
    %56 = vector.multi_reduction <add>, %50, %cst_24 [0] : vector<16x64xf32> to vector<64xf32>
    %57 = vector.shape_cast %56 : vector<64xf32> to vector<1x64xf32>
    %c0_i32 = arith.constant 0 : i32
    %58 = arith.cmpi eq, %arg0, %c0_i32 : i32
    %59 = arith.extui %58 : i1 to i32
    %c0_i32_25 = arith.constant 0 : i32
    %60 = arith.cmpi ne, %59, %c0_i32_25 : i32
    scf.if %60 {
      %cst_35 = arith.constant 0.000000e+00 : f32
      %70 = vector.broadcast %cst_35 : f32 to vector<64x64xf32>
      %c0_36 = arith.constant 0 : index
      %c0_37 = arith.constant 0 : index
      %71 = vector.load %arg8[%c0_36, %c0_37] : memref<64x64xf32, #tpu.memory_space<vmem>>, vector<64x64xf32>
      tpu.vector_store %arg8[%c0_36, %c0_37], %70 {strides = array<i32>} : memref<64x64xf32, #tpu.memory_space<vmem>>, vector<64x64xf32>,
      %cst_38 = arith.constant 0.000000e+00 : f32
      %72 = vector.broadcast %cst_38 : f32 to vector<1x64xf32>
      %c0_39 = arith.constant 0 : index
      %c0_40 = arith.constant 0 : index
      %73 = vector.load %arg9[%c0_39, %c0_40] : memref<1x64xf32, #tpu.memory_space<vmem>>, vector<1x64xf32>
      tpu.vector_store %arg9[%c0_39, %c0_40], %72 {strides = array<i32>} : memref<1x64xf32, #tpu.memory_space<vmem>>, vector<1x64xf32>,
    } else {
    }
    %c0_26 = arith.constant 0 : index
    %c0_27 = arith.constant 0 : index
    %61 = vector.load %arg8[%c0_26, %c0_27] : memref<64x64xf32, #tpu.memory_space<vmem>>, vector<64x64xf32>
    %62 = arith.addf %61, %55 : vector<64x64xf32>
    %c0_28 = arith.constant 0 : index
    %c0_29 = arith.constant 0 : index
    %63 = vector.load %arg8[%c0_28, %c0_29] : memref<64x64xf32, #tpu.memory_space<vmem>>, vector<64x64xf32>
    tpu.vector_store %arg8[%c0_28, %c0_29], %62 {strides = array<i32>} : memref<64x64xf32, #tpu.memory_space<vmem>>, vector<64x64xf32>,
    %c0_30 = arith.constant 0 : index
    %c0_31 = arith.constant 0 : index
    %64 = vector.load %arg9[%c0_30, %c0_31] : memref<1x64xf32, #tpu.memory_space<vmem>>, vector<1x64xf32>
    %65 = arith.addf %64, %57 : vector<1x64xf32>
    %c0_32 = arith.constant 0 : index
    %c0_33 = arith.constant 0 : index
    %66 = vector.load %arg9[%c0_32, %c0_33] : memref<1x64xf32, #tpu.memory_space<vmem>>, vector<1x64xf32>
    tpu.vector_store %arg9[%c0_32, %c0_33], %65 {strides = array<i32>} : memref<1x64xf32, #tpu.memory_space<vmem>>, vector<1x64xf32>,
    %c2_i32 = arith.constant 2 : i32
    %67 = arith.cmpi eq, %arg0, %c2_i32 : i32
    %68 = arith.extui %67 : i1 to i32
    %c0_i32_34 = arith.constant 0 : i32
    %69 = arith.cmpi ne, %68, %c0_i32_34 : i32
    scf.if %69 {
      %c0_35 = arith.constant 0 : index
      %c0_36 = arith.constant 0 : index
      %70 = vector.load %arg6[%c0_35, %c0_36] : memref<64x2xf32, #tpu.memory_space<vmem>>, vector<64x2xf32>
      %c0_37 = arith.constant 0 : index
      %c0_38 = arith.constant 0 : index
      %71 = vector.load %arg7[%c0_37, %c0_38] : memref<2x64xf32, #tpu.memory_space<vmem>>, vector<2x64xf32>
      %cst_39 = arith.constant dense<0.000000e+00> : vector<64x64xf32>
      %72 = tpu.matmul %70, %71, %cst_39 {dimension_numbers = #tpu.dot_dimension_numbers<[1], [0], [0], [1], [0, 0, 1, 1], [], []>} : vector<64x2xf32>, vector<2x64xf32>, vector<64x64xf32> -> vector<64x64xf32>
      %c0_40 = arith.constant 0 : index
      %c0_41 = arith.constant 0 : index
      %73 = vector.load %arg8[%c0_40, %c0_41] : memref<64x64xf32, #tpu.memory_space<vmem>>, vector<64x64xf32>
      %74 = arith.mulf %73, %72 : vector<64x64xf32>
      %c0_42 = arith.constant 0 : index
      %c0_43 = arith.constant 0 : index
      %75 = vector.load %arg8[%c0_42, %c0_43] : memref<64x64xf32, #tpu.memory_space<vmem>>, vector<64x64xf32>
      tpu.vector_store %arg8[%c0_42, %c0_43], %74 {strides = array<i32>} : memref<64x64xf32, #tpu.memory_space<vmem>>, vector<64x64xf32>,
    } else {
    }
    return
  }
  func.func @transform_0(%arg0: i32) -> i32 {
    %c0_i32 = arith.constant 0 : i32
    %c0_i32_0 = arith.constant 0 : i32
    return %c0_i32 : i32
  }
  func.func @transform_1(%arg0: i32) -> (i32, i32) {
    %c0_i32 = arith.constant 0 : i32
    %c0_i32_0 = arith.constant 0 : i32
    return %arg0, %c0_i32 : i32, i32
  }
  func.func @transform_2(%arg0: i32) -> (i32, i32) {
    %c0_i32 = arith.constant 0 : i32
    %c0_i32_0 = arith.constant 0 : i32
    %c0_i32_1 = arith.constant 0 : i32
    return %c0_i32, %c0_i32_0 : i32, i32
  }
  func.func @transform_3(%arg0: i32) -> (i32, i32) {
    %c0_i32 = arith.constant 0 : i32
    %c0_i32_0 = arith.constant 0 : i32
    %c0_i32_1 = arith.constant 0 : i32
    return %c0_i32, %c0_i32_0 : i32, i32
  }
  func.func @transform_4(%arg0: i32) -> (i32, i32) {
    %c0_i32 = arith.constant 0 : i32
    %c0_i32_0 = arith.constant 0 : i32
    %c0_i32_1 = arith.constant 0 : i32
    return %c0_i32, %c0_i32_0 : i32, i32
  }
  func.func @transform_5(%arg0: i32) -> (i32, i32) {
    %c0_i32 = arith.constant 0 : i32
    %c0_i32_0 = arith.constant 0 : i32
    %c0_i32_1 = arith.constant 0 : i32
    return %c0_i32, %c0_i32_0 : i32, i32
  }
  func.func @transform_6(%arg0: i32) -> (i32, i32) {
    %c0_i32 = arith.constant 0 : i32
    %c0_i32_0 = arith.constant 0 : i32
    %c0_i32_1 = arith.constant 0 : i32
    return %c0_i32, %c0_i32_0 : i32, i32
  }
  func.func @transform_7(%arg0: i32) -> (i32, i32) {
    %c0_i32 = arith.constant 0 : i32
    %c0_i32_0 = arith.constant 0 : i32
    %c0_i32_1 = arith.constant 0 : i32
    return %c0_i32, %c0_i32_0 : i32, i32
  }
  func.func @transform_8(%arg0: i32) -> (i32, i32) {
    %c0_i32 = arith.constant 0 : i32
    %c0_i32_0 = arith.constant 0 : i32
    %c0_i32_1 = arith.constant 0 : i32
    return %c0_i32, %c0_i32_0 : i32, i32
  }
}

module attributes {stable_mosaic.version = 11 : i64} {
  func.func @_conv_apply_kernel(%arg0: i32, %arg1: memref<1xf32, #tpu.memory_space<smem>>, %arg2: memref<16x32xf32, #tpu.memory_space<vmem>>, %arg3: memref<16x32xf32, #tpu.memory_space<vmem>>, %arg4: memref<64x64xf32, #tpu.memory_space<vmem>>, %arg5: memref<1x64xf32, #tpu.memory_space<vmem>>, %arg6: memref<1x128xf32, #tpu.memory_space<vmem>>, %arg7: memref<32x128xf32, #tpu.memory_space<vmem>>, %arg8: memref<1x128xf32, #tpu.memory_space<vmem>>, %arg9: memref<32x32xf32, #tpu.memory_space<vmem>>, %arg10: memref<1x32xf32, #tpu.memory_space<vmem>>, %arg11: memref<64x2xf32, #tpu.memory_space<vmem>>, %arg12: memref<2x64xf32, #tpu.memory_space<vmem>>, %arg13: memref<64x32xf32, #tpu.memory_space<vmem>>, %arg14: memref<16x32xf32, #tpu.memory_space<vmem>>) attributes {dimension_semantics = [#tpu.dimension_semantics<parallel>], iteration_bounds = array<i64: 3>, scalar_prefetch = 0 : i64, scratch_operands = 0 : i64, tpu.core_type = #tpu.core_type<tc>, window_params = [{transform_indices = @transform_0, window_bounds = array<i64: 1>}, {transform_indices = @transform_1, window_bounds = array<i64: 16, 32>}, {transform_indices = @transform_2, window_bounds = array<i64: 16, 32>}, {pipeline_mode = #tpu.pipeline_mode<synchronous>, transform_indices = @transform_3, window_bounds = array<i64: 64, 64>}, {pipeline_mode = #tpu.pipeline_mode<synchronous>, transform_indices = @transform_4, window_bounds = array<i64: 1, 64>}, {pipeline_mode = #tpu.pipeline_mode<synchronous>, transform_indices = @transform_5, window_bounds = array<i64: 1, 128>}, {pipeline_mode = #tpu.pipeline_mode<synchronous>, transform_indices = @transform_6, window_bounds = array<i64: 32, 128>}, {pipeline_mode = #tpu.pipeline_mode<synchronous>, transform_indices = @transform_7, window_bounds = array<i64: 1, 128>}, {pipeline_mode = #tpu.pipeline_mode<synchronous>, transform_indices = @transform_8, window_bounds = array<i64: 32, 32>}, {pipeline_mode = #tpu.pipeline_mode<synchronous>, transform_indices = @transform_9, window_bounds = array<i64: 1, 32>}, {pipeline_mode = #tpu.pipeline_mode<synchronous>, transform_indices = @transform_10, window_bounds = array<i64: 64, 2>}, {pipeline_mode = #tpu.pipeline_mode<synchronous>, transform_indices = @transform_11, window_bounds = array<i64: 2, 64>}, {pipeline_mode = #tpu.pipeline_mode<synchronous>, transform_indices = @transform_12, window_bounds = array<i64: 64, 32>}, {transform_indices = @transform_13, window_bounds = array<i64: 16, 32>}]} {
    %c0 = arith.constant 0 : index
    %c0_0 = arith.constant 0 : index
    %0 = vector.load %arg2[%c0, %c0_0] : memref<16x32xf32, #tpu.memory_space<vmem>>, vector<16x32xf32>
    %1 = arith.mulf %0, %0 : vector<16x32xf32>
    %cst = arith.constant dense<0.000000e+00> : vector<16xf32>
    %2 = vector.multi_reduction <add>, %1, %cst [1] : vector<16x32xf32> to vector<16xf32>
    %3 = vector.shape_cast %2 : vector<16xf32> to vector<16x1xf32>
    %cst_1 = arith.constant 1.000000e+00 : f32
    %4 = vector.broadcast %cst_1 : f32 to vector<16x1xf32>
    %5 = arith.addf %3, %4 : vector<16x1xf32>
    %6 = math.sqrt %5 : vector<16x1xf32>
    %c0_2 = arith.constant 0 : index
    %c0_3 = arith.constant 0 : index
    %7 = vector.load %arg7[%c0_2, %c0_3] : memref<32x128xf32, #tpu.memory_space<vmem>>, vector<32x128xf32>
    %cst_4 = arith.constant dense<0.000000e+00> : vector<16x128xf32>
    %8 = tpu.matmul %0, %7, %cst_4 {dimension_numbers = #tpu.dot_dimension_numbers<[1], [0], [0], [1], [0, 0, 1, 1], [], []>} : vector<16x32xf32>, vector<32x128xf32>, vector<16x128xf32> -> vector<16x128xf32>
    %c0_5 = arith.constant 0 : index
    %c0_6 = arith.constant 0 : index
    %9 = vector.load %arg6[%c0_5, %c0_6] : memref<1x128xf32, #tpu.memory_space<vmem>>, vector<1x128xf32>
    %10 = vector.broadcast %6 : vector<16x1xf32> to vector<16x128xf32>
    %11 = vector.broadcast %9 : vector<1x128xf32> to vector<16x128xf32>
    %12 = arith.mulf %10, %11 : vector<16x128xf32>
    %13 = arith.addf %8, %12 : vector<16x128xf32>
    %c0_7 = arith.constant 0 : index
    %c0_8 = arith.constant 0 : index
    %14 = vector.load %arg8[%c0_7, %c0_8] : memref<1x128xf32, #tpu.memory_space<vmem>>, vector<1x128xf32>
    %15 = vector.broadcast %14 : vector<1x128xf32> to vector<16x128xf32>
    %16 = arith.addf %13, %15 : vector<16x128xf32>
    %17 = vector.extract_strided_slice %16 {offsets = [0, 0], sizes = [16, 64], strides = [1, 1]} : vector<16x128xf32> to vector<16x64xf32>
    %18 = vector.extract_strided_slice %16 {offsets = [0, 64], sizes = [16, 64], strides = [1, 1]} : vector<16x128xf32> to vector<16x64xf32>
    %c0_9 = arith.constant 0 : index
    %19 = memref.load %arg1[%c0_9] : memref<1xf32, #tpu.memory_space<smem>>
    %20 = math.absf %19 : f32
    %cst_10 = arith.constant 9.99999997E-7 : f32
    %21 = arith.addf %20, %cst_10 : f32
    %cst_11 = arith.constant 1.000000e+00 : f32
    %22 = arith.divf %cst_11, %21 : f32
    %cst_12 = arith.constant 0.000000e+00 : f32
    %23 = vector.broadcast %cst_12 : f32 to vector<16x64xf32>
    %24 = arith.maximumf %18, %23 : vector<16x64xf32>
    %cst_13 = arith.constant 9.99999997E-7 : f32
    %25 = vector.broadcast %cst_13 : f32 to vector<16x64xf32>
    %26 = arith.addf %24, %25 : vector<16x64xf32>
    %27 = vector.broadcast %22 : f32 to vector<16x64xf32>
    %28 = arith.mulf %26, %27 : vector<16x64xf32>
    %c0_14 = arith.constant 0 : index
    %c0_15 = arith.constant 0 : index
    %29 = vector.load %arg11[%c0_14, %c0_15] : memref<64x2xf32, #tpu.memory_space<vmem>>, vector<64x2xf32>
    %c0_16 = arith.constant 0 : index
    %c0_17 = arith.constant 0 : index
    %30 = vector.load %arg12[%c0_16, %c0_17] : memref<2x64xf32, #tpu.memory_space<vmem>>, vector<2x64xf32>
    %31 = arith.mulf %28, %28 : vector<16x64xf32>
    %32 = arith.mulf %28, %28 : vector<16x64xf32>
    %cst_18 = arith.constant dense<0.000000e+00> : vector<16x2xf32>
    %33 = tpu.matmul %32, %29, %cst_18 {dimension_numbers = #tpu.dot_dimension_numbers<[1], [0], [0], [1], [0, 0, 1, 1], [], []>} : vector<16x64xf32>, vector<64x2xf32>, vector<16x2xf32> -> vector<16x2xf32>
    %34 = arith.mulf %31, %31 : vector<16x64xf32>
    %cst_19 = arith.constant dense<0.000000e+00> : vector<16x2xf32>
    %35 = tpu.matmul %34, %29, %cst_19 {dimension_numbers = #tpu.dot_dimension_numbers<[1], [0], [0], [1], [0, 0, 1, 1], [], []>} : vector<16x64xf32>, vector<64x2xf32>, vector<16x2xf32> -> vector<16x2xf32>
    %36 = math.sqrt %33 : vector<16x2xf32>
    %37 = math.rsqrt %35 : vector<16x2xf32>
    %38 = arith.mulf %36, %37 : vector<16x2xf32>
    %cst_20 = arith.constant dense<0.000000e+00> : vector<16x64xf32>
    %39 = tpu.matmul %38, %30, %cst_20 {dimension_numbers = #tpu.dot_dimension_numbers<[1], [0], [0], [1], [0, 0, 1, 1], [], []>} : vector<16x2xf32>, vector<2x64xf32>, vector<16x64xf32> -> vector<16x64xf32>
    %40 = arith.mulf %39, %31 : vector<16x64xf32>
    %c0_21 = arith.constant 0 : index
    %c0_22 = arith.constant 0 : index
    %41 = vector.load %arg4[%c0_21, %c0_22] : memref<64x64xf32, #tpu.memory_space<vmem>>, vector<64x64xf32>
    %cst_23 = arith.constant dense<0.000000e+00> : vector<16x64xf32>
    %42 = tpu.matmul %40, %41, %cst_23 {dimension_numbers = #tpu.dot_dimension_numbers<[1], [0], [0], [1], [0, 0, 1, 1], [], []>} : vector<16x64xf32>, vector<64x64xf32>, vector<16x64xf32> -> vector<16x64xf32>
    %c0_24 = arith.constant 0 : index
    %c0_25 = arith.constant 0 : index
    %43 = vector.load %arg5[%c0_24, %c0_25] : memref<1x64xf32, #tpu.memory_space<vmem>>, vector<1x64xf32>
    %44 = vector.broadcast %43 : vector<1x64xf32> to vector<16x64xf32>
    %45 = arith.mulf %40, %44 : vector<16x64xf32>
    %c0_26 = arith.constant 0 : index
    %c0_27 = arith.constant 0 : index
    %46 = vector.load %arg11[%c0_26, %c0_27] : memref<64x2xf32, #tpu.memory_space<vmem>>, vector<64x2xf32>
    %cst_28 = arith.constant dense<0.000000e+00> : vector<16x2xf32>
    %47 = tpu.matmul %45, %46, %cst_28 {dimension_numbers = #tpu.dot_dimension_numbers<[1], [0], [0], [1], [0, 0, 1, 1], [], []>} : vector<16x64xf32>, vector<64x2xf32>, vector<16x2xf32> -> vector<16x2xf32>
    %cst_29 = arith.constant 9.99999997E-7 : f32
    %48 = vector.broadcast %cst_29 : f32 to vector<16x2xf32>
    %49 = arith.addf %47, %48 : vector<16x2xf32>
    %50 = tpu.reciprocal %49 {approx = true} : vector<16x2xf32> -> vector<16x2xf32>
    %c0_30 = arith.constant 0 : index
    %c0_31 = arith.constant 0 : index
    %51 = vector.load %arg12[%c0_30, %c0_31] : memref<2x64xf32, #tpu.memory_space<vmem>>, vector<2x64xf32>
    %cst_32 = arith.constant dense<0.000000e+00> : vector<16x64xf32>
    %52 = tpu.matmul %50, %51, %cst_32 {dimension_numbers = #tpu.dot_dimension_numbers<[1], [0], [0], [1], [0, 0, 1, 1], [], []>} : vector<16x2xf32>, vector<2x64xf32>, vector<16x64xf32> -> vector<16x64xf32>
    %53 = arith.mulf %42, %52 : vector<16x64xf32>
    %c0_33 = arith.constant 0 : index
    %c0_34 = arith.constant 0 : index
    %54 = vector.load %arg13[%c0_33, %c0_34] : memref<64x32xf32, #tpu.memory_space<vmem>>, vector<64x32xf32>
    %cst_35 = arith.constant dense<0.000000e+00> : vector<16x32xf32>
    %55 = tpu.matmul %53, %54, %cst_35 {dimension_numbers = #tpu.dot_dimension_numbers<[1], [0], [0], [1], [0, 0, 1, 1], [], []>} : vector<16x64xf32>, vector<64x32xf32>, vector<16x32xf32> -> vector<16x32xf32>
    %c0_36 = arith.constant 0 : index
    %c0_37 = arith.constant 0 : index
    %56 = vector.load %arg13[%c0_36, %c0_37] : memref<64x32xf32, #tpu.memory_space<vmem>>, vector<64x32xf32>
    %cst_38 = arith.constant dense<0.000000e+00> : vector<16x32xf32>
    %57 = tpu.matmul %17, %56, %cst_38 {dimension_numbers = #tpu.dot_dimension_numbers<[1], [0], [0], [1], [0, 0, 1, 1], [], []>} : vector<16x64xf32>, vector<64x32xf32>, vector<16x32xf32> -> vector<16x32xf32>
    %c0_39 = arith.constant 0 : index
    %c0_40 = arith.constant 0 : index
    %58 = vector.load %arg9[%c0_39, %c0_40] : memref<32x32xf32, #tpu.memory_space<vmem>>, vector<32x32xf32>
    %cst_41 = arith.constant dense<0.000000e+00> : vector<16x32xf32>
    %59 = tpu.matmul %57, %58, %cst_41 {dimension_numbers = #tpu.dot_dimension_numbers<[1], [0], [0], [1], [0, 0, 1, 1], [], []>} : vector<16x32xf32>, vector<32x32xf32>, vector<16x32xf32> -> vector<16x32xf32>
    %c0_42 = arith.constant 0 : index
    %c0_43 = arith.constant 0 : index
    %60 = vector.load %arg10[%c0_42, %c0_43] : memref<1x32xf32, #tpu.memory_space<vmem>>, vector<1x32xf32>
    %61 = vector.broadcast %60 : vector<1x32xf32> to vector<16x32xf32>
    %62 = arith.addf %59, %61 : vector<16x32xf32>
    %63 = arith.addf %55, %62 : vector<16x32xf32>
    %c0_44 = arith.constant 0 : index
    %c0_45 = arith.constant 0 : index
    %64 = vector.load %arg3[%c0_44, %c0_45] : memref<16x32xf32, #tpu.memory_space<vmem>>, vector<16x32xf32>
    %65 = arith.mulf %63, %63 : vector<16x32xf32>
    %cst_46 = arith.constant dense<0.000000e+00> : vector<16xf32>
    %66 = vector.multi_reduction <add>, %65, %cst_46 [1] : vector<16x32xf32> to vector<16xf32>
    %67 = vector.shape_cast %66 : vector<16xf32> to vector<16x1xf32>
    %cst_47 = arith.constant 1.000000e+00 : f32
    %68 = vector.broadcast %cst_47 : f32 to vector<16x1xf32>
    %69 = arith.addf %67, %68 : vector<16x1xf32>
    %70 = math.sqrt %69 : vector<16x1xf32>
    %71 = arith.mulf %64, %64 : vector<16x32xf32>
    %cst_48 = arith.constant dense<0.000000e+00> : vector<16xf32>
    %72 = vector.multi_reduction <add>, %71, %cst_48 [1] : vector<16x32xf32> to vector<16xf32>
    %73 = vector.shape_cast %72 : vector<16xf32> to vector<16x1xf32>
    %cst_49 = arith.constant 1.000000e+00 : f32
    %74 = vector.broadcast %cst_49 : f32 to vector<16x1xf32>
    %75 = arith.addf %73, %74 : vector<16x1xf32>
    %76 = math.sqrt %75 : vector<16x1xf32>
    %77 = arith.addf %70, %76 : vector<16x1xf32>
    %cst_50 = arith.constant 5.000000e-01 : f32
    %78 = vector.broadcast %cst_50 : f32 to vector<16x1xf32>
    %79 = arith.mulf %78, %77 : vector<16x1xf32>
    %80 = arith.addf %63, %64 : vector<16x32xf32>
    %cst_51 = arith.constant 5.000000e-01 : f32
    %81 = vector.broadcast %cst_51 : f32 to vector<16x32xf32>
    %82 = arith.mulf %81, %80 : vector<16x32xf32>
    %83 = arith.mulf %82, %82 : vector<16x32xf32>
    %cst_52 = arith.constant dense<0.000000e+00> : vector<16xf32>
    %84 = vector.multi_reduction <add>, %83, %cst_52 [1] : vector<16x32xf32> to vector<16xf32>
    %85 = vector.shape_cast %84 : vector<16xf32> to vector<16x1xf32>
    %86 = arith.mulf %79, %79 : vector<16x1xf32>
    %87 = arith.subf %85, %86 : vector<16x1xf32>
    %88 = math.absf %87 : vector<16x1xf32>
    %cst_53 = arith.constant 9.99999993E-9 : f32
    %89 = vector.broadcast %cst_53 : f32 to vector<16x1xf32>
    %90 = arith.maximumf %88, %89 : vector<16x1xf32>
    %91 = math.rsqrt %90 : vector<16x1xf32>
    %cst_54 = arith.constant 1.000000e+00 : f32
    %92 = vector.broadcast %cst_54 : f32 to vector<16x1xf32>
    %93 = arith.mulf %92, %91 : vector<16x1xf32>
    %94 = vector.broadcast %93 : vector<16x1xf32> to vector<16x32xf32>
    %95 = arith.mulf %82, %94 : vector<16x32xf32>
    %cst_55 = arith.constant 0.000000e+00 : f32
    %96 = vector.broadcast %cst_55 : f32 to vector<16x32xf32>
    %97 = arith.maximumf %95, %96 : vector<16x32xf32>
    %c0_56 = arith.constant 0 : index
    %c0_57 = arith.constant 0 : index
    %98 = vector.load %arg14[%c0_56, %c0_57] : memref<16x32xf32, #tpu.memory_space<vmem>>, vector<16x32xf32>
    tpu.vector_store %arg14[%c0_56, %c0_57], %97 {strides = array<i32>} : memref<16x32xf32, #tpu.memory_space<vmem>>, vector<16x32xf32>,
    return
  }
  func.func @transform_0(%arg0: i32) -> i32 {
    %c0_i32 = arith.constant 0 : i32
    %c0_i32_0 = arith.constant 0 : i32
    return %c0_i32 : i32
  }
  func.func @transform_1(%arg0: i32) -> (i32, i32) {
    %c0_i32 = arith.constant 0 : i32
    %c0_i32_0 = arith.constant 0 : i32
    return %arg0, %c0_i32 : i32, i32
  }
  func.func @transform_2(%arg0: i32) -> (i32, i32) {
    %c0_i32 = arith.constant 0 : i32
    %c0_i32_0 = arith.constant 0 : i32
    return %arg0, %c0_i32 : i32, i32
  }
  func.func @transform_3(%arg0: i32) -> (i32, i32) {
    %c0_i32 = arith.constant 0 : i32
    %c0_i32_0 = arith.constant 0 : i32
    %c0_i32_1 = arith.constant 0 : i32
    return %c0_i32, %c0_i32_0 : i32, i32
  }
  func.func @transform_4(%arg0: i32) -> (i32, i32) {
    %c0_i32 = arith.constant 0 : i32
    %c0_i32_0 = arith.constant 0 : i32
    %c0_i32_1 = arith.constant 0 : i32
    return %c0_i32, %c0_i32_0 : i32, i32
  }
  func.func @transform_5(%arg0: i32) -> (i32, i32) {
    %c0_i32 = arith.constant 0 : i32
    %c0_i32_0 = arith.constant 0 : i32
    %c0_i32_1 = arith.constant 0 : i32
    return %c0_i32, %c0_i32_0 : i32, i32
  }
  func.func @transform_6(%arg0: i32) -> (i32, i32) {
    %c0_i32 = arith.constant 0 : i32
    %c0_i32_0 = arith.constant 0 : i32
    %c0_i32_1 = arith.constant 0 : i32
    return %c0_i32, %c0_i32_0 : i32, i32
  }
  func.func @transform_7(%arg0: i32) -> (i32, i32) {
    %c0_i32 = arith.constant 0 : i32
    %c0_i32_0 = arith.constant 0 : i32
    %c0_i32_1 = arith.constant 0 : i32
    return %c0_i32, %c0_i32_0 : i32, i32
  }
  func.func @transform_8(%arg0: i32) -> (i32, i32) {
    %c0_i32 = arith.constant 0 : i32
    %c0_i32_0 = arith.constant 0 : i32
    %c0_i32_1 = arith.constant 0 : i32
    return %c0_i32, %c0_i32_0 : i32, i32
  }
  func.func @transform_9(%arg0: i32) -> (i32, i32) {
    %c0_i32 = arith.constant 0 : i32
    %c0_i32_0 = arith.constant 0 : i32
    %c0_i32_1 = arith.constant 0 : i32
    return %c0_i32, %c0_i32_0 : i32, i32
  }
  func.func @transform_10(%arg0: i32) -> (i32, i32) {
    %c0_i32 = arith.constant 0 : i32
    %c0_i32_0 = arith.constant 0 : i32
    %c0_i32_1 = arith.constant 0 : i32
    return %c0_i32, %c0_i32_0 : i32, i32
  }
  func.func @transform_11(%arg0: i32) -> (i32, i32) {
    %c0_i32 = arith.constant 0 : i32
    %c0_i32_0 = arith.constant 0 : i32
    %c0_i32_1 = arith.constant 0 : i32
    return %c0_i32, %c0_i32_0 : i32, i32
  }
  func.func @transform_12(%arg0: i32) -> (i32, i32) {
    %c0_i32 = arith.constant 0 : i32
    %c0_i32_0 = arith.constant 0 : i32
    %c0_i32_1 = arith.constant 0 : i32
    return %c0_i32, %c0_i32_0 : i32, i32
  }
  func.func @transform_13(%arg0: i32) -> (i32, i32) {
    %c0_i32 = arith.constant 0 : i32
    %c0_i32_0 = arith.constant 0 : i32
    return %arg0, %c0_i32 : i32, i32
  }
}

module attributes {stable_mosaic.version = 11 : i64} {
  func.func @_conv_apply_kernel(%arg0: i32, %arg1: memref<1xf32, #tpu.memory_space<smem>>, %arg2: memref<16x32xf32, #tpu.memory_space<vmem>>, %arg3: memref<16x32xf32, #tpu.memory_space<vmem>>, %arg4: memref<64x64xf32, #tpu.memory_space<vmem>>, %arg5: memref<1x64xf32, #tpu.memory_space<vmem>>, %arg6: memref<1x128xf32, #tpu.memory_space<vmem>>, %arg7: memref<32x128xf32, #tpu.memory_space<vmem>>, %arg8: memref<1x128xf32, #tpu.memory_space<vmem>>, %arg9: memref<32x32xf32, #tpu.memory_space<vmem>>, %arg10: memref<1x32xf32, #tpu.memory_space<vmem>>, %arg11: memref<64x2xf32, #tpu.memory_space<vmem>>, %arg12: memref<2x64xf32, #tpu.memory_space<vmem>>, %arg13: memref<64x32xf32, #tpu.memory_space<vmem>>, %arg14: memref<16x32xf32, #tpu.memory_space<vmem>>) attributes {dimension_semantics = [#tpu.dimension_semantics<parallel>], iteration_bounds = array<i64: 3>, scalar_prefetch = 0 : i64, scratch_operands = 0 : i64, tpu.core_type = #tpu.core_type<tc>, window_params = [{transform_indices = @transform_0, window_bounds = array<i64: 1>}, {transform_indices = @transform_1, window_bounds = array<i64: 16, 32>}, {transform_indices = @transform_2, window_bounds = array<i64: 16, 32>}, {pipeline_mode = #tpu.pipeline_mode<synchronous>, transform_indices = @transform_3, window_bounds = array<i64: 64, 64>}, {pipeline_mode = #tpu.pipeline_mode<synchronous>, transform_indices = @transform_4, window_bounds = array<i64: 1, 64>}, {pipeline_mode = #tpu.pipeline_mode<synchronous>, transform_indices = @transform_5, window_bounds = array<i64: 1, 128>}, {pipeline_mode = #tpu.pipeline_mode<synchronous>, transform_indices = @transform_6, window_bounds = array<i64: 32, 128>}, {pipeline_mode = #tpu.pipeline_mode<synchronous>, transform_indices = @transform_7, window_bounds = array<i64: 1, 128>}, {pipeline_mode = #tpu.pipeline_mode<synchronous>, transform_indices = @transform_8, window_bounds = array<i64: 32, 32>}, {pipeline_mode = #tpu.pipeline_mode<synchronous>, transform_indices = @transform_9, window_bounds = array<i64: 1, 32>}, {pipeline_mode = #tpu.pipeline_mode<synchronous>, transform_indices = @transform_10, window_bounds = array<i64: 64, 2>}, {pipeline_mode = #tpu.pipeline_mode<synchronous>, transform_indices = @transform_11, window_bounds = array<i64: 2, 64>}, {pipeline_mode = #tpu.pipeline_mode<synchronous>, transform_indices = @transform_12, window_bounds = array<i64: 64, 32>}, {transform_indices = @transform_13, window_bounds = array<i64: 16, 32>}]} {
    %c0 = arith.constant 0 : index
    %c0_0 = arith.constant 0 : index
    %0 = vector.load %arg2[%c0, %c0_0] : memref<16x32xf32, #tpu.memory_space<vmem>>, vector<16x32xf32>
    %1 = arith.mulf %0, %0 : vector<16x32xf32>
    %cst = arith.constant dense<0.000000e+00> : vector<16xf32>
    %2 = vector.multi_reduction <add>, %1, %cst [1] : vector<16x32xf32> to vector<16xf32>
    %3 = vector.shape_cast %2 : vector<16xf32> to vector<16x1xf32>
    %cst_1 = arith.constant 1.000000e+00 : f32
    %4 = vector.broadcast %cst_1 : f32 to vector<16x1xf32>
    %5 = arith.addf %3, %4 : vector<16x1xf32>
    %6 = math.sqrt %5 : vector<16x1xf32>
    %c0_2 = arith.constant 0 : index
    %c0_3 = arith.constant 0 : index
    %7 = vector.load %arg7[%c0_2, %c0_3] : memref<32x128xf32, #tpu.memory_space<vmem>>, vector<32x128xf32>
    %cst_4 = arith.constant dense<0.000000e+00> : vector<16x128xf32>
    %8 = tpu.matmul %0, %7, %cst_4 {dimension_numbers = #tpu.dot_dimension_numbers<[1], [0], [0], [1], [0, 0, 1, 1], [], []>} : vector<16x32xf32>, vector<32x128xf32>, vector<16x128xf32> -> vector<16x128xf32>
    %c0_5 = arith.constant 0 : index
    %c0_6 = arith.constant 0 : index
    %9 = vector.load %arg6[%c0_5, %c0_6] : memref<1x128xf32, #tpu.memory_space<vmem>>, vector<1x128xf32>
    %10 = vector.broadcast %6 : vector<16x1xf32> to vector<16x128xf32>
    %11 = vector.broadcast %9 : vector<1x128xf32> to vector<16x128xf32>
    %12 = arith.mulf %10, %11 : vector<16x128xf32>
    %13 = arith.addf %8, %12 : vector<16x128xf32>
    %c0_7 = arith.constant 0 : index
    %c0_8 = arith.constant 0 : index
    %14 = vector.load %arg8[%c0_7, %c0_8] : memref<1x128xf32, #tpu.memory_space<vmem>>, vector<1x128xf32>
    %15 = vector.broadcast %14 : vector<1x128xf32> to vector<16x128xf32>
    %16 = arith.addf %13, %15 : vector<16x128xf32>
    %17 = vector.extract_strided_slice %16 {offsets = [0, 0], sizes = [16, 64], strides = [1, 1]} : vector<16x128xf32> to vector<16x64xf32>
    %18 = vector.extract_strided_slice %16 {offsets = [0, 64], sizes = [16, 64], strides = [1, 1]} : vector<16x128xf32> to vector<16x64xf32>
    %c0_9 = arith.constant 0 : index
    %19 = memref.load %arg1[%c0_9] : memref<1xf32, #tpu.memory_space<smem>>
    %20 = math.absf %19 : f32
    %cst_10 = arith.constant 9.99999997E-7 : f32
    %21 = arith.addf %20, %cst_10 : f32
    %cst_11 = arith.constant 1.000000e+00 : f32
    %22 = arith.divf %cst_11, %21 : f32
    %cst_12 = arith.constant 0.000000e+00 : f32
    %23 = vector.broadcast %cst_12 : f32 to vector<16x64xf32>
    %24 = arith.maximumf %18, %23 : vector<16x64xf32>
    %cst_13 = arith.constant 9.99999997E-7 : f32
    %25 = vector.broadcast %cst_13 : f32 to vector<16x64xf32>
    %26 = arith.addf %24, %25 : vector<16x64xf32>
    %27 = vector.broadcast %22 : f32 to vector<16x64xf32>
    %28 = arith.mulf %26, %27 : vector<16x64xf32>
    %c0_14 = arith.constant 0 : index
    %c0_15 = arith.constant 0 : index
    %29 = vector.load %arg11[%c0_14, %c0_15] : memref<64x2xf32, #tpu.memory_space<vmem>>, vector<64x2xf32>
    %c0_16 = arith.constant 0 : index
    %c0_17 = arith.constant 0 : index
    %30 = vector.load %arg12[%c0_16, %c0_17] : memref<2x64xf32, #tpu.memory_space<vmem>>, vector<2x64xf32>
    %31 = arith.mulf %28, %28 : vector<16x64xf32>
    %32 = arith.mulf %28, %28 : vector<16x64xf32>
    %cst_18 = arith.constant dense<0.000000e+00> : vector<16x2xf32>
    %33 = tpu.matmul %32, %29, %cst_18 {dimension_numbers = #tpu.dot_dimension_numbers<[1], [0], [0], [1], [0, 0, 1, 1], [], []>} : vector<16x64xf32>, vector<64x2xf32>, vector<16x2xf32> -> vector<16x2xf32>
    %34 = arith.mulf %31, %31 : vector<16x64xf32>
    %cst_19 = arith.constant dense<0.000000e+00> : vector<16x2xf32>
    %35 = tpu.matmul %34, %29, %cst_19 {dimension_numbers = #tpu.dot_dimension_numbers<[1], [0], [0], [1], [0, 0, 1, 1], [], []>} : vector<16x64xf32>, vector<64x2xf32>, vector<16x2xf32> -> vector<16x2xf32>
    %36 = math.sqrt %33 : vector<16x2xf32>
    %37 = math.rsqrt %35 : vector<16x2xf32>
    %38 = arith.mulf %36, %37 : vector<16x2xf32>
    %cst_20 = arith.constant dense<0.000000e+00> : vector<16x64xf32>
    %39 = tpu.matmul %38, %30, %cst_20 {dimension_numbers = #tpu.dot_dimension_numbers<[1], [0], [0], [1], [0, 0, 1, 1], [], []>} : vector<16x2xf32>, vector<2x64xf32>, vector<16x64xf32> -> vector<16x64xf32>
    %40 = arith.mulf %39, %31 : vector<16x64xf32>
    %c0_21 = arith.constant 0 : index
    %c0_22 = arith.constant 0 : index
    %41 = vector.load %arg4[%c0_21, %c0_22] : memref<64x64xf32, #tpu.memory_space<vmem>>, vector<64x64xf32>
    %cst_23 = arith.constant dense<0.000000e+00> : vector<16x64xf32>
    %42 = tpu.matmul %40, %41, %cst_23 {dimension_numbers = #tpu.dot_dimension_numbers<[1], [0], [0], [1], [0, 0, 1, 1], [], []>} : vector<16x64xf32>, vector<64x64xf32>, vector<16x64xf32> -> vector<16x64xf32>
    %c0_24 = arith.constant 0 : index
    %c0_25 = arith.constant 0 : index
    %43 = vector.load %arg5[%c0_24, %c0_25] : memref<1x64xf32, #tpu.memory_space<vmem>>, vector<1x64xf32>
    %44 = vector.broadcast %43 : vector<1x64xf32> to vector<16x64xf32>
    %45 = arith.mulf %40, %44 : vector<16x64xf32>
    %c0_26 = arith.constant 0 : index
    %c0_27 = arith.constant 0 : index
    %46 = vector.load %arg11[%c0_26, %c0_27] : memref<64x2xf32, #tpu.memory_space<vmem>>, vector<64x2xf32>
    %cst_28 = arith.constant dense<0.000000e+00> : vector<16x2xf32>
    %47 = tpu.matmul %45, %46, %cst_28 {dimension_numbers = #tpu.dot_dimension_numbers<[1], [0], [0], [1], [0, 0, 1, 1], [], []>} : vector<16x64xf32>, vector<64x2xf32>, vector<16x2xf32> -> vector<16x2xf32>
    %cst_29 = arith.constant 9.99999997E-7 : f32
    %48 = vector.broadcast %cst_29 : f32 to vector<16x2xf32>
    %49 = arith.addf %47, %48 : vector<16x2xf32>
    %50 = tpu.reciprocal %49 {approx = true} : vector<16x2xf32> -> vector<16x2xf32>
    %c0_30 = arith.constant 0 : index
    %c0_31 = arith.constant 0 : index
    %51 = vector.load %arg12[%c0_30, %c0_31] : memref<2x64xf32, #tpu.memory_space<vmem>>, vector<2x64xf32>
    %cst_32 = arith.constant dense<0.000000e+00> : vector<16x64xf32>
    %52 = tpu.matmul %50, %51, %cst_32 {dimension_numbers = #tpu.dot_dimension_numbers<[1], [0], [0], [1], [0, 0, 1, 1], [], []>} : vector<16x2xf32>, vector<2x64xf32>, vector<16x64xf32> -> vector<16x64xf32>
    %53 = arith.mulf %42, %52 : vector<16x64xf32>
    %c0_33 = arith.constant 0 : index
    %c0_34 = arith.constant 0 : index
    %54 = vector.load %arg13[%c0_33, %c0_34] : memref<64x32xf32, #tpu.memory_space<vmem>>, vector<64x32xf32>
    %cst_35 = arith.constant dense<0.000000e+00> : vector<16x32xf32>
    %55 = tpu.matmul %53, %54, %cst_35 {dimension_numbers = #tpu.dot_dimension_numbers<[1], [0], [0], [1], [0, 0, 1, 1], [], []>} : vector<16x64xf32>, vector<64x32xf32>, vector<16x32xf32> -> vector<16x32xf32>
    %c0_36 = arith.constant 0 : index
    %c0_37 = arith.constant 0 : index
    %56 = vector.load %arg13[%c0_36, %c0_37] : memref<64x32xf32, #tpu.memory_space<vmem>>, vector<64x32xf32>
    %cst_38 = arith.constant dense<0.000000e+00> : vector<16x32xf32>
    %57 = tpu.matmul %17, %56, %cst_38 {dimension_numbers = #tpu.dot_dimension_numbers<[1], [0], [0], [1], [0, 0, 1, 1], [], []>} : vector<16x64xf32>, vector<64x32xf32>, vector<16x32xf32> -> vector<16x32xf32>
    %c0_39 = arith.constant 0 : index
    %c0_40 = arith.constant 0 : index
    %58 = vector.load %arg9[%c0_39, %c0_40] : memref<32x32xf32, #tpu.memory_space<vmem>>, vector<32x32xf32>
    %cst_41 = arith.constant dense<0.000000e+00> : vector<16x32xf32>
    %59 = tpu.matmul %57, %58, %cst_41 {dimension_numbers = #tpu.dot_dimension_numbers<[1], [0], [0], [1], [0, 0, 1, 1], [], []>} : vector<16x32xf32>, vector<32x32xf32>, vector<16x32xf32> -> vector<16x32xf32>
    %c0_42 = arith.constant 0 : index
    %c0_43 = arith.constant 0 : index
    %60 = vector.load %arg10[%c0_42, %c0_43] : memref<1x32xf32, #tpu.memory_space<vmem>>, vector<1x32xf32>
    %61 = vector.broadcast %60 : vector<1x32xf32> to vector<16x32xf32>
    %62 = arith.addf %59, %61 : vector<16x32xf32>
    %63 = arith.addf %55, %62 : vector<16x32xf32>
    %c0_44 = arith.constant 0 : index
    %c0_45 = arith.constant 0 : index
    %64 = vector.load %arg3[%c0_44, %c0_45] : memref<16x32xf32, #tpu.memory_space<vmem>>, vector<16x32xf32>
    %65 = arith.mulf %63, %63 : vector<16x32xf32>
    %cst_46 = arith.constant dense<0.000000e+00> : vector<16xf32>
    %66 = vector.multi_reduction <add>, %65, %cst_46 [1] : vector<16x32xf32> to vector<16xf32>
    %67 = vector.shape_cast %66 : vector<16xf32> to vector<16x1xf32>
    %cst_47 = arith.constant 1.000000e+00 : f32
    %68 = vector.broadcast %cst_47 : f32 to vector<16x1xf32>
    %69 = arith.addf %67, %68 : vector<16x1xf32>
    %70 = math.sqrt %69 : vector<16x1xf32>
    %71 = arith.mulf %64, %64 : vector<16x32xf32>
    %cst_48 = arith.constant dense<0.000000e+00> : vector<16xf32>
    %72 = vector.multi_reduction <add>, %71, %cst_48 [1] : vector<16x32xf32> to vector<16xf32>
    %73 = vector.shape_cast %72 : vector<16xf32> to vector<16x1xf32>
    %cst_49 = arith.constant 1.000000e+00 : f32
    %74 = vector.broadcast %cst_49 : f32 to vector<16x1xf32>
    %75 = arith.addf %73, %74 : vector<16x1xf32>
    %76 = math.sqrt %75 : vector<16x1xf32>
    %77 = arith.addf %70, %76 : vector<16x1xf32>
    %cst_50 = arith.constant 5.000000e-01 : f32
    %78 = vector.broadcast %cst_50 : f32 to vector<16x1xf32>
    %79 = arith.mulf %78, %77 : vector<16x1xf32>
    %80 = arith.addf %63, %64 : vector<16x32xf32>
    %cst_51 = arith.constant 5.000000e-01 : f32
    %81 = vector.broadcast %cst_51 : f32 to vector<16x32xf32>
    %82 = arith.mulf %81, %80 : vector<16x32xf32>
    %83 = arith.mulf %82, %82 : vector<16x32xf32>
    %cst_52 = arith.constant dense<0.000000e+00> : vector<16xf32>
    %84 = vector.multi_reduction <add>, %83, %cst_52 [1] : vector<16x32xf32> to vector<16xf32>
    %85 = vector.shape_cast %84 : vector<16xf32> to vector<16x1xf32>
    %86 = arith.mulf %79, %79 : vector<16x1xf32>
    %87 = arith.subf %85, %86 : vector<16x1xf32>
    %88 = math.absf %87 : vector<16x1xf32>
    %cst_53 = arith.constant 9.99999993E-9 : f32
    %89 = vector.broadcast %cst_53 : f32 to vector<16x1xf32>
    %90 = arith.maximumf %88, %89 : vector<16x1xf32>
    %91 = math.rsqrt %90 : vector<16x1xf32>
    %cst_54 = arith.constant 1.000000e+00 : f32
    %92 = vector.broadcast %cst_54 : f32 to vector<16x1xf32>
    %93 = arith.mulf %92, %91 : vector<16x1xf32>
    %94 = vector.broadcast %93 : vector<16x1xf32> to vector<16x32xf32>
    %95 = arith.mulf %82, %94 : vector<16x32xf32>
    %c0_55 = arith.constant 0 : index
    %c0_56 = arith.constant 0 : index
    %96 = vector.load %arg14[%c0_55, %c0_56] : memref<16x32xf32, #tpu.memory_space<vmem>>, vector<16x32xf32>
    tpu.vector_store %arg14[%c0_55, %c0_56], %95 {strides = array<i32>} : memref<16x32xf32, #tpu.memory_space<vmem>>, vector<16x32xf32>,
    return
  }
  func.func @transform_0(%arg0: i32) -> i32 {
    %c0_i32 = arith.constant 0 : i32
    %c0_i32_0 = arith.constant 0 : i32
    return %c0_i32 : i32
  }
  func.func @transform_1(%arg0: i32) -> (i32, i32) {
    %c0_i32 = arith.constant 0 : i32
    %c0_i32_0 = arith.constant 0 : i32
    return %arg0, %c0_i32 : i32, i32
  }
  func.func @transform_2(%arg0: i32) -> (i32, i32) {
    %c0_i32 = arith.constant 0 : i32
    %c0_i32_0 = arith.constant 0 : i32
    return %arg0, %c0_i32 : i32, i32
  }
  func.func @transform_3(%arg0: i32) -> (i32, i32) {
    %c0_i32 = arith.constant 0 : i32
    %c0_i32_0 = arith.constant 0 : i32
    %c0_i32_1 = arith.constant 0 : i32
    return %c0_i32, %c0_i32_0 : i32, i32
  }
  func.func @transform_4(%arg0: i32) -> (i32, i32) {
    %c0_i32 = arith.constant 0 : i32
    %c0_i32_0 = arith.constant 0 : i32
    %c0_i32_1 = arith.constant 0 : i32
    return %c0_i32, %c0_i32_0 : i32, i32
  }
  func.func @transform_5(%arg0: i32) -> (i32, i32) {
    %c0_i32 = arith.constant 0 : i32
    %c0_i32_0 = arith.constant 0 : i32
    %c0_i32_1 = arith.constant 0 : i32
    return %c0_i32, %c0_i32_0 : i32, i32
  }
  func.func @transform_6(%arg0: i32) -> (i32, i32) {
    %c0_i32 = arith.constant 0 : i32
    %c0_i32_0 = arith.constant 0 : i32
    %c0_i32_1 = arith.constant 0 : i32
    return %c0_i32, %c0_i32_0 : i32, i32
  }
  func.func @transform_7(%arg0: i32) -> (i32, i32) {
    %c0_i32 = arith.constant 0 : i32
    %c0_i32_0 = arith.constant 0 : i32
    %c0_i32_1 = arith.constant 0 : i32
    return %c0_i32, %c0_i32_0 : i32, i32
  }
  func.func @transform_8(%arg0: i32) -> (i32, i32) {
    %c0_i32 = arith.constant 0 : i32
    %c0_i32_0 = arith.constant 0 : i32
    %c0_i32_1 = arith.constant 0 : i32
    return %c0_i32, %c0_i32_0 : i32, i32
  }
  func.func @transform_9(%arg0: i32) -> (i32, i32) {
    %c0_i32 = arith.constant 0 : i32
    %c0_i32_0 = arith.constant 0 : i32
    %c0_i32_1 = arith.constant 0 : i32
    return %c0_i32, %c0_i32_0 : i32, i32
  }
  func.func @transform_10(%arg0: i32) -> (i32, i32) {
    %c0_i32 = arith.constant 0 : i32
    %c0_i32_0 = arith.constant 0 : i32
    %c0_i32_1 = arith.constant 0 : i32
    return %c0_i32, %c0_i32_0 : i32, i32
  }
  func.func @transform_11(%arg0: i32) -> (i32, i32) {
    %c0_i32 = arith.constant 0 : i32
    %c0_i32_0 = arith.constant 0 : i32
    %c0_i32_1 = arith.constant 0 : i32
    return %c0_i32, %c0_i32_0 : i32, i32
  }
  func.func @transform_12(%arg0: i32) -> (i32, i32) {
    %c0_i32 = arith.constant 0 : i32
    %c0_i32_0 = arith.constant 0 : i32
    %c0_i32_1 = arith.constant 0 : i32
    return %c0_i32, %c0_i32_0 : i32, i32
  }
  func.func @transform_13(%arg0: i32) -> (i32, i32) {
    %c0_i32 = arith.constant 0 : i32
    %c0_i32_0 = arith.constant 0 : i32
    return %arg0, %c0_i32 : i32, i32
  }
}

module attributes {stable_mosaic.version = 11 : i64} {
  func.func @_epilogue_kernel(%arg0: i32, %arg1: memref<16x32xf32, #tpu.memory_space<vmem>>, %arg2: memref<1x32xf32, #tpu.memory_space<vmem>>, %arg3: memref<32x32xf32, #tpu.memory_space<vmem>>, %arg4: memref<1x32xf32, #tpu.memory_space<vmem>>, %arg5: memref<32x4xf32, #tpu.memory_space<vmem>>, %arg6: memref<1x4xf32, #tpu.memory_space<vmem>>, %arg7: memref<16x4xf32, #tpu.memory_space<vmem>>) attributes {dimension_semantics = [#tpu.dimension_semantics<parallel>], iteration_bounds = array<i64: 3>, scalar_prefetch = 0 : i64, scratch_operands = 0 : i64, tpu.core_type = #tpu.core_type<tc>, window_params = [{transform_indices = @transform_0, window_bounds = array<i64: 16, 32>}, {pipeline_mode = #tpu.pipeline_mode<synchronous>, transform_indices = @transform_1, window_bounds = array<i64: 1, 32>}, {pipeline_mode = #tpu.pipeline_mode<synchronous>, transform_indices = @transform_2, window_bounds = array<i64: 32, 32>}, {pipeline_mode = #tpu.pipeline_mode<synchronous>, transform_indices = @transform_3, window_bounds = array<i64: 1, 32>}, {pipeline_mode = #tpu.pipeline_mode<synchronous>, transform_indices = @transform_4, window_bounds = array<i64: 32, 4>}, {pipeline_mode = #tpu.pipeline_mode<synchronous>, transform_indices = @transform_5, window_bounds = array<i64: 1, 4>}, {transform_indices = @transform_6, window_bounds = array<i64: 16, 4>}]} {
    %c0 = arith.constant 0 : index
    %c0_0 = arith.constant 0 : index
    %0 = vector.load %arg1[%c0, %c0_0] : memref<16x32xf32, #tpu.memory_space<vmem>>, vector<16x32xf32>
    %1 = arith.mulf %0, %0 : vector<16x32xf32>
    %cst = arith.constant dense<0.000000e+00> : vector<16xf32>
    %2 = vector.multi_reduction <add>, %1, %cst [1] : vector<16x32xf32> to vector<16xf32>
    %3 = vector.shape_cast %2 : vector<16xf32> to vector<16x1xf32>
    %cst_1 = arith.constant 1.000000e+00 : f32
    %4 = vector.broadcast %cst_1 : f32 to vector<16x1xf32>
    %5 = arith.addf %3, %4 : vector<16x1xf32>
    %6 = math.sqrt %5 : vector<16x1xf32>
    %c0_2 = arith.constant 0 : index
    %c0_3 = arith.constant 0 : index
    %7 = vector.load %arg3[%c0_2, %c0_3] : memref<32x32xf32, #tpu.memory_space<vmem>>, vector<32x32xf32>
    %cst_4 = arith.constant dense<0.000000e+00> : vector<16x32xf32>
    %8 = tpu.matmul %0, %7, %cst_4 {dimension_numbers = #tpu.dot_dimension_numbers<[1], [0], [0], [1], [0, 0, 1, 1], [], []>} : vector<16x32xf32>, vector<32x32xf32>, vector<16x32xf32> -> vector<16x32xf32>
    %c0_5 = arith.constant 0 : index
    %c0_6 = arith.constant 0 : index
    %9 = vector.load %arg2[%c0_5, %c0_6] : memref<1x32xf32, #tpu.memory_space<vmem>>, vector<1x32xf32>
    %10 = vector.broadcast %6 : vector<16x1xf32> to vector<16x32xf32>
    %11 = vector.broadcast %9 : vector<1x32xf32> to vector<16x32xf32>
    %12 = arith.mulf %10, %11 : vector<16x32xf32>
    %13 = arith.addf %8, %12 : vector<16x32xf32>
    %c0_7 = arith.constant 0 : index
    %c0_8 = arith.constant 0 : index
    %14 = vector.load %arg4[%c0_7, %c0_8] : memref<1x32xf32, #tpu.memory_space<vmem>>, vector<1x32xf32>
    %15 = vector.broadcast %14 : vector<1x32xf32> to vector<16x32xf32>
    %16 = arith.addf %13, %15 : vector<16x32xf32>
    %17 = arith.mulf %16, %16 : vector<16x32xf32>
    %cst_9 = arith.constant dense<0.000000e+00> : vector<16xf32>
    %18 = vector.multi_reduction <add>, %17, %cst_9 [1] : vector<16x32xf32> to vector<16xf32>
    %19 = vector.shape_cast %18 : vector<16xf32> to vector<16x1xf32>
    %cst_10 = arith.constant 1.000000e+00 : f32
    %20 = vector.broadcast %cst_10 : f32 to vector<16x1xf32>
    %21 = arith.addf %19, %20 : vector<16x1xf32>
    %22 = math.sqrt %21 : vector<16x1xf32>
    %cst_11 = arith.constant 1.000000e+00 : f32
    %23 = vector.broadcast %cst_11 : f32 to vector<16x1xf32>
    %24 = arith.mulf %22, %23 : vector<16x1xf32>
    %25 = arith.mulf %24, %24 : vector<16x1xf32>
    %cst_12 = arith.constant 1.000000e+00 : f32
    %26 = vector.broadcast %cst_12 : f32 to vector<16x1xf32>
    %27 = arith.subf %25, %26 : vector<16x1xf32>
    %cst_13 = arith.constant 0.000000e+00 : f32
    %28 = vector.broadcast %cst_13 : f32 to vector<16x1xf32>
    %29 = arith.maximumf %27, %28 : vector<16x1xf32>
    %30 = math.sqrt %29 : vector<16x1xf32>
    %31 = arith.addf %24, %30 : vector<16x1xf32>
    %32 = math.log %31 : vector<16x1xf32>
    %cst_14 = arith.constant 9.99999993E-9 : f32
    %33 = vector.broadcast %cst_14 : f32 to vector<16x1xf32>
    %34 = arith.maximumf %27, %33 : vector<16x1xf32>
    %35 = math.rsqrt %34 : vector<16x1xf32>
    %36 = arith.mulf %32, %35 : vector<16x1xf32>
    %37 = vector.broadcast %36 : vector<16x1xf32> to vector<16x32xf32>
    %38 = arith.mulf %37, %16 : vector<16x32xf32>
    %c0_15 = arith.constant 0 : index
    %c0_16 = arith.constant 0 : index
    %39 = vector.load %arg5[%c0_15, %c0_16] : memref<32x4xf32, #tpu.memory_space<vmem>>, vector<32x4xf32>
    %cst_17 = arith.constant dense<0.000000e+00> : vector<16x4xf32>
    %40 = tpu.matmul %38, %39, %cst_17 {dimension_numbers = #tpu.dot_dimension_numbers<[1], [0], [0], [1], [0, 0, 1, 1], [], []>} : vector<16x32xf32>, vector<32x4xf32>, vector<16x4xf32> -> vector<16x4xf32>
    %c0_18 = arith.constant 0 : index
    %c0_19 = arith.constant 0 : index
    %41 = vector.load %arg6[%c0_18, %c0_19] : memref<1x4xf32, #tpu.memory_space<vmem>>, vector<1x4xf32>
    %42 = vector.broadcast %41 : vector<1x4xf32> to vector<16x4xf32>
    %43 = arith.addf %40, %42 : vector<16x4xf32>
    %c0_20 = arith.constant 0 : index
    %c0_21 = arith.constant 0 : index
    %44 = vector.load %arg7[%c0_20, %c0_21] : memref<16x4xf32, #tpu.memory_space<vmem>>, vector<16x4xf32>
    tpu.vector_store %arg7[%c0_20, %c0_21], %43 {strides = array<i32>} : memref<16x4xf32, #tpu.memory_space<vmem>>, vector<16x4xf32>,
    return
  }
  func.func @transform_0(%arg0: i32) -> (i32, i32) {
    %c0_i32 = arith.constant 0 : i32
    %c0_i32_0 = arith.constant 0 : i32
    return %arg0, %c0_i32 : i32, i32
  }
  func.func @transform_1(%arg0: i32) -> (i32, i32) {
    %c0_i32 = arith.constant 0 : i32
    %c0_i32_0 = arith.constant 0 : i32
    %c0_i32_1 = arith.constant 0 : i32
    return %c0_i32, %c0_i32_0 : i32, i32
  }
  func.func @transform_2(%arg0: i32) -> (i32, i32) {
    %c0_i32 = arith.constant 0 : i32
    %c0_i32_0 = arith.constant 0 : i32
    %c0_i32_1 = arith.constant 0 : i32
    return %c0_i32, %c0_i32_0 : i32, i32
  }
  func.func @transform_3(%arg0: i32) -> (i32, i32) {
    %c0_i32 = arith.constant 0 : i32
    %c0_i32_0 = arith.constant 0 : i32
    %c0_i32_1 = arith.constant 0 : i32
    return %c0_i32, %c0_i32_0 : i32, i32
  }
  func.func @transform_4(%arg0: i32) -> (i32, i32) {
    %c0_i32 = arith.constant 0 : i32
    %c0_i32_0 = arith.constant 0 : i32
    %c0_i32_1 = arith.constant 0 : i32
    return %c0_i32, %c0_i32_0 : i32, i32
  }
  func.func @transform_5(%arg0: i32) -> (i32, i32) {
    %c0_i32 = arith.constant 0 : i32
    %c0_i32_0 = arith.constant 0 : i32
    %c0_i32_1 = arith.constant 0 : i32
    return %c0_i32, %c0_i32_0 : i32, i32
  }
  func.func @transform_6(%arg0: i32) -> (i32, i32) {
    %c0_i32 = arith.constant 0 : i32
    %c0_i32_0 = arith.constant 0 : i32
    return %arg0, %c0_i32 : i32, i32
  }
}

</mosaic_0001>

<llo_original>
// kernel: _lambda_.10
$region0: #{_lambda_.10}
  #allocation0 [shape = 'u32[]', space=smem, size = 0x4, offset = 0x4, fixed_abs, tag = 'smem constant byte address 0x4 - core index']
  #allocation1 [shape = 'u32[144,128]{1,0:T(1,128)}', space=vmem, size = 0x12000, scoped, tag = 'internal scratch']
  %s0 = inlined_call_operand.vmem [shape: f32[48,8], index: 0, kind: input, shape index: {}]
  %s1 = inlined_call_operand.vmem [shape: f32[1,32], index: 1, kind: input, shape index: {}]
  %s2 = inlined_call_operand.vmem [shape: f32[8,32], index: 2, kind: input, shape index: {}]
  %s3 = inlined_call_operand.vmem [shape: f32[1,32], index: 3, kind: input, shape index: {}]
  %s4 = inlined_call_operand.vmem [shape: f32[1,32], index: 4, kind: input, shape index: {}]
  %s5 = inlined_call_operand.vmem [shape: f32[1,32], index: 5, kind: input, shape index: {}]
  %s6 = inlined_call_operand.vmem [shape: f32[1,32], index: 6, kind: input, shape index: {}]
  %s7 = inlined_call_operand.vmem [shape: f32[8,32], index: 7, kind: input, shape index: {}]
  %s8 = inlined_call_operand.vmem [shape: f32[1,32], index: 8, kind: input, shape index: {}]
  %s9 = inlined_call_operand.vmem [shape: f32[48,32], index: 9, kind: output, shape index: {}]
  %s10 = sld [smem:[#allocation0]]
  $region69: #{_lambda_.10} parent=0
    _
  %s12 = ssub.s32 1, %s10
  %s13 = scalar_select 0, %s12, %s10
  loop: start=0, step=1, limit=5
  $region2: #{_lambda_.10} parent=0 // loop_pre_header
    _
  $region3: #{_lambda_.10} parent=0 // loop_header
    %s15 = sphi 0, %s19
    %p16 = scmp.ge.s32.totalorder %s15, 5
    %s25 = sphi 0, %s27
    %s28 = sphi 0, %s25
    %s29 = sphi 0, %s28
    %s45 = sphi 0, %s29
    %s49 = sphi 0, %s49
    %s51 = sphi 0, %s49
    %s52 = sphi 0, %s51
    %s66 = sphi 0, %s52
    %s70 = sphi 0, %s70
    %s72 = sphi 0, %s70
    %s73 = sphi 0, %s72
    %s87 = sphi 0, %s73
    %s91 = sphi 0, %s91
    %s93 = sphi 0, %s91
    %s94 = sphi 0, %s93
    %s108 = sphi 0, %s94
    %s112 = sphi 0, %s112
    %s114 = sphi 0, %s112
    %s115 = sphi 0, %s114
    %s129 = sphi 0, %s115
    %s133 = sphi 0, %s133
    %s135 = sphi 0, %s133
    %s136 = sphi 0, %s135
    %s150 = sphi 0, %s136
    %s154 = sphi 0, %s154
    %s156 = sphi 0, %s154
    %s157 = sphi 0, %s156
    %s171 = sphi 0, %s157
    %s175 = sphi 0, %s175
    %s177 = sphi 0, %s175
    %s178 = sphi 0, %s177
    %s192 = sphi 0, %s178
    %s196 = sphi 0, %s196
    %s198 = sphi 0, %s196
    %s199 = sphi 0, %s198
    %s213 = sphi 0, %s199
    %s219 = sphi 0, %s221
    %s222 = sphi 0, %s219
    %s223 = sphi 0, %s222
    %s239 = sphi 0, %s223
  $region4: #{_lambda_.10} parent=0 // loop_header_branch
    %18 = sbr.rel (%p16) target = $region8
  $region5: #{_lambda_.10} parent=0 // loop_body
    %s20 = ssub.s32 %s15, 1
    %s21 = ssub.s32 %s15, 2
    %s22 = sadd.s32 %s15, 1
    %s23 = ssub.s32 %s15, %s22
    %p24 = scmp.eq.s32.totalorder %s23, 0
    %s26 = sadd.s32 %s25, 1
    %s27 = scalar_select %p24, %s25, %s26
    %p30 = pneg %p24
    %p31 = scmp.eq.s32.totalorder %s15, 2
    %p32 = por %p30, %p31
    %p33 = scmp.ne.s32.totalorder %s25, %s28
    %p34 = scmp.eq.s32.totalorder %s15, 0
    %p35 = por %p33, %p34
    %p36 = scmp.ne.s32.totalorder %s25, %s28
    %p37 = scmp.eq.s32.totalorder %s20, 2
    %p38 = por %p36, %p37
    %p39 = scmp.ne.s32.totalorder %s28, %s29
    %p40 = scmp.eq.s32.totalorder %s20, 0
    %p41 = por %p39, %p40
    %p42 = scmp.ne.s32.totalorder %s28, %s29
    %p43 = scmp.eq.s32.totalorder %s21, 2
    %p44 = por %p42, %p43
    %p46 = scmp.ne.s32.totalorder %s29, %s45
    %p47 = scmp.eq.s32.totalorder %s21, 0
    %p48 = por %p46, %p47
    %s50 = sadd.s32 %s49, 1
    %p53 = scmp.eq.s32.totalorder %s15, 2
    %p54 = scmp.ne.s32.totalorder %s49, %s51
    %p55 = scmp.eq.s32.totalorder %s15, 0
    %p56 = por %p54, %p55
    %p57 = scmp.ne.s32.totalorder %s49, %s51
    %p58 = scmp.eq.s32.totalorder %s20, 2
    %p59 = por %p57, %p58
    %p60 = scmp.ne.s32.totalorder %s51, %s52
    %p61 = scmp.eq.s32.totalorder %s20, 0
    %p62 = por %p60, %p61
    %p63 = scmp.ne.s32.totalorder %s51, %s52
    %p64 = scmp.eq.s32.totalorder %s21, 2
    %p65 = por %p63, %p64
    %p67 = scmp.ne.s32.totalorder %s52, %s66
    %p68 = scmp.eq.s32.totalorder %s21, 0
    %p69 = por %p67, %p68
    %s71 = sadd.s32 %s70, 1
    %p74 = scmp.eq.s32.totalorder %s15, 2
    %p75 = scmp.ne.s32.totalorder %s70, %s72
    %p76 = scmp.eq.s32.totalorder %s15, 0
    %p77 = por %p75, %p76
    %p78 = scmp.ne.s32.totalorder %s70, %s72
    %p79 = scmp.eq.s32.totalorder %s20, 2
    %p80 = por %p78, %p79
    %p81 = scmp.ne.s32.totalorder %s72, %s73
    %p82 = scmp.eq.s32.totalorder %s20, 0
    %p83 = por %p81, %p82
    %p84 = scmp.ne.s32.totalorder %s72, %s73
    %p85 = scmp.eq.s32.totalorder %s21, 2
    %p86 = por %p84, %p85
    %p88 = scmp.ne.s32.totalorder %s73, %s87
    %p89 = scmp.eq.s32.totalorder %s21, 0
    %p90 = por %p88, %p89
    %s92 = sadd.s32 %s91, 1
    %p95 = scmp.eq.s32.totalorder %s15, 2
    %p96 = scmp.ne.s32.totalorder %s91, %s93
    %p97 = scmp.eq.s32.totalorder %s15, 0
    %p98 = por %p96, %p97
    %p99 = scmp.ne.s32.totalorder %s91, %s93
    %p100 = scmp.eq.s32.totalorder %s20, 2
    %p101 = por %p99, %p100
    %p102 = scmp.ne.s32.totalorder %s93, %s94
    %p103 = scmp.eq.s32.totalorder %s20, 0
    %p104 = por %p102, %p103
    %p105 = scmp.ne.s32.totalorder %s93, %s94
    %p106 = scmp.eq.s32.totalorder %s21, 2
    %p107 = por %p105, %p106
    %p109 = scmp.ne.s32.totalorder %s94, %s108
    %p110 = scmp.eq.s32.totalorder %s21, 0
    %p111 = por %p109, %p110
    %s113 = sadd.s32 %s112, 1
    %p116 = scmp.eq.s32.totalorder %s15, 2
    %p117 = scmp.ne.s32.totalorder %s112, %s114
    %p118 = scmp.eq.s32.totalorder %s15, 0
    %p119 = por %p117, %p118
    %p120 = scmp.ne.s32.totalorder %s112, %s114
    %p121 = scmp.eq.s32.totalorder %s20, 2
    %p122 = por %p120, %p121
    %p123 = scmp.ne.s32.totalorder %s114, %s115
    %p124 = scmp.eq.s32.totalorder %s20, 0
    %p125 = por %p123, %p124
    %p126 = scmp.ne.s32.totalorder %s114, %s115
    %p127 = scmp.eq.s32.totalorder %s21, 2
    %p128 = por %p126, %p127
    %p130 = scmp.ne.s32.totalorder %s115, %s129
    %p131 = scmp.eq.s32.totalorder %s21, 0
    %p132 = por %p130, %p131
    %s134 = sadd.s32 %s133, 1
    %p137 = scmp.eq.s32.totalorder %s15, 2
    %p138 = scmp.ne.s32.totalorder %s133, %s135
    %p139 = scmp.eq.s32.totalorder %s15, 0
    %p140 = por %p138, %p139
    %p141 = scmp.ne.s32.totalorder %s133, %s135
    %p142 = scmp.eq.s32.totalorder %s20, 2
    %p143 = por %p141, %p142
    %p144 = scmp.ne.s32.totalorder %s135, %s136
    %p145 = scmp.eq.s32.totalorder %s20, 0
    %p146 = por %p144, %p145
    %p147 = scmp.ne.s32.totalorder %s135, %s136
    %p148 = scmp.eq.s32.totalorder %s21, 2
    %p149 = por %p147, %p148
    %p151 = scmp.ne.s32.totalorder %s136, %s150
    %p152 = scmp.eq.s32.totalorder %s21, 0
    %p153 = por %p151, %p152
    %s155 = sadd.s32 %s154, 1
    %p158 = scmp.eq.s32.totalorder %s15, 2
    %p159 = scmp.ne.s32.totalorder %s154, %s156
    %p160 = scmp.eq.s32.totalorder %s15, 0
    %p161 = por %p159, %p160
    %p162 = scmp.ne.s32.totalorder %s154, %s156
    %p163 = scmp.eq.s32.totalorder %s20, 2
    %p164 = por %p162, %p163
    %p165 = scmp.ne.s32.totalorder %s156, %s157
    %p166 = scmp.eq.s32.totalorder %s20, 0
    %p167 = por %p165, %p166
    %p168 = scmp.ne.s32.totalorder %s156, %s157
    %p169 = scmp.eq.s32.totalorder %s21, 2
    %p170 = por %p168, %p169
    %p172 = scmp.ne.s32.totalorder %s157, %s171
    %p173 = scmp.eq.s32.totalorder %s21, 0
    %p174 = por %p172, %p173
    %s176 = sadd.s32 %s175, 1
    %p179 = scmp.eq.s32.totalorder %s15, 2
    %p180 = scmp.ne.s32.totalorder %s175, %s177
    %p181 = scmp.eq.s32.totalorder %s15, 0
    %p182 = por %p180, %p181
    %p183 = scmp.ne.s32.totalorder %s175, %s177
    %p184 = scmp.eq.s32.totalorder %s20, 2
    %p185 = por %p183, %p184
    %p186 = scmp.ne.s32.totalorder %s177, %s178
    %p187 = scmp.eq.s32.totalorder %s20, 0
    %p188 = por %p186, %p187
    %p189 = scmp.ne.s32.totalorder %s177, %s178
    %p190 = scmp.eq.s32.totalorder %s21, 2
    %p191 = por %p189, %p190
    %p193 = scmp.ne.s32.totalorder %s178, %s192
    %p194 = scmp.eq.s32.totalorder %s21, 0
    %p195 = por %p193, %p194
    %s197 = sadd.s32 %s196, 1
    %p200 = scmp.eq.s32.totalorder %s15, 2
    %p201 = scmp.ne.s32.totalorder %s196, %s198
    %p202 = scmp.eq.s32.totalorder %s15, 0
    %p203 = por %p201, %p202
    %p204 = scmp.ne.s32.totalorder %s196, %s198
    %p205 = scmp.eq.s32.totalorder %s20, 2
    %p206 = por %p204, %p205
    %p207 = scmp.ne.s32.totalorder %s198, %s199
    %p208 = scmp.eq.s32.totalorder %s20, 0
    %p209 = por %p207, %p208
    %p210 = scmp.ne.s32.totalorder %s198, %s199
    %p211 = scmp.eq.s32.totalorder %s21, 2
    %p212 = por %p210, %p211
    %p214 = scmp.ne.s32.totalorder %s199, %s213
    %p215 = scmp.eq.s32.totalorder %s21, 0
    %p216 = por %p214, %p215
    %s217 = ssub.s32 %s15, %s22
    %p218 = scmp.eq.s32.totalorder %s217, 0
    %s220 = sadd.s32 %s219, 1
    %s221 = scalar_select %p218, %s219, %s220
    %p224 = pneg %p218
    %p225 = scmp.eq.s32.totalorder %s15, 2
    %p226 = por %p224, %p225
    %p227 = scmp.ne.s32.totalorder %s219, %s222
    %p228 = scmp.eq.s32.totalorder %s15, 0
    %p229 = por %p227, %p228
    %p230 = scmp.ne.s32.totalorder %s219, %s222
    %p231 = scmp.eq.s32.totalorder %s20, 2
    %p232 = por %p230, %p231
    %p233 = scmp.ne.s32.totalorder %s222, %s223
    %p234 = scmp.eq.s32.totalorder %s20, 0
    %p235 = por %p233, %p234
    %p236 = scmp.ne.s32.totalorder %s222, %s223
    %p237 = scmp.eq.s32.totalorder %s21, 2
    %p238 = por %p236, %p237
    %p240 = scmp.ne.s32.totalorder %s223, %s239
    %p241 = scmp.eq.s32.totalorder %s21, 0
    %p242 = por %p240, %p241
    %p243 = scmp.le.s32.totalorder 1, %s15
    %p244 = scmp.lt.s32.totalorder %s15, 4
    %p245 = pnand %p243, %p244
    %p246 = pneg %p245
    // Predicated region
    $region9: #{_lambda_.10} parent=5 // pred_check
      _
    $region10: #{_lambda_.10} parent=5 // pred_check_branch
      %248 = sbr.rel (%p245) target = $region12
    $region11: #{_lambda_.10} parent=5 // pred_region
      %s249 = ssub.s32 %s15, 1
      // Predicated region
      $region13: #{_lambda_.10} parent=11 // pred_check
        %p250 = pneg %p62
      $region14: #{_lambda_.10} parent=11 // pred_check_branch
        %252 = sbr.rel (%p250) target = $region16
      $region15: #{_lambda_.10} parent=11 // pred_region
        _
      $region16: #{_lambda_.10} parent=11 // pred_fallthru
        _
      // Predicated region
      $region17: #{_lambda_.10} parent=11 // pred_check
        %p253 = pneg %p83
      $region18: #{_lambda_.10} parent=11 // pred_check_branch
        %255 = sbr.rel (%p253) target = $region20
      $region19: #{_lambda_.10} parent=11 // pred_region
        _
      $region20: #{_lambda_.10} parent=11 // pred_fallthru
        _
      // Predicated region
      $region21: #{_lambda_.10} parent=11 // pred_check
        %p256 = pneg %p104
      $region22: #{_lambda_.10} parent=11 // pred_check_branch
        %258 = sbr.rel (%p256) target = $region24
      $region23: #{_lambda_.10} parent=11 // pred_region
        _
      $region24: #{_lambda_.10} parent=11 // pred_fallthru
        _
      // Predicated region
      $region25: #{_lambda_.10} parent=11 // pred_check
        %p259 = pneg %p125
      $region26: #{_lambda_.10} parent=11 // pred_check_branch
        %261 = sbr.rel (%p259) target = $region28
      $region27: #{_lambda_.10} parent=11 // pred_region
        _
      $region28: #{_lambda_.10} parent=11 // pred_fallthru
        _
      // Predicated region
      $region29: #{_lambda_.10} parent=11 // pred_check
        %p262 = pneg %p146
      $region30: #{_lambda_.10} parent=11 // pred_check_branch
        %264 = sbr.rel (%p262) target = $region32
      $region31: #{_lambda_.10} parent=11 // pred_region
        _
      $region32: #{_lambda_.10} parent=11 // pred_fallthru
        _
      // Predicated region
      $region33: #{_lambda_.10} parent=11 // pred_check
        %p265 = pneg %p167
      $region34: #{_lambda_.10} parent=11 // pred_check_branch
        %267 = sbr.rel (%p265) target = $region36
      $region35: #{_lambda_.10} parent=11 // pred_region
        _
      $region36: #{_lambda_.10} parent=11 // pred_fallthru
        _
      // Predicated region
      $region37: #{_lambda_.10} parent=11 // pred_check
        %p268 = pneg %p188
      $region38: #{_lambda_.10} parent=11 // pred_check_branch
        %270 = sbr.rel (%p268) target = $region40
      $region39: #{_lambda_.10} parent=11 // pred_region
        _
      $region40: #{_lambda_.10} parent=11 // pred_fallthru
        _
      // Predicated region
      $region41: #{_lambda_.10} parent=11 // pred_check
        %p271 = pneg %p209
      $region42: #{_lambda_.10} parent=11 // pred_check_branch
        %273 = sbr.rel (%p271) target = $region44
      $region43: #{_lambda_.10} parent=11 // pred_region
        _
      $region44: #{_lambda_.10} parent=11 // pred_fallthru
        _
    $region12: #{_lambda_.10} parent=5 // pred_fallthru
      _
    %p274 = scmp.lt.s32.totalorder %s15, 3
    // Predicated region
    $region45: #{_lambda_.10} parent=5 // pred_check
      %p275 = pneg %p274
    $region46: #{_lambda_.10} parent=5 // pred_check_branch
      %277 = sbr.rel (%p275) target = $region48
    $region47: #{_lambda_.10} parent=5 // pred_region
      // Predicated region
      $region49: #{_lambda_.10} parent=47 // pred_check
        %p278 = pneg %p35
      $region50: #{_lambda_.10} parent=47 // pred_check_branch
        %280 = sbr.rel (%p278) target = $region52
      $region51: #{_lambda_.10} parent=47 // pred_region
        %s281 = smul.u32 2, %s15
        %p282 = scmp.lt.s32.totalorder %s281, 5
        %s283 = scalar_select %p282, %s281, 5
        %s284 = smul.addr %s283, 8
        %s285 = scalar_lea.vmem %s0, %s284
        %s286 = smul.u32 2, %s15
      $region52: #{_lambda_.10} parent=47 // pred_fallthru
        _
    $region48: #{_lambda_.10} parent=5 // pred_fallthru
      _
    %p287 = scmp.le.s32.totalorder 1, %s15
    %p288 = scmp.lt.s32.totalorder %s15, 4
    %p289 = pnand %p287, %p288
    %p290 = pneg %p289
    // Predicated region
    $region53: #{_lambda_.10} parent=5 // pred_check
      _
    $region54: #{_lambda_.10} parent=5 // pred_check_branch
      %292 = sbr.rel (%p289) target = $region56
    $region55: #{_lambda_.10} parent=5 // pred_region
      %s293 = ssub.s32 %s15, 1
      %s294 = smul.u32 2, %s20
      %p295 = scmp.lt.s32.totalorder %s294, 5
      %s296 = scalar_select %p295, %s294, 5
      %s297 = smul.addr %s296, 8
      %s298 = scalar_lea.vmem %s0, %s297
      %p299 = pneg %p41
      %p300 = pneg %p38
      %p301 = pneg %p62
      %p302 = pneg %p59
      %p303 = pneg %p83
      %p304 = pneg %p80
      %p305 = pneg %p104
      %p306 = pneg %p101
      %p307 = pneg %p125
      %p308 = pneg %p122
      %p309 = pneg %p146
      %p310 = pneg %p143
      %p311 = pneg %p167
      %p312 = pneg %p164
      %p313 = pneg %p188
      %p314 = pneg %p185
      %p315 = pneg %p209
      %p316 = pneg %p206
      %p317 = pneg %p235
      %p318 = pneg %p232
      %s319 = smul.u32 2, %s20
      %p320 = scmp.lt.s32.totalorder %s319, 5
      %s321 = scalar_select %p320, %s319, 5
      %s322 = smul.addr %s321, 8
      %s323 = scalar_lea.vmem %s9, %s322
      %s324 = smul.u32 2, %s20
      %p325 = scmp.lt.s32.totalorder %s324, 5
      %s326 = scalar_select %p325, %s324, 5
      %s327 = smul.addr %s326, 8
      %s328 = scalar_lea.vmem %s0, %s327
      %s329 = smul.u32 2, %s20
      %s330 = smul.u32 2, %s20
      %p331 = scmp.lt.s32.totalorder %s330, 5
      %s332 = scalar_select %p331, %s330, 5
      %s333 = smul.addr %s332, 8
      %s334 = scalar_lea.vmem %s9, %s333
      %s335 = smul.u32 2, %s20
      %v336 = vld [vmem:[%s328] sm:$0xff]
      %v337 = vld [vmem:[%s328 + $0x8] sm:$0xff]
      %v338 = vmul.f32 %v336, %v336
      %v339 = vmul.f32 %v337, %v337
      %vm340 = vcmask 64512
      %v341 = vsel %vm340, %v338, 0.0
      %342 = vadd.xlane.f32.xlu0 %v341
      %v343 = vpop.xlane.xlu0 %342
      %v344 = vsel %vm340, %v339, 0.0
      %345 = vadd.xlane.f32.xlu0 %v344
      %v346 = vpop.xlane.xlu0 %345
      %v347 = vsub.f32 %v343, 1.0
      %v348 = vsub.f32 %v346, 1.0
      %v349 = vmax.f32 %v347, 1e-08
      %v350 = vmax.f32 %v348, 1e-08
      %v351 = vrsqrt.pop %v349
      %v352 = vmul.f32 %v349, %v351
      %vm353 = vcmp.eq.f32.partialorder %v349, inf
      %v354 = vsel %vm353, %v349, %v352
      %vm355 = vcmp.eq.f32.partialorder %v349, 0.0
      %v356 = vand.u32 %v349, 2147483648
      %v357 = vsel %vm355, %v356, %v354
      %v358 = vrsqrt.pop %v350
      %v359 = vmul.f32 %v350, %v358
      %vm360 = vcmp.eq.f32.partialorder %v350, inf
      %v361 = vsel %vm360, %v350, %v359
      %vm362 = vcmp.eq.f32.partialorder %v350, 0.0
      %v363 = vand.u32 %v350, 2147483648
      %v364 = vsel %vm362, %v363, %v361
      %v365 = vmul.f32 %v357, %v357
      %v366 = vmul.f32 %v364, %v364
      %v367 = vmul.f32 %v365, 0.16666667
      %v368 = vmul.f32 %v366, 0.16666667
      %v369 = vadd.f32 %v367, 1.0
      %v370 = vadd.f32 %v368, 1.0
      %v371 = vmul.f32 %v357, %v369
      %v372 = vmul.f32 %v364, %v370
      %v373 = vmul.f32 %v357, 1.442695
      %v374 = vpow.pop %v373
      %v375 = vmul.f32 %v364, 1.442695
      %v376 = vpow.pop %v375
      %v377 = vsub.f32 0.0, %v357
      %v378 = vsub.f32 0.0, %v364
      %v379 = vmul.f32 %v377, 1.442695
      %v380 = vpow.pop %v379
      %v381 = vmul.f32 %v378, 1.442695
      %v382 = vpow.pop %v381
      %v383 = vsub.f32 %v374, %v380
      %v384 = vsub.f32 %v376, %v382
      %v385 = vmul.f32 %v383, 0.5
      %v386 = vmul.f32 %v384, 0.5
      %vm387 = vcmp.lt.f32.partialorder %v357, 0.01
      %vm388 = vcmp.lt.f32.partialorder %v364, 0.01
      %v389 = vsel %vm387, %v371, %v385
      %v390 = vsel %vm388, %v372, %v386
      %v391 = vrcp.pop %v357
      %v392 = vrcp.pop %v364
      %v393 = vmul.f32 %v389, %v391
      %v394 = vmul.f32 %v390, %v392
      %v395 = vmul.f32 %v393, %v336
      %v396 = vmul.f32 %v394, %v337
      %v397 = vmul.f32 %v395, %v395
      %v398 = vmul.f32 %v396, %v396
      %v399 = vsel %vm340, %v397, 0.0
      %400 = vadd.xlane.f32.xlu0 %v399
      %v401 = vpop.xlane.xlu0 %400
      %v402 = vsel %vm340, %v398, 0.0
      %403 = vadd.xlane.f32.xlu0 %v402
      %v404 = vpop.xlane.xlu0 %403
      %v405 = vadd.f32 %v401, 1.0
      %v406 = vadd.f32 %v404, 1.0
      %v407 = vrsqrt.pop %v405
      %v408 = vmul.f32 %v405, %v407
      %vm409 = vcmp.eq.f32.partialorder %v405, inf
      %v410 = vsel %vm409, %v405, %v408
      %vm411 = vcmp.eq.f32.partialorder %v405, 0.0
      %v412 = vand.u32 %v405, 2147483648
      %v413 = vsel %vm411, %v412, %v410
      %v414 = vrsqrt.pop %v406
      %v415 = vmul.f32 %v406, %v414
      %vm416 = vcmp.eq.f32.partialorder %v406, inf
      %v417 = vsel %vm416, %v406, %v415
      %vm418 = vcmp.eq.f32.partialorder %v406, 0.0
      %v419 = vand.u32 %v406, 2147483648
      %v420 = vsel %vm418, %v419, %v417
      %v421 = vld [vmem:[%s2] sm:$0xff]
      %v422 = vld [vmem:[%s1] sm:$0x1]
      %v424 = vlaneseq
      %v425 = vshrl.u32 %v424, 7
      %v426 = vsub.s32 0, %v425
      %v427 = vrot.slane %v422, %v426
      %v429 = vmul.f32 %v413, %v427
      %v430 = vmul.f32 %v420, %v427
      %v432 = vsel %vm340, %v395, 0
      %v435 = vsel %vm340, %v396, 0
      %437 = vmatprep.subr.mxu0 0.0
      %438 = vmatpush1.msra.mxu0 %v421
      %439 = vmatprep.subr.mxu0 0.0
      %440 = vmatpush1.msra.mxu0 0.0
      %441 = vmatprep.subr.mxu0 0.0
      %442 = vmatpush1.msra.mxu0 0.0
      %443 = vmatprep.subr.mxu0 0.0
      %444 = vmatpush1.msra.mxu0 0.0
      %445 = vmatprep.subr.mxu0 0.0
      %446 = vmatpush1.msra.mxu0 0.0
      %447 = vmatprep.subr.mxu0 0.0
      %448 = vmatpush1.msra.mxu0 0.0
      %449 = vmatprep.subr.mxu0 0.0
      %450 = vmatpush1.msra.mxu0 0.0
      %451 = vmatprep.subr.mxu0 0.0
      %452 = vmatpush1.msra.mxu0 0.0
      %453 = vmatprep.subr.mxu0 0.0
      %454 = vmatpush1.msra.mxu0 0.0
      %455 = vmatprep.subr.mxu0 0.0
      %456 = vmatpush1.msra.mxu0 0.0
      %457 = vmatprep.subr.mxu0 0.0
      %458 = vmatpush1.msra.mxu0 0.0
      %459 = vmatprep.subr.mxu0 0.0
      %460 = vmatpush1.msra.mxu0 0.0
      %461 = vmatprep.subr.mxu0 0.0
      %462 = vmatpush1.msra.mxu0 0.0
      %463 = vmatprep.subr.mxu0 0.0
      %464 = vmatpush1.msra.mxu0 0.0
      %465 = vmatprep.subr.mxu0 0.0
      %466 = vmatpush1.msra.mxu0 0.0
      %467 = vmatprep.subr.mxu0 0.0
      %468 = vmatpush1.msra.mxu0 0.0
      %469 = vmatprep.subr.mxu0 0.0
      %470 = vmatpush1.msra.mxu0 0.0
      %471 = vmatprep.subr.mxu0 0.0
      %472 = vmatpush1.msra.mxu0 0.0
      %473 = vmatprep.subr.mxu0 0.0
      %474 = vmatpush1.msra.mxu0 0.0
      %475 = vmatprep.subr.mxu0 0.0
      %476 = vmatpush1.msra.mxu0 0.0
      %477 = vmatprep.subr.mxu0 0.0
      %478 = vmatpush1.msra.mxu0 0.0
      %479 = vmatprep.subr.mxu0 0.0
      %480 = vmatpush1.msra.mxu0 0.0
      %481 = vmatprep.subr.mxu0 0.0
      %482 = vmatpush1.msra.mxu0 0.0
      %483 = vmatprep.subr.mxu0 0.0
      %484 = vmatpush1.msra.mxu0 0.0
      %485 = vmatprep.subr.mxu0 0.0
      %486 = vmatpush1.msra.mxu0 0.0
      %487 = vmatprep.subr.mxu0 0.0
      %488 = vmatpush1.msra.mxu0 0.0
      %489 = vmatprep.subr.mxu0 0.0
      %490 = vmatpush1.msra.mxu0 0.0
      %491 = vmatprep.subr.mxu0 0.0
      %492 = vmatpush1.msra.mxu0 0.0
      %493 = vmatprep.subr.mxu0 0.0
      %494 = vmatpush1.msra.mxu0 0.0
      %495 = vmatprep.subr.mxu0 0.0
      %496 = vmatpush1.msra.mxu0 0.0
      %497 = vmatprep.subr.mxu0 0.0
      %498 = vmatpush1.msra.mxu0 0.0
      %499 = vmatprep.subr.mxu0 0.0
      %500 = vmatpush1.msra.mxu0 0.0
      %501 = vmatprep.mubr.f32.mxu0 0.0
      %502 = vmatmul.mubr.f32.gmra.mrb[0].mxu0 %v432
      %v503 = vpop.f32.mrb[0].mxu0
      %v504 = vadd.f32 %v429, %v503
      %v505 = vpop.f32.mrb[0].mxu0
      %506 = vmatprep.mubr.f32.mxu0 0.0
      %507 = vmatmul.mubr.f32.gmra.mrb[0].mxu0 %v435
      %v508 = vpop.f32.mrb[0].mxu0
      %v509 = vadd.f32 %v430, %v508
      %v510 = vpop.f32.mrb[0].mxu0
      %511 = vdwg.mxu0
      %v512 = vld [vmem:[%s3] sm:$0x1]
      %v514 = vlaneseq
      %v515 = vshrl.u32 %v514, 7
      %v516 = vsub.s32 0, %v515
      %v517 = vrot.slane %v512, %v516
      %v519 = vadd.f32 %v504, %v517
      %v520 = vadd.f32 %v509, %v517
      %vm521 = vcmask 261120
      %v522 = vsel %vm521, %v519, 0.0
      %523 = vadd.xlane.f32.xlu0 %v522
      %v524 = vpop.xlane.xlu0 %523
      %v525 = vsel %vm521, %v520, 0.0
      %526 = vadd.xlane.f32.xlu0 %v525
      %v527 = vpop.xlane.xlu0 %526
      %v528 = vrcp.pop 32.0
      %v529 = vmul.f32 %v524, %v528
      %v530 = vmul.f32 %v527, %v528
      %v531 = vsub.f32 %v519, %v529
      %v532 = vsub.f32 %v520, %v530
      %v533 = vmul.f32 %v531, %v531
      %v534 = vmul.f32 %v532, %v532
      %v535 = vsel %vm521, %v533, 0.0
      %536 = vadd.xlane.f32.xlu0 %v535
      %v537 = vpop.xlane.xlu0 %536
      %v538 = vsel %vm521, %v534, 0.0
      %539 = vadd.xlane.f32.xlu0 %v538
      %v540 = vpop.xlane.xlu0 %539
      %v541 = vmul.f32 %v537, %v528
      %v542 = vmul.f32 %v540, %v528
      %v543 = vadd.f32 %v541, 1e-05
      %v544 = vadd.f32 %v542, 1e-05
      %v545 = vrsqrt.pop %v543
      %v546 = vrsqrt.pop %v544
      %v547 = vmul.f32 %v531, %v545
      %v548 = vmul.f32 %v532, %v546
      %v549 = vld [vmem:[%s4] sm:$0x1]
      %v551 = vlaneseq
      %v552 = vshrl.u32 %v551, 7
      %v553 = vsub.s32 0, %v552
      %v554 = vrot.slane %v549, %v553
      %v556 = vmul.f32 %v547, %v554
      %v557 = vmul.f32 %v548, %v554
      %v558 = vld [vmem:[%s5] sm:$0x1]
      %v560 = vlaneseq
      %v561 = vshrl.u32 %v560, 7
      %v562 = vsub.s32 0, %v561
      %v563 = vrot.slane %v558, %v562
      %v565 = vadd.f32 %v556, %v563
      %v566 = vadd.f32 %v557, %v563
      %v567 = vld [vmem:[%s7] sm:$0xff]
      %v568 = vld [vmem:[%s6] sm:$0x1]
      %v570 = vlaneseq
      %v571 = vshrl.u32 %v570, 7
      %v572 = vsub.s32 0, %v571
      %v573 = vrot.slane %v568, %v572
      %v575 = vmul.f32 %v413, %v573
      %v576 = vmul.f32 %v420, %v573
      %577 = vmatprep.subr.mxu0 0.0
      %578 = vmatpush1.msra.mxu0 %v567
      %579 = vmatprep.subr.mxu0 0.0
      %580 = vmatpush1.msra.mxu0 0.0
      %581 = vmatprep.subr.mxu0 0.0
      %582 = vmatpush1.msra.mxu0 0.0
      %583 = vmatprep.subr.mxu0 0.0
      %584 = vmatpush1.msra.mxu0 0.0
      %585 = vmatprep.subr.mxu0 0.0
      %586 = vmatpush1.msra.mxu0 0.0
      %587 = vmatprep.subr.mxu0 0.0
      %588 = vmatpush1.msra.mxu0 0.0
      %589 = vmatprep.subr.mxu0 0.0
      %590 = vmatpush1.msra.mxu0 0.0
      %591 = vmatprep.subr.mxu0 0.0
      %592 = vmatpush1.msra.mxu0 0.0
      %593 = vmatprep.subr.mxu0 0.0
      %594 = vmatpush1.msra.mxu0 0.0
      %595 = vmatprep.subr.mxu0 0.0
      %596 = vmatpush1.msra.mxu0 0.0
      %597 = vmatprep.subr.mxu0 0.0
      %598 = vmatpush1.msra.mxu0 0.0
      %599 = vmatprep.subr.mxu0 0.0
      %600 = vmatpush1.msra.mxu0 0.0
      %601 = vmatprep.subr.mxu0 0.0
      %602 = vmatpush1.msra.mxu0 0.0
      %603 = vmatprep.subr.mxu0 0.0
      %604 = vmatpush1.msra.mxu0 0.0
      %605 = vmatprep.subr.mxu0 0.0
      %606 = vmatpush1.msra.mxu0 0.0
      %607 = vmatprep.subr.mxu0 0.0
      %608 = vmatpush1.msra.mxu0 0.0
      %609 = vmatprep.subr.mxu0 0.0
      %610 = vmatpush1.msra.mxu0 0.0
      %611 = vmatprep.subr.mxu0 0.0
      %612 = vmatpush1.msra.mxu0 0.0
      %613 = vmatprep.subr.mxu0 0.0
      %614 = vmatpush1.msra.mxu0 0.0
      %615 = vmatprep.subr.mxu0 0.0
      %616 = vmatpush1.msra.mxu0 0.0
      %617 = vmatprep.subr.mxu0 0.0
      %618 = vmatpush1.msra.mxu0 0.0
      %619 = vmatprep.subr.mxu0 0.0
      %620 = vmatpush1.msra.mxu0 0.0
      %621 = vmatprep.subr.mxu0 0.0
      %622 = vmatpush1.msra.mxu0 0.0
      %623 = vmatprep.subr.mxu0 0.0
      %624 = vmatpush1.msra.mxu0 0.0
      %625 = vmatprep.subr.mxu0 0.0
      %626 = vmatpush1.msra.mxu0 0.0
      %627 = vmatprep.subr.mxu0 0.0
      %628 = vmatpush1.msra.mxu0 0.0
      %629 = vmatprep.subr.mxu0 0.0
      %630 = vmatpush1.msra.mxu0 0.0
      %631 = vmatprep.subr.mxu0 0.0
      %632 = vmatpush1.msra.mxu0 0.0
      %633 = vmatprep.subr.mxu0 0.0
      %634 = vmatpush1.msra.mxu0 0.0
      %635 = vmatprep.subr.mxu0 0.0
      %636 = vmatpush1.msra.mxu0 0.0
      %637 = vmatprep.subr.mxu0 0.0
      %638 = vmatpush1.msra.mxu0 0.0
      %639 = vmatprep.subr.mxu0 0.0
      %640 = vmatpush1.msra.mxu0 0.0
      %641 = vmatprep.mubr.f32.mxu0 0.0
      %642 = vmatmul.mubr.f32.gmra.mrb[0].mxu0 %v432
      %v643 = vpop.f32.mrb[0].mxu0
      %v644 = vadd.f32 %v575, %v643
      %v645 = vpop.f32.mrb[0].mxu0
      %646 = vmatprep.mubr.f32.mxu0 0.0
      %647 = vmatmul.mubr.f32.gmra.mrb[0].mxu0 %v435
      %v648 = vpop.f32.mrb[0].mxu0
      %v649 = vadd.f32 %v576, %v648
      %v650 = vpop.f32.mrb[0].mxu0
      %651 = vdwg.mxu0
      %v652 = vld [vmem:[%s8] sm:$0x1]
      %v654 = vlaneseq
      %v655 = vshrl.u32 %v654, 7
      %v656 = vsub.s32 0, %v655
      %v657 = vrot.slane %v652, %v656
      %v659 = vadd.f32 %v644, %v657
      %v660 = vadd.f32 %v649, %v657
      %v661 = vmul.f32 %v659, %v659
      %v662 = vmul.f32 %v660, %v660
      %v663 = vsel %vm521, %v661, 0.0
      %664 = vadd.xlane.f32.xlu0 %v663
      %v665 = vpop.xlane.xlu0 %664
      %v666 = vsel %vm521, %v662, 0.0
      %667 = vadd.xlane.f32.xlu0 %v666
      %v668 = vpop.xlane.xlu0 %667
      %v669 = vadd.f32 %v665, 1.0
      %v670 = vadd.f32 %v668, 1.0
      %v671 = vrsqrt.pop %v669
      %v672 = vmul.f32 %v669, %v671
      %vm673 = vcmp.eq.f32.partialorder %v669, inf
      %v674 = vsel %vm673, %v669, %v672
      %vm675 = vcmp.eq.f32.partialorder %v669, 0.0
      %v676 = vand.u32 %v669, 2147483648
      %v677 = vsel %vm675, %v676, %v674
      %v678 = vrsqrt.pop %v670
      %v679 = vmul.f32 %v670, %v678
      %vm680 = vcmp.eq.f32.partialorder %v670, inf
      %v681 = vsel %vm680, %v670, %v679
      %vm682 = vcmp.eq.f32.partialorder %v670, 0.0
      %v683 = vand.u32 %v670, 2147483648
      %v684 = vsel %vm682, %v683, %v681
      %v685 = vmul.f32 %v565, %v565
      %v686 = vmul.f32 %v566, %v566
      %v687 = vsel %vm521, %v685, 0.0
      %688 = vadd.xlane.f32.xlu0 %v687
      %v689 = vpop.xlane.xlu0 %688
      %v690 = vsel %vm521, %v686, 0.0
      %691 = vadd.xlane.f32.xlu0 %v690
      %v692 = vpop.xlane.xlu0 %691
      %v693 = vadd.f32 %v689, 1.0
      %v694 = vadd.f32 %v692, 1.0
      %v695 = vrsqrt.pop %v693
      %v696 = vmul.f32 %v693, %v695
      %vm697 = vcmp.eq.f32.partialorder %v693, inf
      %v698 = vsel %vm697, %v693, %v696
      %vm699 = vcmp.eq.f32.partialorder %v693, 0.0
      %v700 = vand.u32 %v693, 2147483648
      %v701 = vsel %vm699, %v700, %v698
      %v702 = vrsqrt.pop %v694
      %v703 = vmul.f32 %v694, %v702
      %vm704 = vcmp.eq.f32.partialorder %v694, inf
      %v705 = vsel %vm704, %v694, %v703
      %vm706 = vcmp.eq.f32.partialorder %v694, 0.0
      %v707 = vand.u32 %v694, 2147483648
      %v708 = vsel %vm706, %v707, %v705
      %v709 = vadd.f32 %v701, %v677
      %v710 = vadd.f32 %v708, %v684
      %v711 = vmul.f32 %v709, 0.5
      %v712 = vmul.f32 %v710, 0.5
      %v713 = vadd.f32 %v565, %v659
      %v714 = vadd.f32 %v566, %v660
      %v715 = vmul.f32 %v713, 0.5
      %v716 = vmul.f32 %v714, 0.5
      %v717 = vmul.f32 %v715, %v715
      %v718 = vmul.f32 %v716, %v716
      %v719 = vsel %vm521, %v717, 0.0
      %720 = vadd.xlane.f32.xlu0 %v719
      %v721 = vpop.xlane.xlu0 %720
      %v722 = vsel %vm521, %v718, 0.0
      %723 = vadd.xlane.f32.xlu0 %v722
      %v724 = vpop.xlane.xlu0 %723
      %v725 = vmul.f32 %v711, %v711
      %v726 = vmul.f32 %v712, %v712
      %v727 = vsub.f32 %v721, %v725
      %v728 = vsub.f32 %v724, %v726
      %v729 = vand.u32 2147483647, %v727
      %v730 = vand.u32 2147483647, %v728
      %v731 = vmax.f32 %v729, 1e-08
      %v732 = vmax.f32 %v730, 1e-08
      %v733 = vrsqrt.pop %v731
      %v734 = vrsqrt.pop %v732
      %v735 = vmul.f32 %v715, %v733
      %v736 = vmul.f32 %v716, %v734
      %737 = vst.msk [vmem:[%s334] sm:$0xff] %vm521, %v735
      %738 = vst.msk [vmem:[%s334 + $0x8] sm:$0xff] %vm521, %v736
      %s739 = smul.u32 2, %s20
      %p740 = scmp.lt.s32.totalorder %s739, 5
      %s741 = scalar_select %p740, %s739, 5
      %s742 = smul.addr %s741, 8
      %s743 = scalar_lea.vmem %s9, %s742
      // Predicated region
      $region57: #{_lambda_.10} parent=55 // pred_check
        %p744 = pneg %p232
      $region58: #{_lambda_.10} parent=55 // pred_check_branch
        %746 = sbr.rel (%p744) target = $region60
      $region59: #{_lambda_.10} parent=55 // pred_region
        %s747 = smul.u32 2, %s20
      $region60: #{_lambda_.10} parent=55 // pred_fallthru
        _
    $region56: #{_lambda_.10} parent=5 // pred_fallthru
      _
    %p748 = scmp.le.s32.totalorder 2, %s15
    // Predicated region
    $region61: #{_lambda_.10} parent=5 // pred_check
      %p749 = pneg %p748
    $region62: #{_lambda_.10} parent=5 // pred_check_branch
      %751 = sbr.rel (%p749) target = $region64
    $region63: #{_lambda_.10} parent=5 // pred_region
      %s752 = ssub.s32 %s15, 2
      // Predicated region
      $region65: #{_lambda_.10} parent=63 // pred_check
        %p753 = pneg %p238
      $region66: #{_lambda_.10} parent=63 // pred_check_branch
        %755 = sbr.rel (%p753) target = $region68
      $region67: #{_lambda_.10} parent=63 // pred_region
        %s756 = smul.u32 2, %s21
        %p757 = scmp.lt.s32.totalorder %s756, 5
        %s758 = scalar_select %p757, %s756, 5
        %s759 = smul.addr %s758, 8
        %s760 = scalar_lea.vmem %s9, %s759
      $region68: #{_lambda_.10} parent=63 // pred_fallthru
        _
    $region64: #{_lambda_.10} parent=5 // pred_fallthru
      _
  $region6: #{_lambda_.10} parent=0 // loop_footer
    %s19 = sadd.s32 1, %s15
  $region7: #{_lambda_.10} parent=0 // loop_footer_branch
    %14 = sbr.rel target = $region3
  $region8: #{_lambda_.10} parent=0 // loop_exit
    _

// kernel: _lambda_.11
$region0: #{_lambda_.11}
  #allocation0 [shape = 'u32[]', space=smem, size = 0x4, offset = 0x4, fixed_abs, tag = 'smem constant byte address 0x4 - core index']
  #allocation1 [shape = 'u32[144,128]{1,0:T(1,128)}', space=vmem, size = 0x12000, scoped, tag = 'internal scratch']
  #allocation2 [shape = 'f32[1]{0:T(128)S(6)}', space=smem, size = 0x200, scoped, tag = 'scoped memory for _lambda_.11']
  %s0 = inlined_call_operand.<no memory space> [shape: f32[1], index: 0, kind: input, shape index: {}]
  %s1 = inlined_call_operand.vmem [shape: f32[48,32], index: 1, kind: input, shape index: {}]
  %s2 = inlined_call_operand.vmem [shape: f32[1,128], index: 2, kind: input, shape index: {}]
  %s3 = inlined_call_operand.vmem [shape: f32[32,128], index: 3, kind: input, shape index: {}]
  %s4 = inlined_call_operand.vmem [shape: f32[1,128], index: 4, kind: input, shape index: {}]
  %s5 = inlined_call_operand.vmem [shape: f32[64,2], index: 5, kind: input, shape index: {}]
  %s6 = inlined_call_operand.vmem [shape: f32[2,64], index: 6, kind: input, shape index: {}]
  %s7 = inlined_call_operand.vmem [shape: f32[64,64], index: 7, kind: output, shape index: {0}]
  %s8 = inlined_call_operand.vmem [shape: f32[1,64], index: 8, kind: output, shape index: {1}]
  %9 = xla_tuple %s7, %s8
  %s10 = sld [smem:[#allocation0]]
  $region77: #{_lambda_.11} parent=0
    _
  %s12 = ssub.s32 1, %s10
  %s13 = scalar_select 0, %s12, %s10
  %14 = sst [smem:[#allocation2]] %s0
  loop: start=0, step=1, limit=5
  $region2: #{_lambda_.11} parent=0 // loop_pre_header
    _
  $region3: #{_lambda_.11} parent=0 // loop_header
    %s16 = sphi 0, %s20
    %p17 = scmp.ge.s32.totalorder %s16, 5
    %s24 = sphi 0, %s24
    %s26 = sphi 0, %s24
    %s27 = sphi 0, %s26
    %s41 = sphi 0, %s27
    %s47 = sphi 0, %s49
    %s50 = sphi 0, %s47
    %s51 = sphi 0, %s50
    %s67 = sphi 0, %s51
    %s71 = sphi 0, %s71
    %s73 = sphi 0, %s71
    %s74 = sphi 0, %s73
    %s88 = sphi 0, %s74
    %s92 = sphi 0, %s92
    %s94 = sphi 0, %s92
    %s95 = sphi 0, %s94
    %s109 = sphi 0, %s95
    %s113 = sphi 0, %s113
    %s115 = sphi 0, %s113
    %s116 = sphi 0, %s115
    %s130 = sphi 0, %s116
    %s134 = sphi 0, %s134
    %s136 = sphi 0, %s134
    %s137 = sphi 0, %s136
    %s151 = sphi 0, %s137
    %s155 = sphi 0, %s155
    %s157 = sphi 0, %s155
    %s158 = sphi 0, %s157
    %s172 = sphi 0, %s158
    %s176 = sphi 0, %s176
    %s178 = sphi 0, %s176
    %s179 = sphi 0, %s178
    %s193 = sphi 0, %s179
    %s197 = sphi 0, %s197
    %s199 = sphi 0, %s197
    %s200 = sphi 0, %s199
    %s214 = sphi 0, %s200
  $region4: #{_lambda_.11} parent=0 // loop_header_branch
    %19 = sbr.rel (%p17) target = $region8
  $region5: #{_lambda_.11} parent=0 // loop_body
    %s21 = ssub.s32 %s16, 1
    %s22 = ssub.s32 %s16, 2
    %s23 = sadd.s32 %s16, 1
    %s25 = sadd.s32 %s24, 1
    %p28 = scmp.eq.s32.totalorder %s16, 2
    %p29 = scmp.ne.s32.totalorder %s24, %s26
    %p30 = scmp.eq.s32.totalorder %s16, 0
    %p31 = por %p29, %p30
    %p32 = scmp.ne.s32.totalorder %s24, %s26
    %p33 = scmp.eq.s32.totalorder %s21, 2
    %p34 = por %p32, %p33
    %p35 = scmp.ne.s32.totalorder %s26, %s27
    %p36 = scmp.eq.s32.totalorder %s21, 0
    %p37 = por %p35, %p36
    %p38 = scmp.ne.s32.totalorder %s26, %s27
    %p39 = scmp.eq.s32.totalorder %s22, 2
    %p40 = por %p38, %p39
    %p42 = scmp.ne.s32.totalorder %s27, %s41
    %p43 = scmp.eq.s32.totalorder %s22, 0
    %p44 = por %p42, %p43
    %s45 = ssub.s32 %s16, %s23
    %p46 = scmp.eq.s32.totalorder %s45, 0
    %s48 = sadd.s32 %s47, 1
    %s49 = scalar_select %p46, %s47, %s48
    %p52 = pneg %p46
    %p53 = scmp.eq.s32.totalorder %s16, 2
    %p54 = por %p52, %p53
    %p55 = scmp.ne.s32.totalorder %s47, %s50
    %p56 = scmp.eq.s32.totalorder %s16, 0
    %p57 = por %p55, %p56
    %p58 = scmp.ne.s32.totalorder %s47, %s50
    %p59 = scmp.eq.s32.totalorder %s21, 2
    %p60 = por %p58, %p59
    %p61 = scmp.ne.s32.totalorder %s50, %s51
    %p62 = scmp.eq.s32.totalorder %s21, 0
    %p63 = por %p61, %p62
    %p64 = scmp.ne.s32.totalorder %s50, %s51
    %p65 = scmp.eq.s32.totalorder %s22, 2
    %p66 = por %p64, %p65
    %p68 = scmp.ne.s32.totalorder %s51, %s67
    %p69 = scmp.eq.s32.totalorder %s22, 0
    %p70 = por %p68, %p69
    %s72 = sadd.s32 %s71, 1
    %p75 = scmp.eq.s32.totalorder %s16, 2
    %p76 = scmp.ne.s32.totalorder %s71, %s73
    %p77 = scmp.eq.s32.totalorder %s16, 0
    %p78 = por %p76, %p77
    %p79 = scmp.ne.s32.totalorder %s71, %s73
    %p80 = scmp.eq.s32.totalorder %s21, 2
    %p81 = por %p79, %p80
    %p82 = scmp.ne.s32.totalorder %s73, %s74
    %p83 = scmp.eq.s32.totalorder %s21, 0
    %p84 = por %p82, %p83
    %p85 = scmp.ne.s32.totalorder %s73, %s74
    %p86 = scmp.eq.s32.totalorder %s22, 2
    %p87 = por %p85, %p86
    %p89 = scmp.ne.s32.totalorder %s74, %s88
    %p90 = scmp.eq.s32.totalorder %s22, 0
    %p91 = por %p89, %p90
    %s93 = sadd.s32 %s92, 1
    %p96 = scmp.eq.s32.totalorder %s16, 2
    %p97 = scmp.ne.s32.totalorder %s92, %s94
    %p98 = scmp.eq.s32.totalorder %s16, 0
    %p99 = por %p97, %p98
    %p100 = scmp.ne.s32.totalorder %s92, %s94
    %p101 = scmp.eq.s32.totalorder %s21, 2
    %p102 = por %p100, %p101
    %p103 = scmp.ne.s32.totalorder %s94, %s95
    %p104 = scmp.eq.s32.totalorder %s21, 0
    %p105 = por %p103, %p104
    %p106 = scmp.ne.s32.totalorder %s94, %s95
    %p107 = scmp.eq.s32.totalorder %s22, 2
    %p108 = por %p106, %p107
    %p110 = scmp.ne.s32.totalorder %s95, %s109
    %p111 = scmp.eq.s32.totalorder %s22, 0
    %p112 = por %p110, %p111
    %s114 = sadd.s32 %s113, 1
    %p117 = scmp.eq.s32.totalorder %s16, 2
    %p118 = scmp.ne.s32.totalorder %s113, %s115
    %p119 = scmp.eq.s32.totalorder %s16, 0
    %p120 = por %p118, %p119
    %p121 = scmp.ne.s32.totalorder %s113, %s115
    %p122 = scmp.eq.s32.totalorder %s21, 2
    %p123 = por %p121, %p122
    %p124 = scmp.ne.s32.totalorder %s115, %s116
    %p125 = scmp.eq.s32.totalorder %s21, 0
    %p126 = por %p124, %p125
    %p127 = scmp.ne.s32.totalorder %s115, %s116
    %p128 = scmp.eq.s32.totalorder %s22, 2
    %p129 = por %p127, %p128
    %p131 = scmp.ne.s32.totalorder %s116, %s130
    %p132 = scmp.eq.s32.totalorder %s22, 0
    %p133 = por %p131, %p132
    %s135 = sadd.s32 %s134, 1
    %p138 = scmp.eq.s32.totalorder %s16, 2
    %p139 = scmp.ne.s32.totalorder %s134, %s136
    %p140 = scmp.eq.s32.totalorder %s16, 0
    %p141 = por %p139, %p140
    %p142 = scmp.ne.s32.totalorder %s134, %s136
    %p143 = scmp.eq.s32.totalorder %s21, 2
    %p144 = por %p142, %p143
    %p145 = scmp.ne.s32.totalorder %s136, %s137
    %p146 = scmp.eq.s32.totalorder %s21, 0
    %p147 = por %p145, %p146
    %p148 = scmp.ne.s32.totalorder %s136, %s137
    %p149 = scmp.eq.s32.totalorder %s22, 2
    %p150 = por %p148, %p149
    %p152 = scmp.ne.s32.totalorder %s137, %s151
    %p153 = scmp.eq.s32.totalorder %s22, 0
    %p154 = por %p152, %p153
    %s156 = sadd.s32 %s155, 1
    %p159 = scmp.eq.s32.totalorder %s16, 2
    %p160 = scmp.ne.s32.totalorder %s155, %s157
    %p161 = scmp.eq.s32.totalorder %s16, 0
    %p162 = por %p160, %p161
    %p163 = scmp.ne.s32.totalorder %s155, %s157
    %p164 = scmp.eq.s32.totalorder %s21, 2
    %p165 = por %p163, %p164
    %p166 = scmp.ne.s32.totalorder %s157, %s158
    %p167 = scmp.eq.s32.totalorder %s21, 0
    %p168 = por %p166, %p167
    %p169 = scmp.ne.s32.totalorder %s157, %s158
    %p170 = scmp.eq.s32.totalorder %s22, 2
    %p171 = por %p169, %p170
    %p173 = scmp.ne.s32.totalorder %s158, %s172
    %p174 = scmp.eq.s32.totalorder %s22, 0
    %p175 = por %p173, %p174
    %s177 = sadd.s32 %s176, 1
    %p180 = scmp.eq.s32.totalorder %s16, 2
    %p181 = scmp.ne.s32.totalorder %s176, %s178
    %p182 = scmp.eq.s32.totalorder %s16, 0
    %p183 = por %p181, %p182
    %p184 = scmp.ne.s32.totalorder %s176, %s178
    %p185 = scmp.eq.s32.totalorder %s21, 2
    %p186 = por %p184, %p185
    %p187 = scmp.ne.s32.totalorder %s178, %s179
    %p188 = scmp.eq.s32.totalorder %s21, 0
    %p189 = por %p187, %p188
    %p190 = scmp.ne.s32.totalorder %s178, %s179
    %p191 = scmp.eq.s32.totalorder %s22, 2
    %p192 = por %p190, %p191
    %p194 = scmp.ne.s32.totalorder %s179, %s193
    %p195 = scmp.eq.s32.totalorder %s22, 0
    %p196 = por %p194, %p195
    %s198 = sadd.s32 %s197, 1
    %p201 = scmp.eq.s32.totalorder %s16, 2
    %p202 = scmp.ne.s32.totalorder %s197, %s199
    %p203 = scmp.eq.s32.totalorder %s16, 0
    %p204 = por %p202, %p203
    %p205 = scmp.ne.s32.totalorder %s197, %s199
    %p206 = scmp.eq.s32.totalorder %s21, 2
    %p207 = por %p205, %p206
    %p208 = scmp.ne.s32.totalorder %s199, %s200
    %p209 = scmp.eq.s32.totalorder %s21, 0
    %p210 = por %p208, %p209
    %p211 = scmp.ne.s32.totalorder %s199, %s200
    %p212 = scmp.eq.s32.totalorder %s22, 2
    %p213 = por %p211, %p212
    %p215 = scmp.ne.s32.totalorder %s200, %s214
    %p216 = scmp.eq.s32.totalorder %s22, 0
    %p217 = por %p215, %p216
    %p218 = scmp.le.s32.totalorder 1, %s16
    %p219 = scmp.lt.s32.totalorder %s16, 4
    %p220 = pnand %p218, %p219
    %p221 = pneg %p220
    // Predicated region
    $region9: #{_lambda_.11} parent=5 // pred_check
      _
    $region10: #{_lambda_.11} parent=5 // pred_check_branch
      %223 = sbr.rel (%p220) target = $region12
    $region11: #{_lambda_.11} parent=5 // pred_region
      %s224 = ssub.s32 %s16, 1
      // Predicated region
      $region13: #{_lambda_.11} parent=11 // pred_check
        %p225 = pneg %p37
      $region14: #{_lambda_.11} parent=11 // pred_check_branch
        %227 = sbr.rel (%p225) target = $region16
      $region15: #{_lambda_.11} parent=11 // pred_region
        _
      $region16: #{_lambda_.11} parent=11 // pred_fallthru
        _
      // Predicated region
      $region17: #{_lambda_.11} parent=11 // pred_check
        %p228 = pneg %p84
      $region18: #{_lambda_.11} parent=11 // pred_check_branch
        %230 = sbr.rel (%p228) target = $region20
      $region19: #{_lambda_.11} parent=11 // pred_region
        _
      $region20: #{_lambda_.11} parent=11 // pred_fallthru
        _
      // Predicated region
      $region21: #{_lambda_.11} parent=11 // pred_check
        %p231 = pneg %p105
      $region22: #{_lambda_.11} parent=11 // pred_check_branch
        %233 = sbr.rel (%p231) target = $region24
      $region23: #{_lambda_.11} parent=11 // pred_region
        _
      $region24: #{_lambda_.11} parent=11 // pred_fallthru
        _
      // Predicated region
      $region25: #{_lambda_.11} parent=11 // pred_check
        %p234 = pneg %p126
      $region26: #{_lambda_.11} parent=11 // pred_check_branch
        %236 = sbr.rel (%p234) target = $region28
      $region27: #{_lambda_.11} parent=11 // pred_region
        _
      $region28: #{_lambda_.11} parent=11 // pred_fallthru
        _
      // Predicated region
      $region29: #{_lambda_.11} parent=11 // pred_check
        %p237 = pneg %p147
      $region30: #{_lambda_.11} parent=11 // pred_check_branch
        %239 = sbr.rel (%p237) target = $region32
      $region31: #{_lambda_.11} parent=11 // pred_region
        _
      $region32: #{_lambda_.11} parent=11 // pred_fallthru
        _
      // Predicated region
      $region33: #{_lambda_.11} parent=11 // pred_check
        %p240 = pneg %p168
      $region34: #{_lambda_.11} parent=11 // pred_check_branch
        %242 = sbr.rel (%p240) target = $region36
      $region35: #{_lambda_.11} parent=11 // pred_region
        _
      $region36: #{_lambda_.11} parent=11 // pred_fallthru
        _
    $region12: #{_lambda_.11} parent=5 // pred_fallthru
      _
    %p243 = scmp.lt.s32.totalorder %s16, 3
    // Predicated region
    $region37: #{_lambda_.11} parent=5 // pred_check
      %p244 = pneg %p243
    $region38: #{_lambda_.11} parent=5 // pred_check_branch
      %246 = sbr.rel (%p244) target = $region40
    $region39: #{_lambda_.11} parent=5 // pred_region
      // Predicated region
      $region41: #{_lambda_.11} parent=39 // pred_check
        %p247 = pneg %p57
      $region42: #{_lambda_.11} parent=39 // pred_check_branch
        %249 = sbr.rel (%p247) target = $region44
      $region43: #{_lambda_.11} parent=39 // pred_region
        %s250 = smul.u32 2, %s16
        %p251 = scmp.lt.s32.totalorder %s250, 5
        %s252 = scalar_select %p251, %s250, 5
        %s253 = smul.addr %s252, 8
        %s254 = scalar_lea.vmem %s1, %s253
        %s255 = smul.u32 2, %s16
      $region44: #{_lambda_.11} parent=39 // pred_fallthru
        _
    $region40: #{_lambda_.11} parent=5 // pred_fallthru
      _
    %p256 = scmp.le.s32.totalorder 1, %s16
    %p257 = scmp.lt.s32.totalorder %s16, 4
    %p258 = pnand %p256, %p257
    %p259 = pneg %p258
    // Predicated region
    $region45: #{_lambda_.11} parent=5 // pred_check
      _
    $region46: #{_lambda_.11} parent=5 // pred_check_branch
      %261 = sbr.rel (%p258) target = $region48
    $region47: #{_lambda_.11} parent=5 // pred_region
      %s262 = ssub.s32 %s16, 1
      %p263 = pneg %p37
      %p264 = pneg %p34
      %s265 = smul.u32 2, %s21
      %p266 = scmp.lt.s32.totalorder %s265, 5
      %s267 = scalar_select %p266, %s265, 5
      %s268 = smul.addr %s267, 8
      %s269 = scalar_lea.vmem %s1, %s268
      %p270 = pneg %p63
      %p271 = pneg %p60
      %p272 = pneg %p84
      %p273 = pneg %p81
      %p274 = pneg %p105
      %p275 = pneg %p102
      %p276 = pneg %p126
      %p277 = pneg %p123
      %p278 = pneg %p147
      %p279 = pneg %p144
      %p280 = pneg %p168
      %p281 = pneg %p165
      %p282 = pneg %p189
      %p283 = pneg %p186
      %p284 = pneg %p210
      %p285 = pneg %p207
      %s286 = smul.u32 2, %s21
      %p287 = scmp.lt.s32.totalorder %s286, 5
      %s288 = scalar_select %p287, %s286, 5
      %s289 = smul.addr %s288, 8
      %s290 = scalar_lea.vmem %s1, %s289
      %s291 = smul.u32 2, %s21
      %v292 = vld [vmem:[%s290] sm:$0xff]
      %v293 = vld [vmem:[%s290 + $0x8] sm:$0xff]
      %v294 = vmul.f32 %v292, %v292
      %v295 = vmul.f32 %v293, %v293
      %vm296 = vcmask 261120
      %v297 = vsel %vm296, %v294, 0.0
      %298 = vadd.xlane.f32.xlu0 %v297
      %v299 = vpop.xlane.xlu0 %298
      %v300 = vsel %vm296, %v295, 0.0
      %301 = vadd.xlane.f32.xlu0 %v300
      %v302 = vpop.xlane.xlu0 %301
      %v303 = vadd.f32 %v299, 1.0
      %v304 = vadd.f32 %v302, 1.0
      %v305 = vrsqrt.pop %v303
      %v306 = vmul.f32 %v303, %v305
      %vm307 = vcmp.eq.f32.partialorder %v303, inf
      %v308 = vsel %vm307, %v303, %v306
      %vm309 = vcmp.eq.f32.partialorder %v303, 0.0
      %v310 = vand.u32 %v303, 2147483648
      %v311 = vsel %vm309, %v310, %v308
      %v312 = vrsqrt.pop %v304
      %v313 = vmul.f32 %v304, %v312
      %vm314 = vcmp.eq.f32.partialorder %v304, inf
      %v315 = vsel %vm314, %v304, %v313
      %vm316 = vcmp.eq.f32.partialorder %v304, 0.0
      %v317 = vand.u32 %v304, 2147483648
      %v318 = vsel %vm316, %v317, %v315
      %v319 = vld [vmem:[%s3] sm:$0xff]
      %v320 = vld [vmem:[%s3 + $0x8] sm:$0xff]
      %v321 = vld [vmem:[%s3 + $0x10] sm:$0xff]
      %v322 = vld [vmem:[%s3 + $0x18] sm:$0xff]
      %v323 = vld [vmem:[%s2] sm:$0x1]
      %v325 = vlaneseq
      %v326 = vshrl.u32 %v325, 7
      %v327 = vsub.s32 0, %v326
      %v328 = vrot.slane %v323, %v327
      %v330 = vmul.f32 %v311, %v328
      %v331 = vmul.f32 %v318, %v328
      %v333 = vsel %vm296, %v292, 0
      %v336 = vsel %vm296, %v293, 0
      %338 = vmatprep.subr.mxu0 0.0
      %339 = vmatpush1.msra.mxu0 %v319
      %340 = vmatprep.subr.mxu0 0.0
      %341 = vmatpush1.msra.mxu0 %v320
      %342 = vmatprep.subr.mxu0 0.0
      %343 = vmatpush1.msra.mxu0 %v321
      %344 = vmatprep.subr.mxu0 0.0
      %345 = vmatpush1.msra.mxu0 %v322
      %346 = vmatprep.subr.mxu0 0.0
      %347 = vmatpush1.msra.mxu0 0.0
      %348 = vmatprep.subr.mxu0 0.0
      %349 = vmatpush1.msra.mxu0 0.0
      %350 = vmatprep.subr.mxu0 0.0
      %351 = vmatpush1.msra.mxu0 0.0
      %352 = vmatprep.subr.mxu0 0.0
      %353 = vmatpush1.msra.mxu0 0.0
      %354 = vmatprep.subr.mxu0 0.0
      %355 = vmatpush1.msra.mxu0 0.0
      %356 = vmatprep.subr.mxu0 0.0
      %357 = vmatpush1.msra.mxu0 0.0
      %358 = vmatprep.subr.mxu0 0.0
      %359 = vmatpush1.msra.mxu0 0.0
      %360 = vmatprep.subr.mxu0 0.0
      %361 = vmatpush1.msra.mxu0 0.0
      %362 = vmatprep.subr.mxu0 0.0
      %363 = vmatpush1.msra.mxu0 0.0
      %364 = vmatprep.subr.mxu0 0.0
      %365 = vmatpush1.msra.mxu0 0.0
      %366 = vmatprep.subr.mxu0 0.0
      %367 = vmatpush1.msra.mxu0 0.0
      %368 = vmatprep.subr.mxu0 0.0
      %369 = vmatpush1.msra.mxu0 0.0
      %370 = vmatprep.subr.mxu0 0.0
      %371 = vmatpush1.msra.mxu0 0.0
      %372 = vmatprep.subr.mxu0 0.0
      %373 = vmatpush1.msra.mxu0 0.0
      %374 = vmatprep.subr.mxu0 0.0
      %375 = vmatpush1.msra.mxu0 0.0
      %376 = vmatprep.subr.mxu0 0.0
      %377 = vmatpush1.msra.mxu0 0.0
      %378 = vmatprep.subr.mxu0 0.0
      %379 = vmatpush1.msra.mxu0 0.0
      %380 = vmatprep.subr.mxu0 0.0
      %381 = vmatpush1.msra.mxu0 0.0
      %382 = vmatprep.subr.mxu0 0.0
      %383 = vmatpush1.msra.mxu0 0.0
      %384 = vmatprep.subr.mxu0 0.0
      %385 = vmatpush1.msra.mxu0 0.0
      %386 = vmatprep.subr.mxu0 0.0
      %387 = vmatpush1.msra.mxu0 0.0
      %388 = vmatprep.subr.mxu0 0.0
      %389 = vmatpush1.msra.mxu0 0.0
      %390 = vmatprep.subr.mxu0 0.0
      %391 = vmatpush1.msra.mxu0 0.0
      %392 = vmatprep.subr.mxu0 0.0
      %393 = vmatpush1.msra.mxu0 0.0
      %394 = vmatprep.subr.mxu0 0.0
      %395 = vmatpush1.msra.mxu0 0.0
      %396 = vmatprep.subr.mxu0 0.0
      %397 = vmatpush1.msra.mxu0 0.0
      %398 = vmatprep.subr.mxu0 0.0
      %399 = vmatpush1.msra.mxu0 0.0
      %400 = vmatprep.subr.mxu0 0.0
      %401 = vmatpush1.msra.mxu0 0.0
      %402 = vmatprep.mubr.f32.mxu0 0.0
      %403 = vmatmul.mubr.f32.gmra.mrb[0].mxu0 %v333
      %v404 = vpop.f32.mrb[0].mxu0
      %v405 = vadd.f32 %v330, %v404
      %v406 = vpop.f32.mrb[0].mxu0
      %407 = vmatprep.mubr.f32.mxu0 0.0
      %408 = vmatmul.mubr.f32.gmra.mrb[0].mxu0 %v336
      %v409 = vpop.f32.mrb[0].mxu0
      %v410 = vadd.f32 %v331, %v409
      %v411 = vpop.f32.mrb[0].mxu0
      %412 = vdwg.mxu0
      %v413 = vld [vmem:[%s4] sm:$0x1]
      %v415 = vlaneseq
      %v416 = vshrl.u32 %v415, 7
      %v417 = vsub.s32 0, %v416
      %v418 = vrot.slane %v413, %v417
      %v420 = vadd.f32 %v405, %v418
      %v421 = vadd.f32 %v410, %v418
      %s422 = sld [smem:[#allocation2]]
      %s423 = sand.u32 2147483647, %s422
      %s424 = sadd.f32 %s423, 1e-06
      %v425 = vstv %s424
      %v426 = vrcp.pop %v425
      %s427 = vtos %v426
      %v428 = vmax.f32 %v420, 0.0
      %v429 = vmax.f32 %v421, 0.0
      %v430 = vadd.f32 %v428, 1e-06
      %v431 = vadd.f32 %v429, 1e-06
      %v432 = vstv %s427
      %v433 = vmul.f32 %v430, %v432
      %v434 = vmul.f32 %v431, %v432
      %v435 = vld [vmem:[%s5] sm:$0xff]
      %v436 = vld [vmem:[%s5 + $0x8] sm:$0xff]
      %v437 = vld [vmem:[%s5 + $0x10] sm:$0xff]
      %v438 = vld [vmem:[%s5 + $0x18] sm:$0xff]
      %v439 = vld [vmem:[%s5 + $0x20] sm:$0xff]
      %v440 = vld [vmem:[%s5 + $0x28] sm:$0xff]
      %v441 = vld [vmem:[%s5 + $0x30] sm:$0xff]
      %v442 = vld [vmem:[%s5 + $0x38] sm:$0xff]
      %v443 = vld [vmem:[%s6] sm:$0x3]
      %v444 = vmul.f32 %v433, %v433
      %v445 = vmul.f32 %v434, %v434
      %vm446 = vcmask 523264
      %v448 = vsel %vm446, %v444, 0
      %v451 = vsel %vm446, %v445, 0
      %453 = vmatprep.subr.mxu0 0.0
      %454 = vmatpush1.msra.mxu0 %v435
      %455 = vmatprep.subr.mxu0 0.0
      %456 = vmatpush1.msra.mxu0 %v436
      %457 = vmatprep.subr.mxu0 0.0
      %458 = vmatpush1.msra.mxu0 %v437
      %459 = vmatprep.subr.mxu0 0.0
      %460 = vmatpush1.msra.mxu0 %v438
      %461 = vmatprep.subr.mxu0 0.0
      %462 = vmatpush1.msra.mxu0 %v439
      %463 = vmatprep.subr.mxu0 0.0
      %464 = vmatpush1.msra.mxu0 %v440
      %465 = vmatprep.subr.mxu0 0.0
      %466 = vmatpush1.msra.mxu0 %v441
      %467 = vmatprep.subr.mxu0 0.0
      %468 = vmatpush1.msra.mxu0 %v442
      %469 = vmatprep.subr.mxu0 0.0
      %470 = vmatpush1.msra.mxu0 0.0
      %471 = vmatprep.subr.mxu0 0.0
      %472 = vmatpush1.msra.mxu0 0.0
      %473 = vmatprep.subr.mxu0 0.0
      %474 = vmatpush1.msra.mxu0 0.0
      %475 = vmatprep.subr.mxu0 0.0
      %476 = vmatpush1.msra.mxu0 0.0
      %477 = vmatprep.subr.mxu0 0.0
      %478 = vmatpush1.msra.mxu0 0.0
      %479 = vmatprep.subr.mxu0 0.0
      %480 = vmatpush1.msra.mxu0 0.0
      %481 = vmatprep.subr.mxu0 0.0
      %482 = vmatpush1.msra.mxu0 0.0
      %483 = vmatprep.subr.mxu0 0.0
      %484 = vmatpush1.msra.mxu0 0.0
      %485 = vmatprep.subr.mxu0 0.0
      %486 = vmatpush1.msra.mxu0 0.0
      %487 = vmatprep.subr.mxu0 0.0
      %488 = vmatpush1.msra.mxu0 0.0
      %489 = vmatprep.subr.mxu0 0.0
      %490 = vmatpush1.msra.mxu0 0.0
      %491 = vmatprep.subr.mxu0 0.0
      %492 = vmatpush1.msra.mxu0 0.0
      %493 = vmatprep.subr.mxu0 0.0
      %494 = vmatpush1.msra.mxu0 0.0
      %495 = vmatprep.subr.mxu0 0.0
      %496 = vmatpush1.msra.mxu0 0.0
      %497 = vmatprep.subr.mxu0 0.0
      %498 = vmatpush1.msra.mxu0 0.0
      %499 = vmatprep.subr.mxu0 0.0
      %500 = vmatpush1.msra.mxu0 0.0
      %501 = vmatprep.subr.mxu0 0.0
      %502 = vmatpush1.msra.mxu0 0.0
      %503 = vmatprep.subr.mxu0 0.0
      %504 = vmatpush1.msra.mxu0 0.0
      %505 = vmatprep.subr.mxu0 0.0
      %506 = vmatpush1.msra.mxu0 0.0
      %507 = vmatprep.subr.mxu0 0.0
      %508 = vmatpush1.msra.mxu0 0.0
      %509 = vmatprep.subr.mxu0 0.0
      %510 = vmatpush1.msra.mxu0 0.0
      %511 = vmatprep.subr.mxu0 0.0
      %512 = vmatpush1.msra.mxu0 0.0
      %513 = vmatprep.subr.mxu0 0.0
      %514 = vmatpush1.msra.mxu0 0.0
      %515 = vmatprep.subr.mxu0 0.0
      %516 = vmatpush1.msra.mxu0 0.0
      %517 = vmatprep.mubr.f32.mxu0 0.0
      %518 = vmatmul.mubr.f32.gmra.mrb[0].mxu0 %v448
      %v519 = vpop.f32.mrb[0].mxu0
      %v520 = vadd.f32 0.0, %v519
      %v521 = vpop.f32.mrb[0].mxu0
      %522 = vmatprep.mubr.f32.mxu0 0.0
      %523 = vmatmul.mubr.f32.gmra.mrb[0].mxu0 %v451
      %v524 = vpop.f32.mrb[0].mxu0
      %v525 = vadd.f32 0.0, %v524
      %v526 = vpop.f32.mrb[0].mxu0
      %527 = vdwg.mxu0
      %v528 = vmul.f32 %v444, %v444
      %v529 = vmul.f32 %v445, %v445
      %v531 = vsel %vm446, %v528, 0
      %v534 = vsel %vm446, %v529, 0
      %536 = vmatprep.subr.mxu0 0.0
      %537 = vmatpush1.msra.mxu0 %v435
      %538 = vmatprep.subr.mxu0 0.0
      %539 = vmatpush1.msra.mxu0 %v436
      %540 = vmatprep.subr.mxu0 0.0
      %541 = vmatpush1.msra.mxu0 %v437
      %542 = vmatprep.subr.mxu0 0.0
      %543 = vmatpush1.msra.mxu0 %v438
      %544 = vmatprep.subr.mxu0 0.0
      %545 = vmatpush1.msra.mxu0 %v439
      %546 = vmatprep.subr.mxu0 0.0
      %547 = vmatpush1.msra.mxu0 %v440
      %548 = vmatprep.subr.mxu0 0.0
      %549 = vmatpush1.msra.mxu0 %v441
      %550 = vmatprep.subr.mxu0 0.0
      %551 = vmatpush1.msra.mxu0 %v442
      %552 = vmatprep.subr.mxu0 0.0
      %553 = vmatpush1.msra.mxu0 0.0
      %554 = vmatprep.subr.mxu0 0.0
      %555 = vmatpush1.msra.mxu0 0.0
      %556 = vmatprep.subr.mxu0 0.0
      %557 = vmatpush1.msra.mxu0 0.0
      %558 = vmatprep.subr.mxu0 0.0
      %559 = vmatpush1.msra.mxu0 0.0
      %560 = vmatprep.subr.mxu0 0.0
      %561 = vmatpush1.msra.mxu0 0.0
      %562 = vmatprep.subr.mxu0 0.0
      %563 = vmatpush1.msra.mxu0 0.0
      %564 = vmatprep.subr.mxu0 0.0
      %565 = vmatpush1.msra.mxu0 0.0
      %566 = vmatprep.subr.mxu0 0.0
      %567 = vmatpush1.msra.mxu0 0.0
      %568 = vmatprep.subr.mxu0 0.0
      %569 = vmatpush1.msra.mxu0 0.0
      %570 = vmatprep.subr.mxu0 0.0
      %571 = vmatpush1.msra.mxu0 0.0
      %572 = vmatprep.subr.mxu0 0.0
      %573 = vmatpush1.msra.mxu0 0.0
      %574 = vmatprep.subr.mxu0 0.0
      %575 = vmatpush1.msra.mxu0 0.0
      %576 = vmatprep.subr.mxu0 0.0
      %577 = vmatpush1.msra.mxu0 0.0
      %578 = vmatprep.subr.mxu0 0.0
      %579 = vmatpush1.msra.mxu0 0.0
      %580 = vmatprep.subr.mxu0 0.0
      %581 = vmatpush1.msra.mxu0 0.0
      %582 = vmatprep.subr.mxu0 0.0
      %583 = vmatpush1.msra.mxu0 0.0
      %584 = vmatprep.subr.mxu0 0.0
      %585 = vmatpush1.msra.mxu0 0.0
      %586 = vmatprep.subr.mxu0 0.0
      %587 = vmatpush1.msra.mxu0 0.0
      %588 = vmatprep.subr.mxu0 0.0
      %589 = vmatpush1.msra.mxu0 0.0
      %590 = vmatprep.subr.mxu0 0.0
      %591 = vmatpush1.msra.mxu0 0.0
      %592 = vmatprep.subr.mxu0 0.0
      %593 = vmatpush1.msra.mxu0 0.0
      %594 = vmatprep.subr.mxu0 0.0
      %595 = vmatpush1.msra.mxu0 0.0
      %596 = vmatprep.subr.mxu0 0.0
      %597 = vmatpush1.msra.mxu0 0.0
      %598 = vmatprep.subr.mxu0 0.0
      %599 = vmatpush1.msra.mxu0 0.0
      %600 = vmatprep.mubr.f32.mxu0 0.0
      %601 = vmatmul.mubr.f32.gmra.mrb[0].mxu0 %v531
      %v602 = vpop.f32.mrb[0].mxu0
      %v603 = vadd.f32 0.0, %v602
      %v604 = vpop.f32.mrb[0].mxu0
      %605 = vmatprep.mubr.f32.mxu0 0.0
      %606 = vmatmul.mubr.f32.gmra.mrb[0].mxu0 %v534
      %v607 = vpop.f32.mrb[0].mxu0
      %v608 = vadd.f32 0.0, %v607
      %v609 = vpop.f32.mrb[0].mxu0
      %610 = vdwg.mxu0
      %v611 = vrsqrt.pop %v520
      %v612 = vmul.f32 %v520, %v611
      %vm613 = vcmp.eq.f32.partialorder %v520, inf
      %v614 = vsel %vm613, %v520, %v612
      %vm615 = vcmp.eq.f32.partialorder %v520, 0.0
      %v616 = vand.u32 %v520, 2147483648
      %v617 = vsel %vm615, %v616, %v614
      %v618 = vrsqrt.pop %v525
      %v619 = vmul.f32 %v525, %v618
      %vm620 = vcmp.eq.f32.partialorder %v525, inf
      %v621 = vsel %vm620, %v525, %v619
      %vm622 = vcmp.eq.f32.partialorder %v525, 0.0
      %v623 = vand.u32 %v525, 2147483648
      %v624 = vsel %vm622, %v623, %v621
      %v625 = vrsqrt.pop %v603
      %v626 = vrsqrt.pop %v608
      %v627 = vmul.f32 %v617, %v625
      %v628 = vmul.f32 %v624, %v626
      %vm629 = vcmask 15360
      %v631 = vsel %vm629, %v627, 0
      %v634 = vsel %vm629, %v628, 0
      %vm636 = vcmask 1041408
      %v638 = vsel %vm636, %v443, 0
      %640 = vmatprep.subr.mxu0 0.0
      %641 = vmatpush1.msra.mxu0 %v638
      %642 = vmatprep.subr.mxu0 0.0
      %643 = vmatpush1.msra.mxu0 0.0
      %644 = vmatprep.subr.mxu0 0.0
      %645 = vmatpush1.msra.mxu0 0.0
      %646 = vmatprep.subr.mxu0 0.0
      %647 = vmatpush1.msra.mxu0 0.0
      %648 = vmatprep.subr.mxu0 0.0
      %649 = vmatpush1.msra.mxu0 0.0
      %650 = vmatprep.subr.mxu0 0.0
      %651 = vmatpush1.msra.mxu0 0.0
      %652 = vmatprep.subr.mxu0 0.0
      %653 = vmatpush1.msra.mxu0 0.0
      %654 = vmatprep.subr.mxu0 0.0
      %655 = vmatpush1.msra.mxu0 0.0
      %656 = vmatprep.subr.mxu0 0.0
      %657 = vmatpush1.msra.mxu0 0.0
      %658 = vmatprep.subr.mxu0 0.0
      %659 = vmatpush1.msra.mxu0 0.0
      %660 = vmatprep.subr.mxu0 0.0
      %661 = vmatpush1.msra.mxu0 0.0
      %662 = vmatprep.subr.mxu0 0.0
      %663 = vmatpush1.msra.mxu0 0.0
      %664 = vmatprep.subr.mxu0 0.0
      %665 = vmatpush1.msra.mxu0 0.0
      %666 = vmatprep.subr.mxu0 0.0
      %667 = vmatpush1.msra.mxu0 0.0
      %668 = vmatprep.subr.mxu0 0.0
      %669 = vmatpush1.msra.mxu0 0.0
      %670 = vmatprep.subr.mxu0 0.0
      %671 = vmatpush1.msra.mxu0 0.0
      %672 = vmatprep.subr.mxu0 0.0
      %673 = vmatpush1.msra.mxu0 0.0
      %674 = vmatprep.subr.mxu0 0.0
      %675 = vmatpush1.msra.mxu0 0.0
      %676 = vmatprep.subr.mxu0 0.0
      %677 = vmatpush1.msra.mxu0 0.0
      %678 = vmatprep.subr.mxu0 0.0
      %679 = vmatpush1.msra.mxu0 0.0
      %680 = vmatprep.subr.mxu0 0.0
      %681 = vmatpush1.msra.mxu0 0.0
      %682 = vmatprep.subr.mxu0 0.0
      %683 = vmatpush1.msra.mxu0 0.0
      %684 = vmatprep.subr.mxu0 0.0
      %685 = vmatpush1.msra.mxu0 0.0
      %686 = vmatprep.subr.mxu0 0.0
      %687 = vmatpush1.msra.mxu0 0.0
      %688 = vmatprep.subr.mxu0 0.0
      %689 = vmatpush1.msra.mxu0 0.0
      %690 = vmatprep.subr.mxu0 0.0
      %691 = vmatpush1.msra.mxu0 0.0
      %692 = vmatprep.subr.mxu0 0.0
      %693 = vmatpush1.msra.mxu0 0.0
      %694 = vmatprep.subr.mxu0 0.0
      %695 = vmatpush1.msra.mxu0 0.0
      %696 = vmatprep.subr.mxu0 0.0
      %697 = vmatpush1.msra.mxu0 0.0
      %698 = vmatprep.subr.mxu0 0.0
      %699 = vmatpush1.msra.mxu0 0.0
      %700 = vmatprep.subr.mxu0 0.0
      %701 = vmatpush1.msra.mxu0 0.0
      %702 = vmatprep.subr.mxu0 0.0
      %703 = vmatpush1.msra.mxu0 0.0
      %704 = vmatprep.mubr.f32.mxu0 0.0
      %705 = vmatmul.mubr.f32.gmra.mrb[0].mxu0 %v631
      %v706 = vpop.f32.mrb[0].mxu0
      %v707 = vadd.f32 0.0, %v706
      %v708 = vpop.f32.mrb[0].mxu0
      %709 = vmatprep.mubr.f32.mxu0 0.0
      %710 = vmatmul.mubr.f32.gmra.mrb[0].mxu0 %v634
      %v711 = vpop.f32.mrb[0].mxu0
      %v712 = vadd.f32 0.0, %v711
      %v713 = vpop.f32.mrb[0].mxu0
      %714 = vdwg.mxu0
      %v715 = vmul.f32 %v707, %v444
      %v716 = vmul.f32 %v712, %v445
      %s717 = smul.u32 %s21, 16
      %v718 = vlaneseq
      %v719 = vshrl.u32 %v718, 7
      %v720 = vadd.s32 %v719, 8
      %v721 = vstv %s717
      %v722 = vadd.s32 %v721, %v719
      %v723 = vadd.s32 %v721, %v720
      %vm724 = vcmp.lt.s32.totalorder %v722, 44
      %vm725 = vcmp.lt.s32.totalorder %v723, 44
      %v726 = vsel %vm724, 1, 0
      %v727 = vsel %vm725, 1, 0
      %vm728 = vcmp.eq.s32.totalorder %v726, 1
      %vm729 = vcmp.eq.s32.totalorder %v727, 1
      %v730 = vsel %vm728, %v715, 0.0
      %v731 = vsel %vm729, %v716, 0.0
      %v732 = vsel %vm728, %v420, 0.0
      %v733 = vsel %vm729, %v421, 0.0
      %734 = vxpose.xlu0.b32.start [1/16] %v730, 128
      %735 = vxpose.xlu0.b32.cont [2/16] %v731, 128
      %736 = vxpose.xlu0.b32.cont [3/16] 0.0, 128
      %737 = vxpose.xlu0.b32.cont [4/16] 0.0, 128
      %738 = vxpose.xlu0.b32.cont [5/16] 0.0, 128
      %739 = vxpose.xlu0.b32.cont [6/16] 0.0, 128
      %740 = vxpose.xlu0.b32.cont [7/16] 0.0, 128
      %741 = vxpose.xlu0.b32.cont [8/16] 0.0, 128
      %742 = vxpose.xlu0.b32.cont [9/16] 0.0, 128
      %743 = vxpose.xlu0.b32.cont [10/16] 0.0, 128
      %744 = vxpose.xlu0.b32.cont [11/16] 0.0, 128
      %745 = vxpose.xlu0.b32.cont [12/16] 0.0, 128
      %746 = vxpose.xlu0.b32.cont [13/16] 0.0, 128
      %747 = vxpose.xlu0.b32.cont [14/16] 0.0, 128
      %748 = vxpose.xlu0.b32.cont [15/16] 0.0, 128
      %749 = vxpose.xlu0.b32.end [16/16] 0.0, 128
      %v750 = vpop.trf.xlu0
      %v751 = vpop.trf.xlu0
      %v752 = vpop.trf.xlu0
      %v753 = vpop.trf.xlu0
      %v754 = vpop.trf.xlu0
      %v755 = vpop.trf.xlu0
      %v756 = vpop.trf.xlu0
      %v757 = vpop.trf.xlu0
      %v758 = vpop.trf.xlu0
      %v759 = vpop.trf.xlu0
      %v760 = vpop.trf.xlu0
      %v761 = vpop.trf.xlu0
      %v762 = vpop.trf.xlu0
      %v763 = vpop.trf.xlu0
      %v764 = vpop.trf.xlu0
      %v765 = vpop.trf.xlu0
      %768 = vrot.lane.b32.xlu0 %v732, 64
      %v769 = vpop.permute.xlu0 %768
      %770 = vrot.lane.b32.xlu0 %v733, 64
      %v771 = vpop.permute.xlu0 %770
      %vm774 = vcmask 130048
      %v776 = vsel %vm774, %v750, 0
      %v779 = vsel %vm774, %v751, 0
      %v782 = vsel %vm774, %v752, 0
      %v785 = vsel %vm774, %v753, 0
      %v788 = vsel %vm774, %v754, 0
      %v791 = vsel %vm774, %v755, 0
      %v794 = vsel %vm774, %v756, 0
      %v797 = vsel %vm774, %v757, 0
      %799 = vmatprep.subr.mxu0 0.0
      %800 = vmatpush1.msra.mxu0 %v769
      %801 = vmatprep.subr.mxu0 0.0
      %802 = vmatpush1.msra.mxu0 %v771
      %803 = vmatprep.subr.mxu0 0.0
      %804 = vmatpush1.msra.mxu0 0.0
      %805 = vmatprep.subr.mxu0 0.0
      %806 = vmatpush1.msra.mxu0 0.0
      %807 = vmatprep.subr.mxu0 0.0
      %808 = vmatpush1.msra.mxu0 0.0
      %809 = vmatprep.subr.mxu0 0.0
      %810 = vmatpush1.msra.mxu0 0.0
      %811 = vmatprep.subr.mxu0 0.0
      %812 = vmatpush1.msra.mxu0 0.0
      %813 = vmatprep.subr.mxu0 0.0
      %814 = vmatpush1.msra.mxu0 0.0
      %815 = vmatprep.subr.mxu0 0.0
      %816 = vmatpush1.msra.mxu0 0.0
      %817 = vmatprep.subr.mxu0 0.0
      %818 = vmatpush1.msra.mxu0 0.0
      %819 = vmatprep.subr.mxu0 0.0
      %820 = vmatpush1.msra.mxu0 0.0
      %821 = vmatprep.subr.mxu0 0.0
      %822 = vmatpush1.msra.mxu0 0.0
      %823 = vmatprep.subr.mxu0 0.0
      %824 = vmatpush1.msra.mxu0 0.0
      %825 = vmatprep.subr.mxu0 0.0
      %826 = vmatpush1.msra.mxu0 0.0
      %827 = vmatprep.subr.mxu0 0.0
      %828 = vmatpush1.msra.mxu0 0.0
      %829 = vmatprep.subr.mxu0 0.0
      %830 = vmatpush1.msra.mxu0 0.0
      %831 = vmatprep.subr.mxu0 0.0
      %832 = vmatpush1.msra.mxu0 0.0
      %833 = vmatprep.subr.mxu0 0.0
      %834 = vmatpush1.msra.mxu0 0.0
      %835 = vmatprep.subr.mxu0 0.0
      %836 = vmatpush1.msra.mxu0 0.0
      %837 = vmatprep.subr.mxu0 0.0
      %838 = vmatpush1.msra.mxu0 0.0
      %839 = vmatprep.subr.mxu0 0.0
      %840 = vmatpush1.msra.mxu0 0.0
      %841 = vmatprep.subr.mxu0 0.0
      %842 = vmatpush1.msra.mxu0 0.0
      %843 = vmatprep.subr.mxu0 0.0
      %844 = vmatpush1.msra.mxu0 0.0
      %845 = vmatprep.subr.mxu0 0.0
      %846 = vmatpush1.msra.mxu0 0.0
      %847 = vmatprep.subr.mxu0 0.0
      %848 = vmatpush1.msra.mxu0 0.0
      %849 = vmatprep.subr.mxu0 0.0
      %850 = vmatpush1.msra.mxu0 0.0
      %851 = vmatprep.subr.mxu0 0.0
      %852 = vmatpush1.msra.mxu0 0.0
      %853 = vmatprep.subr.mxu0 0.0
      %854 = vmatpush1.msra.mxu0 0.0
      %855 = vmatprep.subr.mxu0 0.0
      %856 = vmatpush1.msra.mxu0 0.0
      %857 = vmatprep.subr.mxu0 0.0
      %858 = vmatpush1.msra.mxu0 0.0
      %859 = vmatprep.subr.mxu0 0.0
      %860 = vmatpush1.msra.mxu0 0.0
      %861 = vmatprep.subr.mxu0 0.0
      %862 = vmatpush1.msra.mxu0 0.0
      %863 = vmatprep.mubr.f32.mxu0 0.0
      %864 = vmatmul.mubr.f32.gmra.mrb[0].mxu0 %v776
      %v865 = vpop.f32.mrb[0].mxu0
      %v866 = vadd.f32 0.0, %v865
      %v867 = vpop.f32.mrb[0].mxu0
      %868 = vmatprep.mubr.f32.mxu0 0.0
      %869 = vmatmul.mubr.f32.gmra.mrb[0].mxu0 %v779
      %v870 = vpop.f32.mrb[0].mxu0
      %v871 = vadd.f32 0.0, %v870
      %v872 = vpop.f32.mrb[0].mxu0
      %873 = vmatprep.mubr.f32.mxu0 0.0
      %874 = vmatmul.mubr.f32.gmra.mrb[0].mxu0 %v782
      %v875 = vpop.f32.mrb[0].mxu0
      %v876 = vadd.f32 0.0, %v875
      %v877 = vpop.f32.mrb[0].mxu0
      %878 = vmatprep.mubr.f32.mxu0 0.0
      %879 = vmatmul.mubr.f32.gmra.mrb[0].mxu0 %v785
      %v880 = vpop.f32.mrb[0].mxu0
      %v881 = vadd.f32 0.0, %v880
      %v882 = vpop.f32.mrb[0].mxu0
      %883 = vmatprep.mubr.f32.mxu0 0.0
      %884 = vmatmul.mubr.f32.gmra.mrb[0].mxu0 %v788
      %v885 = vpop.f32.mrb[0].mxu0
      %v886 = vadd.f32 0.0, %v885
      %v887 = vpop.f32.mrb[0].mxu0
      %888 = vmatprep.mubr.f32.mxu0 0.0
      %889 = vmatmul.mubr.f32.gmra.mrb[0].mxu0 %v791
      %v890 = vpop.f32.mrb[0].mxu0
      %v891 = vadd.f32 0.0, %v890
      %v892 = vpop.f32.mrb[0].mxu0
      %893 = vmatprep.mubr.f32.mxu0 0.0
      %894 = vmatmul.mubr.f32.gmra.mrb[0].mxu0 %v794
      %v895 = vpop.f32.mrb[0].mxu0
      %v896 = vadd.f32 0.0, %v895
      %v897 = vpop.f32.mrb[0].mxu0
      %898 = vmatprep.mubr.f32.mxu0 0.0
      %899 = vmatmul.mubr.f32.gmra.mrb[0].mxu0 %v797
      %v900 = vpop.f32.mrb[0].mxu0
      %v901 = vadd.f32 0.0, %v900
      %v902 = vpop.f32.mrb[0].mxu0
      %903 = vdwg.mxu0
      %v904 = vsel %vm446, %v730, 0.0
      %v905 = vsel %vm446, %v731, 0.0
      %v906 = vadd.f32 %v904, %v905
      %v907 = vrot.slane %v906, 4
      %v908 = vadd.f32 %v906, %v907
      %v909 = vrot.slane %v908, 2
      %v910 = vadd.f32 %v908, %v909
      %v911 = vrot.slane %v910, 1
      %v912 = vadd.f32 %v910, %v911
      %p913 = scmp.eq.s32.totalorder %s21, 0
      // Predicated region
      $region49: #{_lambda_.11} parent=47 // pred_check
        %p914 = pneg %p913
      $region50: #{_lambda_.11} parent=47 // pred_check_branch
        %916 = sbr.rel (%p914) target = $region52
      $region51: #{_lambda_.11} parent=47 // pred_region
        %917 = vst.msk [vmem:[%s7] sm:$0xff] %vm446, 0.0
        %918 = vst.msk [vmem:[%s7 + $0x8] sm:$0xff] %vm446, 0.0
        %919 = vst.msk [vmem:[%s7 + $0x10] sm:$0xff] %vm446, 0.0
        %920 = vst.msk [vmem:[%s7 + $0x18] sm:$0xff] %vm446, 0.0
        %921 = vst.msk [vmem:[%s7 + $0x20] sm:$0xff] %vm446, 0.0
        %922 = vst.msk [vmem:[%s7 + $0x28] sm:$0xff] %vm446, 0.0
        %923 = vst.msk [vmem:[%s7 + $0x30] sm:$0xff] %vm446, 0.0
        %924 = vst.msk [vmem:[%s7 + $0x38] sm:$0xff] %vm446, 0.0
        %vm925 = vcmask 516096
        %926 = vst.msk [vmem:[%s8] sm:$0x1] %vm925, 0.0
      $region52: #{_lambda_.11} parent=47 // pred_fallthru
        _
      %v927 = vld [vmem:[%s7] sm:$0xff]
      %v928 = vld [vmem:[%s7 + $0x8] sm:$0xff]
      %v929 = vld [vmem:[%s7 + $0x10] sm:$0xff]
      %v930 = vld [vmem:[%s7 + $0x18] sm:$0xff]
      %v931 = vld [vmem:[%s7 + $0x20] sm:$0xff]
      %v932 = vld [vmem:[%s7 + $0x28] sm:$0xff]
      %v933 = vld [vmem:[%s7 + $0x30] sm:$0xff]
      %v934 = vld [vmem:[%s7 + $0x38] sm:$0xff]
      %v935 = vadd.f32 %v927, %v866
      %v936 = vadd.f32 %v928, %v871
      %v937 = vadd.f32 %v929, %v876
      %v938 = vadd.f32 %v930, %v881
      %v939 = vadd.f32 %v931, %v886
      %v940 = vadd.f32 %v932, %v891
      %v941 = vadd.f32 %v933, %v896
      %v942 = vadd.f32 %v934, %v901
      %943 = vst.msk [vmem:[%s7] sm:$0xff] %vm446, %v935
      %944 = vst.msk [vmem:[%s7 + $0x8] sm:$0xff] %vm446, %v936
      %945 = vst.msk [vmem:[%s7 + $0x10] sm:$0xff] %vm446, %v937
      %946 = vst.msk [vmem:[%s7 + $0x18] sm:$0xff] %vm446, %v938
      %947 = vst.msk [vmem:[%s7 + $0x20] sm:$0xff] %vm446, %v939
      %948 = vst.msk [vmem:[%s7 + $0x28] sm:$0xff] %vm446, %v940
      %949 = vst.msk [vmem:[%s7 + $0x30] sm:$0xff] %vm446, %v941
      %950 = vst.msk [vmem:[%s7 + $0x38] sm:$0xff] %vm446, %v942
      %v951 = vld [vmem:[%s8] sm:$0x1]
      %v952 = vadd.f32 %v951, %v912
      %vm953 = vcmask 516096
      %954 = vst.msk [vmem:[%s8] sm:$0x1] %vm953, %v952
      %p955 = scmp.eq.s32.totalorder %s21, 2
      // Predicated region
      $region53: #{_lambda_.11} parent=47 // pred_check
        %p956 = pneg %p955
      $region54: #{_lambda_.11} parent=47 // pred_check_branch
        %958 = sbr.rel (%p956) target = $region56
      $region55: #{_lambda_.11} parent=47 // pred_region
        %v959 = vld [vmem:[%s5] sm:$0xff]
        %v960 = vld [vmem:[%s5 + $0x8] sm:$0xff]
        %v961 = vld [vmem:[%s5 + $0x10] sm:$0xff]
        %v962 = vld [vmem:[%s5 + $0x18] sm:$0xff]
        %v963 = vld [vmem:[%s5 + $0x20] sm:$0xff]
        %v964 = vld [vmem:[%s5 + $0x28] sm:$0xff]
        %v965 = vld [vmem:[%s5 + $0x30] sm:$0xff]
        %v966 = vld [vmem:[%s5 + $0x38] sm:$0xff]
        %v967 = vld [vmem:[%s6] sm:$0x3]
        %v969 = vsel %vm629, %v959, 0
        %v972 = vsel %vm629, %v960, 0
        %v975 = vsel %vm629, %v961, 0
        %v978 = vsel %vm629, %v962, 0
        %v981 = vsel %vm629, %v963, 0
        %v984 = vsel %vm629, %v964, 0
        %v987 = vsel %vm629, %v965, 0
        %v990 = vsel %vm629, %v966, 0
        %v993 = vsel %vm636, %v967, 0
        %995 = vmatprep.subr.mxu0 0.0
        %996 = vmatpush1.msra.mxu0 %v993
        %997 = vmatprep.subr.mxu0 0.0
        %998 = vmatpush1.msra.mxu0 0.0
        %999 = vmatprep.subr.mxu0 0.0
        %1000 = vmatpush1.msra.mxu0 0.0
        %1001 = vmatprep.subr.mxu0 0.0
        %1002 = vmatpush1.msra.mxu0 0.0
        %1003 = vmatprep.subr.mxu0 0.0
        %1004 = vmatpush1.msra.mxu0 0.0
        %1005 = vmatprep.subr.mxu0 0.0
        %1006 = vmatpush1.msra.mxu0 0.0
        %1007 = vmatprep.subr.mxu0 0.0
        %1008 = vmatpush1.msra.mxu0 0.0
        %1009 = vmatprep.subr.mxu0 0.0
        %1010 = vmatpush1.msra.mxu0 0.0
        %1011 = vmatprep.subr.mxu0 0.0
        %1012 = vmatpush1.msra.mxu0 0.0
        %1013 = vmatprep.subr.mxu0 0.0
        %1014 = vmatpush1.msra.mxu0 0.0
        %1015 = vmatprep.subr.mxu0 0.0
        %1016 = vmatpush1.msra.mxu0 0.0
        %1017 = vmatprep.subr.mxu0 0.0
        %1018 = vmatpush1.msra.mxu0 0.0
        %1019 = vmatprep.subr.mxu0 0.0
        %1020 = vmatpush1.msra.mxu0 0.0
        %1021 = vmatprep.subr.mxu0 0.0
        %1022 = vmatpush1.msra.mxu0 0.0
        %1023 = vmatprep.subr.mxu0 0.0
        %1024 = vmatpush1.msra.mxu0 0.0
        %1025 = vmatprep.subr.mxu0 0.0
        %1026 = vmatpush1.msra.mxu0 0.0
        %1027 = vmatprep.subr.mxu0 0.0
        %1028 = vmatpush1.msra.mxu0 0.0
        %1029 = vmatprep.subr.mxu0 0.0
        %1030 = vmatpush1.msra.mxu0 0.0
        %1031 = vmatprep.subr.mxu0 0.0
        %1032 = vmatpush1.msra.mxu0 0.0
        %1033 = vmatprep.subr.mxu0 0.0
        %1034 = vmatpush1.msra.mxu0 0.0
        %1035 = vmatprep.subr.mxu0 0.0
        %1036 = vmatpush1.msra.mxu0 0.0
        %1037 = vmatprep.subr.mxu0 0.0
        %1038 = vmatpush1.msra.mxu0 0.0
        %1039 = vmatprep.subr.mxu0 0.0
        %1040 = vmatpush1.msra.mxu0 0.0
        %1041 = vmatprep.subr.mxu0 0.0
        %1042 = vmatpush1.msra.mxu0 0.0
        %1043 = vmatprep.subr.mxu0 0.0
        %1044 = vmatpush1.msra.mxu0 0.0
        %1045 = vmatprep.subr.mxu0 0.0
        %1046 = vmatpush1.msra.mxu0 0.0
        %1047 = vmatprep.subr.mxu0 0.0
        %1048 = vmatpush1.msra.mxu0 0.0
        %1049 = vmatprep.subr.mxu0 0.0
        %1050 = vmatpush1.msra.mxu0 0.0
        %1051 = vmatprep.subr.mxu0 0.0
        %1052 = vmatpush1.msra.mxu0 0.0
        %1053 = vmatprep.subr.mxu0 0.0
        %1054 = vmatpush1.msra.mxu0 0.0
        %1055 = vmatprep.subr.mxu0 0.0
        %1056 = vmatpush1.msra.mxu0 0.0
        %1057 = vmatprep.subr.mxu0 0.0
        %1058 = vmatpush1.msra.mxu0 0.0
        %1059 = vmatprep.mubr.f32.mxu0 0.0
        %1060 = vmatmul.mubr.f32.gmra.mrb[0].mxu0 %v969
        %v1061 = vpop.f32.mrb[0].mxu0
        %v1062 = vadd.f32 0.0, %v1061
        %v1063 = vpop.f32.mrb[0].mxu0
        %1064 = vmatprep.mubr.f32.mxu0 0.0
        %1065 = vmatmul.mubr.f32.gmra.mrb[0].mxu0 %v972
        %v1066 = vpop.f32.mrb[0].mxu0
        %v1067 = vadd.f32 0.0, %v1066
        %v1068 = vpop.f32.mrb[0].mxu0
        %1069 = vmatprep.mubr.f32.mxu0 0.0
        %1070 = vmatmul.mubr.f32.gmra.mrb[0].mxu0 %v975
        %v1071 = vpop.f32.mrb[0].mxu0
        %v1072 = vadd.f32 0.0, %v1071
        %v1073 = vpop.f32.mrb[0].mxu0
        %1074 = vmatprep.mubr.f32.mxu0 0.0
        %1075 = vmatmul.mubr.f32.gmra.mrb[0].mxu0 %v978
        %v1076 = vpop.f32.mrb[0].mxu0
        %v1077 = vadd.f32 0.0, %v1076
        %v1078 = vpop.f32.mrb[0].mxu0
        %1079 = vmatprep.mubr.f32.mxu0 0.0
        %1080 = vmatmul.mubr.f32.gmra.mrb[0].mxu0 %v981
        %v1081 = vpop.f32.mrb[0].mxu0
        %v1082 = vadd.f32 0.0, %v1081
        %v1083 = vpop.f32.mrb[0].mxu0
        %1084 = vmatprep.mubr.f32.mxu0 0.0
        %1085 = vmatmul.mubr.f32.gmra.mrb[0].mxu0 %v984
        %v1086 = vpop.f32.mrb[0].mxu0
        %v1087 = vadd.f32 0.0, %v1086
        %v1088 = vpop.f32.mrb[0].mxu0
        %1089 = vmatprep.mubr.f32.mxu0 0.0
        %1090 = vmatmul.mubr.f32.gmra.mrb[0].mxu0 %v987
        %v1091 = vpop.f32.mrb[0].mxu0
        %v1092 = vadd.f32 0.0, %v1091
        %v1093 = vpop.f32.mrb[0].mxu0
        %1094 = vmatprep.mubr.f32.mxu0 0.0
        %1095 = vmatmul.mubr.f32.gmra.mrb[0].mxu0 %v990
        %v1096 = vpop.f32.mrb[0].mxu0
        %v1097 = vadd.f32 0.0, %v1096
        %v1098 = vpop.f32.mrb[0].mxu0
        %1099 = vdwg.mxu0
        %v1100 = vld [vmem:[%s7] sm:$0xff]
        %v1101 = vld [vmem:[%s7 + $0x8] sm:$0xff]
        %v1102 = vld [vmem:[%s7 + $0x10] sm:$0xff]
        %v1103 = vld [vmem:[%s7 + $0x18] sm:$0xff]
        %v1104 = vld [vmem:[%s7 + $0x20] sm:$0xff]
        %v1105 = vld [vmem:[%s7 + $0x28] sm:$0xff]
        %v1106 = vld [vmem:[%s7 + $0x30] sm:$0xff]
        %v1107 = vld [vmem:[%s7 + $0x38] sm:$0xff]
        %v1108 = vmul.f32 %v1100, %v1062
        %v1109 = vmul.f32 %v1101, %v1067
        %v1110 = vmul.f32 %v1102, %v1072
        %v1111 = vmul.f32 %v1103, %v1077
        %v1112 = vmul.f32 %v1104, %v1082
        %v1113 = vmul.f32 %v1105, %v1087
        %v1114 = vmul.f32 %v1106, %v1092
        %v1115 = vmul.f32 %v1107, %v1097
        %1116 = vst.msk [vmem:[%s7] sm:$0xff] %vm446, %v1108
        %1117 = vst.msk [vmem:[%s7 + $0x8] sm:$0xff] %vm446, %v1109
        %1118 = vst.msk [vmem:[%s7 + $0x10] sm:$0xff] %vm446, %v1110
        %1119 = vst.msk [vmem:[%s7 + $0x18] sm:$0xff] %vm446, %v1111
        %1120 = vst.msk [vmem:[%s7 + $0x20] sm:$0xff] %vm446, %v1112
        %1121 = vst.msk [vmem:[%s7 + $0x28] sm:$0xff] %vm446, %v1113
        %1122 = vst.msk [vmem:[%s7 + $0x30] sm:$0xff] %vm446, %v1114
        %1123 = vst.msk [vmem:[%s7 + $0x38] sm:$0xff] %vm446, %v1115
      $region56: #{_lambda_.11} parent=47 // pred_fallthru
        _
      // Predicated region
      $region57: #{_lambda_.11} parent=47 // pred_check
        %p1124 = pneg %p186
      $region58: #{_lambda_.11} parent=47 // pred_check_branch
        %1126 = sbr.rel (%p1124) target = $region60
      $region59: #{_lambda_.11} parent=47 // pred_region
        _
      $region60: #{_lambda_.11} parent=47 // pred_fallthru
        _
      // Predicated region
      $region61: #{_lambda_.11} parent=47 // pred_check
        %p1127 = pneg %p207
      $region62: #{_lambda_.11} parent=47 // pred_check_branch
        %1129 = sbr.rel (%p1127) target = $region64
      $region63: #{_lambda_.11} parent=47 // pred_region
        _
      $region64: #{_lambda_.11} parent=47 // pred_fallthru
        _
      // Predicated region
      $region65: #{_lambda_.11} parent=47 // pred_check
        %p1130 = pneg %p186
      $region66: #{_lambda_.11} parent=47 // pred_check_branch
        %1132 = sbr.rel (%p1130) target = $region68
      $region67: #{_lambda_.11} parent=47 // pred_region
        _
      $region68: #{_lambda_.11} parent=47 // pred_fallthru
        _
      // Predicated region
      $region69: #{_lambda_.11} parent=47 // pred_check
        %p1133 = pneg %p207
      $region70: #{_lambda_.11} parent=47 // pred_check_branch
        %1135 = sbr.rel (%p1133) target = $region72
      $region71: #{_lambda_.11} parent=47 // pred_region
        _
      $region72: #{_lambda_.11} parent=47 // pred_fallthru
        _
    $region48: #{_lambda_.11} parent=5 // pred_fallthru
      _
    %p1136 = scmp.le.s32.totalorder 2, %s16
    // Predicated region
    $region73: #{_lambda_.11} parent=5 // pred_check
      %p1137 = pneg %p1136
    $region74: #{_lambda_.11} parent=5 // pred_check_branch
      %1139 = sbr.rel (%p1137) target = $region76
    $region75: #{_lambda_.11} parent=5 // pred_region
      %s1140 = ssub.s32 %s16, 2
    $region76: #{_lambda_.11} parent=5 // pred_fallthru
      _
  $region6: #{_lambda_.11} parent=0 // loop_footer
    %s20 = sadd.s32 1, %s16
  $region7: #{_lambda_.11} parent=0 // loop_footer_branch
    %15 = sbr.rel target = $region3
  $region8: #{_lambda_.11} parent=0 // loop_exit
    _

// kernel: _lambda_.16
$region0: #{_lambda_.16}
  #allocation0 [shape = 'u32[]', space=smem, size = 0x4, offset = 0x4, fixed_abs, tag = 'smem constant byte address 0x4 - core index']
  #allocation1 [shape = 'u32[144,128]{1,0:T(1,128)}', space=vmem, size = 0x12000, scoped, tag = 'internal scratch']
  #allocation2 [shape = 'f32[1]{0:T(128)S(6)}', space=smem, size = 0x200, scoped, tag = 'scoped memory for _lambda_.16']
  %s0 = inlined_call_operand.<no memory space> [shape: f32[1], index: 0, kind: input, shape index: {}]
  %s1 = inlined_call_operand.vmem [shape: f32[48,32], index: 1, kind: input, shape index: {}]
  %s2 = inlined_call_operand.vmem [shape: f32[48,32], index: 2, kind: input, shape index: {}]
  %s3 = inlined_call_operand.vmem [shape: f32[64,64], index: 3, kind: input, shape index: {}]
  %s4 = inlined_call_operand.vmem [shape: f32[1,64], index: 4, kind: input, shape index: {}]
  %s5 = inlined_call_operand.vmem [shape: f32[1,128], index: 5, kind: input, shape index: {}]
  %s6 = inlined_call_operand.vmem [shape: f32[32,128], index: 6, kind: input, shape index: {}]
  %s7 = inlined_call_operand.vmem [shape: f32[1,128], index: 7, kind: input, shape index: {}]
  %s8 = inlined_call_operand.vmem [shape: f32[32,32], index: 8, kind: input, shape index: {}]
  %s9 = inlined_call_operand.vmem [shape: f32[1,32], index: 9, kind: input, shape index: {}]
  %s10 = inlined_call_operand.vmem [shape: f32[64,2], index: 10, kind: input, shape index: {}]
  %s11 = inlined_call_operand.vmem [shape: f32[2,64], index: 11, kind: input, shape index: {}]
  %s12 = inlined_call_operand.vmem [shape: f32[64,32], index: 12, kind: input, shape index: {}]
  %s13 = inlined_call_operand.vmem [shape: f32[48,32], index: 13, kind: output, shape index: {}]
  %s14 = sld [smem:[#allocation0]]
  $region85: #{_lambda_.16} parent=0
    _
  %s16 = ssub.s32 1, %s14
  %s17 = scalar_select 0, %s16, %s14
  %18 = sst [smem:[#allocation2]] %s0
  loop: start=0, step=1, limit=5
  $region2: #{_lambda_.16} parent=0 // loop_pre_header
    _
  $region3: #{_lambda_.16} parent=0 // loop_header
    %s20 = sphi 0, %s24
    %p21 = scmp.ge.s32.totalorder %s20, 5
    %s28 = sphi 0, %s28
    %s30 = sphi 0, %s28
    %s31 = sphi 0, %s30
    %s45 = sphi 0, %s31
    %s51 = sphi 0, %s53
    %s54 = sphi 0, %s51
    %s55 = sphi 0, %s54
    %s71 = sphi 0, %s55
    %s77 = sphi 0, %s79
    %s80 = sphi 0, %s77
    %s81 = sphi 0, %s80
    %s97 = sphi 0, %s81
    %s101 = sphi 0, %s101
    %s103 = sphi 0, %s101
    %s104 = sphi 0, %s103
    %s118 = sphi 0, %s104
    %s122 = sphi 0, %s122
    %s124 = sphi 0, %s122
    %s125 = sphi 0, %s124
    %s139 = sphi 0, %s125
    %s143 = sphi 0, %s143
    %s145 = sphi 0, %s143
    %s146 = sphi 0, %s145
    %s160 = sphi 0, %s146
    %s164 = sphi 0, %s164
    %s166 = sphi 0, %s164
    %s167 = sphi 0, %s166
    %s181 = sphi 0, %s167
    %s185 = sphi 0, %s185
    %s187 = sphi 0, %s185
    %s188 = sphi 0, %s187
    %s202 = sphi 0, %s188
    %s206 = sphi 0, %s206
    %s208 = sphi 0, %s206
    %s209 = sphi 0, %s208
    %s223 = sphi 0, %s209
    %s227 = sphi 0, %s227
    %s229 = sphi 0, %s227
    %s230 = sphi 0, %s229
    %s244 = sphi 0, %s230
    %s248 = sphi 0, %s248
    %s250 = sphi 0, %s248
    %s251 = sphi 0, %s250
    %s265 = sphi 0, %s251
    %s269 = sphi 0, %s269
    %s271 = sphi 0, %s269
    %s272 = sphi 0, %s271
    %s286 = sphi 0, %s272
    %s290 = sphi 0, %s290
    %s292 = sphi 0, %s290
    %s293 = sphi 0, %s292
    %s307 = sphi 0, %s293
    %s313 = sphi 0, %s315
    %s316 = sphi 0, %s313
    %s317 = sphi 0, %s316
    %s333 = sphi 0, %s317
  $region4: #{_lambda_.16} parent=0 // loop_header_branch
    %23 = sbr.rel (%p21) target = $region8
  $region5: #{_lambda_.16} parent=0 // loop_body
    %s25 = ssub.s32 %s20, 1
    %s26 = ssub.s32 %s20, 2
    %s27 = sadd.s32 %s20, 1
    %s29 = sadd.s32 %s28, 1
    %p32 = scmp.eq.s32.totalorder %s20, 2
    %p33 = scmp.ne.s32.totalorder %s28, %s30
    %p34 = scmp.eq.s32.totalorder %s20, 0
    %p35 = por %p33, %p34
    %p36 = scmp.ne.s32.totalorder %s28, %s30
    %p37 = scmp.eq.s32.totalorder %s25, 2
    %p38 = por %p36, %p37
    %p39 = scmp.ne.s32.totalorder %s30, %s31
    %p40 = scmp.eq.s32.totalorder %s25, 0
    %p41 = por %p39, %p40
    %p42 = scmp.ne.s32.totalorder %s30, %s31
    %p43 = scmp.eq.s32.totalorder %s26, 2
    %p44 = por %p42, %p43
    %p46 = scmp.ne.s32.totalorder %s31, %s45
    %p47 = scmp.eq.s32.totalorder %s26, 0
    %p48 = por %p46, %p47
    %s49 = ssub.s32 %s20, %s27
    %p50 = scmp.eq.s32.totalorder %s49, 0
    %s52 = sadd.s32 %s51, 1
    %s53 = scalar_select %p50, %s51, %s52
    %p56 = pneg %p50
    %p57 = scmp.eq.s32.totalorder %s20, 2
    %p58 = por %p56, %p57
    %p59 = scmp.ne.s32.totalorder %s51, %s54
    %p60 = scmp.eq.s32.totalorder %s20, 0
    %p61 = por %p59, %p60
    %p62 = scmp.ne.s32.totalorder %s51, %s54
    %p63 = scmp.eq.s32.totalorder %s25, 2
    %p64 = por %p62, %p63
    %p65 = scmp.ne.s32.totalorder %s54, %s55
    %p66 = scmp.eq.s32.totalorder %s25, 0
    %p67 = por %p65, %p66
    %p68 = scmp.ne.s32.totalorder %s54, %s55
    %p69 = scmp.eq.s32.totalorder %s26, 2
    %p70 = por %p68, %p69
    %p72 = scmp.ne.s32.totalorder %s55, %s71
    %p73 = scmp.eq.s32.totalorder %s26, 0
    %p74 = por %p72, %p73
    %s75 = ssub.s32 %s20, %s27
    %p76 = scmp.eq.s32.totalorder %s75, 0
    %s78 = sadd.s32 %s77, 1
    %s79 = scalar_select %p76, %s77, %s78
    %p82 = pneg %p76
    %p83 = scmp.eq.s32.totalorder %s20, 2
    %p84 = por %p82, %p83
    %p85 = scmp.ne.s32.totalorder %s77, %s80
    %p86 = scmp.eq.s32.totalorder %s20, 0
    %p87 = por %p85, %p86
    %p88 = scmp.ne.s32.totalorder %s77, %s80
    %p89 = scmp.eq.s32.totalorder %s25, 2
    %p90 = por %p88, %p89
    %p91 = scmp.ne.s32.totalorder %s80, %s81
    %p92 = scmp.eq.s32.totalorder %s25, 0
    %p93 = por %p91, %p92
    %p94 = scmp.ne.s32.totalorder %s80, %s81
    %p95 = scmp.eq.s32.totalorder %s26, 2
    %p96 = por %p94, %p95
    %p98 = scmp.ne.s32.totalorder %s81, %s97
    %p99 = scmp.eq.s32.totalorder %s26, 0
    %p100 = por %p98, %p99
    %s102 = sadd.s32 %s101, 1
    %p105 = scmp.eq.s32.totalorder %s20, 2
    %p106 = scmp.ne.s32.totalorder %s101, %s103
    %p107 = scmp.eq.s32.totalorder %s20, 0
    %p108 = por %p106, %p107
    %p109 = scmp.ne.s32.totalorder %s101, %s103
    %p110 = scmp.eq.s32.totalorder %s25, 2
    %p111 = por %p109, %p110
    %p112 = scmp.ne.s32.totalorder %s103, %s104
    %p113 = scmp.eq.s32.totalorder %s25, 0
    %p114 = por %p112, %p113
    %p115 = scmp.ne.s32.totalorder %s103, %s104
    %p116 = scmp.eq.s32.totalorder %s26, 2
    %p117 = por %p115, %p116
    %p119 = scmp.ne.s32.totalorder %s104, %s118
    %p120 = scmp.eq.s32.totalorder %s26, 0
    %p121 = por %p119, %p120
    %s123 = sadd.s32 %s122, 1
    %p126 = scmp.eq.s32.totalorder %s20, 2
    %p127 = scmp.ne.s32.totalorder %s122, %s124
    %p128 = scmp.eq.s32.totalorder %s20, 0
    %p129 = por %p127, %p128
    %p130 = scmp.ne.s32.totalorder %s122, %s124
    %p131 = scmp.eq.s32.totalorder %s25, 2
    %p132 = por %p130, %p131
    %p133 = scmp.ne.s32.totalorder %s124, %s125
    %p134 = scmp.eq.s32.totalorder %s25, 0
    %p135 = por %p133, %p134
    %p136 = scmp.ne.s32.totalorder %s124, %s125
    %p137 = scmp.eq.s32.totalorder %s26, 2
    %p138 = por %p136, %p137
    %p140 = scmp.ne.s32.totalorder %s125, %s139
    %p141 = scmp.eq.s32.totalorder %s26, 0
    %p142 = por %p140, %p141
    %s144 = sadd.s32 %s143, 1
    %p147 = scmp.eq.s32.totalorder %s20, 2
    %p148 = scmp.ne.s32.totalorder %s143, %s145
    %p149 = scmp.eq.s32.totalorder %s20, 0
    %p150 = por %p148, %p149
    %p151 = scmp.ne.s32.totalorder %s143, %s145
    %p152 = scmp.eq.s32.totalorder %s25, 2
    %p153 = por %p151, %p152
    %p154 = scmp.ne.s32.totalorder %s145, %s146
    %p155 = scmp.eq.s32.totalorder %s25, 0
    %p156 = por %p154, %p155
    %p157 = scmp.ne.s32.totalorder %s145, %s146
    %p158 = scmp.eq.s32.totalorder %s26, 2
    %p159 = por %p157, %p158
    %p161 = scmp.ne.s32.totalorder %s146, %s160
    %p162 = scmp.eq.s32.totalorder %s26, 0
    %p163 = por %p161, %p162
    %s165 = sadd.s32 %s164, 1
    %p168 = scmp.eq.s32.totalorder %s20, 2
    %p169 = scmp.ne.s32.totalorder %s164, %s166
    %p170 = scmp.eq.s32.totalorder %s20, 0
    %p171 = por %p169, %p170
    %p172 = scmp.ne.s32.totalorder %s164, %s166
    %p173 = scmp.eq.s32.totalorder %s25, 2
    %p174 = por %p172, %p173
    %p175 = scmp.ne.s32.totalorder %s166, %s167
    %p176 = scmp.eq.s32.totalorder %s25, 0
    %p177 = por %p175, %p176
    %p178 = scmp.ne.s32.totalorder %s166, %s167
    %p179 = scmp.eq.s32.totalorder %s26, 2
    %p180 = por %p178, %p179
    %p182 = scmp.ne.s32.totalorder %s167, %s181
    %p183 = scmp.eq.s32.totalorder %s26, 0
    %p184 = por %p182, %p183
    %s186 = sadd.s32 %s185, 1
    %p189 = scmp.eq.s32.totalorder %s20, 2
    %p190 = scmp.ne.s32.totalorder %s185, %s187
    %p191 = scmp.eq.s32.totalorder %s20, 0
    %p192 = por %p190, %p191
    %p193 = scmp.ne.s32.totalorder %s185, %s187
    %p194 = scmp.eq.s32.totalorder %s25, 2
    %p195 = por %p193, %p194
    %p196 = scmp.ne.s32.totalorder %s187, %s188
    %p197 = scmp.eq.s32.totalorder %s25, 0
    %p198 = por %p196, %p197
    %p199 = scmp.ne.s32.totalorder %s187, %s188
    %p200 = scmp.eq.s32.totalorder %s26, 2
    %p201 = por %p199, %p200
    %p203 = scmp.ne.s32.totalorder %s188, %s202
    %p204 = scmp.eq.s32.totalorder %s26, 0
    %p205 = por %p203, %p204
    %s207 = sadd.s32 %s206, 1
    %p210 = scmp.eq.s32.totalorder %s20, 2
    %p211 = scmp.ne.s32.totalorder %s206, %s208
    %p212 = scmp.eq.s32.totalorder %s20, 0
    %p213 = por %p211, %p212
    %p214 = scmp.ne.s32.totalorder %s206, %s208
    %p215 = scmp.eq.s32.totalorder %s25, 2
    %p216 = por %p214, %p215
    %p217 = scmp.ne.s32.totalorder %s208, %s209
    %p218 = scmp.eq.s32.totalorder %s25, 0
    %p219 = por %p217, %p218
    %p220 = scmp.ne.s32.totalorder %s208, %s209
    %p221 = scmp.eq.s32.totalorder %s26, 2
    %p222 = por %p220, %p221
    %p224 = scmp.ne.s32.totalorder %s209, %s223
    %p225 = scmp.eq.s32.totalorder %s26, 0
    %p226 = por %p224, %p225
    %s228 = sadd.s32 %s227, 1
    %p231 = scmp.eq.s32.totalorder %s20, 2
    %p232 = scmp.ne.s32.totalorder %s227, %s229
    %p233 = scmp.eq.s32.totalorder %s20, 0
    %p234 = por %p232, %p233
    %p235 = scmp.ne.s32.totalorder %s227, %s229
    %p236 = scmp.eq.s32.totalorder %s25, 2
    %p237 = por %p235, %p236
    %p238 = scmp.ne.s32.totalorder %s229, %s230
    %p239 = scmp.eq.s32.totalorder %s25, 0
    %p240 = por %p238, %p239
    %p241 = scmp.ne.s32.totalorder %s229, %s230
    %p242 = scmp.eq.s32.totalorder %s26, 2
    %p243 = por %p241, %p242
    %p245 = scmp.ne.s32.totalorder %s230, %s244
    %p246 = scmp.eq.s32.totalorder %s26, 0
    %p247 = por %p245, %p246
    %s249 = sadd.s32 %s248, 1
    %p252 = scmp.eq.s32.totalorder %s20, 2
    %p253 = scmp.ne.s32.totalorder %s248, %s250
    %p254 = scmp.eq.s32.totalorder %s20, 0
    %p255 = por %p253, %p254
    %p256 = scmp.ne.s32.totalorder %s248, %s250
    %p257 = scmp.eq.s32.totalorder %s25, 2
    %p258 = por %p256, %p257
    %p259 = scmp.ne.s32.totalorder %s250, %s251
    %p260 = scmp.eq.s32.totalorder %s25, 0
    %p261 = por %p259, %p260
    %p262 = scmp.ne.s32.totalorder %s250, %s251
    %p263 = scmp.eq.s32.totalorder %s26, 2
    %p264 = por %p262, %p263
    %p266 = scmp.ne.s32.totalorder %s251, %s265
    %p267 = scmp.eq.s32.totalorder %s26, 0
    %p268 = por %p266, %p267
    %s270 = sadd.s32 %s269, 1
    %p273 = scmp.eq.s32.totalorder %s20, 2
    %p274 = scmp.ne.s32.totalorder %s269, %s271
    %p275 = scmp.eq.s32.totalorder %s20, 0
    %p276 = por %p274, %p275
    %p277 = scmp.ne.s32.totalorder %s269, %s271
    %p278 = scmp.eq.s32.totalorder %s25, 2
    %p279 = por %p277, %p278
    %p280 = scmp.ne.s32.totalorder %s271, %s272
    %p281 = scmp.eq.s32.totalorder %s25, 0
    %p282 = por %p280, %p281
    %p283 = scmp.ne.s32.totalorder %s271, %s272
    %p284 = scmp.eq.s32.totalorder %s26, 2
    %p285 = por %p283, %p284
    %p287 = scmp.ne.s32.totalorder %s272, %s286
    %p288 = scmp.eq.s32.totalorder %s26, 0
    %p289 = por %p287, %p288
    %s291 = sadd.s32 %s290, 1
    %p294 = scmp.eq.s32.totalorder %s20, 2
    %p295 = scmp.ne.s32.totalorder %s290, %s292
    %p296 = scmp.eq.s32.totalorder %s20, 0
    %p297 = por %p295, %p296
    %p298 = scmp.ne.s32.totalorder %s290, %s292
    %p299 = scmp.eq.s32.totalorder %s25, 2
    %p300 = por %p298, %p299
    %p301 = scmp.ne.s32.totalorder %s292, %s293
    %p302 = scmp.eq.s32.totalorder %s25, 0
    %p303 = por %p301, %p302
    %p304 = scmp.ne.s32.totalorder %s292, %s293
    %p305 = scmp.eq.s32.totalorder %s26, 2
    %p306 = por %p304, %p305
    %p308 = scmp.ne.s32.totalorder %s293, %s307
    %p309 = scmp.eq.s32.totalorder %s26, 0
    %p310 = por %p308, %p309
    %s311 = ssub.s32 %s20, %s27
    %p312 = scmp.eq.s32.totalorder %s311, 0
    %s314 = sadd.s32 %s313, 1
    %s315 = scalar_select %p312, %s313, %s314
    %p318 = pneg %p312
    %p319 = scmp.eq.s32.totalorder %s20, 2
    %p320 = por %p318, %p319
    %p321 = scmp.ne.s32.totalorder %s313, %s316
    %p322 = scmp.eq.s32.totalorder %s20, 0
    %p323 = por %p321, %p322
    %p324 = scmp.ne.s32.totalorder %s313, %s316
    %p325 = scmp.eq.s32.totalorder %s25, 2
    %p326 = por %p324, %p325
    %p327 = scmp.ne.s32.totalorder %s316, %s317
    %p328 = scmp.eq.s32.totalorder %s25, 0
    %p329 = por %p327, %p328
    %p330 = scmp.ne.s32.totalorder %s316, %s317
    %p331 = scmp.eq.s32.totalorder %s26, 2
    %p332 = por %p330, %p331
    %p334 = scmp.ne.s32.totalorder %s317, %s333
    %p335 = scmp.eq.s32.totalorder %s26, 0
    %p336 = por %p334, %p335
    %p337 = scmp.le.s32.totalorder 1, %s20
    %p338 = scmp.lt.s32.totalorder %s20, 4
    %p339 = pnand %p337, %p338
    %p340 = pneg %p339
    // Predicated region
    $region9: #{_lambda_.16} parent=5 // pred_check
      _
    $region10: #{_lambda_.16} parent=5 // pred_check_branch
      %342 = sbr.rel (%p339) target = $region12
    $region11: #{_lambda_.16} parent=5 // pred_region
      %s343 = ssub.s32 %s20, 1
      // Predicated region
      $region13: #{_lambda_.16} parent=11 // pred_check
        %p344 = pneg %p41
      $region14: #{_lambda_.16} parent=11 // pred_check_branch
        %346 = sbr.rel (%p344) target = $region16
      $region15: #{_lambda_.16} parent=11 // pred_region
        _
      $region16: #{_lambda_.16} parent=11 // pred_fallthru
        _
      // Predicated region
      $region17: #{_lambda_.16} parent=11 // pred_check
        %p347 = pneg %p114
      $region18: #{_lambda_.16} parent=11 // pred_check_branch
        %349 = sbr.rel (%p347) target = $region20
      $region19: #{_lambda_.16} parent=11 // pred_region
        _
      $region20: #{_lambda_.16} parent=11 // pred_fallthru
        _
      // Predicated region
      $region21: #{_lambda_.16} parent=11 // pred_check
        %p350 = pneg %p135
      $region22: #{_lambda_.16} parent=11 // pred_check_branch
        %352 = sbr.rel (%p350) target = $region24
      $region23: #{_lambda_.16} parent=11 // pred_region
        _
      $region24: #{_lambda_.16} parent=11 // pred_fallthru
        _
      // Predicated region
      $region25: #{_lambda_.16} parent=11 // pred_check
        %p353 = pneg %p156
      $region26: #{_lambda_.16} parent=11 // pred_check_branch
        %355 = sbr.rel (%p353) target = $region28
      $region27: #{_lambda_.16} parent=11 // pred_region
        _
      $region28: #{_lambda_.16} parent=11 // pred_fallthru
        _
      // Predicated region
      $region29: #{_lambda_.16} parent=11 // pred_check
        %p356 = pneg %p177
      $region30: #{_lambda_.16} parent=11 // pred_check_branch
        %358 = sbr.rel (%p356) target = $region32
      $region31: #{_lambda_.16} parent=11 // pred_region
        _
      $region32: #{_lambda_.16} parent=11 // pred_fallthru
        _
      // Predicated region
      $region33: #{_lambda_.16} parent=11 // pred_check
        %p359 = pneg %p198
      $region34: #{_lambda_.16} parent=11 // pred_check_branch
        %361 = sbr.rel (%p359) target = $region36
      $region35: #{_lambda_.16} parent=11 // pred_region
        _
      $region36: #{_lambda_.16} parent=11 // pred_fallthru
        _
      // Predicated region
      $region37: #{_lambda_.16} parent=11 // pred_check
        %p362 = pneg %p219
      $region38: #{_lambda_.16} parent=11 // pred_check_branch
        %364 = sbr.rel (%p362) target = $region40
      $region39: #{_lambda_.16} parent=11 // pred_region
        _
      $region40: #{_lambda_.16} parent=11 // pred_fallthru
        _
      // Predicated region
      $region41: #{_lambda_.16} parent=11 // pred_check
        %p365 = pneg %p240
      $region42: #{_lambda_.16} parent=11 // pred_check_branch
        %367 = sbr.rel (%p365) target = $region44
      $region43: #{_lambda_.16} parent=11 // pred_region
        _
      $region44: #{_lambda_.16} parent=11 // pred_fallthru
        _
      // Predicated region
      $region45: #{_lambda_.16} parent=11 // pred_check
        %p368 = pneg %p261
      $region46: #{_lambda_.16} parent=11 // pred_check_branch
        %370 = sbr.rel (%p368) target = $region48
      $region47: #{_lambda_.16} parent=11 // pred_region
        _
      $region48: #{_lambda_.16} parent=11 // pred_fallthru
        _
      // Predicated region
      $region49: #{_lambda_.16} parent=11 // pred_check
        %p371 = pneg %p282
      $region50: #{_lambda_.16} parent=11 // pred_check_branch
        %373 = sbr.rel (%p371) target = $region52
      $region51: #{_lambda_.16} parent=11 // pred_region
        _
      $region52: #{_lambda_.16} parent=11 // pred_fallthru
        _
      // Predicated region
      $region53: #{_lambda_.16} parent=11 // pred_check
        %p374 = pneg %p303
      $region54: #{_lambda_.16} parent=11 // pred_check_branch
        %376 = sbr.rel (%p374) target = $region56
      $region55: #{_lambda_.16} parent=11 // pred_region
        _
      $region56: #{_lambda_.16} parent=11 // pred_fallthru
        _
    $region12: #{_lambda_.16} parent=5 // pred_fallthru
      _
    %p377 = scmp.lt.s32.totalorder %s20, 3
    // Predicated region
    $region57: #{_lambda_.16} parent=5 // pred_check
      %p378 = pneg %p377
    $region58: #{_lambda_.16} parent=5 // pred_check_branch
      %380 = sbr.rel (%p378) target = $region60
    $region59: #{_lambda_.16} parent=5 // pred_region
      // Predicated region
      $region61: #{_lambda_.16} parent=59 // pred_check
        %p381 = pneg %p61
      $region62: #{_lambda_.16} parent=59 // pred_check_branch
        %383 = sbr.rel (%p381) target = $region64
      $region63: #{_lambda_.16} parent=59 // pred_region
        %s384 = smul.u32 2, %s20
        %p385 = scmp.lt.s32.totalorder %s384, 5
        %s386 = scalar_select %p385, %s384, 5
        %s387 = smul.addr %s386, 8
        %s388 = scalar_lea.vmem %s1, %s387
        %s389 = smul.u32 2, %s20
      $region64: #{_lambda_.16} parent=59 // pred_fallthru
        _
      // Predicated region
      $region65: #{_lambda_.16} parent=59 // pred_check
        %p390 = pneg %p87
      $region66: #{_lambda_.16} parent=59 // pred_check_branch
        %392 = sbr.rel (%p390) target = $region68
      $region67: #{_lambda_.16} parent=59 // pred_region
        %s393 = smul.u32 2, %s20
        %p394 = scmp.lt.s32.totalorder %s393, 5
        %s395 = scalar_select %p394, %s393, 5
        %s396 = smul.addr %s395, 8
        %s397 = scalar_lea.vmem %s2, %s396
        %s398 = smul.u32 2, %s20
      $region68: #{_lambda_.16} parent=59 // pred_fallthru
        _
    $region60: #{_lambda_.16} parent=5 // pred_fallthru
      _
    %p399 = scmp.le.s32.totalorder 1, %s20
    %p400 = scmp.lt.s32.totalorder %s20, 4
    %p401 = pnand %p399, %p400
    %p402 = pneg %p401
    // Predicated region
    $region69: #{_lambda_.16} parent=5 // pred_check
      _
    $region70: #{_lambda_.16} parent=5 // pred_check_branch
      %404 = sbr.rel (%p401) target = $region72
    $region71: #{_lambda_.16} parent=5 // pred_region
      %s405 = ssub.s32 %s20, 1
      %p406 = pneg %p41
      %p407 = pneg %p38
      %s408 = smul.u32 2, %s25
      %p409 = scmp.lt.s32.totalorder %s408, 5
      %s410 = scalar_select %p409, %s408, 5
      %s411 = smul.addr %s410, 8
      %s412 = scalar_lea.vmem %s1, %s411
      %p413 = pneg %p67
      %p414 = pneg %p64
      %s415 = smul.u32 2, %s25
      %p416 = scmp.lt.s32.totalorder %s415, 5
      %s417 = scalar_select %p416, %s415, 5
      %s418 = smul.addr %s417, 8
      %s419 = scalar_lea.vmem %s2, %s418
      %p420 = pneg %p93
      %p421 = pneg %p90
      %p422 = pneg %p114
      %p423 = pneg %p111
      %p424 = pneg %p135
      %p425 = pneg %p132
      %p426 = pneg %p156
      %p427 = pneg %p153
      %p428 = pneg %p177
      %p429 = pneg %p174
      %p430 = pneg %p198
      %p431 = pneg %p195
      %p432 = pneg %p219
      %p433 = pneg %p216
      %p434 = pneg %p240
      %p435 = pneg %p237
      %p436 = pneg %p261
      %p437 = pneg %p258
      %p438 = pneg %p282
      %p439 = pneg %p279
      %p440 = pneg %p303
      %p441 = pneg %p300
      %p442 = pneg %p329
      %p443 = pneg %p326
      %s444 = smul.u32 2, %s25
      %p445 = scmp.lt.s32.totalorder %s444, 5
      %s446 = scalar_select %p445, %s444, 5
      %s447 = smul.addr %s446, 8
      %s448 = scalar_lea.vmem %s13, %s447
      %s449 = smul.u32 2, %s25
      %p450 = scmp.lt.s32.totalorder %s449, 5
      %s451 = scalar_select %p450, %s449, 5
      %s452 = smul.addr %s451, 8
      %s453 = scalar_lea.vmem %s1, %s452
      %s454 = smul.u32 2, %s25
      %s455 = smul.u32 2, %s25
      %p456 = scmp.lt.s32.totalorder %s455, 5
      %s457 = scalar_select %p456, %s455, 5
      %s458 = smul.addr %s457, 8
      %s459 = scalar_lea.vmem %s2, %s458
      %s460 = smul.u32 2, %s25
      %s461 = smul.u32 2, %s25
      %p462 = scmp.lt.s32.totalorder %s461, 5
      %s463 = scalar_select %p462, %s461, 5
      %s464 = smul.addr %s463, 8
      %s465 = scalar_lea.vmem %s13, %s464
      %s466 = smul.u32 2, %s25
      %v467 = vld [vmem:[%s453] sm:$0xff]
      %v468 = vld [vmem:[%s453 + $0x8] sm:$0xff]
      %v469 = vmul.f32 %v467, %v467
      %v470 = vmul.f32 %v468, %v468
      %vm471 = vcmask 261120
      %v472 = vsel %vm471, %v469, 0.0
      %473 = vadd.xlane.f32.xlu0 %v472
      %v474 = vpop.xlane.xlu0 %473
      %v475 = vsel %vm471, %v470, 0.0
      %476 = vadd.xlane.f32.xlu0 %v475
      %v477 = vpop.xlane.xlu0 %476
      %v478 = vadd.f32 %v474, 1.0
      %v479 = vadd.f32 %v477, 1.0
      %v480 = vrsqrt.pop %v478
      %v481 = vmul.f32 %v478, %v480
      %vm482 = vcmp.eq.f32.partialorder %v478, inf
      %v483 = vsel %vm482, %v478, %v481
      %vm484 = vcmp.eq.f32.partialorder %v478, 0.0
      %v485 = vand.u32 %v478, 2147483648
      %v486 = vsel %vm484, %v485, %v483
      %v487 = vrsqrt.pop %v479
      %v488 = vmul.f32 %v479, %v487
      %vm489 = vcmp.eq.f32.partialorder %v479, inf
      %v490 = vsel %vm489, %v479, %v488
      %vm491 = vcmp.eq.f32.partialorder %v479, 0.0
      %v492 = vand.u32 %v479, 2147483648
      %v493 = vsel %vm491, %v492, %v490
      %v494 = vld [vmem:[%s6] sm:$0xff]
      %v495 = vld [vmem:[%s6 + $0x8] sm:$0xff]
      %v496 = vld [vmem:[%s6 + $0x10] sm:$0xff]
      %v497 = vld [vmem:[%s6 + $0x18] sm:$0xff]
      %v498 = vld [vmem:[%s5] sm:$0x1]
      %v500 = vlaneseq
      %v501 = vshrl.u32 %v500, 7
      %v502 = vsub.s32 0, %v501
      %v503 = vrot.slane %v498, %v502
      %v505 = vmul.f32 %v486, %v503
      %v506 = vmul.f32 %v493, %v503
      %v508 = vsel %vm471, %v467, 0
      %v511 = vsel %vm471, %v468, 0
      %513 = vmatprep.subr.mxu0 0.0
      %514 = vmatpush1.msra.mxu0 %v494
      %515 = vmatprep.subr.mxu0 0.0
      %516 = vmatpush1.msra.mxu0 %v495
      %517 = vmatprep.subr.mxu0 0.0
      %518 = vmatpush1.msra.mxu0 %v496
      %519 = vmatprep.subr.mxu0 0.0
      %520 = vmatpush1.msra.mxu0 %v497
      %521 = vmatprep.subr.mxu0 0.0
      %522 = vmatpush1.msra.mxu0 0.0
      %523 = vmatprep.subr.mxu0 0.0
      %524 = vmatpush1.msra.mxu0 0.0
      %525 = vmatprep.subr.mxu0 0.0
      %526 = vmatpush1.msra.mxu0 0.0
      %527 = vmatprep.subr.mxu0 0.0
      %528 = vmatpush1.msra.mxu0 0.0
      %529 = vmatprep.subr.mxu0 0.0
      %530 = vmatpush1.msra.mxu0 0.0
      %531 = vmatprep.subr.mxu0 0.0
      %532 = vmatpush1.msra.mxu0 0.0
      %533 = vmatprep.subr.mxu0 0.0
      %534 = vmatpush1.msra.mxu0 0.0
      %535 = vmatprep.subr.mxu0 0.0
      %536 = vmatpush1.msra.mxu0 0.0
      %537 = vmatprep.subr.mxu0 0.0
      %538 = vmatpush1.msra.mxu0 0.0
      %539 = vmatprep.subr.mxu0 0.0
      %540 = vmatpush1.msra.mxu0 0.0
      %541 = vmatprep.subr.mxu0 0.0
      %542 = vmatpush1.msra.mxu0 0.0
      %543 = vmatprep.subr.mxu0 0.0
      %544 = vmatpush1.msra.mxu0 0.0
      %545 = vmatprep.subr.mxu0 0.0
      %546 = vmatpush1.msra.mxu0 0.0
      %547 = vmatprep.subr.mxu0 0.0
      %548 = vmatpush1.msra.mxu0 0.0
      %549 = vmatprep.subr.mxu0 0.0
      %550 = vmatpush1.msra.mxu0 0.0
      %551 = vmatprep.subr.mxu0 0.0
      %552 = vmatpush1.msra.mxu0 0.0
      %553 = vmatprep.subr.mxu0 0.0
      %554 = vmatpush1.msra.mxu0 0.0
      %555 = vmatprep.subr.mxu0 0.0
      %556 = vmatpush1.msra.mxu0 0.0
      %557 = vmatprep.subr.mxu0 0.0
      %558 = vmatpush1.msra.mxu0 0.0
      %559 = vmatprep.subr.mxu0 0.0
      %560 = vmatpush1.msra.mxu0 0.0
      %561 = vmatprep.subr.mxu0 0.0
      %562 = vmatpush1.msra.mxu0 0.0
      %563 = vmatprep.subr.mxu0 0.0
      %564 = vmatpush1.msra.mxu0 0.0
      %565 = vmatprep.subr.mxu0 0.0
      %566 = vmatpush1.msra.mxu0 0.0
      %567 = vmatprep.subr.mxu0 0.0
      %568 = vmatpush1.msra.mxu0 0.0
      %569 = vmatprep.subr.mxu0 0.0
      %570 = vmatpush1.msra.mxu0 0.0
      %571 = vmatprep.subr.mxu0 0.0
      %572 = vmatpush1.msra.mxu0 0.0
      %573 = vmatprep.subr.mxu0 0.0
      %574 = vmatpush1.msra.mxu0 0.0
      %575 = vmatprep.subr.mxu0 0.0
      %576 = vmatpush1.msra.mxu0 0.0
      %577 = vmatprep.mubr.f32.mxu0 0.0
      %578 = vmatmul.mubr.f32.gmra.mrb[0].mxu0 %v508
      %v579 = vpop.f32.mrb[0].mxu0
      %v580 = vadd.f32 %v505, %v579
      %v581 = vpop.f32.mrb[0].mxu0
      %582 = vmatprep.mubr.f32.mxu0 0.0
      %583 = vmatmul.mubr.f32.gmra.mrb[0].mxu0 %v511
      %v584 = vpop.f32.mrb[0].mxu0
      %v585 = vadd.f32 %v506, %v584
      %v586 = vpop.f32.mrb[0].mxu0
      %587 = vdwg.mxu0
      %v588 = vld [vmem:[%s7] sm:$0x1]
      %v590 = vlaneseq
      %v591 = vshrl.u32 %v590, 7
      %v592 = vsub.s32 0, %v591
      %v593 = vrot.slane %v588, %v592
      %v595 = vadd.f32 %v580, %v593
      %v596 = vadd.f32 %v585, %v593
      %s597 = sld [smem:[#allocation2]]
      %s598 = sand.u32 2147483647, %s597
      %s599 = sadd.f32 %s598, 1e-06
      %v600 = vstv %s599
      %v601 = vrcp.pop %v600
      %s602 = vtos %v601
      %v603 = vmax.f32 %v595, 0.0
      %v604 = vmax.f32 %v596, 0.0
      %v605 = vadd.f32 %v603, 1e-06
      %v606 = vadd.f32 %v604, 1e-06
      %v607 = vstv %s602
      %v608 = vmul.f32 %v605, %v607
      %v609 = vmul.f32 %v606, %v607
      %v610 = vld [vmem:[%s10] sm:$0xff]
      %v611 = vld [vmem:[%s10 + $0x8] sm:$0xff]
      %v612 = vld [vmem:[%s10 + $0x10] sm:$0xff]
      %v613 = vld [vmem:[%s10 + $0x18] sm:$0xff]
      %v614 = vld [vmem:[%s10 + $0x20] sm:$0xff]
      %v615 = vld [vmem:[%s10 + $0x28] sm:$0xff]
      %v616 = vld [vmem:[%s10 + $0x30] sm:$0xff]
      %v617 = vld [vmem:[%s10 + $0x38] sm:$0xff]
      %v618 = vld [vmem:[%s11] sm:$0x3]
      %v619 = vmul.f32 %v608, %v608
      %v620 = vmul.f32 %v609, %v609
      %623 = vrot.lane.b32.xlu0 %v619, 64
      %v624 = vpop.permute.xlu0 %623
      %625 = vrot.lane.b32.xlu0 %v620, 64
      %v626 = vpop.permute.xlu0 %625
      %vm627 = vcmask 523264
      %v628 = vsel %vm627, %v624, 0
      %v630 = vsel %vm627, %v626, 0
      %632 = vmatprep.subr.mxu0 0.0
      %633 = vmatpush1.msra.mxu0 %v610
      %634 = vmatprep.subr.mxu0 0.0
      %635 = vmatpush1.msra.mxu0 %v611
      %636 = vmatprep.subr.mxu0 0.0
      %637 = vmatpush1.msra.mxu0 %v612
      %638 = vmatprep.subr.mxu0 0.0
      %639 = vmatpush1.msra.mxu0 %v613
      %640 = vmatprep.subr.mxu0 0.0
      %641 = vmatpush1.msra.mxu0 %v614
      %642 = vmatprep.subr.mxu0 0.0
      %643 = vmatpush1.msra.mxu0 %v615
      %644 = vmatprep.subr.mxu0 0.0
      %645 = vmatpush1.msra.mxu0 %v616
      %646 = vmatprep.subr.mxu0 0.0
      %647 = vmatpush1.msra.mxu0 %v617
      %648 = vmatprep.subr.mxu0 0.0
      %649 = vmatpush1.msra.mxu0 0.0
      %650 = vmatprep.subr.mxu0 0.0
      %651 = vmatpush1.msra.mxu0 0.0
      %652 = vmatprep.subr.mxu0 0.0
      %653 = vmatpush1.msra.mxu0 0.0
      %654 = vmatprep.subr.mxu0 0.0
      %655 = vmatpush1.msra.mxu0 0.0
      %656 = vmatprep.subr.mxu0 0.0
      %657 = vmatpush1.msra.mxu0 0.0
      %658 = vmatprep.subr.mxu0 0.0
      %659 = vmatpush1.msra.mxu0 0.0
      %660 = vmatprep.subr.mxu0 0.0
      %661 = vmatpush1.msra.mxu0 0.0
      %662 = vmatprep.subr.mxu0 0.0
      %663 = vmatpush1.msra.mxu0 0.0
      %664 = vmatprep.subr.mxu0 0.0
      %665 = vmatpush1.msra.mxu0 0.0
      %666 = vmatprep.subr.mxu0 0.0
      %667 = vmatpush1.msra.mxu0 0.0
      %668 = vmatprep.subr.mxu0 0.0
      %669 = vmatpush1.msra.mxu0 0.0
      %670 = vmatprep.subr.mxu0 0.0
      %671 = vmatpush1.msra.mxu0 0.0
      %672 = vmatprep.subr.mxu0 0.0
      %673 = vmatpush1.msra.mxu0 0.0
      %674 = vmatprep.subr.mxu0 0.0
      %675 = vmatpush1.msra.mxu0 0.0
      %676 = vmatprep.subr.mxu0 0.0
      %677 = vmatpush1.msra.mxu0 0.0
      %678 = vmatprep.subr.mxu0 0.0
      %679 = vmatpush1.msra.mxu0 0.0
      %680 = vmatprep.subr.mxu0 0.0
      %681 = vmatpush1.msra.mxu0 0.0
      %682 = vmatprep.subr.mxu0 0.0
      %683 = vmatpush1.msra.mxu0 0.0
      %684 = vmatprep.subr.mxu0 0.0
      %685 = vmatpush1.msra.mxu0 0.0
      %686 = vmatprep.subr.mxu0 0.0
      %687 = vmatpush1.msra.mxu0 0.0
      %688 = vmatprep.subr.mxu0 0.0
      %689 = vmatpush1.msra.mxu0 0.0
      %690 = vmatprep.subr.mxu0 0.0
      %691 = vmatpush1.msra.mxu0 0.0
      %692 = vmatprep.subr.mxu0 0.0
      %693 = vmatpush1.msra.mxu0 0.0
      %694 = vmatprep.subr.mxu0 0.0
      %695 = vmatpush1.msra.mxu0 0.0
      %696 = vmatprep.mubr.f32.mxu0 0.0
      %697 = vmatmul.mubr.f32.gmra.mrb[0].mxu0 %v628
      %v698 = vpop.f32.mrb[0].mxu0
      %v699 = vadd.f32 0.0, %v698
      %v700 = vpop.f32.mrb[0].mxu0
      %701 = vmatprep.mubr.f32.mxu0 0.0
      %702 = vmatmul.mubr.f32.gmra.mrb[0].mxu0 %v630
      %v703 = vpop.f32.mrb[0].mxu0
      %v704 = vadd.f32 0.0, %v703
      %v705 = vpop.f32.mrb[0].mxu0
      %706 = vdwg.mxu0
      %v707 = vmul.f32 %v619, %v619
      %v708 = vmul.f32 %v620, %v620
      %711 = vrot.lane.b32.xlu0 %v707, 64
      %v712 = vpop.permute.xlu0 %711
      %713 = vrot.lane.b32.xlu0 %v708, 64
      %v714 = vpop.permute.xlu0 %713
      %v715 = vsel %vm627, %v712, 0
      %v717 = vsel %vm627, %v714, 0
      %719 = vmatprep.subr.mxu0 0.0
      %720 = vmatpush1.msra.mxu0 %v610
      %721 = vmatprep.subr.mxu0 0.0
      %722 = vmatpush1.msra.mxu0 %v611
      %723 = vmatprep.subr.mxu0 0.0
      %724 = vmatpush1.msra.mxu0 %v612
      %725 = vmatprep.subr.mxu0 0.0
      %726 = vmatpush1.msra.mxu0 %v613
      %727 = vmatprep.subr.mxu0 0.0
      %728 = vmatpush1.msra.mxu0 %v614
      %729 = vmatprep.subr.mxu0 0.0
      %730 = vmatpush1.msra.mxu0 %v615
      %731 = vmatprep.subr.mxu0 0.0
      %732 = vmatpush1.msra.mxu0 %v616
      %733 = vmatprep.subr.mxu0 0.0
      %734 = vmatpush1.msra.mxu0 %v617
      %735 = vmatprep.subr.mxu0 0.0
      %736 = vmatpush1.msra.mxu0 0.0
      %737 = vmatprep.subr.mxu0 0.0
      %738 = vmatpush1.msra.mxu0 0.0
      %739 = vmatprep.subr.mxu0 0.0
      %740 = vmatpush1.msra.mxu0 0.0
      %741 = vmatprep.subr.mxu0 0.0
      %742 = vmatpush1.msra.mxu0 0.0
      %743 = vmatprep.subr.mxu0 0.0
      %744 = vmatpush1.msra.mxu0 0.0
      %745 = vmatprep.subr.mxu0 0.0
      %746 = vmatpush1.msra.mxu0 0.0
      %747 = vmatprep.subr.mxu0 0.0
      %748 = vmatpush1.msra.mxu0 0.0
      %749 = vmatprep.subr.mxu0 0.0
      %750 = vmatpush1.msra.mxu0 0.0
      %751 = vmatprep.subr.mxu0 0.0
      %752 = vmatpush1.msra.mxu0 0.0
      %753 = vmatprep.subr.mxu0 0.0
      %754 = vmatpush1.msra.mxu0 0.0
      %755 = vmatprep.subr.mxu0 0.0
      %756 = vmatpush1.msra.mxu0 0.0
      %757 = vmatprep.subr.mxu0 0.0
      %758 = vmatpush1.msra.mxu0 0.0
      %759 = vmatprep.subr.mxu0 0.0
      %760 = vmatpush1.msra.mxu0 0.0
      %761 = vmatprep.subr.mxu0 0.0
      %762 = vmatpush1.msra.mxu0 0.0
      %763 = vmatprep.subr.mxu0 0.0
      %764 = vmatpush1.msra.mxu0 0.0
      %765 = vmatprep.subr.mxu0 0.0
      %766 = vmatpush1.msra.mxu0 0.0
      %767 = vmatprep.subr.mxu0 0.0
      %768 = vmatpush1.msra.mxu0 0.0
      %769 = vmatprep.subr.mxu0 0.0
      %770 = vmatpush1.msra.mxu0 0.0
      %771 = vmatprep.subr.mxu0 0.0
      %772 = vmatpush1.msra.mxu0 0.0
      %773 = vmatprep.subr.mxu0 0.0
      %774 = vmatpush1.msra.mxu0 0.0
      %775 = vmatprep.subr.mxu0 0.0
      %776 = vmatpush1.msra.mxu0 0.0
      %777 = vmatprep.subr.mxu0 0.0
      %778 = vmatpush1.msra.mxu0 0.0
      %779 = vmatprep.subr.mxu0 0.0
      %780 = vmatpush1.msra.mxu0 0.0
      %781 = vmatprep.subr.mxu0 0.0
      %782 = vmatpush1.msra.mxu0 0.0
      %783 = vmatprep.mubr.f32.mxu0 0.0
      %784 = vmatmul.mubr.f32.gmra.mrb[0].mxu0 %v715
      %v785 = vpop.f32.mrb[0].mxu0
      %v786 = vadd.f32 0.0, %v785
      %v787 = vpop.f32.mrb[0].mxu0
      %788 = vmatprep.mubr.f32.mxu0 0.0
      %789 = vmatmul.mubr.f32.gmra.mrb[0].mxu0 %v717
      %v790 = vpop.f32.mrb[0].mxu0
      %v791 = vadd.f32 0.0, %v790
      %v792 = vpop.f32.mrb[0].mxu0
      %793 = vdwg.mxu0
      %v794 = vrsqrt.pop %v699
      %v795 = vmul.f32 %v699, %v794
      %vm796 = vcmp.eq.f32.partialorder %v699, inf
      %v797 = vsel %vm796, %v699, %v795
      %vm798 = vcmp.eq.f32.partialorder %v699, 0.0
      %v799 = vand.u32 %v699, 2147483648
      %v800 = vsel %vm798, %v799, %v797
      %v801 = vrsqrt.pop %v704
      %v802 = vmul.f32 %v704, %v801
      %vm803 = vcmp.eq.f32.partialorder %v704, inf
      %v804 = vsel %vm803, %v704, %v802
      %vm805 = vcmp.eq.f32.partialorder %v704, 0.0
      %v806 = vand.u32 %v704, 2147483648
      %v807 = vsel %vm805, %v806, %v804
      %v808 = vrsqrt.pop %v786
      %v809 = vrsqrt.pop %v791
      %v810 = vmul.f32 %v800, %v808
      %v811 = vmul.f32 %v807, %v809
      %vm812 = vcmask 15360
      %v814 = vsel %vm812, %v810, 0
      %v817 = vsel %vm812, %v811, 0
      %vm819 = vcmask 1041408
      %v821 = vsel %vm819, %v618, 0
      %823 = vmatprep.subr.mxu0 0.0
      %824 = vmatpush1.msra.mxu0 %v821
      %825 = vmatprep.subr.mxu0 0.0
      %826 = vmatpush1.msra.mxu0 0.0
      %827 = vmatprep.subr.mxu0 0.0
      %828 = vmatpush1.msra.mxu0 0.0
      %829 = vmatprep.subr.mxu0 0.0
      %830 = vmatpush1.msra.mxu0 0.0
      %831 = vmatprep.subr.mxu0 0.0
      %832 = vmatpush1.msra.mxu0 0.0
      %833 = vmatprep.subr.mxu0 0.0
      %834 = vmatpush1.msra.mxu0 0.0
      %835 = vmatprep.subr.mxu0 0.0
      %836 = vmatpush1.msra.mxu0 0.0
      %837 = vmatprep.subr.mxu0 0.0
      %838 = vmatpush1.msra.mxu0 0.0
      %839 = vmatprep.subr.mxu0 0.0
      %840 = vmatpush1.msra.mxu0 0.0
      %841 = vmatprep.subr.mxu0 0.0
      %842 = vmatpush1.msra.mxu0 0.0
      %843 = vmatprep.subr.mxu0 0.0
      %844 = vmatpush1.msra.mxu0 0.0
      %845 = vmatprep.subr.mxu0 0.0
      %846 = vmatpush1.msra.mxu0 0.0
      %847 = vmatprep.subr.mxu0 0.0
      %848 = vmatpush1.msra.mxu0 0.0
      %849 = vmatprep.subr.mxu0 0.0
      %850 = vmatpush1.msra.mxu0 0.0
      %851 = vmatprep.subr.mxu0 0.0
      %852 = vmatpush1.msra.mxu0 0.0
      %853 = vmatprep.subr.mxu0 0.0
      %854 = vmatpush1.msra.mxu0 0.0
      %855 = vmatprep.subr.mxu0 0.0
      %856 = vmatpush1.msra.mxu0 0.0
      %857 = vmatprep.subr.mxu0 0.0
      %858 = vmatpush1.msra.mxu0 0.0
      %859 = vmatprep.subr.mxu0 0.0
      %860 = vmatpush1.msra.mxu0 0.0
      %861 = vmatprep.subr.mxu0 0.0
      %862 = vmatpush1.msra.mxu0 0.0
      %863 = vmatprep.subr.mxu0 0.0
      %864 = vmatpush1.msra.mxu0 0.0
      %865 = vmatprep.subr.mxu0 0.0
      %866 = vmatpush1.msra.mxu0 0.0
      %867 = vmatprep.subr.mxu0 0.0
      %868 = vmatpush1.msra.mxu0 0.0
      %869 = vmatprep.subr.mxu0 0.0
      %870 = vmatpush1.msra.mxu0 0.0
      %871 = vmatprep.subr.mxu0 0.0
      %872 = vmatpush1.msra.mxu0 0.0
      %873 = vmatprep.subr.mxu0 0.0
      %874 = vmatpush1.msra.mxu0 0.0
      %875 = vmatprep.subr.mxu0 0.0
      %876 = vmatpush1.msra.mxu0 0.0
      %877 = vmatprep.subr.mxu0 0.0
      %878 = vmatpush1.msra.mxu0 0.0
      %879 = vmatprep.subr.mxu0 0.0
      %880 = vmatpush1.msra.mxu0 0.0
      %881 = vmatprep.subr.mxu0 0.0
      %882 = vmatpush1.msra.mxu0 0.0
      %883 = vmatprep.subr.mxu0 0.0
      %884 = vmatpush1.msra.mxu0 0.0
      %885 = vmatprep.subr.mxu0 0.0
      %886 = vmatpush1.msra.mxu0 0.0
      %887 = vmatprep.mubr.f32.mxu0 0.0
      %888 = vmatmul.mubr.f32.gmra.mrb[0].mxu0 %v814
      %v889 = vpop.f32.mrb[0].mxu0
      %v890 = vadd.f32 0.0, %v889
      %v891 = vpop.f32.mrb[0].mxu0
      %892 = vmatprep.mubr.f32.mxu0 0.0
      %893 = vmatmul.mubr.f32.gmra.mrb[0].mxu0 %v817
      %v894 = vpop.f32.mrb[0].mxu0
      %v895 = vadd.f32 0.0, %v894
      %v896 = vpop.f32.mrb[0].mxu0
      %897 = vdwg.mxu0
      %v900 = vmul.f32 %v890, %v624
      %v901 = vmul.f32 %v895, %v626
      %v902 = vld [vmem:[%s3] sm:$0xff]
      %v903 = vld [vmem:[%s3 + $0x8] sm:$0xff]
      %v904 = vld [vmem:[%s3 + $0x10] sm:$0xff]
      %v905 = vld [vmem:[%s3 + $0x18] sm:$0xff]
      %v906 = vld [vmem:[%s3 + $0x20] sm:$0xff]
      %v907 = vld [vmem:[%s3 + $0x28] sm:$0xff]
      %v908 = vld [vmem:[%s3 + $0x30] sm:$0xff]
      %v909 = vld [vmem:[%s3 + $0x38] sm:$0xff]
      %v911 = vsel %vm627, %v900, 0
      %v914 = vsel %vm627, %v901, 0
      %916 = vmatprep.subr.mxu0 0.0
      %917 = vmatpush1.msra.mxu0 %v902
      %918 = vmatprep.subr.mxu0 0.0
      %919 = vmatpush1.msra.mxu0 %v903
      %920 = vmatprep.subr.mxu0 0.0
      %921 = vmatpush1.msra.mxu0 %v904
      %922 = vmatprep.subr.mxu0 0.0
      %923 = vmatpush1.msra.mxu0 %v905
      %924 = vmatprep.subr.mxu0 0.0
      %925 = vmatpush1.msra.mxu0 %v906
      %926 = vmatprep.subr.mxu0 0.0
      %927 = vmatpush1.msra.mxu0 %v907
      %928 = vmatprep.subr.mxu0 0.0
      %929 = vmatpush1.msra.mxu0 %v908
      %930 = vmatprep.subr.mxu0 0.0
      %931 = vmatpush1.msra.mxu0 %v909
      %932 = vmatprep.subr.mxu0 0.0
      %933 = vmatpush1.msra.mxu0 0.0
      %934 = vmatprep.subr.mxu0 0.0
      %935 = vmatpush1.msra.mxu0 0.0
      %936 = vmatprep.subr.mxu0 0.0
      %937 = vmatpush1.msra.mxu0 0.0
      %938 = vmatprep.subr.mxu0 0.0
      %939 = vmatpush1.msra.mxu0 0.0
      %940 = vmatprep.subr.mxu0 0.0
      %941 = vmatpush1.msra.mxu0 0.0
      %942 = vmatprep.subr.mxu0 0.0
      %943 = vmatpush1.msra.mxu0 0.0
      %944 = vmatprep.subr.mxu0 0.0
      %945 = vmatpush1.msra.mxu0 0.0
      %946 = vmatprep.subr.mxu0 0.0
      %947 = vmatpush1.msra.mxu0 0.0
      %948 = vmatprep.subr.mxu0 0.0
      %949 = vmatpush1.msra.mxu0 0.0
      %950 = vmatprep.subr.mxu0 0.0
      %951 = vmatpush1.msra.mxu0 0.0
      %952 = vmatprep.subr.mxu0 0.0
      %953 = vmatpush1.msra.mxu0 0.0
      %954 = vmatprep.subr.mxu0 0.0
      %955 = vmatpush1.msra.mxu0 0.0
      %956 = vmatprep.subr.mxu0 0.0
      %957 = vmatpush1.msra.mxu0 0.0
      %958 = vmatprep.subr.mxu0 0.0
      %959 = vmatpush1.msra.mxu0 0.0
      %960 = vmatprep.subr.mxu0 0.0
      %961 = vmatpush1.msra.mxu0 0.0
      %962 = vmatprep.subr.mxu0 0.0
      %963 = vmatpush1.msra.mxu0 0.0
      %964 = vmatprep.subr.mxu0 0.0
      %965 = vmatpush1.msra.mxu0 0.0
      %966 = vmatprep.subr.mxu0 0.0
      %967 = vmatpush1.msra.mxu0 0.0
      %968 = vmatprep.subr.mxu0 0.0
      %969 = vmatpush1.msra.mxu0 0.0
      %970 = vmatprep.subr.mxu0 0.0
      %971 = vmatpush1.msra.mxu0 0.0
      %972 = vmatprep.subr.mxu0 0.0
      %973 = vmatpush1.msra.mxu0 0.0
      %974 = vmatprep.subr.mxu0 0.0
      %975 = vmatpush1.msra.mxu0 0.0
      %976 = vmatprep.subr.mxu0 0.0
      %977 = vmatpush1.msra.mxu0 0.0
      %978 = vmatprep.subr.mxu0 0.0
      %979 = vmatpush1.msra.mxu0 0.0
      %980 = vmatprep.mubr.f32.mxu0 0.0
      %981 = vmatmul.mubr.f32.gmra.mrb[0].mxu0 %v911
      %v982 = vpop.f32.mrb[0].mxu0
      %v983 = vadd.f32 0.0, %v982
      %v984 = vpop.f32.mrb[0].mxu0
      %985 = vmatprep.mubr.f32.mxu0 0.0
      %986 = vmatmul.mubr.f32.gmra.mrb[0].mxu0 %v914
      %v987 = vpop.f32.mrb[0].mxu0
      %v988 = vadd.f32 0.0, %v987
      %v989 = vpop.f32.mrb[0].mxu0
      %990 = vdwg.mxu0
      %v991 = vld [vmem:[%s4] sm:$0x1]
      %v993 = vlaneseq
      %v994 = vshrl.u32 %v993, 7
      %v995 = vsub.s32 0, %v994
      %v996 = vrot.slane %v991, %v995
      %v998 = vmul.f32 %v900, %v996
      %v999 = vmul.f32 %v901, %v996
      %v1001 = vsel %vm627, %v998, 0
      %v1004 = vsel %vm627, %v999, 0
      %1006 = vmatprep.subr.mxu0 0.0
      %1007 = vmatpush1.msra.mxu0 %v610
      %1008 = vmatprep.subr.mxu0 0.0
      %1009 = vmatpush1.msra.mxu0 %v611
      %1010 = vmatprep.subr.mxu0 0.0
      %1011 = vmatpush1.msra.mxu0 %v612
      %1012 = vmatprep.subr.mxu0 0.0
      %1013 = vmatpush1.msra.mxu0 %v613
      %1014 = vmatprep.subr.mxu0 0.0
      %1015 = vmatpush1.msra.mxu0 %v614
      %1016 = vmatprep.subr.mxu0 0.0
      %1017 = vmatpush1.msra.mxu0 %v615
      %1018 = vmatprep.subr.mxu0 0.0
      %1019 = vmatpush1.msra.mxu0 %v616
      %1020 = vmatprep.subr.mxu0 0.0
      %1021 = vmatpush1.msra.mxu0 %v617
      %1022 = vmatprep.subr.mxu0 0.0
      %1023 = vmatpush1.msra.mxu0 0.0
      %1024 = vmatprep.subr.mxu0 0.0
      %1025 = vmatpush1.msra.mxu0 0.0
      %1026 = vmatprep.subr.mxu0 0.0
      %1027 = vmatpush1.msra.mxu0 0.0
      %1028 = vmatprep.subr.mxu0 0.0
      %1029 = vmatpush1.msra.mxu0 0.0
      %1030 = vmatprep.subr.mxu0 0.0
      %1031 = vmatpush1.msra.mxu0 0.0
      %1032 = vmatprep.subr.mxu0 0.0
      %1033 = vmatpush1.msra.mxu0 0.0
      %1034 = vmatprep.subr.mxu0 0.0
      %1035 = vmatpush1.msra.mxu0 0.0
      %1036 = vmatprep.subr.mxu0 0.0
      %1037 = vmatpush1.msra.mxu0 0.0
      %1038 = vmatprep.subr.mxu0 0.0
      %1039 = vmatpush1.msra.mxu0 0.0
      %1040 = vmatprep.subr.mxu0 0.0
      %1041 = vmatpush1.msra.mxu0 0.0
      %1042 = vmatprep.subr.mxu0 0.0
      %1043 = vmatpush1.msra.mxu0 0.0
      %1044 = vmatprep.subr.mxu0 0.0
      %1045 = vmatpush1.msra.mxu0 0.0
      %1046 = vmatprep.subr.mxu0 0.0
      %1047 = vmatpush1.msra.mxu0 0.0
      %1048 = vmatprep.subr.mxu0 0.0
      %1049 = vmatpush1.msra.mxu0 0.0
      %1050 = vmatprep.subr.mxu0 0.0
      %1051 = vmatpush1.msra.mxu0 0.0
      %1052 = vmatprep.subr.mxu0 0.0
      %1053 = vmatpush1.msra.mxu0 0.0
      %1054 = vmatprep.subr.mxu0 0.0
      %1055 = vmatpush1.msra.mxu0 0.0
      %1056 = vmatprep.subr.mxu0 0.0
      %1057 = vmatpush1.msra.mxu0 0.0
      %1058 = vmatprep.subr.mxu0 0.0
      %1059 = vmatpush1.msra.mxu0 0.0
      %1060 = vmatprep.subr.mxu0 0.0
      %1061 = vmatpush1.msra.mxu0 0.0
      %1062 = vmatprep.subr.mxu0 0.0
      %1063 = vmatpush1.msra.mxu0 0.0
      %1064 = vmatprep.subr.mxu0 0.0
      %1065 = vmatpush1.msra.mxu0 0.0
      %1066 = vmatprep.subr.mxu0 0.0
      %1067 = vmatpush1.msra.mxu0 0.0
      %1068 = vmatprep.subr.mxu0 0.0
      %1069 = vmatpush1.msra.mxu0 0.0
      %1070 = vmatprep.mubr.f32.mxu0 0.0
      %1071 = vmatmul.mubr.f32.gmra.mrb[0].mxu0 %v1001
      %v1072 = vpop.f32.mrb[0].mxu0
      %v1073 = vadd.f32 1e-06, %v1072
      %v1074 = vpop.f32.mrb[0].mxu0
      %1075 = vmatprep.mubr.f32.mxu0 0.0
      %1076 = vmatmul.mubr.f32.gmra.mrb[0].mxu0 %v1004
      %v1077 = vpop.f32.mrb[0].mxu0
      %v1078 = vadd.f32 1e-06, %v1077
      %v1079 = vpop.f32.mrb[0].mxu0
      %1080 = vdwg.mxu0
      %v1081 = vrcp.pop %v1073
      %v1082 = vrcp.pop %v1078
      %v1084 = vsel %vm812, %v1081, 0
      %v1087 = vsel %vm812, %v1082, 0
      %1089 = vmatprep.subr.mxu0 0.0
      %1090 = vmatpush1.msra.mxu0 %v821
      %1091 = vmatprep.subr.mxu0 0.0
      %1092 = vmatpush1.msra.mxu0 0.0
      %1093 = vmatprep.subr.mxu0 0.0
      %1094 = vmatpush1.msra.mxu0 0.0
      %1095 = vmatprep.subr.mxu0 0.0
      %1096 = vmatpush1.msra.mxu0 0.0
      %1097 = vmatprep.subr.mxu0 0.0
      %1098 = vmatpush1.msra.mxu0 0.0
      %1099 = vmatprep.subr.mxu0 0.0
      %1100 = vmatpush1.msra.mxu0 0.0
      %1101 = vmatprep.subr.mxu0 0.0
      %1102 = vmatpush1.msra.mxu0 0.0
      %1103 = vmatprep.subr.mxu0 0.0
      %1104 = vmatpush1.msra.mxu0 0.0
      %1105 = vmatprep.subr.mxu0 0.0
      %1106 = vmatpush1.msra.mxu0 0.0
      %1107 = vmatprep.subr.mxu0 0.0
      %1108 = vmatpush1.msra.mxu0 0.0
      %1109 = vmatprep.subr.mxu0 0.0
      %1110 = vmatpush1.msra.mxu0 0.0
      %1111 = vmatprep.subr.mxu0 0.0
      %1112 = vmatpush1.msra.mxu0 0.0
      %1113 = vmatprep.subr.mxu0 0.0
      %1114 = vmatpush1.msra.mxu0 0.0
      %1115 = vmatprep.subr.mxu0 0.0
      %1116 = vmatpush1.msra.mxu0 0.0
      %1117 = vmatprep.subr.mxu0 0.0
      %1118 = vmatpush1.msra.mxu0 0.0
      %1119 = vmatprep.subr.mxu0 0.0
      %1120 = vmatpush1.msra.mxu0 0.0
      %1121 = vmatprep.subr.mxu0 0.0
      %1122 = vmatpush1.msra.mxu0 0.0
      %1123 = vmatprep.subr.mxu0 0.0
      %1124 = vmatpush1.msra.mxu0 0.0
      %1125 = vmatprep.subr.mxu0 0.0
      %1126 = vmatpush1.msra.mxu0 0.0
      %1127 = vmatprep.subr.mxu0 0.0
      %1128 = vmatpush1.msra.mxu0 0.0
      %1129 = vmatprep.subr.mxu0 0.0
      %1130 = vmatpush1.msra.mxu0 0.0
      %1131 = vmatprep.subr.mxu0 0.0
      %1132 = vmatpush1.msra.mxu0 0.0
      %1133 = vmatprep.subr.mxu0 0.0
      %1134 = vmatpush1.msra.mxu0 0.0
      %1135 = vmatprep.subr.mxu0 0.0
      %1136 = vmatpush1.msra.mxu0 0.0
      %1137 = vmatprep.subr.mxu0 0.0
      %1138 = vmatpush1.msra.mxu0 0.0
      %1139 = vmatprep.subr.mxu0 0.0
      %1140 = vmatpush1.msra.mxu0 0.0
      %1141 = vmatprep.subr.mxu0 0.0
      %1142 = vmatpush1.msra.mxu0 0.0
      %1143 = vmatprep.subr.mxu0 0.0
      %1144 = vmatpush1.msra.mxu0 0.0
      %1145 = vmatprep.subr.mxu0 0.0
      %1146 = vmatpush1.msra.mxu0 0.0
      %1147 = vmatprep.subr.mxu0 0.0
      %1148 = vmatpush1.msra.mxu0 0.0
      %1149 = vmatprep.subr.mxu0 0.0
      %1150 = vmatpush1.msra.mxu0 0.0
      %1151 = vmatprep.subr.mxu0 0.0
      %1152 = vmatpush1.msra.mxu0 0.0
      %1153 = vmatprep.mubr.f32.mxu0 0.0
      %1154 = vmatmul.mubr.f32.gmra.mrb[0].mxu0 %v1084
      %v1155 = vpop.f32.mrb[0].mxu0
      %v1156 = vadd.f32 0.0, %v1155
      %v1157 = vpop.f32.mrb[0].mxu0
      %1158 = vmatprep.mubr.f32.mxu0 0.0
      %1159 = vmatmul.mubr.f32.gmra.mrb[0].mxu0 %v1087
      %v1160 = vpop.f32.mrb[0].mxu0
      %v1161 = vadd.f32 0.0, %v1160
      %v1162 = vpop.f32.mrb[0].mxu0
      %1163 = vdwg.mxu0
      %v1164 = vmul.f32 %v983, %v1156
      %v1165 = vmul.f32 %v988, %v1161
      %v1166 = vld [vmem:[%s12] sm:$0xff]
      %v1167 = vld [vmem:[%s12 + $0x8] sm:$0xff]
      %v1168 = vld [vmem:[%s12 + $0x10] sm:$0xff]
      %v1169 = vld [vmem:[%s12 + $0x18] sm:$0xff]
      %v1170 = vld [vmem:[%s12 + $0x20] sm:$0xff]
      %v1171 = vld [vmem:[%s12 + $0x28] sm:$0xff]
      %v1172 = vld [vmem:[%s12 + $0x30] sm:$0xff]
      %v1173 = vld [vmem:[%s12 + $0x38] sm:$0xff]
      %v1175 = vsel %vm627, %v595, 0
      %v1178 = vsel %vm627, %v596, 0
      %1180 = vmatprep.subr.mxu0 0.0
      %1181 = vmatpush1.msra.mxu0 %v1166
      %1182 = vmatprep.subr.mxu0 0.0
      %1183 = vmatpush1.msra.mxu0 %v1167
      %1184 = vmatprep.subr.mxu0 0.0
      %1185 = vmatpush1.msra.mxu0 %v1168
      %1186 = vmatprep.subr.mxu0 0.0
      %1187 = vmatpush1.msra.mxu0 %v1169
      %1188 = vmatprep.subr.mxu0 0.0
      %1189 = vmatpush1.msra.mxu0 %v1170
      %1190 = vmatprep.subr.mxu0 0.0
      %1191 = vmatpush1.msra.mxu0 %v1171
      %1192 = vmatprep.subr.mxu0 0.0
      %1193 = vmatpush1.msra.mxu0 %v1172
      %1194 = vmatprep.subr.mxu0 0.0
      %1195 = vmatpush1.msra.mxu0 %v1173
      %1196 = vmatprep.subr.mxu0 0.0
      %1197 = vmatpush1.msra.mxu0 0.0
      %1198 = vmatprep.subr.mxu0 0.0
      %1199 = vmatpush1.msra.mxu0 0.0
      %1200 = vmatprep.subr.mxu0 0.0
      %1201 = vmatpush1.msra.mxu0 0.0
      %1202 = vmatprep.subr.mxu0 0.0
      %1203 = vmatpush1.msra.mxu0 0.0
      %1204 = vmatprep.subr.mxu0 0.0
      %1205 = vmatpush1.msra.mxu0 0.0
      %1206 = vmatprep.subr.mxu0 0.0
      %1207 = vmatpush1.msra.mxu0 0.0
      %1208 = vmatprep.subr.mxu0 0.0
      %1209 = vmatpush1.msra.mxu0 0.0
      %1210 = vmatprep.subr.mxu0 0.0
      %1211 = vmatpush1.msra.mxu0 0.0
      %1212 = vmatprep.subr.mxu0 0.0
      %1213 = vmatpush1.msra.mxu0 0.0
      %1214 = vmatprep.subr.mxu0 0.0
      %1215 = vmatpush1.msra.mxu0 0.0
      %1216 = vmatprep.subr.mxu0 0.0
      %1217 = vmatpush1.msra.mxu0 0.0
      %1218 = vmatprep.subr.mxu0 0.0
      %1219 = vmatpush1.msra.mxu0 0.0
      %1220 = vmatprep.subr.mxu0 0.0
      %1221 = vmatpush1.msra.mxu0 0.0
      %1222 = vmatprep.subr.mxu0 0.0
      %1223 = vmatpush1.msra.mxu0 0.0
      %1224 = vmatprep.subr.mxu0 0.0
      %1225 = vmatpush1.msra.mxu0 0.0
      %1226 = vmatprep.subr.mxu0 0.0
      %1227 = vmatpush1.msra.mxu0 0.0
      %1228 = vmatprep.subr.mxu0 0.0
      %1229 = vmatpush1.msra.mxu0 0.0
      %1230 = vmatprep.subr.mxu0 0.0
      %1231 = vmatpush1.msra.mxu0 0.0
      %1232 = vmatprep.subr.mxu0 0.0
      %1233 = vmatpush1.msra.mxu0 0.0
      %1234 = vmatprep.subr.mxu0 0.0
      %1235 = vmatpush1.msra.mxu0 0.0
      %1236 = vmatprep.subr.mxu0 0.0
      %1237 = vmatpush1.msra.mxu0 0.0
      %1238 = vmatprep.subr.mxu0 0.0
      %1239 = vmatpush1.msra.mxu0 0.0
      %1240 = vmatprep.subr.mxu0 0.0
      %1241 = vmatpush1.msra.mxu0 0.0
      %1242 = vmatprep.subr.mxu0 0.0
      %1243 = vmatpush1.msra.mxu0 0.0
      %1244 = vmatprep.mubr.f32.mxu0 0.0
      %1245 = vmatmul.mubr.f32.gmra.mrb[0].mxu0 %v1175
      %v1246 = vpop.f32.mrb[0].mxu0
      %v1247 = vadd.f32 0.0, %v1246
      %v1248 = vpop.f32.mrb[0].mxu0
      %1249 = vmatprep.mubr.f32.mxu0 0.0
      %1250 = vmatmul.mubr.f32.gmra.mrb[0].mxu0 %v1178
      %v1251 = vpop.f32.mrb[0].mxu0
      %v1252 = vadd.f32 0.0, %v1251
      %v1253 = vpop.f32.mrb[0].mxu0
      %1254 = vdwg.mxu0
      %v1255 = vld [vmem:[%s8] sm:$0xff]
      %v1256 = vld [vmem:[%s8 + $0x8] sm:$0xff]
      %v1257 = vld [vmem:[%s8 + $0x10] sm:$0xff]
      %v1258 = vld [vmem:[%s8 + $0x18] sm:$0xff]
      %v1259 = vld [vmem:[%s9] sm:$0x1]
      %v1261 = vlaneseq
      %v1262 = vshrl.u32 %v1261, 7
      %v1263 = vsub.s32 0, %v1262
      %v1264 = vrot.slane %v1259, %v1263
      %v1267 = vsel %vm471, %v1247, 0
      %v1270 = vsel %vm471, %v1252, 0
      %1272 = vmatprep.subr.mxu0 0.0
      %1273 = vmatpush1.msra.mxu0 %v1255
      %1274 = vmatprep.subr.mxu0 0.0
      %1275 = vmatpush1.msra.mxu0 %v1256
      %1276 = vmatprep.subr.mxu0 0.0
      %1277 = vmatpush1.msra.mxu0 %v1257
      %1278 = vmatprep.subr.mxu0 0.0
      %1279 = vmatpush1.msra.mxu0 %v1258
      %1280 = vmatprep.subr.mxu0 0.0
      %1281 = vmatpush1.msra.mxu0 0.0
      %1282 = vmatprep.subr.mxu0 0.0
      %1283 = vmatpush1.msra.mxu0 0.0
      %1284 = vmatprep.subr.mxu0 0.0
      %1285 = vmatpush1.msra.mxu0 0.0
      %1286 = vmatprep.subr.mxu0 0.0
      %1287 = vmatpush1.msra.mxu0 0.0
      %1288 = vmatprep.subr.mxu0 0.0
      %1289 = vmatpush1.msra.mxu0 0.0
      %1290 = vmatprep.subr.mxu0 0.0
      %1291 = vmatpush1.msra.mxu0 0.0
      %1292 = vmatprep.subr.mxu0 0.0
      %1293 = vmatpush1.msra.mxu0 0.0
      %1294 = vmatprep.subr.mxu0 0.0
      %1295 = vmatpush1.msra.mxu0 0.0
      %1296 = vmatprep.subr.mxu0 0.0
      %1297 = vmatpush1.msra.mxu0 0.0
      %1298 = vmatprep.subr.mxu0 0.0
      %1299 = vmatpush1.msra.mxu0 0.0
      %1300 = vmatprep.subr.mxu0 0.0
      %1301 = vmatpush1.msra.mxu0 0.0
      %1302 = vmatprep.subr.mxu0 0.0
      %1303 = vmatpush1.msra.mxu0 0.0
      %1304 = vmatprep.subr.mxu0 0.0
      %1305 = vmatpush1.msra.mxu0 0.0
      %1306 = vmatprep.subr.mxu0 0.0
      %1307 = vmatpush1.msra.mxu0 0.0
      %1308 = vmatprep.subr.mxu0 0.0
      %1309 = vmatpush1.msra.mxu0 0.0
      %1310 = vmatprep.subr.mxu0 0.0
      %1311 = vmatpush1.msra.mxu0 0.0
      %1312 = vmatprep.subr.mxu0 0.0
      %1313 = vmatpush1.msra.mxu0 0.0
      %1314 = vmatprep.subr.mxu0 0.0
      %1315 = vmatpush1.msra.mxu0 0.0
      %1316 = vmatprep.subr.mxu0 0.0
      %1317 = vmatpush1.msra.mxu0 0.0
      %1318 = vmatprep.subr.mxu0 0.0
      %1319 = vmatpush1.msra.mxu0 0.0
      %1320 = vmatprep.subr.mxu0 0.0
      %1321 = vmatpush1.msra.mxu0 0.0
      %1322 = vmatprep.subr.mxu0 0.0
      %1323 = vmatpush1.msra.mxu0 0.0
      %1324 = vmatprep.subr.mxu0 0.0
      %1325 = vmatpush1.msra.mxu0 0.0
      %1326 = vmatprep.subr.mxu0 0.0
      %1327 = vmatpush1.msra.mxu0 0.0
      %1328 = vmatprep.subr.mxu0 0.0
      %1329 = vmatpush1.msra.mxu0 0.0
      %1330 = vmatprep.subr.mxu0 0.0
      %1331 = vmatpush1.msra.mxu0 0.0
      %1332 = vmatprep.subr.mxu0 0.0
      %1333 = vmatpush1.msra.mxu0 0.0
      %1334 = vmatprep.subr.mxu0 0.0
      %1335 = vmatpush1.msra.mxu0 0.0
      %1336 = vmatprep.mubr.f32.mxu0 0.0
      %1337 = vmatmul.mubr.f32.gmra.mrb[0].mxu0 %v1267
      %v1338 = vpop.f32.mrb[0].mxu0
      %v1339 = vadd.f32 %v1264, %v1338
      %v1340 = vpop.f32.mrb[0].mxu0
      %1341 = vmatprep.mubr.f32.mxu0 0.0
      %1342 = vmatmul.mubr.f32.gmra.mrb[0].mxu0 %v1270
      %v1343 = vpop.f32.mrb[0].mxu0
      %v1344 = vadd.f32 %v1264, %v1343
      %v1345 = vpop.f32.mrb[0].mxu0
      %1346 = vdwg.mxu0
      %v1348 = vsel %vm627, %v1164, 0
      %v1351 = vsel %vm627, %v1165, 0
      %1353 = vmatprep.subr.mxu0 0.0
      %1354 = vmatpush1.msra.mxu0 %v1166
      %1355 = vmatprep.subr.mxu0 0.0
      %1356 = vmatpush1.msra.mxu0 %v1167
      %1357 = vmatprep.subr.mxu0 0.0
      %1358 = vmatpush1.msra.mxu0 %v1168
      %1359 = vmatprep.subr.mxu0 0.0
      %1360 = vmatpush1.msra.mxu0 %v1169
      %1361 = vmatprep.subr.mxu0 0.0
      %1362 = vmatpush1.msra.mxu0 %v1170
      %1363 = vmatprep.subr.mxu0 0.0
      %1364 = vmatpush1.msra.mxu0 %v1171
      %1365 = vmatprep.subr.mxu0 0.0
      %1366 = vmatpush1.msra.mxu0 %v1172
      %1367 = vmatprep.subr.mxu0 0.0
      %1368 = vmatpush1.msra.mxu0 %v1173
      %1369 = vmatprep.subr.mxu0 0.0
      %1370 = vmatpush1.msra.mxu0 0.0
      %1371 = vmatprep.subr.mxu0 0.0
      %1372 = vmatpush1.msra.mxu0 0.0
      %1373 = vmatprep.subr.mxu0 0.0
      %1374 = vmatpush1.msra.mxu0 0.0
      %1375 = vmatprep.subr.mxu0 0.0
      %1376 = vmatpush1.msra.mxu0 0.0
      %1377 = vmatprep.subr.mxu0 0.0
      %1378 = vmatpush1.msra.mxu0 0.0
      %1379 = vmatprep.subr.mxu0 0.0
      %1380 = vmatpush1.msra.mxu0 0.0
      %1381 = vmatprep.subr.mxu0 0.0
      %1382 = vmatpush1.msra.mxu0 0.0
      %1383 = vmatprep.subr.mxu0 0.0
      %1384 = vmatpush1.msra.mxu0 0.0
      %1385 = vmatprep.subr.mxu0 0.0
      %1386 = vmatpush1.msra.mxu0 0.0
      %1387 = vmatprep.subr.mxu0 0.0
      %1388 = vmatpush1.msra.mxu0 0.0
      %1389 = vmatprep.subr.mxu0 0.0
      %1390 = vmatpush1.msra.mxu0 0.0
      %1391 = vmatprep.subr.mxu0 0.0
      %1392 = vmatpush1.msra.mxu0 0.0
      %1393 = vmatprep.subr.mxu0 0.0
      %1394 = vmatpush1.msra.mxu0 0.0
      %1395 = vmatprep.subr.mxu0 0.0
      %1396 = vmatpush1.msra.mxu0 0.0
      %1397 = vmatprep.subr.mxu0 0.0
      %1398 = vmatpush1.msra.mxu0 0.0
      %1399 = vmatprep.subr.mxu0 0.0
      %1400 = vmatpush1.msra.mxu0 0.0
      %1401 = vmatprep.subr.mxu0 0.0
      %1402 = vmatpush1.msra.mxu0 0.0
      %1403 = vmatprep.subr.mxu0 0.0
      %1404 = vmatpush1.msra.mxu0 0.0
      %1405 = vmatprep.subr.mxu0 0.0
      %1406 = vmatpush1.msra.mxu0 0.0
      %1407 = vmatprep.subr.mxu0 0.0
      %1408 = vmatpush1.msra.mxu0 0.0
      %1409 = vmatprep.subr.mxu0 0.0
      %1410 = vmatpush1.msra.mxu0 0.0
      %1411 = vmatprep.subr.mxu0 0.0
      %1412 = vmatpush1.msra.mxu0 0.0
      %1413 = vmatprep.subr.mxu0 0.0
      %1414 = vmatpush1.msra.mxu0 0.0
      %1415 = vmatprep.subr.mxu0 0.0
      %1416 = vmatpush1.msra.mxu0 0.0
      %1417 = vmatprep.mubr.f32.mxu0 0.0
      %1418 = vmatmul.mubr.f32.gmra.mrb[0].mxu0 %v1348
      %v1419 = vpop.f32.mrb[0].mxu0
      %v1420 = vadd.f32 %v1339, %v1419
      %v1421 = vpop.f32.mrb[0].mxu0
      %1422 = vmatprep.mubr.f32.mxu0 0.0
      %1423 = vmatmul.mubr.f32.gmra.mrb[0].mxu0 %v1351
      %v1424 = vpop.f32.mrb[0].mxu0
      %v1425 = vadd.f32 %v1344, %v1424
      %v1426 = vpop.f32.mrb[0].mxu0
      %1427 = vdwg.mxu0
      %v1428 = vld [vmem:[%s459] sm:$0xff]
      %v1429 = vld [vmem:[%s459 + $0x8] sm:$0xff]
      %v1430 = vmul.f32 %v1420, %v1420
      %v1431 = vmul.f32 %v1425, %v1425
      %v1432 = vsel %vm471, %v1430, 0.0
      %1433 = vadd.xlane.f32.xlu0 %v1432
      %v1434 = vpop.xlane.xlu0 %1433
      %v1435 = vsel %vm471, %v1431, 0.0
      %1436 = vadd.xlane.f32.xlu0 %v1435
      %v1437 = vpop.xlane.xlu0 %1436
      %v1438 = vadd.f32 %v1434, 1.0
      %v1439 = vadd.f32 %v1437, 1.0
      %v1440 = vrsqrt.pop %v1438
      %v1441 = vmul.f32 %v1438, %v1440
      %vm1442 = vcmp.eq.f32.partialorder %v1438, inf
      %v1443 = vsel %vm1442, %v1438, %v1441
      %vm1444 = vcmp.eq.f32.partialorder %v1438, 0.0
      %v1445 = vand.u32 %v1438, 2147483648
      %v1446 = vsel %vm1444, %v1445, %v1443
      %v1447 = vrsqrt.pop %v1439
      %v1448 = vmul.f32 %v1439, %v1447
      %vm1449 = vcmp.eq.f32.partialorder %v1439, inf
      %v1450 = vsel %vm1449, %v1439, %v1448
      %vm1451 = vcmp.eq.f32.partialorder %v1439, 0.0
      %v1452 = vand.u32 %v1439, 2147483648
      %v1453 = vsel %vm1451, %v1452, %v1450
      %v1454 = vmul.f32 %v1428, %v1428
      %v1455 = vmul.f32 %v1429, %v1429
      %v1456 = vsel %vm471, %v1454, 0.0
      %1457 = vadd.xlane.f32.xlu0 %v1456
      %v1458 = vpop.xlane.xlu0 %1457
      %v1459 = vsel %vm471, %v1455, 0.0
      %1460 = vadd.xlane.f32.xlu0 %v1459
      %v1461 = vpop.xlane.xlu0 %1460
      %v1462 = vadd.f32 %v1458, 1.0
      %v1463 = vadd.f32 %v1461, 1.0
      %v1464 = vrsqrt.pop %v1462
      %v1465 = vmul.f32 %v1462, %v1464
      %vm1466 = vcmp.eq.f32.partialorder %v1462, inf
      %v1467 = vsel %vm1466, %v1462, %v1465
      %vm1468 = vcmp.eq.f32.partialorder %v1462, 0.0
      %v1469 = vand.u32 %v1462, 2147483648
      %v1470 = vsel %vm1468, %v1469, %v1467
      %v1471 = vrsqrt.pop %v1463
      %v1472 = vmul.f32 %v1463, %v1471
      %vm1473 = vcmp.eq.f32.partialorder %v1463, inf
      %v1474 = vsel %vm1473, %v1463, %v1472
      %vm1475 = vcmp.eq.f32.partialorder %v1463, 0.0
      %v1476 = vand.u32 %v1463, 2147483648
      %v1477 = vsel %vm1475, %v1476, %v1474
      %v1478 = vadd.f32 %v1446, %v1470
      %v1479 = vadd.f32 %v1453, %v1477
      %v1480 = vmul.f32 %v1478, 0.5
      %v1481 = vmul.f32 %v1479, 0.5
      %v1482 = vadd.f32 %v1420, %v1428
      %v1483 = vadd.f32 %v1425, %v1429
      %v1484 = vmul.f32 %v1482, 0.5
      %v1485 = vmul.f32 %v1483, 0.5
      %v1486 = vmul.f32 %v1484, %v1484
      %v1487 = vmul.f32 %v1485, %v1485
      %v1488 = vsel %vm471, %v1486, 0.0
      %1489 = vadd.xlane.f32.xlu0 %v1488
      %v1490 = vpop.xlane.xlu0 %1489
      %v1491 = vsel %vm471, %v1487, 0.0
      %1492 = vadd.xlane.f32.xlu0 %v1491
      %v1493 = vpop.xlane.xlu0 %1492
      %v1494 = vmul.f32 %v1480, %v1480
      %v1495 = vmul.f32 %v1481, %v1481
      %v1496 = vsub.f32 %v1490, %v1494
      %v1497 = vsub.f32 %v1493, %v1495
      %v1498 = vand.u32 2147483647, %v1496
      %v1499 = vand.u32 2147483647, %v1497
      %v1500 = vmax.f32 %v1498, 1e-08
      %v1501 = vmax.f32 %v1499, 1e-08
      %v1502 = vrsqrt.pop %v1500
      %v1503 = vrsqrt.pop %v1501
      %v1504 = vmul.f32 %v1484, %v1502
      %v1505 = vmul.f32 %v1485, %v1503
      %v1506 = vmax.f32 %v1504, 0.0
      %v1507 = vmax.f32 %v1505, 0.0
      %1508 = vst.msk [vmem:[%s465] sm:$0xff] %vm471, %v1506
      %1509 = vst.msk [vmem:[%s465 + $0x8] sm:$0xff] %vm471, %v1507
      %s1510 = smul.u32 2, %s25
      %p1511 = scmp.lt.s32.totalorder %s1510, 5
      %s1512 = scalar_select %p1511, %s1510, 5
      %s1513 = smul.addr %s1512, 8
      %s1514 = scalar_lea.vmem %s13, %s1513
      // Predicated region
      $region73: #{_lambda_.16} parent=71 // pred_check
        %p1515 = pneg %p326
      $region74: #{_lambda_.16} parent=71 // pred_check_branch
        %1517 = sbr.rel (%p1515) target = $region76
      $region75: #{_lambda_.16} parent=71 // pred_region
        %s1518 = smul.u32 2, %s25
      $region76: #{_lambda_.16} parent=71 // pred_fallthru
        _
    $region72: #{_lambda_.16} parent=5 // pred_fallthru
      _
    %p1519 = scmp.le.s32.totalorder 2, %s20
    // Predicated region
    $region77: #{_lambda_.16} parent=5 // pred_check
      %p1520 = pneg %p1519
    $region78: #{_lambda_.16} parent=5 // pred_check_branch
      %1522 = sbr.rel (%p1520) target = $region80
    $region79: #{_lambda_.16} parent=5 // pred_region
      %s1523 = ssub.s32 %s20, 2
      // Predicated region
      $region81: #{_lambda_.16} parent=79 // pred_check
        %p1524 = pneg %p332
      $region82: #{_lambda_.16} parent=79 // pred_check_branch
        %1526 = sbr.rel (%p1524) target = $region84
      $region83: #{_lambda_.16} parent=79 // pred_region
        %s1527 = smul.u32 2, %s26
        %p1528 = scmp.lt.s32.totalorder %s1527, 5
        %s1529 = scalar_select %p1528, %s1527, 5
        %s1530 = smul.addr %s1529, 8
        %s1531 = scalar_lea.vmem %s13, %s1530
      $region84: #{_lambda_.16} parent=79 // pred_fallthru
        _
    $region80: #{_lambda_.16} parent=5 // pred_fallthru
      _
  $region6: #{_lambda_.16} parent=0 // loop_footer
    %s24 = sadd.s32 1, %s20
  $region7: #{_lambda_.16} parent=0 // loop_footer_branch
    %19 = sbr.rel target = $region3
  $region8: #{_lambda_.16} parent=0 // loop_exit
    _

// kernel: _lambda_.12
$region0: #{_lambda_.12}
  #allocation0 [shape = 'u32[]', space=smem, size = 0x4, offset = 0x4, fixed_abs, tag = 'smem constant byte address 0x4 - core index']
  #allocation1 [shape = 'u32[144,128]{1,0:T(1,128)}', space=vmem, size = 0x12000, scoped, tag = 'internal scratch']
  #allocation2 [shape = 'f32[1]{0:T(128)S(6)}', space=smem, size = 0x200, scoped, tag = 'scoped memory for _lambda_.12']
  %s0 = inlined_call_operand.<no memory space> [shape: f32[1], index: 0, kind: input, shape index: {}]
  %s1 = inlined_call_operand.vmem [shape: f32[48,32], index: 1, kind: input, shape index: {}, may-alias: {1,2}]
  %s2 = inlined_call_operand.vmem [shape: f32[48,32], index: 2, kind: input, shape index: {}, may-alias: {1,2}]
  %s3 = inlined_call_operand.vmem [shape: f32[64,64], index: 3, kind: input, shape index: {}]
  %s4 = inlined_call_operand.vmem [shape: f32[1,64], index: 4, kind: input, shape index: {}]
  %s5 = inlined_call_operand.vmem [shape: f32[1,128], index: 5, kind: input, shape index: {}]
  %s6 = inlined_call_operand.vmem [shape: f32[32,128], index: 6, kind: input, shape index: {}]
  %s7 = inlined_call_operand.vmem [shape: f32[1,128], index: 7, kind: input, shape index: {}]
  %s8 = inlined_call_operand.vmem [shape: f32[32,32], index: 8, kind: input, shape index: {}]
  %s9 = inlined_call_operand.vmem [shape: f32[1,32], index: 9, kind: input, shape index: {}]
  %s10 = inlined_call_operand.vmem [shape: f32[64,2], index: 10, kind: input, shape index: {}]
  %s11 = inlined_call_operand.vmem [shape: f32[2,64], index: 11, kind: input, shape index: {}]
  %s12 = inlined_call_operand.vmem [shape: f32[64,32], index: 12, kind: input, shape index: {}]
  %s13 = inlined_call_operand.vmem [shape: f32[48,32], index: 13, kind: output, shape index: {}]
  %s14 = sld [smem:[#allocation0]]
  $region85: #{_lambda_.12} parent=0
    _
  %s16 = ssub.s32 1, %s14
  %s17 = scalar_select 0, %s16, %s14
  %18 = sst [smem:[#allocation2]] %s0
  loop: start=0, step=1, limit=5
  $region2: #{_lambda_.12} parent=0 // loop_pre_header
    _
  $region3: #{_lambda_.12} parent=0 // loop_header
    %s20 = sphi 0, %s24
    %p21 = scmp.ge.s32.totalorder %s20, 5
    %s28 = sphi 0, %s28
    %s30 = sphi 0, %s28
    %s31 = sphi 0, %s30
    %s45 = sphi 0, %s31
    %s51 = sphi 0, %s53
    %s54 = sphi 0, %s51
    %s55 = sphi 0, %s54
    %s71 = sphi 0, %s55
    %s77 = sphi 0, %s79
    %s80 = sphi 0, %s77
    %s81 = sphi 0, %s80
    %s97 = sphi 0, %s81
    %s101 = sphi 0, %s101
    %s103 = sphi 0, %s101
    %s104 = sphi 0, %s103
    %s118 = sphi 0, %s104
    %s122 = sphi 0, %s122
    %s124 = sphi 0, %s122
    %s125 = sphi 0, %s124
    %s139 = sphi 0, %s125
    %s143 = sphi 0, %s143
    %s145 = sphi 0, %s143
    %s146 = sphi 0, %s145
    %s160 = sphi 0, %s146
    %s164 = sphi 0, %s164
    %s166 = sphi 0, %s164
    %s167 = sphi 0, %s166
    %s181 = sphi 0, %s167
    %s185 = sphi 0, %s185
    %s187 = sphi 0, %s185
    %s188 = sphi 0, %s187
    %s202 = sphi 0, %s188
    %s206 = sphi 0, %s206
    %s208 = sphi 0, %s206
    %s209 = sphi 0, %s208
    %s223 = sphi 0, %s209
    %s227 = sphi 0, %s227
    %s229 = sphi 0, %s227
    %s230 = sphi 0, %s229
    %s244 = sphi 0, %s230
    %s248 = sphi 0, %s248
    %s250 = sphi 0, %s248
    %s251 = sphi 0, %s250
    %s265 = sphi 0, %s251
    %s269 = sphi 0, %s269
    %s271 = sphi 0, %s269
    %s272 = sphi 0, %s271
    %s286 = sphi 0, %s272
    %s290 = sphi 0, %s290
    %s292 = sphi 0, %s290
    %s293 = sphi 0, %s292
    %s307 = sphi 0, %s293
    %s313 = sphi 0, %s315
    %s316 = sphi 0, %s313
    %s317 = sphi 0, %s316
    %s333 = sphi 0, %s317
  $region4: #{_lambda_.12} parent=0 // loop_header_branch
    %23 = sbr.rel (%p21) target = $region8
  $region5: #{_lambda_.12} parent=0 // loop_body
    %s25 = ssub.s32 %s20, 1
    %s26 = ssub.s32 %s20, 2
    %s27 = sadd.s32 %s20, 1
    %s29 = sadd.s32 %s28, 1
    %p32 = scmp.eq.s32.totalorder %s20, 2
    %p33 = scmp.ne.s32.totalorder %s28, %s30
    %p34 = scmp.eq.s32.totalorder %s20, 0
    %p35 = por %p33, %p34
    %p36 = scmp.ne.s32.totalorder %s28, %s30
    %p37 = scmp.eq.s32.totalorder %s25, 2
    %p38 = por %p36, %p37
    %p39 = scmp.ne.s32.totalorder %s30, %s31
    %p40 = scmp.eq.s32.totalorder %s25, 0
    %p41 = por %p39, %p40
    %p42 = scmp.ne.s32.totalorder %s30, %s31
    %p43 = scmp.eq.s32.totalorder %s26, 2
    %p44 = por %p42, %p43
    %p46 = scmp.ne.s32.totalorder %s31, %s45
    %p47 = scmp.eq.s32.totalorder %s26, 0
    %p48 = por %p46, %p47
    %s49 = ssub.s32 %s20, %s27
    %p50 = scmp.eq.s32.totalorder %s49, 0
    %s52 = sadd.s32 %s51, 1
    %s53 = scalar_select %p50, %s51, %s52
    %p56 = pneg %p50
    %p57 = scmp.eq.s32.totalorder %s20, 2
    %p58 = por %p56, %p57
    %p59 = scmp.ne.s32.totalorder %s51, %s54
    %p60 = scmp.eq.s32.totalorder %s20, 0
    %p61 = por %p59, %p60
    %p62 = scmp.ne.s32.totalorder %s51, %s54
    %p63 = scmp.eq.s32.totalorder %s25, 2
    %p64 = por %p62, %p63
    %p65 = scmp.ne.s32.totalorder %s54, %s55
    %p66 = scmp.eq.s32.totalorder %s25, 0
    %p67 = por %p65, %p66
    %p68 = scmp.ne.s32.totalorder %s54, %s55
    %p69 = scmp.eq.s32.totalorder %s26, 2
    %p70 = por %p68, %p69
    %p72 = scmp.ne.s32.totalorder %s55, %s71
    %p73 = scmp.eq.s32.totalorder %s26, 0
    %p74 = por %p72, %p73
    %s75 = ssub.s32 %s20, %s27
    %p76 = scmp.eq.s32.totalorder %s75, 0
    %s78 = sadd.s32 %s77, 1
    %s79 = scalar_select %p76, %s77, %s78
    %p82 = pneg %p76
    %p83 = scmp.eq.s32.totalorder %s20, 2
    %p84 = por %p82, %p83
    %p85 = scmp.ne.s32.totalorder %s77, %s80
    %p86 = scmp.eq.s32.totalorder %s20, 0
    %p87 = por %p85, %p86
    %p88 = scmp.ne.s32.totalorder %s77, %s80
    %p89 = scmp.eq.s32.totalorder %s25, 2
    %p90 = por %p88, %p89
    %p91 = scmp.ne.s32.totalorder %s80, %s81
    %p92 = scmp.eq.s32.totalorder %s25, 0
    %p93 = por %p91, %p92
    %p94 = scmp.ne.s32.totalorder %s80, %s81
    %p95 = scmp.eq.s32.totalorder %s26, 2
    %p96 = por %p94, %p95
    %p98 = scmp.ne.s32.totalorder %s81, %s97
    %p99 = scmp.eq.s32.totalorder %s26, 0
    %p100 = por %p98, %p99
    %s102 = sadd.s32 %s101, 1
    %p105 = scmp.eq.s32.totalorder %s20, 2
    %p106 = scmp.ne.s32.totalorder %s101, %s103
    %p107 = scmp.eq.s32.totalorder %s20, 0
    %p108 = por %p106, %p107
    %p109 = scmp.ne.s32.totalorder %s101, %s103
    %p110 = scmp.eq.s32.totalorder %s25, 2
    %p111 = por %p109, %p110
    %p112 = scmp.ne.s32.totalorder %s103, %s104
    %p113 = scmp.eq.s32.totalorder %s25, 0
    %p114 = por %p112, %p113
    %p115 = scmp.ne.s32.totalorder %s103, %s104
    %p116 = scmp.eq.s32.totalorder %s26, 2
    %p117 = por %p115, %p116
    %p119 = scmp.ne.s32.totalorder %s104, %s118
    %p120 = scmp.eq.s32.totalorder %s26, 0
    %p121 = por %p119, %p120
    %s123 = sadd.s32 %s122, 1
    %p126 = scmp.eq.s32.totalorder %s20, 2
    %p127 = scmp.ne.s32.totalorder %s122, %s124
    %p128 = scmp.eq.s32.totalorder %s20, 0
    %p129 = por %p127, %p128
    %p130 = scmp.ne.s32.totalorder %s122, %s124
    %p131 = scmp.eq.s32.totalorder %s25, 2
    %p132 = por %p130, %p131
    %p133 = scmp.ne.s32.totalorder %s124, %s125
    %p134 = scmp.eq.s32.totalorder %s25, 0
    %p135 = por %p133, %p134
    %p136 = scmp.ne.s32.totalorder %s124, %s125
    %p137 = scmp.eq.s32.totalorder %s26, 2
    %p138 = por %p136, %p137
    %p140 = scmp.ne.s32.totalorder %s125, %s139
    %p141 = scmp.eq.s32.totalorder %s26, 0
    %p142 = por %p140, %p141
    %s144 = sadd.s32 %s143, 1
    %p147 = scmp.eq.s32.totalorder %s20, 2
    %p148 = scmp.ne.s32.totalorder %s143, %s145
    %p149 = scmp.eq.s32.totalorder %s20, 0
    %p150 = por %p148, %p149
    %p151 = scmp.ne.s32.totalorder %s143, %s145
    %p152 = scmp.eq.s32.totalorder %s25, 2
    %p153 = por %p151, %p152
    %p154 = scmp.ne.s32.totalorder %s145, %s146
    %p155 = scmp.eq.s32.totalorder %s25, 0
    %p156 = por %p154, %p155
    %p157 = scmp.ne.s32.totalorder %s145, %s146
    %p158 = scmp.eq.s32.totalorder %s26, 2
    %p159 = por %p157, %p158
    %p161 = scmp.ne.s32.totalorder %s146, %s160
    %p162 = scmp.eq.s32.totalorder %s26, 0
    %p163 = por %p161, %p162
    %s165 = sadd.s32 %s164, 1
    %p168 = scmp.eq.s32.totalorder %s20, 2
    %p169 = scmp.ne.s32.totalorder %s164, %s166
    %p170 = scmp.eq.s32.totalorder %s20, 0
    %p171 = por %p169, %p170
    %p172 = scmp.ne.s32.totalorder %s164, %s166
    %p173 = scmp.eq.s32.totalorder %s25, 2
    %p174 = por %p172, %p173
    %p175 = scmp.ne.s32.totalorder %s166, %s167
    %p176 = scmp.eq.s32.totalorder %s25, 0
    %p177 = por %p175, %p176
    %p178 = scmp.ne.s32.totalorder %s166, %s167
    %p179 = scmp.eq.s32.totalorder %s26, 2
    %p180 = por %p178, %p179
    %p182 = scmp.ne.s32.totalorder %s167, %s181
    %p183 = scmp.eq.s32.totalorder %s26, 0
    %p184 = por %p182, %p183
    %s186 = sadd.s32 %s185, 1
    %p189 = scmp.eq.s32.totalorder %s20, 2
    %p190 = scmp.ne.s32.totalorder %s185, %s187
    %p191 = scmp.eq.s32.totalorder %s20, 0
    %p192 = por %p190, %p191
    %p193 = scmp.ne.s32.totalorder %s185, %s187
    %p194 = scmp.eq.s32.totalorder %s25, 2
    %p195 = por %p193, %p194
    %p196 = scmp.ne.s32.totalorder %s187, %s188
    %p197 = scmp.eq.s32.totalorder %s25, 0
    %p198 = por %p196, %p197
    %p199 = scmp.ne.s32.totalorder %s187, %s188
    %p200 = scmp.eq.s32.totalorder %s26, 2
    %p201 = por %p199, %p200
    %p203 = scmp.ne.s32.totalorder %s188, %s202
    %p204 = scmp.eq.s32.totalorder %s26, 0
    %p205 = por %p203, %p204
    %s207 = sadd.s32 %s206, 1
    %p210 = scmp.eq.s32.totalorder %s20, 2
    %p211 = scmp.ne.s32.totalorder %s206, %s208
    %p212 = scmp.eq.s32.totalorder %s20, 0
    %p213 = por %p211, %p212
    %p214 = scmp.ne.s32.totalorder %s206, %s208
    %p215 = scmp.eq.s32.totalorder %s25, 2
    %p216 = por %p214, %p215
    %p217 = scmp.ne.s32.totalorder %s208, %s209
    %p218 = scmp.eq.s32.totalorder %s25, 0
    %p219 = por %p217, %p218
    %p220 = scmp.ne.s32.totalorder %s208, %s209
    %p221 = scmp.eq.s32.totalorder %s26, 2
    %p222 = por %p220, %p221
    %p224 = scmp.ne.s32.totalorder %s209, %s223
    %p225 = scmp.eq.s32.totalorder %s26, 0
    %p226 = por %p224, %p225
    %s228 = sadd.s32 %s227, 1
    %p231 = scmp.eq.s32.totalorder %s20, 2
    %p232 = scmp.ne.s32.totalorder %s227, %s229
    %p233 = scmp.eq.s32.totalorder %s20, 0
    %p234 = por %p232, %p233
    %p235 = scmp.ne.s32.totalorder %s227, %s229
    %p236 = scmp.eq.s32.totalorder %s25, 2
    %p237 = por %p235, %p236
    %p238 = scmp.ne.s32.totalorder %s229, %s230
    %p239 = scmp.eq.s32.totalorder %s25, 0
    %p240 = por %p238, %p239
    %p241 = scmp.ne.s32.totalorder %s229, %s230
    %p242 = scmp.eq.s32.totalorder %s26, 2
    %p243 = por %p241, %p242
    %p245 = scmp.ne.s32.totalorder %s230, %s244
    %p246 = scmp.eq.s32.totalorder %s26, 0
    %p247 = por %p245, %p246
    %s249 = sadd.s32 %s248, 1
    %p252 = scmp.eq.s32.totalorder %s20, 2
    %p253 = scmp.ne.s32.totalorder %s248, %s250
    %p254 = scmp.eq.s32.totalorder %s20, 0
    %p255 = por %p253, %p254
    %p256 = scmp.ne.s32.totalorder %s248, %s250
    %p257 = scmp.eq.s32.totalorder %s25, 2
    %p258 = por %p256, %p257
    %p259 = scmp.ne.s32.totalorder %s250, %s251
    %p260 = scmp.eq.s32.totalorder %s25, 0
    %p261 = por %p259, %p260
    %p262 = scmp.ne.s32.totalorder %s250, %s251
    %p263 = scmp.eq.s32.totalorder %s26, 2
    %p264 = por %p262, %p263
    %p266 = scmp.ne.s32.totalorder %s251, %s265
    %p267 = scmp.eq.s32.totalorder %s26, 0
    %p268 = por %p266, %p267
    %s270 = sadd.s32 %s269, 1
    %p273 = scmp.eq.s32.totalorder %s20, 2
    %p274 = scmp.ne.s32.totalorder %s269, %s271
    %p275 = scmp.eq.s32.totalorder %s20, 0
    %p276 = por %p274, %p275
    %p277 = scmp.ne.s32.totalorder %s269, %s271
    %p278 = scmp.eq.s32.totalorder %s25, 2
    %p279 = por %p277, %p278
    %p280 = scmp.ne.s32.totalorder %s271, %s272
    %p281 = scmp.eq.s32.totalorder %s25, 0
    %p282 = por %p280, %p281
    %p283 = scmp.ne.s32.totalorder %s271, %s272
    %p284 = scmp.eq.s32.totalorder %s26, 2
    %p285 = por %p283, %p284
    %p287 = scmp.ne.s32.totalorder %s272, %s286
    %p288 = scmp.eq.s32.totalorder %s26, 0
    %p289 = por %p287, %p288
    %s291 = sadd.s32 %s290, 1
    %p294 = scmp.eq.s32.totalorder %s20, 2
    %p295 = scmp.ne.s32.totalorder %s290, %s292
    %p296 = scmp.eq.s32.totalorder %s20, 0
    %p297 = por %p295, %p296
    %p298 = scmp.ne.s32.totalorder %s290, %s292
    %p299 = scmp.eq.s32.totalorder %s25, 2
    %p300 = por %p298, %p299
    %p301 = scmp.ne.s32.totalorder %s292, %s293
    %p302 = scmp.eq.s32.totalorder %s25, 0
    %p303 = por %p301, %p302
    %p304 = scmp.ne.s32.totalorder %s292, %s293
    %p305 = scmp.eq.s32.totalorder %s26, 2
    %p306 = por %p304, %p305
    %p308 = scmp.ne.s32.totalorder %s293, %s307
    %p309 = scmp.eq.s32.totalorder %s26, 0
    %p310 = por %p308, %p309
    %s311 = ssub.s32 %s20, %s27
    %p312 = scmp.eq.s32.totalorder %s311, 0
    %s314 = sadd.s32 %s313, 1
    %s315 = scalar_select %p312, %s313, %s314
    %p318 = pneg %p312
    %p319 = scmp.eq.s32.totalorder %s20, 2
    %p320 = por %p318, %p319
    %p321 = scmp.ne.s32.totalorder %s313, %s316
    %p322 = scmp.eq.s32.totalorder %s20, 0
    %p323 = por %p321, %p322
    %p324 = scmp.ne.s32.totalorder %s313, %s316
    %p325 = scmp.eq.s32.totalorder %s25, 2
    %p326 = por %p324, %p325
    %p327 = scmp.ne.s32.totalorder %s316, %s317
    %p328 = scmp.eq.s32.totalorder %s25, 0
    %p329 = por %p327, %p328
    %p330 = scmp.ne.s32.totalorder %s316, %s317
    %p331 = scmp.eq.s32.totalorder %s26, 2
    %p332 = por %p330, %p331
    %p334 = scmp.ne.s32.totalorder %s317, %s333
    %p335 = scmp.eq.s32.totalorder %s26, 0
    %p336 = por %p334, %p335
    %p337 = scmp.le.s32.totalorder 1, %s20
    %p338 = scmp.lt.s32.totalorder %s20, 4
    %p339 = pnand %p337, %p338
    %p340 = pneg %p339
    // Predicated region
    $region9: #{_lambda_.12} parent=5 // pred_check
      _
    $region10: #{_lambda_.12} parent=5 // pred_check_branch
      %342 = sbr.rel (%p339) target = $region12
    $region11: #{_lambda_.12} parent=5 // pred_region
      %s343 = ssub.s32 %s20, 1
      // Predicated region
      $region13: #{_lambda_.12} parent=11 // pred_check
        %p344 = pneg %p41
      $region14: #{_lambda_.12} parent=11 // pred_check_branch
        %346 = sbr.rel (%p344) target = $region16
      $region15: #{_lambda_.12} parent=11 // pred_region
        _
      $region16: #{_lambda_.12} parent=11 // pred_fallthru
        _
      // Predicated region
      $region17: #{_lambda_.12} parent=11 // pred_check
        %p347 = pneg %p114
      $region18: #{_lambda_.12} parent=11 // pred_check_branch
        %349 = sbr.rel (%p347) target = $region20
      $region19: #{_lambda_.12} parent=11 // pred_region
        _
      $region20: #{_lambda_.12} parent=11 // pred_fallthru
        _
      // Predicated region
      $region21: #{_lambda_.12} parent=11 // pred_check
        %p350 = pneg %p135
      $region22: #{_lambda_.12} parent=11 // pred_check_branch
        %352 = sbr.rel (%p350) target = $region24
      $region23: #{_lambda_.12} parent=11 // pred_region
        _
      $region24: #{_lambda_.12} parent=11 // pred_fallthru
        _
      // Predicated region
      $region25: #{_lambda_.12} parent=11 // pred_check
        %p353 = pneg %p156
      $region26: #{_lambda_.12} parent=11 // pred_check_branch
        %355 = sbr.rel (%p353) target = $region28
      $region27: #{_lambda_.12} parent=11 // pred_region
        _
      $region28: #{_lambda_.12} parent=11 // pred_fallthru
        _
      // Predicated region
      $region29: #{_lambda_.12} parent=11 // pred_check
        %p356 = pneg %p177
      $region30: #{_lambda_.12} parent=11 // pred_check_branch
        %358 = sbr.rel (%p356) target = $region32
      $region31: #{_lambda_.12} parent=11 // pred_region
        _
      $region32: #{_lambda_.12} parent=11 // pred_fallthru
        _
      // Predicated region
      $region33: #{_lambda_.12} parent=11 // pred_check
        %p359 = pneg %p198
      $region34: #{_lambda_.12} parent=11 // pred_check_branch
        %361 = sbr.rel (%p359) target = $region36
      $region35: #{_lambda_.12} parent=11 // pred_region
        _
      $region36: #{_lambda_.12} parent=11 // pred_fallthru
        _
      // Predicated region
      $region37: #{_lambda_.12} parent=11 // pred_check
        %p362 = pneg %p219
      $region38: #{_lambda_.12} parent=11 // pred_check_branch
        %364 = sbr.rel (%p362) target = $region40
      $region39: #{_lambda_.12} parent=11 // pred_region
        _
      $region40: #{_lambda_.12} parent=11 // pred_fallthru
        _
      // Predicated region
      $region41: #{_lambda_.12} parent=11 // pred_check
        %p365 = pneg %p240
      $region42: #{_lambda_.12} parent=11 // pred_check_branch
        %367 = sbr.rel (%p365) target = $region44
      $region43: #{_lambda_.12} parent=11 // pred_region
        _
      $region44: #{_lambda_.12} parent=11 // pred_fallthru
        _
      // Predicated region
      $region45: #{_lambda_.12} parent=11 // pred_check
        %p368 = pneg %p261
      $region46: #{_lambda_.12} parent=11 // pred_check_branch
        %370 = sbr.rel (%p368) target = $region48
      $region47: #{_lambda_.12} parent=11 // pred_region
        _
      $region48: #{_lambda_.12} parent=11 // pred_fallthru
        _
      // Predicated region
      $region49: #{_lambda_.12} parent=11 // pred_check
        %p371 = pneg %p282
      $region50: #{_lambda_.12} parent=11 // pred_check_branch
        %373 = sbr.rel (%p371) target = $region52
      $region51: #{_lambda_.12} parent=11 // pred_region
        _
      $region52: #{_lambda_.12} parent=11 // pred_fallthru
        _
      // Predicated region
      $region53: #{_lambda_.12} parent=11 // pred_check
        %p374 = pneg %p303
      $region54: #{_lambda_.12} parent=11 // pred_check_branch
        %376 = sbr.rel (%p374) target = $region56
      $region55: #{_lambda_.12} parent=11 // pred_region
        _
      $region56: #{_lambda_.12} parent=11 // pred_fallthru
        _
    $region12: #{_lambda_.12} parent=5 // pred_fallthru
      _
    %p377 = scmp.lt.s32.totalorder %s20, 3
    // Predicated region
    $region57: #{_lambda_.12} parent=5 // pred_check
      %p378 = pneg %p377
    $region58: #{_lambda_.12} parent=5 // pred_check_branch
      %380 = sbr.rel (%p378) target = $region60
    $region59: #{_lambda_.12} parent=5 // pred_region
      // Predicated region
      $region61: #{_lambda_.12} parent=59 // pred_check
        %p381 = pneg %p61
      $region62: #{_lambda_.12} parent=59 // pred_check_branch
        %383 = sbr.rel (%p381) target = $region64
      $region63: #{_lambda_.12} parent=59 // pred_region
        %s384 = smul.u32 2, %s20
        %p385 = scmp.lt.s32.totalorder %s384, 5
        %s386 = scalar_select %p385, %s384, 5
        %s387 = smul.addr %s386, 8
        %s388 = scalar_lea.vmem %s1, %s387
        %s389 = smul.u32 2, %s20
      $region64: #{_lambda_.12} parent=59 // pred_fallthru
        _
      // Predicated region
      $region65: #{_lambda_.12} parent=59 // pred_check
        %p390 = pneg %p87
      $region66: #{_lambda_.12} parent=59 // pred_check_branch
        %392 = sbr.rel (%p390) target = $region68
      $region67: #{_lambda_.12} parent=59 // pred_region
        %s393 = smul.u32 2, %s20
        %p394 = scmp.lt.s32.totalorder %s393, 5
        %s395 = scalar_select %p394, %s393, 5
        %s396 = smul.addr %s395, 8
        %s397 = scalar_lea.vmem %s2, %s396
        %s398 = smul.u32 2, %s20
      $region68: #{_lambda_.12} parent=59 // pred_fallthru
        _
    $region60: #{_lambda_.12} parent=5 // pred_fallthru
      _
    %p399 = scmp.le.s32.totalorder 1, %s20
    %p400 = scmp.lt.s32.totalorder %s20, 4
    %p401 = pnand %p399, %p400
    %p402 = pneg %p401
    // Predicated region
    $region69: #{_lambda_.12} parent=5 // pred_check
      _
    $region70: #{_lambda_.12} parent=5 // pred_check_branch
      %404 = sbr.rel (%p401) target = $region72
    $region71: #{_lambda_.12} parent=5 // pred_region
      %s405 = ssub.s32 %s20, 1
      %p406 = pneg %p41
      %p407 = pneg %p38
      %s408 = smul.u32 2, %s25
      %p409 = scmp.lt.s32.totalorder %s408, 5
      %s410 = scalar_select %p409, %s408, 5
      %s411 = smul.addr %s410, 8
      %s412 = scalar_lea.vmem %s1, %s411
      %p413 = pneg %p67
      %p414 = pneg %p64
      %s415 = smul.u32 2, %s25
      %p416 = scmp.lt.s32.totalorder %s415, 5
      %s417 = scalar_select %p416, %s415, 5
      %s418 = smul.addr %s417, 8
      %s419 = scalar_lea.vmem %s2, %s418
      %p420 = pneg %p93
      %p421 = pneg %p90
      %p422 = pneg %p114
      %p423 = pneg %p111
      %p424 = pneg %p135
      %p425 = pneg %p132
      %p426 = pneg %p156
      %p427 = pneg %p153
      %p428 = pneg %p177
      %p429 = pneg %p174
      %p430 = pneg %p198
      %p431 = pneg %p195
      %p432 = pneg %p219
      %p433 = pneg %p216
      %p434 = pneg %p240
      %p435 = pneg %p237
      %p436 = pneg %p261
      %p437 = pneg %p258
      %p438 = pneg %p282
      %p439 = pneg %p279
      %p440 = pneg %p303
      %p441 = pneg %p300
      %p442 = pneg %p329
      %p443 = pneg %p326
      %s444 = smul.u32 2, %s25
      %p445 = scmp.lt.s32.totalorder %s444, 5
      %s446 = scalar_select %p445, %s444, 5
      %s447 = smul.addr %s446, 8
      %s448 = scalar_lea.vmem %s13, %s447
      %s449 = smul.u32 2, %s25
      %p450 = scmp.lt.s32.totalorder %s449, 5
      %s451 = scalar_select %p450, %s449, 5
      %s452 = smul.addr %s451, 8
      %s453 = scalar_lea.vmem %s1, %s452
      %s454 = smul.u32 2, %s25
      %s455 = smul.u32 2, %s25
      %p456 = scmp.lt.s32.totalorder %s455, 5
      %s457 = scalar_select %p456, %s455, 5
      %s458 = smul.addr %s457, 8
      %s459 = scalar_lea.vmem %s2, %s458
      %s460 = smul.u32 2, %s25
      %s461 = smul.u32 2, %s25
      %p462 = scmp.lt.s32.totalorder %s461, 5
      %s463 = scalar_select %p462, %s461, 5
      %s464 = smul.addr %s463, 8
      %s465 = scalar_lea.vmem %s13, %s464
      %s466 = smul.u32 2, %s25
      %v467 = vld [vmem:[%s453] sm:$0xff]
      %v468 = vld [vmem:[%s453 + $0x8] sm:$0xff]
      %v469 = vmul.f32 %v467, %v467
      %v470 = vmul.f32 %v468, %v468
      %vm471 = vcmask 261120
      %v472 = vsel %vm471, %v469, 0.0
      %473 = vadd.xlane.f32.xlu0 %v472
      %v474 = vpop.xlane.xlu0 %473
      %v475 = vsel %vm471, %v470, 0.0
      %476 = vadd.xlane.f32.xlu0 %v475
      %v477 = vpop.xlane.xlu0 %476
      %v478 = vadd.f32 %v474, 1.0
      %v479 = vadd.f32 %v477, 1.0
      %v480 = vrsqrt.pop %v478
      %v481 = vmul.f32 %v478, %v480
      %vm482 = vcmp.eq.f32.partialorder %v478, inf
      %v483 = vsel %vm482, %v478, %v481
      %vm484 = vcmp.eq.f32.partialorder %v478, 0.0
      %v485 = vand.u32 %v478, 2147483648
      %v486 = vsel %vm484, %v485, %v483
      %v487 = vrsqrt.pop %v479
      %v488 = vmul.f32 %v479, %v487
      %vm489 = vcmp.eq.f32.partialorder %v479, inf
      %v490 = vsel %vm489, %v479, %v488
      %vm491 = vcmp.eq.f32.partialorder %v479, 0.0
      %v492 = vand.u32 %v479, 2147483648
      %v493 = vsel %vm491, %v492, %v490
      %v494 = vld [vmem:[%s6] sm:$0xff]
      %v495 = vld [vmem:[%s6 + $0x8] sm:$0xff]
      %v496 = vld [vmem:[%s6 + $0x10] sm:$0xff]
      %v497 = vld [vmem:[%s6 + $0x18] sm:$0xff]
      %v498 = vld [vmem:[%s5] sm:$0x1]
      %v500 = vlaneseq
      %v501 = vshrl.u32 %v500, 7
      %v502 = vsub.s32 0, %v501
      %v503 = vrot.slane %v498, %v502
      %v505 = vmul.f32 %v486, %v503
      %v506 = vmul.f32 %v493, %v503
      %v508 = vsel %vm471, %v467, 0
      %v511 = vsel %vm471, %v468, 0
      %513 = vmatprep.subr.mxu0 0.0
      %514 = vmatpush1.msra.mxu0 %v494
      %515 = vmatprep.subr.mxu0 0.0
      %516 = vmatpush1.msra.mxu0 %v495
      %517 = vmatprep.subr.mxu0 0.0
      %518 = vmatpush1.msra.mxu0 %v496
      %519 = vmatprep.subr.mxu0 0.0
      %520 = vmatpush1.msra.mxu0 %v497
      %521 = vmatprep.subr.mxu0 0.0
      %522 = vmatpush1.msra.mxu0 0.0
      %523 = vmatprep.subr.mxu0 0.0
      %524 = vmatpush1.msra.mxu0 0.0
      %525 = vmatprep.subr.mxu0 0.0
      %526 = vmatpush1.msra.mxu0 0.0
      %527 = vmatprep.subr.mxu0 0.0
      %528 = vmatpush1.msra.mxu0 0.0
      %529 = vmatprep.subr.mxu0 0.0
      %530 = vmatpush1.msra.mxu0 0.0
      %531 = vmatprep.subr.mxu0 0.0
      %532 = vmatpush1.msra.mxu0 0.0
      %533 = vmatprep.subr.mxu0 0.0
      %534 = vmatpush1.msra.mxu0 0.0
      %535 = vmatprep.subr.mxu0 0.0
      %536 = vmatpush1.msra.mxu0 0.0
      %537 = vmatprep.subr.mxu0 0.0
      %538 = vmatpush1.msra.mxu0 0.0
      %539 = vmatprep.subr.mxu0 0.0
      %540 = vmatpush1.msra.mxu0 0.0
      %541 = vmatprep.subr.mxu0 0.0
      %542 = vmatpush1.msra.mxu0 0.0
      %543 = vmatprep.subr.mxu0 0.0
      %544 = vmatpush1.msra.mxu0 0.0
      %545 = vmatprep.subr.mxu0 0.0
      %546 = vmatpush1.msra.mxu0 0.0
      %547 = vmatprep.subr.mxu0 0.0
      %548 = vmatpush1.msra.mxu0 0.0
      %549 = vmatprep.subr.mxu0 0.0
      %550 = vmatpush1.msra.mxu0 0.0
      %551 = vmatprep.subr.mxu0 0.0
      %552 = vmatpush1.msra.mxu0 0.0
      %553 = vmatprep.subr.mxu0 0.0
      %554 = vmatpush1.msra.mxu0 0.0
      %555 = vmatprep.subr.mxu0 0.0
      %556 = vmatpush1.msra.mxu0 0.0
      %557 = vmatprep.subr.mxu0 0.0
      %558 = vmatpush1.msra.mxu0 0.0
      %559 = vmatprep.subr.mxu0 0.0
      %560 = vmatpush1.msra.mxu0 0.0
      %561 = vmatprep.subr.mxu0 0.0
      %562 = vmatpush1.msra.mxu0 0.0
      %563 = vmatprep.subr.mxu0 0.0
      %564 = vmatpush1.msra.mxu0 0.0
      %565 = vmatprep.subr.mxu0 0.0
      %566 = vmatpush1.msra.mxu0 0.0
      %567 = vmatprep.subr.mxu0 0.0
      %568 = vmatpush1.msra.mxu0 0.0
      %569 = vmatprep.subr.mxu0 0.0
      %570 = vmatpush1.msra.mxu0 0.0
      %571 = vmatprep.subr.mxu0 0.0
      %572 = vmatpush1.msra.mxu0 0.0
      %573 = vmatprep.subr.mxu0 0.0
      %574 = vmatpush1.msra.mxu0 0.0
      %575 = vmatprep.subr.mxu0 0.0
      %576 = vmatpush1.msra.mxu0 0.0
      %577 = vmatprep.mubr.f32.mxu0 0.0
      %578 = vmatmul.mubr.f32.gmra.mrb[0].mxu0 %v508
      %v579 = vpop.f32.mrb[0].mxu0
      %v580 = vadd.f32 %v505, %v579
      %v581 = vpop.f32.mrb[0].mxu0
      %582 = vmatprep.mubr.f32.mxu0 0.0
      %583 = vmatmul.mubr.f32.gmra.mrb[0].mxu0 %v511
      %v584 = vpop.f32.mrb[0].mxu0
      %v585 = vadd.f32 %v506, %v584
      %v586 = vpop.f32.mrb[0].mxu0
      %587 = vdwg.mxu0
      %v588 = vld [vmem:[%s7] sm:$0x1]
      %v590 = vlaneseq
      %v591 = vshrl.u32 %v590, 7
      %v592 = vsub.s32 0, %v591
      %v593 = vrot.slane %v588, %v592
      %v595 = vadd.f32 %v580, %v593
      %v596 = vadd.f32 %v585, %v593
      %s597 = sld [smem:[#allocation2]]
      %s598 = sand.u32 2147483647, %s597
      %s599 = sadd.f32 %s598, 1e-06
      %v600 = vstv %s599
      %v601 = vrcp.pop %v600
      %s602 = vtos %v601
      %v603 = vmax.f32 %v595, 0.0
      %v604 = vmax.f32 %v596, 0.0
      %v605 = vadd.f32 %v603, 1e-06
      %v606 = vadd.f32 %v604, 1e-06
      %v607 = vstv %s602
      %v608 = vmul.f32 %v605, %v607
      %v609 = vmul.f32 %v606, %v607
      %v610 = vld [vmem:[%s10] sm:$0xff]
      %v611 = vld [vmem:[%s10 + $0x8] sm:$0xff]
      %v612 = vld [vmem:[%s10 + $0x10] sm:$0xff]
      %v613 = vld [vmem:[%s10 + $0x18] sm:$0xff]
      %v614 = vld [vmem:[%s10 + $0x20] sm:$0xff]
      %v615 = vld [vmem:[%s10 + $0x28] sm:$0xff]
      %v616 = vld [vmem:[%s10 + $0x30] sm:$0xff]
      %v617 = vld [vmem:[%s10 + $0x38] sm:$0xff]
      %v618 = vld [vmem:[%s11] sm:$0x3]
      %v619 = vmul.f32 %v608, %v608
      %v620 = vmul.f32 %v609, %v609
      %623 = vrot.lane.b32.xlu0 %v619, 64
      %v624 = vpop.permute.xlu0 %623
      %625 = vrot.lane.b32.xlu0 %v620, 64
      %v626 = vpop.permute.xlu0 %625
      %vm627 = vcmask 523264
      %v628 = vsel %vm627, %v624, 0
      %v630 = vsel %vm627, %v626, 0
      %632 = vmatprep.subr.mxu0 0.0
      %633 = vmatpush1.msra.mxu0 %v610
      %634 = vmatprep.subr.mxu0 0.0
      %635 = vmatpush1.msra.mxu0 %v611
      %636 = vmatprep.subr.mxu0 0.0
      %637 = vmatpush1.msra.mxu0 %v612
      %638 = vmatprep.subr.mxu0 0.0
      %639 = vmatpush1.msra.mxu0 %v613
      %640 = vmatprep.subr.mxu0 0.0
      %641 = vmatpush1.msra.mxu0 %v614
      %642 = vmatprep.subr.mxu0 0.0
      %643 = vmatpush1.msra.mxu0 %v615
      %644 = vmatprep.subr.mxu0 0.0
      %645 = vmatpush1.msra.mxu0 %v616
      %646 = vmatprep.subr.mxu0 0.0
      %647 = vmatpush1.msra.mxu0 %v617
      %648 = vmatprep.subr.mxu0 0.0
      %649 = vmatpush1.msra.mxu0 0.0
      %650 = vmatprep.subr.mxu0 0.0
      %651 = vmatpush1.msra.mxu0 0.0
      %652 = vmatprep.subr.mxu0 0.0
      %653 = vmatpush1.msra.mxu0 0.0
      %654 = vmatprep.subr.mxu0 0.0
      %655 = vmatpush1.msra.mxu0 0.0
      %656 = vmatprep.subr.mxu0 0.0
      %657 = vmatpush1.msra.mxu0 0.0
      %658 = vmatprep.subr.mxu0 0.0
      %659 = vmatpush1.msra.mxu0 0.0
      %660 = vmatprep.subr.mxu0 0.0
      %661 = vmatpush1.msra.mxu0 0.0
      %662 = vmatprep.subr.mxu0 0.0
      %663 = vmatpush1.msra.mxu0 0.0
      %664 = vmatprep.subr.mxu0 0.0
      %665 = vmatpush1.msra.mxu0 0.0
      %666 = vmatprep.subr.mxu0 0.0
      %667 = vmatpush1.msra.mxu0 0.0
      %668 = vmatprep.subr.mxu0 0.0
      %669 = vmatpush1.msra.mxu0 0.0
      %670 = vmatprep.subr.mxu0 0.0
      %671 = vmatpush1.msra.mxu0 0.0
      %672 = vmatprep.subr.mxu0 0.0
      %673 = vmatpush1.msra.mxu0 0.0
      %674 = vmatprep.subr.mxu0 0.0
      %675 = vmatpush1.msra.mxu0 0.0
      %676 = vmatprep.subr.mxu0 0.0
      %677 = vmatpush1.msra.mxu0 0.0
      %678 = vmatprep.subr.mxu0 0.0
      %679 = vmatpush1.msra.mxu0 0.0
      %680 = vmatprep.subr.mxu0 0.0
      %681 = vmatpush1.msra.mxu0 0.0
      %682 = vmatprep.subr.mxu0 0.0
      %683 = vmatpush1.msra.mxu0 0.0
      %684 = vmatprep.subr.mxu0 0.0
      %685 = vmatpush1.msra.mxu0 0.0
      %686 = vmatprep.subr.mxu0 0.0
      %687 = vmatpush1.msra.mxu0 0.0
      %688 = vmatprep.subr.mxu0 0.0
      %689 = vmatpush1.msra.mxu0 0.0
      %690 = vmatprep.subr.mxu0 0.0
      %691 = vmatpush1.msra.mxu0 0.0
      %692 = vmatprep.subr.mxu0 0.0
      %693 = vmatpush1.msra.mxu0 0.0
      %694 = vmatprep.subr.mxu0 0.0
      %695 = vmatpush1.msra.mxu0 0.0
      %696 = vmatprep.mubr.f32.mxu0 0.0
      %697 = vmatmul.mubr.f32.gmra.mrb[0].mxu0 %v628
      %v698 = vpop.f32.mrb[0].mxu0
      %v699 = vadd.f32 0.0, %v698
      %v700 = vpop.f32.mrb[0].mxu0
      %701 = vmatprep.mubr.f32.mxu0 0.0
      %702 = vmatmul.mubr.f32.gmra.mrb[0].mxu0 %v630
      %v703 = vpop.f32.mrb[0].mxu0
      %v704 = vadd.f32 0.0, %v703
      %v705 = vpop.f32.mrb[0].mxu0
      %706 = vdwg.mxu0
      %v707 = vmul.f32 %v619, %v619
      %v708 = vmul.f32 %v620, %v620
      %711 = vrot.lane.b32.xlu0 %v707, 64
      %v712 = vpop.permute.xlu0 %711
      %713 = vrot.lane.b32.xlu0 %v708, 64
      %v714 = vpop.permute.xlu0 %713
      %v715 = vsel %vm627, %v712, 0
      %v717 = vsel %vm627, %v714, 0
      %719 = vmatprep.subr.mxu0 0.0
      %720 = vmatpush1.msra.mxu0 %v610
      %721 = vmatprep.subr.mxu0 0.0
      %722 = vmatpush1.msra.mxu0 %v611
      %723 = vmatprep.subr.mxu0 0.0
      %724 = vmatpush1.msra.mxu0 %v612
      %725 = vmatprep.subr.mxu0 0.0
      %726 = vmatpush1.msra.mxu0 %v613
      %727 = vmatprep.subr.mxu0 0.0
      %728 = vmatpush1.msra.mxu0 %v614
      %729 = vmatprep.subr.mxu0 0.0
      %730 = vmatpush1.msra.mxu0 %v615
      %731 = vmatprep.subr.mxu0 0.0
      %732 = vmatpush1.msra.mxu0 %v616
      %733 = vmatprep.subr.mxu0 0.0
      %734 = vmatpush1.msra.mxu0 %v617
      %735 = vmatprep.subr.mxu0 0.0
      %736 = vmatpush1.msra.mxu0 0.0
      %737 = vmatprep.subr.mxu0 0.0
      %738 = vmatpush1.msra.mxu0 0.0
      %739 = vmatprep.subr.mxu0 0.0
      %740 = vmatpush1.msra.mxu0 0.0
      %741 = vmatprep.subr.mxu0 0.0
      %742 = vmatpush1.msra.mxu0 0.0
      %743 = vmatprep.subr.mxu0 0.0
      %744 = vmatpush1.msra.mxu0 0.0
      %745 = vmatprep.subr.mxu0 0.0
      %746 = vmatpush1.msra.mxu0 0.0
      %747 = vmatprep.subr.mxu0 0.0
      %748 = vmatpush1.msra.mxu0 0.0
      %749 = vmatprep.subr.mxu0 0.0
      %750 = vmatpush1.msra.mxu0 0.0
      %751 = vmatprep.subr.mxu0 0.0
      %752 = vmatpush1.msra.mxu0 0.0
      %753 = vmatprep.subr.mxu0 0.0
      %754 = vmatpush1.msra.mxu0 0.0
      %755 = vmatprep.subr.mxu0 0.0
      %756 = vmatpush1.msra.mxu0 0.0
      %757 = vmatprep.subr.mxu0 0.0
      %758 = vmatpush1.msra.mxu0 0.0
      %759 = vmatprep.subr.mxu0 0.0
      %760 = vmatpush1.msra.mxu0 0.0
      %761 = vmatprep.subr.mxu0 0.0
      %762 = vmatpush1.msra.mxu0 0.0
      %763 = vmatprep.subr.mxu0 0.0
      %764 = vmatpush1.msra.mxu0 0.0
      %765 = vmatprep.subr.mxu0 0.0
      %766 = vmatpush1.msra.mxu0 0.0
      %767 = vmatprep.subr.mxu0 0.0
      %768 = vmatpush1.msra.mxu0 0.0
      %769 = vmatprep.subr.mxu0 0.0
      %770 = vmatpush1.msra.mxu0 0.0
      %771 = vmatprep.subr.mxu0 0.0
      %772 = vmatpush1.msra.mxu0 0.0
      %773 = vmatprep.subr.mxu0 0.0
      %774 = vmatpush1.msra.mxu0 0.0
      %775 = vmatprep.subr.mxu0 0.0
      %776 = vmatpush1.msra.mxu0 0.0
      %777 = vmatprep.subr.mxu0 0.0
      %778 = vmatpush1.msra.mxu0 0.0
      %779 = vmatprep.subr.mxu0 0.0
      %780 = vmatpush1.msra.mxu0 0.0
      %781 = vmatprep.subr.mxu0 0.0
      %782 = vmatpush1.msra.mxu0 0.0
      %783 = vmatprep.mubr.f32.mxu0 0.0
      %784 = vmatmul.mubr.f32.gmra.mrb[0].mxu0 %v715
      %v785 = vpop.f32.mrb[0].mxu0
      %v786 = vadd.f32 0.0, %v785
      %v787 = vpop.f32.mrb[0].mxu0
      %788 = vmatprep.mubr.f32.mxu0 0.0
      %789 = vmatmul.mubr.f32.gmra.mrb[0].mxu0 %v717
      %v790 = vpop.f32.mrb[0].mxu0
      %v791 = vadd.f32 0.0, %v790
      %v792 = vpop.f32.mrb[0].mxu0
      %793 = vdwg.mxu0
      %v794 = vrsqrt.pop %v699
      %v795 = vmul.f32 %v699, %v794
      %vm796 = vcmp.eq.f32.partialorder %v699, inf
      %v797 = vsel %vm796, %v699, %v795
      %vm798 = vcmp.eq.f32.partialorder %v699, 0.0
      %v799 = vand.u32 %v699, 2147483648
      %v800 = vsel %vm798, %v799, %v797
      %v801 = vrsqrt.pop %v704
      %v802 = vmul.f32 %v704, %v801
      %vm803 = vcmp.eq.f32.partialorder %v704, inf
      %v804 = vsel %vm803, %v704, %v802
      %vm805 = vcmp.eq.f32.partialorder %v704, 0.0
      %v806 = vand.u32 %v704, 2147483648
      %v807 = vsel %vm805, %v806, %v804
      %v808 = vrsqrt.pop %v786
      %v809 = vrsqrt.pop %v791
      %v810 = vmul.f32 %v800, %v808
      %v811 = vmul.f32 %v807, %v809
      %vm812 = vcmask 15360
      %v814 = vsel %vm812, %v810, 0
      %v817 = vsel %vm812, %v811, 0
      %vm819 = vcmask 1041408
      %v821 = vsel %vm819, %v618, 0
      %823 = vmatprep.subr.mxu0 0.0
      %824 = vmatpush1.msra.mxu0 %v821
      %825 = vmatprep.subr.mxu0 0.0
      %826 = vmatpush1.msra.mxu0 0.0
      %827 = vmatprep.subr.mxu0 0.0
      %828 = vmatpush1.msra.mxu0 0.0
      %829 = vmatprep.subr.mxu0 0.0
      %830 = vmatpush1.msra.mxu0 0.0
      %831 = vmatprep.subr.mxu0 0.0
      %832 = vmatpush1.msra.mxu0 0.0
      %833 = vmatprep.subr.mxu0 0.0
      %834 = vmatpush1.msra.mxu0 0.0
      %835 = vmatprep.subr.mxu0 0.0
      %836 = vmatpush1.msra.mxu0 0.0
      %837 = vmatprep.subr.mxu0 0.0
      %838 = vmatpush1.msra.mxu0 0.0
      %839 = vmatprep.subr.mxu0 0.0
      %840 = vmatpush1.msra.mxu0 0.0
      %841 = vmatprep.subr.mxu0 0.0
      %842 = vmatpush1.msra.mxu0 0.0
      %843 = vmatprep.subr.mxu0 0.0
      %844 = vmatpush1.msra.mxu0 0.0
      %845 = vmatprep.subr.mxu0 0.0
      %846 = vmatpush1.msra.mxu0 0.0
      %847 = vmatprep.subr.mxu0 0.0
      %848 = vmatpush1.msra.mxu0 0.0
      %849 = vmatprep.subr.mxu0 0.0
      %850 = vmatpush1.msra.mxu0 0.0
      %851 = vmatprep.subr.mxu0 0.0
      %852 = vmatpush1.msra.mxu0 0.0
      %853 = vmatprep.subr.mxu0 0.0
      %854 = vmatpush1.msra.mxu0 0.0
      %855 = vmatprep.subr.mxu0 0.0
      %856 = vmatpush1.msra.mxu0 0.0
      %857 = vmatprep.subr.mxu0 0.0
      %858 = vmatpush1.msra.mxu0 0.0
      %859 = vmatprep.subr.mxu0 0.0
      %860 = vmatpush1.msra.mxu0 0.0
      %861 = vmatprep.subr.mxu0 0.0
      %862 = vmatpush1.msra.mxu0 0.0
      %863 = vmatprep.subr.mxu0 0.0
      %864 = vmatpush1.msra.mxu0 0.0
      %865 = vmatprep.subr.mxu0 0.0
      %866 = vmatpush1.msra.mxu0 0.0
      %867 = vmatprep.subr.mxu0 0.0
      %868 = vmatpush1.msra.mxu0 0.0
      %869 = vmatprep.subr.mxu0 0.0
      %870 = vmatpush1.msra.mxu0 0.0
      %871 = vmatprep.subr.mxu0 0.0
      %872 = vmatpush1.msra.mxu0 0.0
      %873 = vmatprep.subr.mxu0 0.0
      %874 = vmatpush1.msra.mxu0 0.0
      %875 = vmatprep.subr.mxu0 0.0
      %876 = vmatpush1.msra.mxu0 0.0
      %877 = vmatprep.subr.mxu0 0.0
      %878 = vmatpush1.msra.mxu0 0.0
      %879 = vmatprep.subr.mxu0 0.0
      %880 = vmatpush1.msra.mxu0 0.0
      %881 = vmatprep.subr.mxu0 0.0
      %882 = vmatpush1.msra.mxu0 0.0
      %883 = vmatprep.subr.mxu0 0.0
      %884 = vmatpush1.msra.mxu0 0.0
      %885 = vmatprep.subr.mxu0 0.0
      %886 = vmatpush1.msra.mxu0 0.0
      %887 = vmatprep.mubr.f32.mxu0 0.0
      %888 = vmatmul.mubr.f32.gmra.mrb[0].mxu0 %v814
      %v889 = vpop.f32.mrb[0].mxu0
      %v890 = vadd.f32 0.0, %v889
      %v891 = vpop.f32.mrb[0].mxu0
      %892 = vmatprep.mubr.f32.mxu0 0.0
      %893 = vmatmul.mubr.f32.gmra.mrb[0].mxu0 %v817
      %v894 = vpop.f32.mrb[0].mxu0
      %v895 = vadd.f32 0.0, %v894
      %v896 = vpop.f32.mrb[0].mxu0
      %897 = vdwg.mxu0
      %v900 = vmul.f32 %v890, %v624
      %v901 = vmul.f32 %v895, %v626
      %v902 = vld [vmem:[%s3] sm:$0xff]
      %v903 = vld [vmem:[%s3 + $0x8] sm:$0xff]
      %v904 = vld [vmem:[%s3 + $0x10] sm:$0xff]
      %v905 = vld [vmem:[%s3 + $0x18] sm:$0xff]
      %v906 = vld [vmem:[%s3 + $0x20] sm:$0xff]
      %v907 = vld [vmem:[%s3 + $0x28] sm:$0xff]
      %v908 = vld [vmem:[%s3 + $0x30] sm:$0xff]
      %v909 = vld [vmem:[%s3 + $0x38] sm:$0xff]
      %v911 = vsel %vm627, %v900, 0
      %v914 = vsel %vm627, %v901, 0
      %916 = vmatprep.subr.mxu0 0.0
      %917 = vmatpush1.msra.mxu0 %v902
      %918 = vmatprep.subr.mxu0 0.0
      %919 = vmatpush1.msra.mxu0 %v903
      %920 = vmatprep.subr.mxu0 0.0
      %921 = vmatpush1.msra.mxu0 %v904
      %922 = vmatprep.subr.mxu0 0.0
      %923 = vmatpush1.msra.mxu0 %v905
      %924 = vmatprep.subr.mxu0 0.0
      %925 = vmatpush1.msra.mxu0 %v906
      %926 = vmatprep.subr.mxu0 0.0
      %927 = vmatpush1.msra.mxu0 %v907
      %928 = vmatprep.subr.mxu0 0.0
      %929 = vmatpush1.msra.mxu0 %v908
      %930 = vmatprep.subr.mxu0 0.0
      %931 = vmatpush1.msra.mxu0 %v909
      %932 = vmatprep.subr.mxu0 0.0
      %933 = vmatpush1.msra.mxu0 0.0
      %934 = vmatprep.subr.mxu0 0.0
      %935 = vmatpush1.msra.mxu0 0.0
      %936 = vmatprep.subr.mxu0 0.0
      %937 = vmatpush1.msra.mxu0 0.0
      %938 = vmatprep.subr.mxu0 0.0
      %939 = vmatpush1.msra.mxu0 0.0
      %940 = vmatprep.subr.mxu0 0.0
      %941 = vmatpush1.msra.mxu0 0.0
      %942 = vmatprep.subr.mxu0 0.0
      %943 = vmatpush1.msra.mxu0 0.0
      %944 = vmatprep.subr.mxu0 0.0
      %945 = vmatpush1.msra.mxu0 0.0
      %946 = vmatprep.subr.mxu0 0.0
      %947 = vmatpush1.msra.mxu0 0.0
      %948 = vmatprep.subr.mxu0 0.0
      %949 = vmatpush1.msra.mxu0 0.0
      %950 = vmatprep.subr.mxu0 0.0
      %951 = vmatpush1.msra.mxu0 0.0
      %952 = vmatprep.subr.mxu0 0.0
      %953 = vmatpush1.msra.mxu0 0.0
      %954 = vmatprep.subr.mxu0 0.0
      %955 = vmatpush1.msra.mxu0 0.0
      %956 = vmatprep.subr.mxu0 0.0
      %957 = vmatpush1.msra.mxu0 0.0
      %958 = vmatprep.subr.mxu0 0.0
      %959 = vmatpush1.msra.mxu0 0.0
      %960 = vmatprep.subr.mxu0 0.0
      %961 = vmatpush1.msra.mxu0 0.0
      %962 = vmatprep.subr.mxu0 0.0
      %963 = vmatpush1.msra.mxu0 0.0
      %964 = vmatprep.subr.mxu0 0.0
      %965 = vmatpush1.msra.mxu0 0.0
      %966 = vmatprep.subr.mxu0 0.0
      %967 = vmatpush1.msra.mxu0 0.0
      %968 = vmatprep.subr.mxu0 0.0
      %969 = vmatpush1.msra.mxu0 0.0
      %970 = vmatprep.subr.mxu0 0.0
      %971 = vmatpush1.msra.mxu0 0.0
      %972 = vmatprep.subr.mxu0 0.0
      %973 = vmatpush1.msra.mxu0 0.0
      %974 = vmatprep.subr.mxu0 0.0
      %975 = vmatpush1.msra.mxu0 0.0
      %976 = vmatprep.subr.mxu0 0.0
      %977 = vmatpush1.msra.mxu0 0.0
      %978 = vmatprep.subr.mxu0 0.0
      %979 = vmatpush1.msra.mxu0 0.0
      %980 = vmatprep.mubr.f32.mxu0 0.0
      %981 = vmatmul.mubr.f32.gmra.mrb[0].mxu0 %v911
      %v982 = vpop.f32.mrb[0].mxu0
      %v983 = vadd.f32 0.0, %v982
      %v984 = vpop.f32.mrb[0].mxu0
      %985 = vmatprep.mubr.f32.mxu0 0.0
      %986 = vmatmul.mubr.f32.gmra.mrb[0].mxu0 %v914
      %v987 = vpop.f32.mrb[0].mxu0
      %v988 = vadd.f32 0.0, %v987
      %v989 = vpop.f32.mrb[0].mxu0
      %990 = vdwg.mxu0
      %v991 = vld [vmem:[%s4] sm:$0x1]
      %v993 = vlaneseq
      %v994 = vshrl.u32 %v993, 7
      %v995 = vsub.s32 0, %v994
      %v996 = vrot.slane %v991, %v995
      %v998 = vmul.f32 %v900, %v996
      %v999 = vmul.f32 %v901, %v996
      %v1001 = vsel %vm627, %v998, 0
      %v1004 = vsel %vm627, %v999, 0
      %1006 = vmatprep.subr.mxu0 0.0
      %1007 = vmatpush1.msra.mxu0 %v610
      %1008 = vmatprep.subr.mxu0 0.0
      %1009 = vmatpush1.msra.mxu0 %v611
      %1010 = vmatprep.subr.mxu0 0.0
      %1011 = vmatpush1.msra.mxu0 %v612
      %1012 = vmatprep.subr.mxu0 0.0
      %1013 = vmatpush1.msra.mxu0 %v613
      %1014 = vmatprep.subr.mxu0 0.0
      %1015 = vmatpush1.msra.mxu0 %v614
      %1016 = vmatprep.subr.mxu0 0.0
      %1017 = vmatpush1.msra.mxu0 %v615
      %1018 = vmatprep.subr.mxu0 0.0
      %1019 = vmatpush1.msra.mxu0 %v616
      %1020 = vmatprep.subr.mxu0 0.0
      %1021 = vmatpush1.msra.mxu0 %v617
      %1022 = vmatprep.subr.mxu0 0.0
      %1023 = vmatpush1.msra.mxu0 0.0
      %1024 = vmatprep.subr.mxu0 0.0
      %1025 = vmatpush1.msra.mxu0 0.0
      %1026 = vmatprep.subr.mxu0 0.0
      %1027 = vmatpush1.msra.mxu0 0.0
      %1028 = vmatprep.subr.mxu0 0.0
      %1029 = vmatpush1.msra.mxu0 0.0
      %1030 = vmatprep.subr.mxu0 0.0
      %1031 = vmatpush1.msra.mxu0 0.0
      %1032 = vmatprep.subr.mxu0 0.0
      %1033 = vmatpush1.msra.mxu0 0.0
      %1034 = vmatprep.subr.mxu0 0.0
      %1035 = vmatpush1.msra.mxu0 0.0
      %1036 = vmatprep.subr.mxu0 0.0
      %1037 = vmatpush1.msra.mxu0 0.0
      %1038 = vmatprep.subr.mxu0 0.0
      %1039 = vmatpush1.msra.mxu0 0.0
      %1040 = vmatprep.subr.mxu0 0.0
      %1041 = vmatpush1.msra.mxu0 0.0
      %1042 = vmatprep.subr.mxu0 0.0
      %1043 = vmatpush1.msra.mxu0 0.0
      %1044 = vmatprep.subr.mxu0 0.0
      %1045 = vmatpush1.msra.mxu0 0.0
      %1046 = vmatprep.subr.mxu0 0.0
      %1047 = vmatpush1.msra.mxu0 0.0
      %1048 = vmatprep.subr.mxu0 0.0
      %1049 = vmatpush1.msra.mxu0 0.0
      %1050 = vmatprep.subr.mxu0 0.0
      %1051 = vmatpush1.msra.mxu0 0.0
      %1052 = vmatprep.subr.mxu0 0.0
      %1053 = vmatpush1.msra.mxu0 0.0
      %1054 = vmatprep.subr.mxu0 0.0
      %1055 = vmatpush1.msra.mxu0 0.0
      %1056 = vmatprep.subr.mxu0 0.0
      %1057 = vmatpush1.msra.mxu0 0.0
      %1058 = vmatprep.subr.mxu0 0.0
      %1059 = vmatpush1.msra.mxu0 0.0
      %1060 = vmatprep.subr.mxu0 0.0
      %1061 = vmatpush1.msra.mxu0 0.0
      %1062 = vmatprep.subr.mxu0 0.0
      %1063 = vmatpush1.msra.mxu0 0.0
      %1064 = vmatprep.subr.mxu0 0.0
      %1065 = vmatpush1.msra.mxu0 0.0
      %1066 = vmatprep.subr.mxu0 0.0
      %1067 = vmatpush1.msra.mxu0 0.0
      %1068 = vmatprep.subr.mxu0 0.0
      %1069 = vmatpush1.msra.mxu0 0.0
      %1070 = vmatprep.mubr.f32.mxu0 0.0
      %1071 = vmatmul.mubr.f32.gmra.mrb[0].mxu0 %v1001
      %v1072 = vpop.f32.mrb[0].mxu0
      %v1073 = vadd.f32 1e-06, %v1072
      %v1074 = vpop.f32.mrb[0].mxu0
      %1075 = vmatprep.mubr.f32.mxu0 0.0
      %1076 = vmatmul.mubr.f32.gmra.mrb[0].mxu0 %v1004
      %v1077 = vpop.f32.mrb[0].mxu0
      %v1078 = vadd.f32 1e-06, %v1077
      %v1079 = vpop.f32.mrb[0].mxu0
      %1080 = vdwg.mxu0
      %v1081 = vrcp.pop %v1073
      %v1082 = vrcp.pop %v1078
      %v1084 = vsel %vm812, %v1081, 0
      %v1087 = vsel %vm812, %v1082, 0
      %1089 = vmatprep.subr.mxu0 0.0
      %1090 = vmatpush1.msra.mxu0 %v821
      %1091 = vmatprep.subr.mxu0 0.0
      %1092 = vmatpush1.msra.mxu0 0.0
      %1093 = vmatprep.subr.mxu0 0.0
      %1094 = vmatpush1.msra.mxu0 0.0
      %1095 = vmatprep.subr.mxu0 0.0
      %1096 = vmatpush1.msra.mxu0 0.0
      %1097 = vmatprep.subr.mxu0 0.0
      %1098 = vmatpush1.msra.mxu0 0.0
      %1099 = vmatprep.subr.mxu0 0.0
      %1100 = vmatpush1.msra.mxu0 0.0
      %1101 = vmatprep.subr.mxu0 0.0
      %1102 = vmatpush1.msra.mxu0 0.0
      %1103 = vmatprep.subr.mxu0 0.0
      %1104 = vmatpush1.msra.mxu0 0.0
      %1105 = vmatprep.subr.mxu0 0.0
      %1106 = vmatpush1.msra.mxu0 0.0
      %1107 = vmatprep.subr.mxu0 0.0
      %1108 = vmatpush1.msra.mxu0 0.0
      %1109 = vmatprep.subr.mxu0 0.0
      %1110 = vmatpush1.msra.mxu0 0.0
      %1111 = vmatprep.subr.mxu0 0.0
      %1112 = vmatpush1.msra.mxu0 0.0
      %1113 = vmatprep.subr.mxu0 0.0
      %1114 = vmatpush1.msra.mxu0 0.0
      %1115 = vmatprep.subr.mxu0 0.0
      %1116 = vmatpush1.msra.mxu0 0.0
      %1117 = vmatprep.subr.mxu0 0.0
      %1118 = vmatpush1.msra.mxu0 0.0
      %1119 = vmatprep.subr.mxu0 0.0
      %1120 = vmatpush1.msra.mxu0 0.0
      %1121 = vmatprep.subr.mxu0 0.0
      %1122 = vmatpush1.msra.mxu0 0.0
      %1123 = vmatprep.subr.mxu0 0.0
      %1124 = vmatpush1.msra.mxu0 0.0
      %1125 = vmatprep.subr.mxu0 0.0
      %1126 = vmatpush1.msra.mxu0 0.0
      %1127 = vmatprep.subr.mxu0 0.0
      %1128 = vmatpush1.msra.mxu0 0.0
      %1129 = vmatprep.subr.mxu0 0.0
      %1130 = vmatpush1.msra.mxu0 0.0
      %1131 = vmatprep.subr.mxu0 0.0
      %1132 = vmatpush1.msra.mxu0 0.0
      %1133 = vmatprep.subr.mxu0 0.0
      %1134 = vmatpush1.msra.mxu0 0.0
      %1135 = vmatprep.subr.mxu0 0.0
      %1136 = vmatpush1.msra.mxu0 0.0
      %1137 = vmatprep.subr.mxu0 0.0
      %1138 = vmatpush1.msra.mxu0 0.0
      %1139 = vmatprep.subr.mxu0 0.0
      %1140 = vmatpush1.msra.mxu0 0.0
      %1141 = vmatprep.subr.mxu0 0.0
      %1142 = vmatpush1.msra.mxu0 0.0
      %1143 = vmatprep.subr.mxu0 0.0
      %1144 = vmatpush1.msra.mxu0 0.0
      %1145 = vmatprep.subr.mxu0 0.0
      %1146 = vmatpush1.msra.mxu0 0.0
      %1147 = vmatprep.subr.mxu0 0.0
      %1148 = vmatpush1.msra.mxu0 0.0
      %1149 = vmatprep.subr.mxu0 0.0
      %1150 = vmatpush1.msra.mxu0 0.0
      %1151 = vmatprep.subr.mxu0 0.0
      %1152 = vmatpush1.msra.mxu0 0.0
      %1153 = vmatprep.mubr.f32.mxu0 0.0
      %1154 = vmatmul.mubr.f32.gmra.mrb[0].mxu0 %v1084
      %v1155 = vpop.f32.mrb[0].mxu0
      %v1156 = vadd.f32 0.0, %v1155
      %v1157 = vpop.f32.mrb[0].mxu0
      %1158 = vmatprep.mubr.f32.mxu0 0.0
      %1159 = vmatmul.mubr.f32.gmra.mrb[0].mxu0 %v1087
      %v1160 = vpop.f32.mrb[0].mxu0
      %v1161 = vadd.f32 0.0, %v1160
      %v1162 = vpop.f32.mrb[0].mxu0
      %1163 = vdwg.mxu0
      %v1164 = vmul.f32 %v983, %v1156
      %v1165 = vmul.f32 %v988, %v1161
      %v1166 = vld [vmem:[%s12] sm:$0xff]
      %v1167 = vld [vmem:[%s12 + $0x8] sm:$0xff]
      %v1168 = vld [vmem:[%s12 + $0x10] sm:$0xff]
      %v1169 = vld [vmem:[%s12 + $0x18] sm:$0xff]
      %v1170 = vld [vmem:[%s12 + $0x20] sm:$0xff]
      %v1171 = vld [vmem:[%s12 + $0x28] sm:$0xff]
      %v1172 = vld [vmem:[%s12 + $0x30] sm:$0xff]
      %v1173 = vld [vmem:[%s12 + $0x38] sm:$0xff]
      %v1175 = vsel %vm627, %v595, 0
      %v1178 = vsel %vm627, %v596, 0
      %1180 = vmatprep.subr.mxu0 0.0
      %1181 = vmatpush1.msra.mxu0 %v1166
      %1182 = vmatprep.subr.mxu0 0.0
      %1183 = vmatpush1.msra.mxu0 %v1167
      %1184 = vmatprep.subr.mxu0 0.0
      %1185 = vmatpush1.msra.mxu0 %v1168
      %1186 = vmatprep.subr.mxu0 0.0
      %1187 = vmatpush1.msra.mxu0 %v1169
      %1188 = vmatprep.subr.mxu0 0.0
      %1189 = vmatpush1.msra.mxu0 %v1170
      %1190 = vmatprep.subr.mxu0 0.0
      %1191 = vmatpush1.msra.mxu0 %v1171
      %1192 = vmatprep.subr.mxu0 0.0
      %1193 = vmatpush1.msra.mxu0 %v1172
      %1194 = vmatprep.subr.mxu0 0.0
      %1195 = vmatpush1.msra.mxu0 %v1173
      %1196 = vmatprep.subr.mxu0 0.0
      %1197 = vmatpush1.msra.mxu0 0.0
      %1198 = vmatprep.subr.mxu0 0.0
      %1199 = vmatpush1.msra.mxu0 0.0
      %1200 = vmatprep.subr.mxu0 0.0
      %1201 = vmatpush1.msra.mxu0 0.0
      %1202 = vmatprep.subr.mxu0 0.0
      %1203 = vmatpush1.msra.mxu0 0.0
      %1204 = vmatprep.subr.mxu0 0.0
      %1205 = vmatpush1.msra.mxu0 0.0
      %1206 = vmatprep.subr.mxu0 0.0
      %1207 = vmatpush1.msra.mxu0 0.0
      %1208 = vmatprep.subr.mxu0 0.0
      %1209 = vmatpush1.msra.mxu0 0.0
      %1210 = vmatprep.subr.mxu0 0.0
      %1211 = vmatpush1.msra.mxu0 0.0
      %1212 = vmatprep.subr.mxu0 0.0
      %1213 = vmatpush1.msra.mxu0 0.0
      %1214 = vmatprep.subr.mxu0 0.0
      %1215 = vmatpush1.msra.mxu0 0.0
      %1216 = vmatprep.subr.mxu0 0.0
      %1217 = vmatpush1.msra.mxu0 0.0
      %1218 = vmatprep.subr.mxu0 0.0
      %1219 = vmatpush1.msra.mxu0 0.0
      %1220 = vmatprep.subr.mxu0 0.0
      %1221 = vmatpush1.msra.mxu0 0.0
      %1222 = vmatprep.subr.mxu0 0.0
      %1223 = vmatpush1.msra.mxu0 0.0
      %1224 = vmatprep.subr.mxu0 0.0
      %1225 = vmatpush1.msra.mxu0 0.0
      %1226 = vmatprep.subr.mxu0 0.0
      %1227 = vmatpush1.msra.mxu0 0.0
      %1228 = vmatprep.subr.mxu0 0.0
      %1229 = vmatpush1.msra.mxu0 0.0
      %1230 = vmatprep.subr.mxu0 0.0
      %1231 = vmatpush1.msra.mxu0 0.0
      %1232 = vmatprep.subr.mxu0 0.0
      %1233 = vmatpush1.msra.mxu0 0.0
      %1234 = vmatprep.subr.mxu0 0.0
      %1235 = vmatpush1.msra.mxu0 0.0
      %1236 = vmatprep.subr.mxu0 0.0
      %1237 = vmatpush1.msra.mxu0 0.0
      %1238 = vmatprep.subr.mxu0 0.0
      %1239 = vmatpush1.msra.mxu0 0.0
      %1240 = vmatprep.subr.mxu0 0.0
      %1241 = vmatpush1.msra.mxu0 0.0
      %1242 = vmatprep.subr.mxu0 0.0
      %1243 = vmatpush1.msra.mxu0 0.0
      %1244 = vmatprep.mubr.f32.mxu0 0.0
      %1245 = vmatmul.mubr.f32.gmra.mrb[0].mxu0 %v1175
      %v1246 = vpop.f32.mrb[0].mxu0
      %v1247 = vadd.f32 0.0, %v1246
      %v1248 = vpop.f32.mrb[0].mxu0
      %1249 = vmatprep.mubr.f32.mxu0 0.0
      %1250 = vmatmul.mubr.f32.gmra.mrb[0].mxu0 %v1178
      %v1251 = vpop.f32.mrb[0].mxu0
      %v1252 = vadd.f32 0.0, %v1251
      %v1253 = vpop.f32.mrb[0].mxu0
      %1254 = vdwg.mxu0
      %v1255 = vld [vmem:[%s8] sm:$0xff]
      %v1256 = vld [vmem:[%s8 + $0x8] sm:$0xff]
      %v1257 = vld [vmem:[%s8 + $0x10] sm:$0xff]
      %v1258 = vld [vmem:[%s8 + $0x18] sm:$0xff]
      %v1259 = vld [vmem:[%s9] sm:$0x1]
      %v1261 = vlaneseq
      %v1262 = vshrl.u32 %v1261, 7
      %v1263 = vsub.s32 0, %v1262
      %v1264 = vrot.slane %v1259, %v1263
      %v1267 = vsel %vm471, %v1247, 0
      %v1270 = vsel %vm471, %v1252, 0
      %1272 = vmatprep.subr.mxu0 0.0
      %1273 = vmatpush1.msra.mxu0 %v1255
      %1274 = vmatprep.subr.mxu0 0.0
      %1275 = vmatpush1.msra.mxu0 %v1256
      %1276 = vmatprep.subr.mxu0 0.0
      %1277 = vmatpush1.msra.mxu0 %v1257
      %1278 = vmatprep.subr.mxu0 0.0
      %1279 = vmatpush1.msra.mxu0 %v1258
      %1280 = vmatprep.subr.mxu0 0.0
      %1281 = vmatpush1.msra.mxu0 0.0
      %1282 = vmatprep.subr.mxu0 0.0
      %1283 = vmatpush1.msra.mxu0 0.0
      %1284 = vmatprep.subr.mxu0 0.0
      %1285 = vmatpush1.msra.mxu0 0.0
      %1286 = vmatprep.subr.mxu0 0.0
      %1287 = vmatpush1.msra.mxu0 0.0
      %1288 = vmatprep.subr.mxu0 0.0
      %1289 = vmatpush1.msra.mxu0 0.0
      %1290 = vmatprep.subr.mxu0 0.0
      %1291 = vmatpush1.msra.mxu0 0.0
      %1292 = vmatprep.subr.mxu0 0.0
      %1293 = vmatpush1.msra.mxu0 0.0
      %1294 = vmatprep.subr.mxu0 0.0
      %1295 = vmatpush1.msra.mxu0 0.0
      %1296 = vmatprep.subr.mxu0 0.0
      %1297 = vmatpush1.msra.mxu0 0.0
      %1298 = vmatprep.subr.mxu0 0.0
      %1299 = vmatpush1.msra.mxu0 0.0
      %1300 = vmatprep.subr.mxu0 0.0
      %1301 = vmatpush1.msra.mxu0 0.0
      %1302 = vmatprep.subr.mxu0 0.0
      %1303 = vmatpush1.msra.mxu0 0.0
      %1304 = vmatprep.subr.mxu0 0.0
      %1305 = vmatpush1.msra.mxu0 0.0
      %1306 = vmatprep.subr.mxu0 0.0
      %1307 = vmatpush1.msra.mxu0 0.0
      %1308 = vmatprep.subr.mxu0 0.0
      %1309 = vmatpush1.msra.mxu0 0.0
      %1310 = vmatprep.subr.mxu0 0.0
      %1311 = vmatpush1.msra.mxu0 0.0
      %1312 = vmatprep.subr.mxu0 0.0
      %1313 = vmatpush1.msra.mxu0 0.0
      %1314 = vmatprep.subr.mxu0 0.0
      %1315 = vmatpush1.msra.mxu0 0.0
      %1316 = vmatprep.subr.mxu0 0.0
      %1317 = vmatpush1.msra.mxu0 0.0
      %1318 = vmatprep.subr.mxu0 0.0
      %1319 = vmatpush1.msra.mxu0 0.0
      %1320 = vmatprep.subr.mxu0 0.0
      %1321 = vmatpush1.msra.mxu0 0.0
      %1322 = vmatprep.subr.mxu0 0.0
      %1323 = vmatpush1.msra.mxu0 0.0
      %1324 = vmatprep.subr.mxu0 0.0
      %1325 = vmatpush1.msra.mxu0 0.0
      %1326 = vmatprep.subr.mxu0 0.0
      %1327 = vmatpush1.msra.mxu0 0.0
      %1328 = vmatprep.subr.mxu0 0.0
      %1329 = vmatpush1.msra.mxu0 0.0
      %1330 = vmatprep.subr.mxu0 0.0
      %1331 = vmatpush1.msra.mxu0 0.0
      %1332 = vmatprep.subr.mxu0 0.0
      %1333 = vmatpush1.msra.mxu0 0.0
      %1334 = vmatprep.subr.mxu0 0.0
      %1335 = vmatpush1.msra.mxu0 0.0
      %1336 = vmatprep.mubr.f32.mxu0 0.0
      %1337 = vmatmul.mubr.f32.gmra.mrb[0].mxu0 %v1267
      %v1338 = vpop.f32.mrb[0].mxu0
      %v1339 = vadd.f32 %v1264, %v1338
      %v1340 = vpop.f32.mrb[0].mxu0
      %1341 = vmatprep.mubr.f32.mxu0 0.0
      %1342 = vmatmul.mubr.f32.gmra.mrb[0].mxu0 %v1270
      %v1343 = vpop.f32.mrb[0].mxu0
      %v1344 = vadd.f32 %v1264, %v1343
      %v1345 = vpop.f32.mrb[0].mxu0
      %1346 = vdwg.mxu0
      %v1348 = vsel %vm627, %v1164, 0
      %v1351 = vsel %vm627, %v1165, 0
      %1353 = vmatprep.subr.mxu0 0.0
      %1354 = vmatpush1.msra.mxu0 %v1166
      %1355 = vmatprep.subr.mxu0 0.0
      %1356 = vmatpush1.msra.mxu0 %v1167
      %1357 = vmatprep.subr.mxu0 0.0
      %1358 = vmatpush1.msra.mxu0 %v1168
      %1359 = vmatprep.subr.mxu0 0.0
      %1360 = vmatpush1.msra.mxu0 %v1169
      %1361 = vmatprep.subr.mxu0 0.0
      %1362 = vmatpush1.msra.mxu0 %v1170
      %1363 = vmatprep.subr.mxu0 0.0
      %1364 = vmatpush1.msra.mxu0 %v1171
      %1365 = vmatprep.subr.mxu0 0.0
      %1366 = vmatpush1.msra.mxu0 %v1172
      %1367 = vmatprep.subr.mxu0 0.0
      %1368 = vmatpush1.msra.mxu0 %v1173
      %1369 = vmatprep.subr.mxu0 0.0
      %1370 = vmatpush1.msra.mxu0 0.0
      %1371 = vmatprep.subr.mxu0 0.0
      %1372 = vmatpush1.msra.mxu0 0.0
      %1373 = vmatprep.subr.mxu0 0.0
      %1374 = vmatpush1.msra.mxu0 0.0
      %1375 = vmatprep.subr.mxu0 0.0
      %1376 = vmatpush1.msra.mxu0 0.0
      %1377 = vmatprep.subr.mxu0 0.0
      %1378 = vmatpush1.msra.mxu0 0.0
      %1379 = vmatprep.subr.mxu0 0.0
      %1380 = vmatpush1.msra.mxu0 0.0
      %1381 = vmatprep.subr.mxu0 0.0
      %1382 = vmatpush1.msra.mxu0 0.0
      %1383 = vmatprep.subr.mxu0 0.0
      %1384 = vmatpush1.msra.mxu0 0.0
      %1385 = vmatprep.subr.mxu0 0.0
      %1386 = vmatpush1.msra.mxu0 0.0
      %1387 = vmatprep.subr.mxu0 0.0
      %1388 = vmatpush1.msra.mxu0 0.0
      %1389 = vmatprep.subr.mxu0 0.0
      %1390 = vmatpush1.msra.mxu0 0.0
      %1391 = vmatprep.subr.mxu0 0.0
      %1392 = vmatpush1.msra.mxu0 0.0
      %1393 = vmatprep.subr.mxu0 0.0
      %1394 = vmatpush1.msra.mxu0 0.0
      %1395 = vmatprep.subr.mxu0 0.0
      %1396 = vmatpush1.msra.mxu0 0.0
      %1397 = vmatprep.subr.mxu0 0.0
      %1398 = vmatpush1.msra.mxu0 0.0
      %1399 = vmatprep.subr.mxu0 0.0
      %1400 = vmatpush1.msra.mxu0 0.0
      %1401 = vmatprep.subr.mxu0 0.0
      %1402 = vmatpush1.msra.mxu0 0.0
      %1403 = vmatprep.subr.mxu0 0.0
      %1404 = vmatpush1.msra.mxu0 0.0
      %1405 = vmatprep.subr.mxu0 0.0
      %1406 = vmatpush1.msra.mxu0 0.0
      %1407 = vmatprep.subr.mxu0 0.0
      %1408 = vmatpush1.msra.mxu0 0.0
      %1409 = vmatprep.subr.mxu0 0.0
      %1410 = vmatpush1.msra.mxu0 0.0
      %1411 = vmatprep.subr.mxu0 0.0
      %1412 = vmatpush1.msra.mxu0 0.0
      %1413 = vmatprep.subr.mxu0 0.0
      %1414 = vmatpush1.msra.mxu0 0.0
      %1415 = vmatprep.subr.mxu0 0.0
      %1416 = vmatpush1.msra.mxu0 0.0
      %1417 = vmatprep.mubr.f32.mxu0 0.0
      %1418 = vmatmul.mubr.f32.gmra.mrb[0].mxu0 %v1348
      %v1419 = vpop.f32.mrb[0].mxu0
      %v1420 = vadd.f32 %v1339, %v1419
      %v1421 = vpop.f32.mrb[0].mxu0
      %1422 = vmatprep.mubr.f32.mxu0 0.0
      %1423 = vmatmul.mubr.f32.gmra.mrb[0].mxu0 %v1351
      %v1424 = vpop.f32.mrb[0].mxu0
      %v1425 = vadd.f32 %v1344, %v1424
      %v1426 = vpop.f32.mrb[0].mxu0
      %1427 = vdwg.mxu0
      %v1428 = vld [vmem:[%s459] sm:$0xff]
      %v1429 = vld [vmem:[%s459 + $0x8] sm:$0xff]
      %v1430 = vmul.f32 %v1420, %v1420
      %v1431 = vmul.f32 %v1425, %v1425
      %v1432 = vsel %vm471, %v1430, 0.0
      %1433 = vadd.xlane.f32.xlu0 %v1432
      %v1434 = vpop.xlane.xlu0 %1433
      %v1435 = vsel %vm471, %v1431, 0.0
      %1436 = vadd.xlane.f32.xlu0 %v1435
      %v1437 = vpop.xlane.xlu0 %1436
      %v1438 = vadd.f32 %v1434, 1.0
      %v1439 = vadd.f32 %v1437, 1.0
      %v1440 = vrsqrt.pop %v1438
      %v1441 = vmul.f32 %v1438, %v1440
      %vm1442 = vcmp.eq.f32.partialorder %v1438, inf
      %v1443 = vsel %vm1442, %v1438, %v1441
      %vm1444 = vcmp.eq.f32.partialorder %v1438, 0.0
      %v1445 = vand.u32 %v1438, 2147483648
      %v1446 = vsel %vm1444, %v1445, %v1443
      %v1447 = vrsqrt.pop %v1439
      %v1448 = vmul.f32 %v1439, %v1447
      %vm1449 = vcmp.eq.f32.partialorder %v1439, inf
      %v1450 = vsel %vm1449, %v1439, %v1448
      %vm1451 = vcmp.eq.f32.partialorder %v1439, 0.0
      %v1452 = vand.u32 %v1439, 2147483648
      %v1453 = vsel %vm1451, %v1452, %v1450
      %v1454 = vmul.f32 %v1428, %v1428
      %v1455 = vmul.f32 %v1429, %v1429
      %v1456 = vsel %vm471, %v1454, 0.0
      %1457 = vadd.xlane.f32.xlu0 %v1456
      %v1458 = vpop.xlane.xlu0 %1457
      %v1459 = vsel %vm471, %v1455, 0.0
      %1460 = vadd.xlane.f32.xlu0 %v1459
      %v1461 = vpop.xlane.xlu0 %1460
      %v1462 = vadd.f32 %v1458, 1.0
      %v1463 = vadd.f32 %v1461, 1.0
      %v1464 = vrsqrt.pop %v1462
      %v1465 = vmul.f32 %v1462, %v1464
      %vm1466 = vcmp.eq.f32.partialorder %v1462, inf
      %v1467 = vsel %vm1466, %v1462, %v1465
      %vm1468 = vcmp.eq.f32.partialorder %v1462, 0.0
      %v1469 = vand.u32 %v1462, 2147483648
      %v1470 = vsel %vm1468, %v1469, %v1467
      %v1471 = vrsqrt.pop %v1463
      %v1472 = vmul.f32 %v1463, %v1471
      %vm1473 = vcmp.eq.f32.partialorder %v1463, inf
      %v1474 = vsel %vm1473, %v1463, %v1472
      %vm1475 = vcmp.eq.f32.partialorder %v1463, 0.0
      %v1476 = vand.u32 %v1463, 2147483648
      %v1477 = vsel %vm1475, %v1476, %v1474
      %v1478 = vadd.f32 %v1446, %v1470
      %v1479 = vadd.f32 %v1453, %v1477
      %v1480 = vmul.f32 %v1478, 0.5
      %v1481 = vmul.f32 %v1479, 0.5
      %v1482 = vadd.f32 %v1420, %v1428
      %v1483 = vadd.f32 %v1425, %v1429
      %v1484 = vmul.f32 %v1482, 0.5
      %v1485 = vmul.f32 %v1483, 0.5
      %v1486 = vmul.f32 %v1484, %v1484
      %v1487 = vmul.f32 %v1485, %v1485
      %v1488 = vsel %vm471, %v1486, 0.0
      %1489 = vadd.xlane.f32.xlu0 %v1488
      %v1490 = vpop.xlane.xlu0 %1489
      %v1491 = vsel %vm471, %v1487, 0.0
      %1492 = vadd.xlane.f32.xlu0 %v1491
      %v1493 = vpop.xlane.xlu0 %1492
      %v1494 = vmul.f32 %v1480, %v1480
      %v1495 = vmul.f32 %v1481, %v1481
      %v1496 = vsub.f32 %v1490, %v1494
      %v1497 = vsub.f32 %v1493, %v1495
      %v1498 = vand.u32 2147483647, %v1496
      %v1499 = vand.u32 2147483647, %v1497
      %v1500 = vmax.f32 %v1498, 1e-08
      %v1501 = vmax.f32 %v1499, 1e-08
      %v1502 = vrsqrt.pop %v1500
      %v1503 = vrsqrt.pop %v1501
      %v1504 = vmul.f32 %v1484, %v1502
      %v1505 = vmul.f32 %v1485, %v1503
      %1506 = vst.msk [vmem:[%s465] sm:$0xff] %vm471, %v1504
      %1507 = vst.msk [vmem:[%s465 + $0x8] sm:$0xff] %vm471, %v1505
      %s1508 = smul.u32 2, %s25
      %p1509 = scmp.lt.s32.totalorder %s1508, 5
      %s1510 = scalar_select %p1509, %s1508, 5
      %s1511 = smul.addr %s1510, 8
      %s1512 = scalar_lea.vmem %s13, %s1511
      // Predicated region
      $region73: #{_lambda_.12} parent=71 // pred_check
        %p1513 = pneg %p326
      $region74: #{_lambda_.12} parent=71 // pred_check_branch
        %1515 = sbr.rel (%p1513) target = $region76
      $region75: #{_lambda_.12} parent=71 // pred_region
        %s1516 = smul.u32 2, %s25
      $region76: #{_lambda_.12} parent=71 // pred_fallthru
        _
    $region72: #{_lambda_.12} parent=5 // pred_fallthru
      _
    %p1517 = scmp.le.s32.totalorder 2, %s20
    // Predicated region
    $region77: #{_lambda_.12} parent=5 // pred_check
      %p1518 = pneg %p1517
    $region78: #{_lambda_.12} parent=5 // pred_check_branch
      %1520 = sbr.rel (%p1518) target = $region80
    $region79: #{_lambda_.12} parent=5 // pred_region
      %s1521 = ssub.s32 %s20, 2
      // Predicated region
      $region81: #{_lambda_.12} parent=79 // pred_check
        %p1522 = pneg %p332
      $region82: #{_lambda_.12} parent=79 // pred_check_branch
        %1524 = sbr.rel (%p1522) target = $region84
      $region83: #{_lambda_.12} parent=79 // pred_region
        %s1525 = smul.u32 2, %s26
        %p1526 = scmp.lt.s32.totalorder %s1525, 5
        %s1527 = scalar_select %p1526, %s1525, 5
        %s1528 = smul.addr %s1527, 8
        %s1529 = scalar_lea.vmem %s13, %s1528
      $region84: #{_lambda_.12} parent=79 // pred_fallthru
        _
    $region80: #{_lambda_.12} parent=5 // pred_fallthru
      _
  $region6: #{_lambda_.12} parent=0 // loop_footer
    %s24 = sadd.s32 1, %s20
  $region7: #{_lambda_.12} parent=0 // loop_footer_branch
    %19 = sbr.rel target = $region3
  $region8: #{_lambda_.12} parent=0 // loop_exit
    _

// kernel: _lambda_.19
$region0: #{_lambda_.19}
  #allocation0 [shape = 'u32[]', space=smem, size = 0x4, offset = 0x4, fixed_abs, tag = 'smem constant byte address 0x4 - core index']
  #allocation1 [shape = 'u32[144,128]{1,0:T(1,128)}', space=vmem, size = 0x12000, scoped, tag = 'internal scratch']
  %s0 = inlined_call_operand.vmem [shape: f32[48,32], index: 0, kind: input, shape index: {}]
  %s1 = inlined_call_operand.vmem [shape: f32[1,32], index: 1, kind: input, shape index: {}]
  %s2 = inlined_call_operand.vmem [shape: f32[32,32], index: 2, kind: input, shape index: {}]
  %s3 = inlined_call_operand.vmem [shape: f32[1,32], index: 3, kind: input, shape index: {}]
  %s4 = inlined_call_operand.vmem [shape: f32[32,4], index: 4, kind: input, shape index: {}]
  %s5 = inlined_call_operand.vmem [shape: f32[1,4], index: 5, kind: input, shape index: {}]
  %s6 = inlined_call_operand.vmem [shape: f32[48,4], index: 6, kind: output, shape index: {}]
  %s7 = sld [smem:[#allocation0]]
  $region57: #{_lambda_.19} parent=0
    _
  %s9 = ssub.s32 1, %s7
  %s10 = scalar_select 0, %s9, %s7
  loop: start=0, step=1, limit=5
  $region2: #{_lambda_.19} parent=0 // loop_pre_header
    _
  $region3: #{_lambda_.19} parent=0 // loop_header
    %s12 = sphi 0, %s16
    %p13 = scmp.ge.s32.totalorder %s12, 5
    %s22 = sphi 0, %s24
    %s25 = sphi 0, %s22
    %s26 = sphi 0, %s25
    %s42 = sphi 0, %s26
    %s46 = sphi 0, %s46
    %s48 = sphi 0, %s46
    %s49 = sphi 0, %s48
    %s63 = sphi 0, %s49
    %s67 = sphi 0, %s67
    %s69 = sphi 0, %s67
    %s70 = sphi 0, %s69
    %s84 = sphi 0, %s70
    %s88 = sphi 0, %s88
    %s90 = sphi 0, %s88
    %s91 = sphi 0, %s90
    %s105 = sphi 0, %s91
    %s109 = sphi 0, %s109
    %s111 = sphi 0, %s109
    %s112 = sphi 0, %s111
    %s126 = sphi 0, %s112
    %s130 = sphi 0, %s130
    %s132 = sphi 0, %s130
    %s133 = sphi 0, %s132
    %s147 = sphi 0, %s133
    %s153 = sphi 0, %s155
    %s156 = sphi 0, %s153
    %s157 = sphi 0, %s156
    %s173 = sphi 0, %s157
  $region4: #{_lambda_.19} parent=0 // loop_header_branch
    %15 = sbr.rel (%p13) target = $region8
  $region5: #{_lambda_.19} parent=0 // loop_body
    %s17 = ssub.s32 %s12, 1
    %s18 = ssub.s32 %s12, 2
    %s19 = sadd.s32 %s12, 1
    %s20 = ssub.s32 %s12, %s19
    %p21 = scmp.eq.s32.totalorder %s20, 0
    %s23 = sadd.s32 %s22, 1
    %s24 = scalar_select %p21, %s22, %s23
    %p27 = pneg %p21
    %p28 = scmp.eq.s32.totalorder %s12, 2
    %p29 = por %p27, %p28
    %p30 = scmp.ne.s32.totalorder %s22, %s25
    %p31 = scmp.eq.s32.totalorder %s12, 0
    %p32 = por %p30, %p31
    %p33 = scmp.ne.s32.totalorder %s22, %s25
    %p34 = scmp.eq.s32.totalorder %s17, 2
    %p35 = por %p33, %p34
    %p36 = scmp.ne.s32.totalorder %s25, %s26
    %p37 = scmp.eq.s32.totalorder %s17, 0
    %p38 = por %p36, %p37
    %p39 = scmp.ne.s32.totalorder %s25, %s26
    %p40 = scmp.eq.s32.totalorder %s18, 2
    %p41 = por %p39, %p40
    %p43 = scmp.ne.s32.totalorder %s26, %s42
    %p44 = scmp.eq.s32.totalorder %s18, 0
    %p45 = por %p43, %p44
    %s47 = sadd.s32 %s46, 1
    %p50 = scmp.eq.s32.totalorder %s12, 2
    %p51 = scmp.ne.s32.totalorder %s46, %s48
    %p52 = scmp.eq.s32.totalorder %s12, 0
    %p53 = por %p51, %p52
    %p54 = scmp.ne.s32.totalorder %s46, %s48
    %p55 = scmp.eq.s32.totalorder %s17, 2
    %p56 = por %p54, %p55
    %p57 = scmp.ne.s32.totalorder %s48, %s49
    %p58 = scmp.eq.s32.totalorder %s17, 0
    %p59 = por %p57, %p58
    %p60 = scmp.ne.s32.totalorder %s48, %s49
    %p61 = scmp.eq.s32.totalorder %s18, 2
    %p62 = por %p60, %p61
    %p64 = scmp.ne.s32.totalorder %s49, %s63
    %p65 = scmp.eq.s32.totalorder %s18, 0
    %p66 = por %p64, %p65
    %s68 = sadd.s32 %s67, 1
    %p71 = scmp.eq.s32.totalorder %s12, 2
    %p72 = scmp.ne.s32.totalorder %s67, %s69
    %p73 = scmp.eq.s32.totalorder %s12, 0
    %p74 = por %p72, %p73
    %p75 = scmp.ne.s32.totalorder %s67, %s69
    %p76 = scmp.eq.s32.totalorder %s17, 2
    %p77 = por %p75, %p76
    %p78 = scmp.ne.s32.totalorder %s69, %s70
    %p79 = scmp.eq.s32.totalorder %s17, 0
    %p80 = por %p78, %p79
    %p81 = scmp.ne.s32.totalorder %s69, %s70
    %p82 = scmp.eq.s32.totalorder %s18, 2
    %p83 = por %p81, %p82
    %p85 = scmp.ne.s32.totalorder %s70, %s84
    %p86 = scmp.eq.s32.totalorder %s18, 0
    %p87 = por %p85, %p86
    %s89 = sadd.s32 %s88, 1
    %p92 = scmp.eq.s32.totalorder %s12, 2
    %p93 = scmp.ne.s32.totalorder %s88, %s90
    %p94 = scmp.eq.s32.totalorder %s12, 0
    %p95 = por %p93, %p94
    %p96 = scmp.ne.s32.totalorder %s88, %s90
    %p97 = scmp.eq.s32.totalorder %s17, 2
    %p98 = por %p96, %p97
    %p99 = scmp.ne.s32.totalorder %s90, %s91
    %p100 = scmp.eq.s32.totalorder %s17, 0
    %p101 = por %p99, %p100
    %p102 = scmp.ne.s32.totalorder %s90, %s91
    %p103 = scmp.eq.s32.totalorder %s18, 2
    %p104 = por %p102, %p103
    %p106 = scmp.ne.s32.totalorder %s91, %s105
    %p107 = scmp.eq.s32.totalorder %s18, 0
    %p108 = por %p106, %p107
    %s110 = sadd.s32 %s109, 1
    %p113 = scmp.eq.s32.totalorder %s12, 2
    %p114 = scmp.ne.s32.totalorder %s109, %s111
    %p115 = scmp.eq.s32.totalorder %s12, 0
    %p116 = por %p114, %p115
    %p117 = scmp.ne.s32.totalorder %s109, %s111
    %p118 = scmp.eq.s32.totalorder %s17, 2
    %p119 = por %p117, %p118
    %p120 = scmp.ne.s32.totalorder %s111, %s112
    %p121 = scmp.eq.s32.totalorder %s17, 0
    %p122 = por %p120, %p121
    %p123 = scmp.ne.s32.totalorder %s111, %s112
    %p124 = scmp.eq.s32.totalorder %s18, 2
    %p125 = por %p123, %p124
    %p127 = scmp.ne.s32.totalorder %s112, %s126
    %p128 = scmp.eq.s32.totalorder %s18, 0
    %p129 = por %p127, %p128
    %s131 = sadd.s32 %s130, 1
    %p134 = scmp.eq.s32.totalorder %s12, 2
    %p135 = scmp.ne.s32.totalorder %s130, %s132
    %p136 = scmp.eq.s32.totalorder %s12, 0
    %p137 = por %p135, %p136
    %p138 = scmp.ne.s32.totalorder %s130, %s132
    %p139 = scmp.eq.s32.totalorder %s17, 2
    %p140 = por %p138, %p139
    %p141 = scmp.ne.s32.totalorder %s132, %s133
    %p142 = scmp.eq.s32.totalorder %s17, 0
    %p143 = por %p141, %p142
    %p144 = scmp.ne.s32.totalorder %s132, %s133
    %p145 = scmp.eq.s32.totalorder %s18, 2
    %p146 = por %p144, %p145
    %p148 = scmp.ne.s32.totalorder %s133, %s147
    %p149 = scmp.eq.s32.totalorder %s18, 0
    %p150 = por %p148, %p149
    %s151 = ssub.s32 %s12, %s19
    %p152 = scmp.eq.s32.totalorder %s151, 0
    %s154 = sadd.s32 %s153, 1
    %s155 = scalar_select %p152, %s153, %s154
    %p158 = pneg %p152
    %p159 = scmp.eq.s32.totalorder %s12, 2
    %p160 = por %p158, %p159
    %p161 = scmp.ne.s32.totalorder %s153, %s156
    %p162 = scmp.eq.s32.totalorder %s12, 0
    %p163 = por %p161, %p162
    %p164 = scmp.ne.s32.totalorder %s153, %s156
    %p165 = scmp.eq.s32.totalorder %s17, 2
    %p166 = por %p164, %p165
    %p167 = scmp.ne.s32.totalorder %s156, %s157
    %p168 = scmp.eq.s32.totalorder %s17, 0
    %p169 = por %p167, %p168
    %p170 = scmp.ne.s32.totalorder %s156, %s157
    %p171 = scmp.eq.s32.totalorder %s18, 2
    %p172 = por %p170, %p171
    %p174 = scmp.ne.s32.totalorder %s157, %s173
    %p175 = scmp.eq.s32.totalorder %s18, 0
    %p176 = por %p174, %p175
    %p177 = scmp.le.s32.totalorder 1, %s12
    %p178 = scmp.lt.s32.totalorder %s12, 4
    %p179 = pnand %p177, %p178
    %p180 = pneg %p179
    // Predicated region
    $region9: #{_lambda_.19} parent=5 // pred_check
      _
    $region10: #{_lambda_.19} parent=5 // pred_check_branch
      %182 = sbr.rel (%p179) target = $region12
    $region11: #{_lambda_.19} parent=5 // pred_region
      %s183 = ssub.s32 %s12, 1
      // Predicated region
      $region13: #{_lambda_.19} parent=11 // pred_check
        %p184 = pneg %p59
      $region14: #{_lambda_.19} parent=11 // pred_check_branch
        %186 = sbr.rel (%p184) target = $region16
      $region15: #{_lambda_.19} parent=11 // pred_region
        _
      $region16: #{_lambda_.19} parent=11 // pred_fallthru
        _
      // Predicated region
      $region17: #{_lambda_.19} parent=11 // pred_check
        %p187 = pneg %p80
      $region18: #{_lambda_.19} parent=11 // pred_check_branch
        %189 = sbr.rel (%p187) target = $region20
      $region19: #{_lambda_.19} parent=11 // pred_region
        _
      $region20: #{_lambda_.19} parent=11 // pred_fallthru
        _
      // Predicated region
      $region21: #{_lambda_.19} parent=11 // pred_check
        %p190 = pneg %p101
      $region22: #{_lambda_.19} parent=11 // pred_check_branch
        %192 = sbr.rel (%p190) target = $region24
      $region23: #{_lambda_.19} parent=11 // pred_region
        _
      $region24: #{_lambda_.19} parent=11 // pred_fallthru
        _
      // Predicated region
      $region25: #{_lambda_.19} parent=11 // pred_check
        %p193 = pneg %p122
      $region26: #{_lambda_.19} parent=11 // pred_check_branch
        %195 = sbr.rel (%p193) target = $region28
      $region27: #{_lambda_.19} parent=11 // pred_region
        _
      $region28: #{_lambda_.19} parent=11 // pred_fallthru
        _
      // Predicated region
      $region29: #{_lambda_.19} parent=11 // pred_check
        %p196 = pneg %p143
      $region30: #{_lambda_.19} parent=11 // pred_check_branch
        %198 = sbr.rel (%p196) target = $region32
      $region31: #{_lambda_.19} parent=11 // pred_region
        _
      $region32: #{_lambda_.19} parent=11 // pred_fallthru
        _
    $region12: #{_lambda_.19} parent=5 // pred_fallthru
      _
    %p199 = scmp.lt.s32.totalorder %s12, 3
    // Predicated region
    $region33: #{_lambda_.19} parent=5 // pred_check
      %p200 = pneg %p199
    $region34: #{_lambda_.19} parent=5 // pred_check_branch
      %202 = sbr.rel (%p200) target = $region36
    $region35: #{_lambda_.19} parent=5 // pred_region
      // Predicated region
      $region37: #{_lambda_.19} parent=35 // pred_check
        %p203 = pneg %p32
      $region38: #{_lambda_.19} parent=35 // pred_check_branch
        %205 = sbr.rel (%p203) target = $region40
      $region39: #{_lambda_.19} parent=35 // pred_region
        %s206 = smul.u32 2, %s12
        %p207 = scmp.lt.s32.totalorder %s206, 5
        %s208 = scalar_select %p207, %s206, 5
        %s209 = smul.addr %s208, 8
        %s210 = scalar_lea.vmem %s0, %s209
        %s211 = smul.u32 2, %s12
      $region40: #{_lambda_.19} parent=35 // pred_fallthru
        _
    $region36: #{_lambda_.19} parent=5 // pred_fallthru
      _
    %p212 = scmp.le.s32.totalorder 1, %s12
    %p213 = scmp.lt.s32.totalorder %s12, 4
    %p214 = pnand %p212, %p213
    %p215 = pneg %p214
    // Predicated region
    $region41: #{_lambda_.19} parent=5 // pred_check
      _
    $region42: #{_lambda_.19} parent=5 // pred_check_branch
      %217 = sbr.rel (%p214) target = $region44
    $region43: #{_lambda_.19} parent=5 // pred_region
      %s218 = ssub.s32 %s12, 1
      %s219 = smul.u32 2, %s17
      %p220 = scmp.lt.s32.totalorder %s219, 5
      %s221 = scalar_select %p220, %s219, 5
      %s222 = smul.addr %s221, 8
      %s223 = scalar_lea.vmem %s0, %s222
      %p224 = pneg %p38
      %p225 = pneg %p35
      %p226 = pneg %p59
      %p227 = pneg %p56
      %p228 = pneg %p80
      %p229 = pneg %p77
      %p230 = pneg %p101
      %p231 = pneg %p98
      %p232 = pneg %p122
      %p233 = pneg %p119
      %p234 = pneg %p143
      %p235 = pneg %p140
      %p236 = pneg %p169
      %p237 = pneg %p166
      %s238 = smul.u32 2, %s17
      %p239 = scmp.lt.s32.totalorder %s238, 5
      %s240 = scalar_select %p239, %s238, 5
      %s241 = smul.addr %s240, 8
      %s242 = scalar_lea.vmem %s6, %s241
      %s243 = smul.u32 2, %s17
      %p244 = scmp.lt.s32.totalorder %s243, 5
      %s245 = scalar_select %p244, %s243, 5
      %s246 = smul.addr %s245, 8
      %s247 = scalar_lea.vmem %s0, %s246
      %s248 = smul.u32 2, %s17
      %s249 = smul.u32 2, %s17
      %p250 = scmp.lt.s32.totalorder %s249, 5
      %s251 = scalar_select %p250, %s249, 5
      %s252 = smul.addr %s251, 8
      %s253 = scalar_lea.vmem %s6, %s252
      %s254 = smul.u32 2, %s17
      %v255 = vld [vmem:[%s247] sm:$0xff]
      %v256 = vld [vmem:[%s247 + $0x8] sm:$0xff]
      %v257 = vmul.f32 %v255, %v255
      %v258 = vmul.f32 %v256, %v256
      %vm259 = vcmask 261120
      %v260 = vsel %vm259, %v257, 0.0
      %261 = vadd.xlane.f32.xlu0 %v260
      %v262 = vpop.xlane.xlu0 %261
      %v263 = vsel %vm259, %v258, 0.0
      %264 = vadd.xlane.f32.xlu0 %v263
      %v265 = vpop.xlane.xlu0 %264
      %v266 = vadd.f32 %v262, 1.0
      %v267 = vadd.f32 %v265, 1.0
      %v268 = vrsqrt.pop %v266
      %v269 = vmul.f32 %v266, %v268
      %vm270 = vcmp.eq.f32.partialorder %v266, inf
      %v271 = vsel %vm270, %v266, %v269
      %vm272 = vcmp.eq.f32.partialorder %v266, 0.0
      %v273 = vand.u32 %v266, 2147483648
      %v274 = vsel %vm272, %v273, %v271
      %v275 = vrsqrt.pop %v267
      %v276 = vmul.f32 %v267, %v275
      %vm277 = vcmp.eq.f32.partialorder %v267, inf
      %v278 = vsel %vm277, %v267, %v276
      %vm279 = vcmp.eq.f32.partialorder %v267, 0.0
      %v280 = vand.u32 %v267, 2147483648
      %v281 = vsel %vm279, %v280, %v278
      %v282 = vld [vmem:[%s2] sm:$0xff]
      %v283 = vld [vmem:[%s2 + $0x8] sm:$0xff]
      %v284 = vld [vmem:[%s2 + $0x10] sm:$0xff]
      %v285 = vld [vmem:[%s2 + $0x18] sm:$0xff]
      %v286 = vld [vmem:[%s1] sm:$0x1]
      %v288 = vlaneseq
      %v289 = vshrl.u32 %v288, 7
      %v290 = vsub.s32 0, %v289
      %v291 = vrot.slane %v286, %v290
      %v293 = vmul.f32 %v274, %v291
      %v294 = vmul.f32 %v281, %v291
      %v296 = vsel %vm259, %v255, 0
      %v299 = vsel %vm259, %v256, 0
      %301 = vmatprep.subr.mxu0 0.0
      %302 = vmatpush1.msra.mxu0 %v282
      %303 = vmatprep.subr.mxu0 0.0
      %304 = vmatpush1.msra.mxu0 %v283
      %305 = vmatprep.subr.mxu0 0.0
      %306 = vmatpush1.msra.mxu0 %v284
      %307 = vmatprep.subr.mxu0 0.0
      %308 = vmatpush1.msra.mxu0 %v285
      %309 = vmatprep.subr.mxu0 0.0
      %310 = vmatpush1.msra.mxu0 0.0
      %311 = vmatprep.subr.mxu0 0.0
      %312 = vmatpush1.msra.mxu0 0.0
      %313 = vmatprep.subr.mxu0 0.0
      %314 = vmatpush1.msra.mxu0 0.0
      %315 = vmatprep.subr.mxu0 0.0
      %316 = vmatpush1.msra.mxu0 0.0
      %317 = vmatprep.subr.mxu0 0.0
      %318 = vmatpush1.msra.mxu0 0.0
      %319 = vmatprep.subr.mxu0 0.0
      %320 = vmatpush1.msra.mxu0 0.0
      %321 = vmatprep.subr.mxu0 0.0
      %322 = vmatpush1.msra.mxu0 0.0
      %323 = vmatprep.subr.mxu0 0.0
      %324 = vmatpush1.msra.mxu0 0.0
      %325 = vmatprep.subr.mxu0 0.0
      %326 = vmatpush1.msra.mxu0 0.0
      %327 = vmatprep.subr.mxu0 0.0
      %328 = vmatpush1.msra.mxu0 0.0
      %329 = vmatprep.subr.mxu0 0.0
      %330 = vmatpush1.msra.mxu0 0.0
      %331 = vmatprep.subr.mxu0 0.0
      %332 = vmatpush1.msra.mxu0 0.0
      %333 = vmatprep.subr.mxu0 0.0
      %334 = vmatpush1.msra.mxu0 0.0
      %335 = vmatprep.subr.mxu0 0.0
      %336 = vmatpush1.msra.mxu0 0.0
      %337 = vmatprep.subr.mxu0 0.0
      %338 = vmatpush1.msra.mxu0 0.0
      %339 = vmatprep.subr.mxu0 0.0
      %340 = vmatpush1.msra.mxu0 0.0
      %341 = vmatprep.subr.mxu0 0.0
      %342 = vmatpush1.msra.mxu0 0.0
      %343 = vmatprep.subr.mxu0 0.0
      %344 = vmatpush1.msra.mxu0 0.0
      %345 = vmatprep.subr.mxu0 0.0
      %346 = vmatpush1.msra.mxu0 0.0
      %347 = vmatprep.subr.mxu0 0.0
      %348 = vmatpush1.msra.mxu0 0.0
      %349 = vmatprep.subr.mxu0 0.0
      %350 = vmatpush1.msra.mxu0 0.0
      %351 = vmatprep.subr.mxu0 0.0
      %352 = vmatpush1.msra.mxu0 0.0
      %353 = vmatprep.subr.mxu0 0.0
      %354 = vmatpush1.msra.mxu0 0.0
      %355 = vmatprep.subr.mxu0 0.0
      %356 = vmatpush1.msra.mxu0 0.0
      %357 = vmatprep.subr.mxu0 0.0
      %358 = vmatpush1.msra.mxu0 0.0
      %359 = vmatprep.subr.mxu0 0.0
      %360 = vmatpush1.msra.mxu0 0.0
      %361 = vmatprep.subr.mxu0 0.0
      %362 = vmatpush1.msra.mxu0 0.0
      %363 = vmatprep.subr.mxu0 0.0
      %364 = vmatpush1.msra.mxu0 0.0
      %365 = vmatprep.mubr.f32.mxu0 0.0
      %366 = vmatmul.mubr.f32.gmra.mrb[0].mxu0 %v296
      %v367 = vpop.f32.mrb[0].mxu0
      %v368 = vadd.f32 %v293, %v367
      %v369 = vpop.f32.mrb[0].mxu0
      %370 = vmatprep.mubr.f32.mxu0 0.0
      %371 = vmatmul.mubr.f32.gmra.mrb[0].mxu0 %v299
      %v372 = vpop.f32.mrb[0].mxu0
      %v373 = vadd.f32 %v294, %v372
      %v374 = vpop.f32.mrb[0].mxu0
      %375 = vdwg.mxu0
      %v376 = vld [vmem:[%s3] sm:$0x1]
      %v378 = vlaneseq
      %v379 = vshrl.u32 %v378, 7
      %v380 = vsub.s32 0, %v379
      %v381 = vrot.slane %v376, %v380
      %v383 = vadd.f32 %v368, %v381
      %v384 = vadd.f32 %v373, %v381
      %v385 = vmul.f32 %v383, %v383
      %v386 = vmul.f32 %v384, %v384
      %v387 = vsel %vm259, %v385, 0.0
      %388 = vadd.xlane.f32.xlu0 %v387
      %v389 = vpop.xlane.xlu0 %388
      %v390 = vsel %vm259, %v386, 0.0
      %391 = vadd.xlane.f32.xlu0 %v390
      %v392 = vpop.xlane.xlu0 %391
      %v393 = vadd.f32 %v389, 1.0
      %v394 = vadd.f32 %v392, 1.0
      %v395 = vrsqrt.pop %v393
      %v396 = vmul.f32 %v393, %v395
      %vm397 = vcmp.eq.f32.partialorder %v393, inf
      %v398 = vsel %vm397, %v393, %v396
      %vm399 = vcmp.eq.f32.partialorder %v393, 0.0
      %v400 = vand.u32 %v393, 2147483648
      %v401 = vsel %vm399, %v400, %v398
      %v402 = vrsqrt.pop %v394
      %v403 = vmul.f32 %v394, %v402
      %vm404 = vcmp.eq.f32.partialorder %v394, inf
      %v405 = vsel %vm404, %v394, %v403
      %vm406 = vcmp.eq.f32.partialorder %v394, 0.0
      %v407 = vand.u32 %v394, 2147483648
      %v408 = vsel %vm406, %v407, %v405
      %v409 = vmul.f32 %v401, %v401
      %v410 = vmul.f32 %v408, %v408
      %v411 = vsub.f32 %v409, 1.0
      %v412 = vsub.f32 %v410, 1.0
      %v413 = vmax.f32 %v411, 0.0
      %v414 = vmax.f32 %v412, 0.0
      %v415 = vrsqrt.pop %v413
      %v416 = vmul.f32 %v413, %v415
      %vm417 = vcmp.eq.f32.partialorder %v413, inf
      %v418 = vsel %vm417, %v413, %v416
      %vm419 = vcmp.eq.f32.partialorder %v413, 0.0
      %v420 = vand.u32 %v413, 2147483648
      %v421 = vsel %vm419, %v420, %v418
      %v422 = vrsqrt.pop %v414
      %v423 = vmul.f32 %v414, %v422
      %vm424 = vcmp.eq.f32.partialorder %v414, inf
      %v425 = vsel %vm424, %v414, %v423
      %vm426 = vcmp.eq.f32.partialorder %v414, 0.0
      %v427 = vand.u32 %v414, 2147483648
      %v428 = vsel %vm426, %v427, %v425
      %v429 = vadd.f32 %v401, %v421
      %v430 = vadd.f32 %v408, %v428
      %v431 = vlog2.pop %v429
      %v432 = vmul.f32 %v431, 0.6931472
      %v433 = vlog2.pop %v430
      %v434 = vmul.f32 %v433, 0.6931472
      %v435 = vmax.f32 %v411, 1e-08
      %v436 = vmax.f32 %v412, 1e-08
      %v437 = vrsqrt.pop %v435
      %v438 = vrsqrt.pop %v436
      %v439 = vmul.f32 %v432, %v437
      %v440 = vmul.f32 %v434, %v438
      %v441 = vmul.f32 %v439, %v383
      %v442 = vmul.f32 %v440, %v384
      %v443 = vld [vmem:[%s4] sm:$0xff]
      %v444 = vld [vmem:[%s4 + $0x8] sm:$0xff]
      %v445 = vld [vmem:[%s4 + $0x10] sm:$0xff]
      %v446 = vld [vmem:[%s4 + $0x18] sm:$0xff]
      %v447 = vld [vmem:[%s5] sm:$0x1]
      %v449 = vlaneseq
      %v450 = vshrl.u32 %v449, 7
      %v451 = vsub.s32 0, %v450
      %v452 = vrot.slane %v447, %v451
      %v455 = vsel %vm259, %v441, 0
      %v458 = vsel %vm259, %v442, 0
      %460 = vmatprep.subr.mxu0 0.0
      %461 = vmatpush1.msra.mxu0 %v443
      %462 = vmatprep.subr.mxu0 0.0
      %463 = vmatpush1.msra.mxu0 %v444
      %464 = vmatprep.subr.mxu0 0.0
      %465 = vmatpush1.msra.mxu0 %v445
      %466 = vmatprep.subr.mxu0 0.0
      %467 = vmatpush1.msra.mxu0 %v446
      %468 = vmatprep.subr.mxu0 0.0
      %469 = vmatpush1.msra.mxu0 0.0
      %470 = vmatprep.subr.mxu0 0.0
      %471 = vmatpush1.msra.mxu0 0.0
      %472 = vmatprep.subr.mxu0 0.0
      %473 = vmatpush1.msra.mxu0 0.0
      %474 = vmatprep.subr.mxu0 0.0
      %475 = vmatpush1.msra.mxu0 0.0
      %476 = vmatprep.subr.mxu0 0.0
      %477 = vmatpush1.msra.mxu0 0.0
      %478 = vmatprep.subr.mxu0 0.0
      %479 = vmatpush1.msra.mxu0 0.0
      %480 = vmatprep.subr.mxu0 0.0
      %481 = vmatpush1.msra.mxu0 0.0
      %482 = vmatprep.subr.mxu0 0.0
      %483 = vmatpush1.msra.mxu0 0.0
      %484 = vmatprep.subr.mxu0 0.0
      %485 = vmatpush1.msra.mxu0 0.0
      %486 = vmatprep.subr.mxu0 0.0
      %487 = vmatpush1.msra.mxu0 0.0
      %488 = vmatprep.subr.mxu0 0.0
      %489 = vmatpush1.msra.mxu0 0.0
      %490 = vmatprep.subr.mxu0 0.0
      %491 = vmatpush1.msra.mxu0 0.0
      %492 = vmatprep.subr.mxu0 0.0
      %493 = vmatpush1.msra.mxu0 0.0
      %494 = vmatprep.subr.mxu0 0.0
      %495 = vmatpush1.msra.mxu0 0.0
      %496 = vmatprep.subr.mxu0 0.0
      %497 = vmatpush1.msra.mxu0 0.0
      %498 = vmatprep.subr.mxu0 0.0
      %499 = vmatpush1.msra.mxu0 0.0
      %500 = vmatprep.subr.mxu0 0.0
      %501 = vmatpush1.msra.mxu0 0.0
      %502 = vmatprep.subr.mxu0 0.0
      %503 = vmatpush1.msra.mxu0 0.0
      %504 = vmatprep.subr.mxu0 0.0
      %505 = vmatpush1.msra.mxu0 0.0
      %506 = vmatprep.subr.mxu0 0.0
      %507 = vmatpush1.msra.mxu0 0.0
      %508 = vmatprep.subr.mxu0 0.0
      %509 = vmatpush1.msra.mxu0 0.0
      %510 = vmatprep.subr.mxu0 0.0
      %511 = vmatpush1.msra.mxu0 0.0
      %512 = vmatprep.subr.mxu0 0.0
      %513 = vmatpush1.msra.mxu0 0.0
      %514 = vmatprep.subr.mxu0 0.0
      %515 = vmatpush1.msra.mxu0 0.0
      %516 = vmatprep.subr.mxu0 0.0
      %517 = vmatpush1.msra.mxu0 0.0
      %518 = vmatprep.subr.mxu0 0.0
      %519 = vmatpush1.msra.mxu0 0.0
      %520 = vmatprep.subr.mxu0 0.0
      %521 = vmatpush1.msra.mxu0 0.0
      %522 = vmatprep.subr.mxu0 0.0
      %523 = vmatpush1.msra.mxu0 0.0
      %524 = vmatprep.mubr.f32.mxu0 0.0
      %525 = vmatmul.mubr.f32.gmra.mrb[0].mxu0 %v455
      %v526 = vpop.f32.mrb[0].mxu0
      %v527 = vadd.f32 %v452, %v526
      %v528 = vpop.f32.mrb[0].mxu0
      %529 = vmatprep.mubr.f32.mxu0 0.0
      %530 = vmatmul.mubr.f32.gmra.mrb[0].mxu0 %v458
      %v531 = vpop.f32.mrb[0].mxu0
      %v532 = vadd.f32 %v452, %v531
      %v533 = vpop.f32.mrb[0].mxu0
      %534 = vdwg.mxu0
      %vm535 = vcmask 31744
      %536 = vst.msk [vmem:[%s253] sm:$0xff] %vm535, %v527
      %537 = vst.msk [vmem:[%s253 + $0x8] sm:$0xff] %vm535, %v532
      %s538 = smul.u32 2, %s17
      %p539 = scmp.lt.s32.totalorder %s538, 5
      %s540 = scalar_select %p539, %s538, 5
      %s541 = smul.addr %s540, 8
      %s542 = scalar_lea.vmem %s6, %s541
      // Predicated region
      $region45: #{_lambda_.19} parent=43 // pred_check
        %p543 = pneg %p166
      $region46: #{_lambda_.19} parent=43 // pred_check_branch
        %545 = sbr.rel (%p543) target = $region48
      $region47: #{_lambda_.19} parent=43 // pred_region
        %s546 = smul.u32 2, %s17
      $region48: #{_lambda_.19} parent=43 // pred_fallthru
        _
    $region44: #{_lambda_.19} parent=5 // pred_fallthru
      _
    %p547 = scmp.le.s32.totalorder 2, %s12
    // Predicated region
    $region49: #{_lambda_.19} parent=5 // pred_check
      %p548 = pneg %p547
    $region50: #{_lambda_.19} parent=5 // pred_check_branch
      %550 = sbr.rel (%p548) target = $region52
    $region51: #{_lambda_.19} parent=5 // pred_region
      %s551 = ssub.s32 %s12, 2
      // Predicated region
      $region53: #{_lambda_.19} parent=51 // pred_check
        %p552 = pneg %p172
      $region54: #{_lambda_.19} parent=51 // pred_check_branch
        %554 = sbr.rel (%p552) target = $region56
      $region55: #{_lambda_.19} parent=51 // pred_region
        %s555 = smul.u32 2, %s18
        %p556 = scmp.lt.s32.totalorder %s555, 5
        %s557 = scalar_select %p556, %s555, 5
        %s558 = smul.addr %s557, 8
        %s559 = scalar_lea.vmem %s6, %s558
      $region56: #{_lambda_.19} parent=51 // pred_fallthru
        _
    $region52: #{_lambda_.19} parent=5 // pred_fallthru
      _
  $region6: #{_lambda_.19} parent=0 // loop_footer
    %s16 = sadd.s32 1, %s12
  $region7: #{_lambda_.19} parent=0 // loop_footer_branch
    %11 = sbr.rel target = $region3
  $region8: #{_lambda_.19} parent=0 // loop_exit
    _

</llo_original>
